<compile_context>
chip_gen: v7x
topology: tpu7x:2x2x1
jax: 0.10.0
libtpu: 0.0.40
codegen_flags: <defaults>
</compile_context>

<pallas_src>
import functools

import jax
import jax.numpy as jnp
from jax.experimental import pallas as pl
from jax.experimental.pallas import tpu as pltpu


def _subpixel1d_kernel(x_ref, o_ref, *, r):
    # x_ref block: (tC*r, tL)   o_ref block: (tC, r*tL)
    # out[c, l*r + j] = x[c*r + j, l]
    x = x_ref[...]
    rows, tL = x.shape
    tC = rows // r
    y = x.reshape(tC, r, tL)             # split channel dim into (tC, r)
    y = jnp.swapaxes(y, 1, 2)            # (tC, tL, r) -- the sub-pixel permutation
    o_ref[...] = y.reshape(tC, r * tL)   # lane-dense contiguous store


def _vmem_limit_bytes():
    """Generation-gated scoped-VMEM limit (v5e/v6e: 64 MiB, v7x: 32 MiB)."""
    cap = None
    try:
        cap = pltpu.get_tpu_info().vmem_capacity_bytes
    except Exception:
        cap = None
    if not cap or cap <= 0:
        cap = 64 * 1024 * 1024           # conservative (v7x-safe) default
    return int(min(96 * 1024 * 1024, max(32 * 1024 * 1024, cap // 2)))


def _pick_tiles(M_out, L, r, itemsize, *, payload_target, vmem_budget):
    """Pick (tC, tL): output-channel block and L tile.

    Legality: tC is a multiple of the native sublane pack (or == M_out, the
    full folded channel count); tL is a multiple of 128 (or == L).
    Performance: per-step payload (one input + one output tile) near
    `payload_target`, double-buffered footprint within `vmem_budget`, and at
    least 4 grid steps when possible (keeps both v7x TensorCores busy).
    """
    sub = 8 * max(1, 4 // itemsize)      # native sublane pack: 8 f32 / 16 bf16 / 32 i8
    m_cands = {d for d in range(sub, M_out + 1, sub) if M_out % d == 0}
    if not m_cands:
        m_cands = {d for d in range(8, M_out + 1, 8) if M_out % d == 0}
    m_cands = sorted(m_cands | {M_out})

    if L % 128 == 0:
        l_cands = [d for d in range(128, L + 1, 128) if L % d == 0]
    else:
        # Non-lane-aligned length: lane-dense tiles with a masked last block
        # (grid uses cdiv), plus the full length as a single (legal) block.
        l_cands = sorted({t for t in (128, 256, 512, 1024, 2048, 4096) if t < L}
                         | {L})

    cands = []
    for tC in m_cands:
        for tL in l_cands:
            payload = 2 * tC * r * tL * itemsize     # one input + one output tile
            if 2 * payload > vmem_budget:            # double-buffered in + out
                continue
            steps = (M_out // tC) * pl.cdiv(L, tL)
            cands.append((tC, tL, payload, steps))
    if not cands:                                    # pathological shapes: smallest legal
        return m_cands[0], l_cands[0]

    for min_steps in (4, 2, 1):                      # prefer >=4 steps for v7x's 2 TCs
        pool = [c for c in cands if c[3] >= min_steps]
        if pool:
            break
    meeting = [c for c in pool if c[2] >= payload_target]
    if meeting:                                      # smallest tile meeting the target
        tC, tL, _, _ = min(meeting, key=lambda c: c[2])
    else:                                            # otherwise the biggest available
        tC, tL, _, _ = max(pool, key=lambda c: c[2])
    return tC, tL


def subpixel1d(x, r):
    """1-D sub-pixel upsampling: (N, rC, L) -> (N, C, r*L)."""
    N, rC, L = x.shape
    assert rC % r == 0, "input channels must be divisible by the upsample factor"
    C = rC // r
    itemsize = jnp.dtype(x.dtype).itemsize

    # Fold batch into the channel axis (free reshape; index math is invariant):
    #   out_f[m, l*r + j] = x_f[m*r + j, l],  m = n*C + c
    M_out = N * C
    xf = x.reshape(M_out * r, L)

    vmem_limit = _vmem_limit_bytes()
    tC, tL = _pick_tiles(M_out, L, r, itemsize,
                         payload_target=2 * 1024 * 1024,
                         vmem_budget=vmem_limit // 2)
    grid = (M_out // tC, pl.cdiv(L, tL))

    kernel = functools.partial(_subpixel1d_kernel, r=r)
    # Pure data movement: one read + one write of the whole tensor.
    bytes_accessed = 2 * N * rC * L * itemsize

    out_f = pl.pallas_call(
        kernel,
        out_shape=jax.ShapeDtypeStruct((M_out, r * L), x.dtype),
        grid_spec=pltpu.PrefetchScalarGridSpec(
            num_scalar_prefetch=0,
            grid=grid,
            # Sublane dims are multiples of the native pack (or full); lane
            # dims are 128-multiples (or full), so the tiling is legal for
            # f32/bf16/int8 alike and the output store stays unmasked.
            in_specs=[pl.BlockSpec((tC * r, tL), lambda m, i: (m, i))],
            out_specs=pl.BlockSpec((tC, r * tL), lambda m, i: (m, i)),
        ),
        compiler_params=pltpu.CompilerParams(
            dimension_semantics=("parallel", "parallel"),
            vmem_limit_bytes=vmem_limit,
        ),
        cost_estimate=pl.CostEstimate(
            flops=0, transcendentals=0, bytes_accessed=bytes_accessed),
    )(xf)
    return out_f.reshape(N, C, r * L)


def subpixel1d_ref(x, r):
    """Pure-JAX reference mirroring the PyTorch module exactly."""
    N, rC, L = x.shape
    C = rC // r
    return x.reshape(N, C, r, L).transpose(0, 1, 3, 2).reshape(N, C, r * L)


if __name__ == "__main__":
    key = jax.random.PRNGKey(0)
    k1, k2 = jax.random.split(key)

    # f32: N=2, r=4, rC=32 (C=8), L=1024 -> out (2, 8, 4096)
    x1 = jax.random.normal(k1, (2, 32, 1024), dtype=jnp.float32)
    o1 = jax.block_until_ready(subpixel1d(x1, 4))
    assert o1.shape == (2, 8, 4096) and o1.dtype == x1.dtype
    assert jnp.array_equal(o1, subpixel1d_ref(x1, 4)), "f32 SubPixel1D mismatch"

    # bf16: N=2, r=2, rC=16 (C=8), L=512 -> out (2, 8, 1024)
    x2 = jax.random.normal(k2, (2, 16, 512), dtype=jnp.bfloat16)
    o2 = jax.block_until_ready(subpixel1d(x2, 2))
    assert o2.shape == (2, 8, 1024) and o2.dtype == x2.dtype
    assert jnp.array_equal(o2, subpixel1d_ref(x2, 2)), "bf16 SubPixel1D mismatch"

    print("KERNEL_OK")
</pallas_src>

<mosaic_0001>
module attributes {stable_mosaic.version = 11 : i64} {
  func.func @_subpixel1d_kernel(%arg0: i32, %arg1: i32, %arg2: memref<32x512xf32, #tpu.memory_space<vmem>>, %arg3: memref<8x2048xf32, #tpu.memory_space<vmem>>) attributes {dimension_semantics = [#tpu.dimension_semantics<parallel>, #tpu.dimension_semantics<parallel>], iteration_bounds = array<i64: 2, 2>, scalar_prefetch = 0 : i64, scratch_operands = 0 : i64, tpu.core_type = #tpu.core_type<tc>, window_params = [{transform_indices = @transform_0, window_bounds = array<i64: 32, 512>}, {transform_indices = @transform_1, window_bounds = array<i64: 8, 2048>}]} {
    %c0 = arith.constant 0 : index
    %c0_0 = arith.constant 0 : index
    %0 = vector.load %arg2[%c0, %c0_0] : memref<32x512xf32, #tpu.memory_space<vmem>>, vector<32x512xf32>
    %1 = vector.shape_cast %0 : vector<32x512xf32> to vector<8x4x512xf32>
    %2 = tpu.transpose %1, [0, 2, 1] : vector<8x4x512xf32> -> vector<8x512x4xf32>
    %3 = vector.shape_cast %2 : vector<8x512x4xf32> to vector<8x2048xf32>
    %c0_1 = arith.constant 0 : index
    %c0_2 = arith.constant 0 : index
    %4 = vector.load %arg3[%c0_1, %c0_2] : memref<8x2048xf32, #tpu.memory_space<vmem>>, vector<8x2048xf32>
    tpu.vector_store %arg3[%c0_1, %c0_2], %3 {strides = array<i32>} : memref<8x2048xf32, #tpu.memory_space<vmem>>, vector<8x2048xf32>,
    return
  }
  func.func @transform_0(%arg0: i32, %arg1: i32) -> (i32, i32) {
    %c0_i32 = arith.constant 0 : i32
    return %arg0, %arg1 : i32, i32
  }
  func.func @transform_1(%arg0: i32, %arg1: i32) -> (i32, i32) {
    %c0_i32 = arith.constant 0 : i32
    return %arg0, %arg1 : i32, i32
  }
}

</mosaic_0001>

<llo_original>
// kernel: tpu_custom_call.1
$region0: #{tpu_custom_call.1}
  #allocation0 [shape = 'u32[]', space=smem, size = 0x4, offset = 0x4, fixed_abs, tag = 'smem constant byte address 0x4 - core index']
  #allocation1 [shape = 'u32[144,128]{1,0:T(1,128)}', space=vmem, size = 0x12000, scoped, tag = 'internal scratch']
  %s0 = inlined_call_operand.hbm [shape: f32[64,1024], index: 0, kind: input, shape index: {}]
  %s1 = inlined_call_operand.hbm [shape: f32[16,4096], index: 1, kind: output, shape index: {}]
  %s2 = sld [smem:[#allocation0]]
  $region41: #{tpu_custom_call.1} parent=0
    _
  %s4 = ssub.s32 1, %s2
  %s5 = scalar_select 0, %s4, %s2
  $region1: #{tpu_custom_call.1} parent=0
    #allocation2 [shape = 'u8[131072]{0}', space=vmem, size = 0x20000, scoped, tag = 'input window, operand 0']
    #allocation3 [shape = 's32[2]{0}', space=sflag, size = 0x8, scoped, tag = 'scoped memory for tpu_custom_call.1']
    #allocation4 [shape = 's32[2]{0}', space=sflag, size = 0x8, scoped, tag = 'scoped memory for tpu_custom_call.1']
    #allocation5 [shape = 'u8[131072]{0}', space=vmem, size = 0x20000, scoped, tag = 'output window, operand 0']
    %6 = vsyncpa [#allocation3], 0
    %s7 = scalar_lea.sflag [#allocation3], 1
    %8 = vsyncpa %s7, 0
    %9 = vsyncpa [#allocation4], 0
    %s10 = scalar_lea.sflag [#allocation4], 1
    %11 = vsyncpa %s10, 0
    loop: start=0, step=1, limit=6
    $region2: #{tpu_custom_call.1} parent=1 // loop_pre_header
      _
    $region3: #{tpu_custom_call.1} parent=1 // loop_header
      %s13 = sphi 0, %s17
      %p14 = scmp.ge.s32.totalorder %s13, 6
      %s20 = sphi 0, %s32
      %s21 = sphi 0, %s28
      %s22 = sphi 0, %s20
      %s23 = sphi 0, %s21
      %s24 = sphi 0, %s22
      %s25 = sphi 0, %s23
      %s37 = sphi 0, %s39
      %s40 = sphi 0, %s37
      %s41 = sphi 0, %s40
      %s57 = sphi 0, %s41
      %s65 = sphi 0, %s67
      %s68 = sphi 0, %s65
      %s69 = sphi 0, %s68
      %s85 = sphi 0, %s69
    $region4: #{tpu_custom_call.1} parent=1 // loop_header_branch
      %16 = sbr.rel (%p14) target = $region8
    $region5: #{tpu_custom_call.1} parent=1 // loop_body
      %s18 = ssub.s32 %s13, 1
      %s19 = ssub.s32 %s13, 2
      %s26 = sadd.s32 1, %s21
      %p27 = scmp.ge.s32.totalorder %s26, 2
      %s28 = scalar_select %p27, 0, %s26
      %s29 = sadd.s32 1, %s20
      %s30 = scalar_select %p27, %s29, %s20
      %p31 = scmp.ge.s32.totalorder %s30, 2
      %s32 = scalar_select %p31, 0, %s30
      %s33 = ssub.s32 %s20, %s32
      %s34 = ssub.s32 %s21, %s28
      %s35 = sor.u32 %s33, %s34
      %p36 = scmp.eq.s32.totalorder %s35, 0
      %s38 = sadd.s32 %s37, 1
      %s39 = scalar_select %p36, %s37, %s38
      %p42 = pneg %p36
      %p43 = scmp.eq.s32.totalorder %s13, 3
      %p44 = por %p42, %p43
      %p45 = scmp.ne.s32.totalorder %s37, %s40
      %p46 = scmp.eq.s32.totalorder %s13, 0
      %p47 = por %p45, %p46
      %p48 = scmp.ne.s32.totalorder %s37, %s40
      %p49 = scmp.eq.s32.totalorder %s18, 3
      %p50 = por %p48, %p49
      %p51 = scmp.ne.s32.totalorder %s40, %s41
      %p52 = scmp.eq.s32.totalorder %s18, 0
      %p53 = por %p51, %p52
      %p54 = scmp.ne.s32.totalorder %s40, %s41
      %p55 = scmp.eq.s32.totalorder %s19, 3
      %p56 = por %p54, %p55
      %p58 = scmp.ne.s32.totalorder %s41, %s57
      %p59 = scmp.eq.s32.totalorder %s19, 0
      %p60 = por %p58, %p59
      %s61 = ssub.s32 %s20, %s32
      %s62 = ssub.s32 %s21, %s28
      %s63 = sor.u32 %s61, %s62
      %p64 = scmp.eq.s32.totalorder %s63, 0
      %s66 = sadd.s32 %s65, 1
      %s67 = scalar_select %p64, %s65, %s66
      %p70 = pneg %p64
      %p71 = scmp.eq.s32.totalorder %s13, 3
      %p72 = por %p70, %p71
      %p73 = scmp.ne.s32.totalorder %s65, %s68
      %p74 = scmp.eq.s32.totalorder %s13, 0
      %p75 = por %p73, %p74
      %p76 = scmp.ne.s32.totalorder %s65, %s68
      %p77 = scmp.eq.s32.totalorder %s18, 3
      %p78 = por %p76, %p77
      %p79 = scmp.ne.s32.totalorder %s68, %s69
      %p80 = scmp.eq.s32.totalorder %s18, 0
      %p81 = por %p79, %p80
      %p82 = scmp.ne.s32.totalorder %s68, %s69
      %p83 = scmp.eq.s32.totalorder %s19, 3
      %p84 = por %p82, %p83
      %p86 = scmp.ne.s32.totalorder %s69, %s85
      %p87 = scmp.eq.s32.totalorder %s19, 0
      %p88 = por %p86, %p87
      %p89 = scmp.le.s32.totalorder 1, %s13
      %p90 = scmp.lt.s32.totalorder %s13, 5
      %p91 = pnand %p89, %p90
      %p92 = pneg %p91
      // Predicated region
      $region9: #{tpu_custom_call.1} parent=5 // pred_check
        _
      $region10: #{tpu_custom_call.1} parent=5 // pred_check_branch
        %94 = sbr.rel (%p91) target = $region12
      $region11: #{tpu_custom_call.1} parent=5 // pred_region
        %s95 = ssub.s32 %s13, 1
      $region12: #{tpu_custom_call.1} parent=5 // pred_fallthru
        _
      %p96 = scmp.lt.s32.totalorder %s13, 4
      // Predicated region
      $region13: #{tpu_custom_call.1} parent=5 // pred_check
        %p97 = pneg %p96
      $region14: #{tpu_custom_call.1} parent=5 // pred_check_branch
        %99 = sbr.rel (%p97) target = $region16
      $region15: #{tpu_custom_call.1} parent=5 // pred_region
        // Predicated region
        $region17: #{tpu_custom_call.1} parent=15 // pred_check
          %p100 = pneg %p47
        $region18: #{tpu_custom_call.1} parent=15 // pred_check_branch
          %102 = sbr.rel (%p100) target = $region20
        $region19: #{tpu_custom_call.1} parent=15 // pred_region
          %s103 = sand.u32 %s37, 1
          %s104 = scalar_lea.sflag [#allocation3], %s103
          %s105 = sand.u32 %s37, 1
          %s106 = smul.addr %s105, 128
          %s107 = scalar_lea.vmem [#allocation2], %s106
          %s108 = smul.u32 4, %s20
          %s109 = smul.u32 4, %s21
          %s111 = ssub.s32 2048, 2048
          %112 = vsyncadd %s104, %s111
          %s113 = smul.addr %s108, 8
          %s114 = sadd.s32 %s109, %s113
          %s115 = smul.addr %s114, 128
          %s116 = scalar_lea.hbm %s0, %s115
          %s117 = sshll.u32 %s107, 4
          %s118 = int_to_ptr.vmem [resolvable:$true] %s117
          %123 = dma.hbm_to_vmem [thread:$0]  %s116, 2048, %s118, %s104, 1024, 512, 32
        $region20: #{tpu_custom_call.1} parent=15 // pred_fallthru
          _
      $region16: #{tpu_custom_call.1} parent=5 // pred_fallthru
        _
      %p124 = scmp.le.s32.totalorder 1, %s13
      %p125 = scmp.lt.s32.totalorder %s13, 5
      %p126 = pnand %p124, %p125
      %p127 = pneg %p126
      // Predicated region
      $region21: #{tpu_custom_call.1} parent=5 // pred_check
        _
      $region22: #{tpu_custom_call.1} parent=5 // pred_check_branch
        %129 = sbr.rel (%p126) target = $region24
      $region23: #{tpu_custom_call.1} parent=5 // pred_region
        %s130 = ssub.s32 %s13, 1
        %s131 = sand.u32 %s40, 1
        %s132 = scalar_lea.sflag [#allocation3], %s131
        %s133 = sand.u32 %s40, 1
        %s134 = smul.addr %s133, 128
        %s135 = scalar_lea.vmem [#allocation2], %s134
        // Predicated region
        $region25: #{tpu_custom_call.1} parent=23 // pred_check
          %p136 = pneg %p53
        $region26: #{tpu_custom_call.1} parent=23 // pred_check_branch
          %138 = sbr.rel (%p136) target = $region28
        $region27: #{tpu_custom_call.1} parent=23 // pred_region
          %139 = dma.done %s132, 2048
        $region28: #{tpu_custom_call.1} parent=23 // pred_fallthru
          _
        %s140 = sand.u32 %s40, 1
        %s141 = scalar_lea.sflag [#allocation3], %s140
        %s142 = sand.u32 %s40, 1
        %s143 = smul.addr %s142, 128
        %s144 = scalar_lea.vmem [#allocation2], %s143
        %p145 = pneg %p53
        %p146 = pneg %p50
        %p147 = pneg %p81
        %p148 = pneg %p78
        %s149 = sand.u32 %s68, 1
        %s150 = scalar_lea.sflag [#allocation4], %s149
        %s151 = sand.u32 %s68, 1
        %s152 = smul.addr %s151, 128
        %s153 = scalar_lea.vmem [#allocation5], %s152
        %s154 = smul.u32 4, %s22
        %s155 = smul.u32 4, %s23
        %s156 = smul.u32 16, %s23
        %v157 = vld [vmem:[%s135] sm:$0xff]
        %v158 = vld [vmem:[%s135 + $0x8] sm:$0xff]
        %v159 = vld [vmem:[%s135 + $0x10] sm:$0xff]
        %v160 = vld [vmem:[%s135 + $0x18] sm:$0xff]
        %v161 = vld [vmem:[%s135 + $0x20] sm:$0xff]
        %v162 = vld [vmem:[%s135 + $0x28] sm:$0xff]
        %v163 = vld [vmem:[%s135 + $0x30] sm:$0xff]
        %v164 = vld [vmem:[%s135 + $0x38] sm:$0xff]
        %v165 = vld [vmem:[%s135 + $0x40] sm:$0xff]
        %v166 = vld [vmem:[%s135 + $0x48] sm:$0xff]
        %v167 = vld [vmem:[%s135 + $0x50] sm:$0xff]
        %v168 = vld [vmem:[%s135 + $0x58] sm:$0xff]
        %v169 = vld [vmem:[%s135 + $0x60] sm:$0xff]
        %v170 = vld [vmem:[%s135 + $0x68] sm:$0xff]
        %v171 = vld [vmem:[%s135 + $0x70] sm:$0xff]
        %v172 = vld [vmem:[%s135 + $0x78] sm:$0xff]
        %v189 = vcombine.low %v157, %v158
        %v190 = vcombine.high %v157, %v158
        %v191 = vcombine.low %v159, %v160
        %v192 = vcombine.high %v159, %v160
        %v193 = vcombine.low %v161, %v162
        %v194 = vcombine.high %v161, %v162
        %v195 = vcombine.low %v163, %v164
        %v196 = vcombine.high %v163, %v164
        %v197 = vcombine.low %v165, %v166
        %v198 = vcombine.high %v165, %v166
        %v199 = vcombine.low %v167, %v168
        %v200 = vcombine.high %v167, %v168
        %v201 = vcombine.low %v169, %v170
        %v202 = vcombine.high %v169, %v170
        %v203 = vcombine.low %v171, %v172
        %v204 = vcombine.high %v171, %v172
        %v221 = vcombine.high %v189, %v189
        %v222 = vcombine.high %v191, %v191
        %v223 = vcombine.high %v190, %v190
        %v224 = vcombine.high %v192, %v192
        %v225 = vcombine.high %v193, %v193
        %v226 = vcombine.high %v195, %v195
        %v227 = vcombine.high %v194, %v194
        %v228 = vcombine.high %v196, %v196
        %v229 = vcombine.high %v197, %v197
        %v230 = vcombine.high %v199, %v199
        %v231 = vcombine.high %v198, %v198
        %v232 = vcombine.high %v200, %v200
        %v233 = vcombine.high %v201, %v201
        %v234 = vcombine.high %v203, %v203
        %v235 = vcombine.high %v202, %v202
        %v236 = vcombine.high %v204, %v204
        %253 = vxpose.xlu0.b32.start [1/16] %v189, 128
        %254 = vxpose.xlu0.b32.cont [2/16] 0.0, 128
        %255 = vxpose.xlu0.b32.cont [3/16] 0.0, 128
        %256 = vxpose.xlu0.b32.cont [4/16] 0.0, 128
        %257 = vxpose.xlu0.b32.cont [5/16] 0.0, 128
        %258 = vxpose.xlu0.b32.cont [6/16] 0.0, 128
        %259 = vxpose.xlu0.b32.cont [7/16] 0.0, 128
        %260 = vxpose.xlu0.b32.cont [8/16] 0.0, 128
        %261 = vxpose.xlu0.b32.cont [9/16] 0.0, 128
        %262 = vxpose.xlu0.b32.cont [10/16] 0.0, 128
        %263 = vxpose.xlu0.b32.cont [11/16] 0.0, 128
        %264 = vxpose.xlu0.b32.cont [12/16] 0.0, 128
        %265 = vxpose.xlu0.b32.cont [13/16] 0.0, 128
        %266 = vxpose.xlu0.b32.cont [14/16] 0.0, 128
        %267 = vxpose.xlu0.b32.cont [15/16] 0.0, 128
        %268 = vxpose.xlu0.b32.end [16/16] 0.0, 128
        %v269 = vpop.trf.xlu0
        %v270 = vpop.trf.xlu0
        %v271 = vpop.trf.xlu0
        %v272 = vpop.trf.xlu0
        %v273 = vpop.trf.xlu0
        %v274 = vpop.trf.xlu0
        %v275 = vpop.trf.xlu0
        %v276 = vpop.trf.xlu0
        %v277 = vpop.trf.xlu0
        %v278 = vpop.trf.xlu0
        %v279 = vpop.trf.xlu0
        %v280 = vpop.trf.xlu0
        %v281 = vpop.trf.xlu0
        %v282 = vpop.trf.xlu0
        %v283 = vpop.trf.xlu0
        %v284 = vpop.trf.xlu0
        %285 = vxpose.xlu0.b32.start [1/16] %v221, 128
        %286 = vxpose.xlu0.b32.cont [2/16] 0.0, 128
        %287 = vxpose.xlu0.b32.cont [3/16] 0.0, 128
        %288 = vxpose.xlu0.b32.cont [4/16] 0.0, 128
        %289 = vxpose.xlu0.b32.cont [5/16] 0.0, 128
        %290 = vxpose.xlu0.b32.cont [6/16] 0.0, 128
        %291 = vxpose.xlu0.b32.cont [7/16] 0.0, 128
        %292 = vxpose.xlu0.b32.cont [8/16] 0.0, 128
        %293 = vxpose.xlu0.b32.cont [9/16] 0.0, 128
        %294 = vxpose.xlu0.b32.cont [10/16] 0.0, 128
        %295 = vxpose.xlu0.b32.cont [11/16] 0.0, 128
        %296 = vxpose.xlu0.b32.cont [12/16] 0.0, 128
        %297 = vxpose.xlu0.b32.cont [13/16] 0.0, 128
        %298 = vxpose.xlu0.b32.cont [14/16] 0.0, 128
        %299 = vxpose.xlu0.b32.cont [15/16] 0.0, 128
        %300 = vxpose.xlu0.b32.end [16/16] 0.0, 128
        %v301 = vpop.trf.xlu0
        %v302 = vpop.trf.xlu0
        %v303 = vpop.trf.xlu0
        %v304 = vpop.trf.xlu0
        %v305 = vpop.trf.xlu0
        %v306 = vpop.trf.xlu0
        %v307 = vpop.trf.xlu0
        %v308 = vpop.trf.xlu0
        %v309 = vpop.trf.xlu0
        %v310 = vpop.trf.xlu0
        %v311 = vpop.trf.xlu0
        %v312 = vpop.trf.xlu0
        %v313 = vpop.trf.xlu0
        %v314 = vpop.trf.xlu0
        %v315 = vpop.trf.xlu0
        %v316 = vpop.trf.xlu0
        %317 = vxpose.xlu0.b32.start [1/16] %v191, 128
        %318 = vxpose.xlu0.b32.cont [2/16] 0.0, 128
        %319 = vxpose.xlu0.b32.cont [3/16] 0.0, 128
        %320 = vxpose.xlu0.b32.cont [4/16] 0.0, 128
        %321 = vxpose.xlu0.b32.cont [5/16] 0.0, 128
        %322 = vxpose.xlu0.b32.cont [6/16] 0.0, 128
        %323 = vxpose.xlu0.b32.cont [7/16] 0.0, 128
        %324 = vxpose.xlu0.b32.cont [8/16] 0.0, 128
        %325 = vxpose.xlu0.b32.cont [9/16] 0.0, 128
        %326 = vxpose.xlu0.b32.cont [10/16] 0.0, 128
        %327 = vxpose.xlu0.b32.cont [11/16] 0.0, 128
        %328 = vxpose.xlu0.b32.cont [12/16] 0.0, 128
        %329 = vxpose.xlu0.b32.cont [13/16] 0.0, 128
        %330 = vxpose.xlu0.b32.cont [14/16] 0.0, 128
        %331 = vxpose.xlu0.b32.cont [15/16] 0.0, 128
        %332 = vxpose.xlu0.b32.end [16/16] 0.0, 128
        %v333 = vpop.trf.xlu0
        %v334 = vpop.trf.xlu0
        %v335 = vpop.trf.xlu0
        %v336 = vpop.trf.xlu0
        %v337 = vpop.trf.xlu0
        %v338 = vpop.trf.xlu0
        %v339 = vpop.trf.xlu0
        %v340 = vpop.trf.xlu0
        %v341 = vpop.trf.xlu0
        %v342 = vpop.trf.xlu0
        %v343 = vpop.trf.xlu0
        %v344 = vpop.trf.xlu0
        %v345 = vpop.trf.xlu0
        %v346 = vpop.trf.xlu0
        %v347 = vpop.trf.xlu0
        %v348 = vpop.trf.xlu0
        %349 = vxpose.xlu0.b32.start [1/16] %v222, 128
        %350 = vxpose.xlu0.b32.cont [2/16] 0.0, 128
        %351 = vxpose.xlu0.b32.cont [3/16] 0.0, 128
        %352 = vxpose.xlu0.b32.cont [4/16] 0.0, 128
        %353 = vxpose.xlu0.b32.cont [5/16] 0.0, 128
        %354 = vxpose.xlu0.b32.cont [6/16] 0.0, 128
        %355 = vxpose.xlu0.b32.cont [7/16] 0.0, 128
        %356 = vxpose.xlu0.b32.cont [8/16] 0.0, 128
        %357 = vxpose.xlu0.b32.cont [9/16] 0.0, 128
        %358 = vxpose.xlu0.b32.cont [10/16] 0.0, 128
        %359 = vxpose.xlu0.b32.cont [11/16] 0.0, 128
        %360 = vxpose.xlu0.b32.cont [12/16] 0.0, 128
        %361 = vxpose.xlu0.b32.cont [13/16] 0.0, 128
        %362 = vxpose.xlu0.b32.cont [14/16] 0.0, 128
        %363 = vxpose.xlu0.b32.cont [15/16] 0.0, 128
        %364 = vxpose.xlu0.b32.end [16/16] 0.0, 128
        %v365 = vpop.trf.xlu0
        %v366 = vpop.trf.xlu0
        %v367 = vpop.trf.xlu0
        %v368 = vpop.trf.xlu0
        %v369 = vpop.trf.xlu0
        %v370 = vpop.trf.xlu0
        %v371 = vpop.trf.xlu0
        %v372 = vpop.trf.xlu0
        %v373 = vpop.trf.xlu0
        %v374 = vpop.trf.xlu0
        %v375 = vpop.trf.xlu0
        %v376 = vpop.trf.xlu0
        %v377 = vpop.trf.xlu0
        %v378 = vpop.trf.xlu0
        %v379 = vpop.trf.xlu0
        %v380 = vpop.trf.xlu0
        %381 = vxpose.xlu0.b32.start [1/16] %v190, 128
        %382 = vxpose.xlu0.b32.cont [2/16] 0.0, 128
        %383 = vxpose.xlu0.b32.cont [3/16] 0.0, 128
        %384 = vxpose.xlu0.b32.cont [4/16] 0.0, 128
        %385 = vxpose.xlu0.b32.cont [5/16] 0.0, 128
        %386 = vxpose.xlu0.b32.cont [6/16] 0.0, 128
        %387 = vxpose.xlu0.b32.cont [7/16] 0.0, 128
        %388 = vxpose.xlu0.b32.cont [8/16] 0.0, 128
        %389 = vxpose.xlu0.b32.cont [9/16] 0.0, 128
        %390 = vxpose.xlu0.b32.cont [10/16] 0.0, 128
        %391 = vxpose.xlu0.b32.cont [11/16] 0.0, 128
        %392 = vxpose.xlu0.b32.cont [12/16] 0.0, 128
        %393 = vxpose.xlu0.b32.cont [13/16] 0.0, 128
        %394 = vxpose.xlu0.b32.cont [14/16] 0.0, 128
        %395 = vxpose.xlu0.b32.cont [15/16] 0.0, 128
        %396 = vxpose.xlu0.b32.end [16/16] 0.0, 128
        %v397 = vpop.trf.xlu0
        %v398 = vpop.trf.xlu0
        %v399 = vpop.trf.xlu0
        %v400 = vpop.trf.xlu0
        %v401 = vpop.trf.xlu0
        %v402 = vpop.trf.xlu0
        %v403 = vpop.trf.xlu0
        %v404 = vpop.trf.xlu0
        %v405 = vpop.trf.xlu0
        %v406 = vpop.trf.xlu0
        %v407 = vpop.trf.xlu0
        %v408 = vpop.trf.xlu0
        %v409 = vpop.trf.xlu0
        %v410 = vpop.trf.xlu0
        %v411 = vpop.trf.xlu0
        %v412 = vpop.trf.xlu0
        %413 = vxpose.xlu0.b32.start [1/16] %v223, 128
        %414 = vxpose.xlu0.b32.cont [2/16] 0.0, 128
        %415 = vxpose.xlu0.b32.cont [3/16] 0.0, 128
        %416 = vxpose.xlu0.b32.cont [4/16] 0.0, 128
        %417 = vxpose.xlu0.b32.cont [5/16] 0.0, 128
        %418 = vxpose.xlu0.b32.cont [6/16] 0.0, 128
        %419 = vxpose.xlu0.b32.cont [7/16] 0.0, 128
        %420 = vxpose.xlu0.b32.cont [8/16] 0.0, 128
        %421 = vxpose.xlu0.b32.cont [9/16] 0.0, 128
        %422 = vxpose.xlu0.b32.cont [10/16] 0.0, 128
        %423 = vxpose.xlu0.b32.cont [11/16] 0.0, 128
        %424 = vxpose.xlu0.b32.cont [12/16] 0.0, 128
        %425 = vxpose.xlu0.b32.cont [13/16] 0.0, 128
        %426 = vxpose.xlu0.b32.cont [14/16] 0.0, 128
        %427 = vxpose.xlu0.b32.cont [15/16] 0.0, 128
        %428 = vxpose.xlu0.b32.end [16/16] 0.0, 128
        %v429 = vpop.trf.xlu0
        %v430 = vpop.trf.xlu0
        %v431 = vpop.trf.xlu0
        %v432 = vpop.trf.xlu0
        %v433 = vpop.trf.xlu0
        %v434 = vpop.trf.xlu0
        %v435 = vpop.trf.xlu0
        %v436 = vpop.trf.xlu0
        %v437 = vpop.trf.xlu0
        %v438 = vpop.trf.xlu0
        %v439 = vpop.trf.xlu0
        %v440 = vpop.trf.xlu0
        %v441 = vpop.trf.xlu0
        %v442 = vpop.trf.xlu0
        %v443 = vpop.trf.xlu0
        %v444 = vpop.trf.xlu0
        %445 = vxpose.xlu0.b32.start [1/16] %v192, 128
        %446 = vxpose.xlu0.b32.cont [2/16] 0.0, 128
        %447 = vxpose.xlu0.b32.cont [3/16] 0.0, 128
        %448 = vxpose.xlu0.b32.cont [4/16] 0.0, 128
        %449 = vxpose.xlu0.b32.cont [5/16] 0.0, 128
        %450 = vxpose.xlu0.b32.cont [6/16] 0.0, 128
        %451 = vxpose.xlu0.b32.cont [7/16] 0.0, 128
        %452 = vxpose.xlu0.b32.cont [8/16] 0.0, 128
        %453 = vxpose.xlu0.b32.cont [9/16] 0.0, 128
        %454 = vxpose.xlu0.b32.cont [10/16] 0.0, 128
        %455 = vxpose.xlu0.b32.cont [11/16] 0.0, 128
        %456 = vxpose.xlu0.b32.cont [12/16] 0.0, 128
        %457 = vxpose.xlu0.b32.cont [13/16] 0.0, 128
        %458 = vxpose.xlu0.b32.cont [14/16] 0.0, 128
        %459 = vxpose.xlu0.b32.cont [15/16] 0.0, 128
        %460 = vxpose.xlu0.b32.end [16/16] 0.0, 128
        %v461 = vpop.trf.xlu0
        %v462 = vpop.trf.xlu0
        %v463 = vpop.trf.xlu0
        %v464 = vpop.trf.xlu0
        %v465 = vpop.trf.xlu0
        %v466 = vpop.trf.xlu0
        %v467 = vpop.trf.xlu0
        %v468 = vpop.trf.xlu0
        %v469 = vpop.trf.xlu0
        %v470 = vpop.trf.xlu0
        %v471 = vpop.trf.xlu0
        %v472 = vpop.trf.xlu0
        %v473 = vpop.trf.xlu0
        %v474 = vpop.trf.xlu0
        %v475 = vpop.trf.xlu0
        %v476 = vpop.trf.xlu0
        %477 = vxpose.xlu0.b32.start [1/16] %v224, 128
        %478 = vxpose.xlu0.b32.cont [2/16] 0.0, 128
        %479 = vxpose.xlu0.b32.cont [3/16] 0.0, 128
        %480 = vxpose.xlu0.b32.cont [4/16] 0.0, 128
        %481 = vxpose.xlu0.b32.cont [5/16] 0.0, 128
        %482 = vxpose.xlu0.b32.cont [6/16] 0.0, 128
        %483 = vxpose.xlu0.b32.cont [7/16] 0.0, 128
        %484 = vxpose.xlu0.b32.cont [8/16] 0.0, 128
        %485 = vxpose.xlu0.b32.cont [9/16] 0.0, 128
        %486 = vxpose.xlu0.b32.cont [10/16] 0.0, 128
        %487 = vxpose.xlu0.b32.cont [11/16] 0.0, 128
        %488 = vxpose.xlu0.b32.cont [12/16] 0.0, 128
        %489 = vxpose.xlu0.b32.cont [13/16] 0.0, 128
        %490 = vxpose.xlu0.b32.cont [14/16] 0.0, 128
        %491 = vxpose.xlu0.b32.cont [15/16] 0.0, 128
        %492 = vxpose.xlu0.b32.end [16/16] 0.0, 128
        %v493 = vpop.trf.xlu0
        %v494 = vpop.trf.xlu0
        %v495 = vpop.trf.xlu0
        %v496 = vpop.trf.xlu0
        %v497 = vpop.trf.xlu0
        %v498 = vpop.trf.xlu0
        %v499 = vpop.trf.xlu0
        %v500 = vpop.trf.xlu0
        %v501 = vpop.trf.xlu0
        %v502 = vpop.trf.xlu0
        %v503 = vpop.trf.xlu0
        %v504 = vpop.trf.xlu0
        %v505 = vpop.trf.xlu0
        %v506 = vpop.trf.xlu0
        %v507 = vpop.trf.xlu0
        %v508 = vpop.trf.xlu0
        %509 = vxpose.xlu0.b32.start [1/16] %v193, 128
        %510 = vxpose.xlu0.b32.cont [2/16] 0.0, 128
        %511 = vxpose.xlu0.b32.cont [3/16] 0.0, 128
        %512 = vxpose.xlu0.b32.cont [4/16] 0.0, 128
        %513 = vxpose.xlu0.b32.cont [5/16] 0.0, 128
        %514 = vxpose.xlu0.b32.cont [6/16] 0.0, 128
        %515 = vxpose.xlu0.b32.cont [7/16] 0.0, 128
        %516 = vxpose.xlu0.b32.cont [8/16] 0.0, 128
        %517 = vxpose.xlu0.b32.cont [9/16] 0.0, 128
        %518 = vxpose.xlu0.b32.cont [10/16] 0.0, 128
        %519 = vxpose.xlu0.b32.cont [11/16] 0.0, 128
        %520 = vxpose.xlu0.b32.cont [12/16] 0.0, 128
        %521 = vxpose.xlu0.b32.cont [13/16] 0.0, 128
        %522 = vxpose.xlu0.b32.cont [14/16] 0.0, 128
        %523 = vxpose.xlu0.b32.cont [15/16] 0.0, 128
        %524 = vxpose.xlu0.b32.end [16/16] 0.0, 128
        %v525 = vpop.trf.xlu0
        %v526 = vpop.trf.xlu0
        %v527 = vpop.trf.xlu0
        %v528 = vpop.trf.xlu0
        %v529 = vpop.trf.xlu0
        %v530 = vpop.trf.xlu0
        %v531 = vpop.trf.xlu0
        %v532 = vpop.trf.xlu0
        %v533 = vpop.trf.xlu0
        %v534 = vpop.trf.xlu0
        %v535 = vpop.trf.xlu0
        %v536 = vpop.trf.xlu0
        %v537 = vpop.trf.xlu0
        %v538 = vpop.trf.xlu0
        %v539 = vpop.trf.xlu0
        %v540 = vpop.trf.xlu0
        %541 = vxpose.xlu0.b32.start [1/16] %v225, 128
        %542 = vxpose.xlu0.b32.cont [2/16] 0.0, 128
        %543 = vxpose.xlu0.b32.cont [3/16] 0.0, 128
        %544 = vxpose.xlu0.b32.cont [4/16] 0.0, 128
        %545 = vxpose.xlu0.b32.cont [5/16] 0.0, 128
        %546 = vxpose.xlu0.b32.cont [6/16] 0.0, 128
        %547 = vxpose.xlu0.b32.cont [7/16] 0.0, 128
        %548 = vxpose.xlu0.b32.cont [8/16] 0.0, 128
        %549 = vxpose.xlu0.b32.cont [9/16] 0.0, 128
        %550 = vxpose.xlu0.b32.cont [10/16] 0.0, 128
        %551 = vxpose.xlu0.b32.cont [11/16] 0.0, 128
        %552 = vxpose.xlu0.b32.cont [12/16] 0.0, 128
        %553 = vxpose.xlu0.b32.cont [13/16] 0.0, 128
        %554 = vxpose.xlu0.b32.cont [14/16] 0.0, 128
        %555 = vxpose.xlu0.b32.cont [15/16] 0.0, 128
        %556 = vxpose.xlu0.b32.end [16/16] 0.0, 128
        %v557 = vpop.trf.xlu0
        %v558 = vpop.trf.xlu0
        %v559 = vpop.trf.xlu0
        %v560 = vpop.trf.xlu0
        %v561 = vpop.trf.xlu0
        %v562 = vpop.trf.xlu0
        %v563 = vpop.trf.xlu0
        %v564 = vpop.trf.xlu0
        %v565 = vpop.trf.xlu0
        %v566 = vpop.trf.xlu0
        %v567 = vpop.trf.xlu0
        %v568 = vpop.trf.xlu0
        %v569 = vpop.trf.xlu0
        %v570 = vpop.trf.xlu0
        %v571 = vpop.trf.xlu0
        %v572 = vpop.trf.xlu0
        %573 = vxpose.xlu0.b32.start [1/16] %v195, 128
        %574 = vxpose.xlu0.b32.cont [2/16] 0.0, 128
        %575 = vxpose.xlu0.b32.cont [3/16] 0.0, 128
        %576 = vxpose.xlu0.b32.cont [4/16] 0.0, 128
        %577 = vxpose.xlu0.b32.cont [5/16] 0.0, 128
        %578 = vxpose.xlu0.b32.cont [6/16] 0.0, 128
        %579 = vxpose.xlu0.b32.cont [7/16] 0.0, 128
        %580 = vxpose.xlu0.b32.cont [8/16] 0.0, 128
        %581 = vxpose.xlu0.b32.cont [9/16] 0.0, 128
        %582 = vxpose.xlu0.b32.cont [10/16] 0.0, 128
        %583 = vxpose.xlu0.b32.cont [11/16] 0.0, 128
        %584 = vxpose.xlu0.b32.cont [12/16] 0.0, 128
        %585 = vxpose.xlu0.b32.cont [13/16] 0.0, 128
        %586 = vxpose.xlu0.b32.cont [14/16] 0.0, 128
        %587 = vxpose.xlu0.b32.cont [15/16] 0.0, 128
        %588 = vxpose.xlu0.b32.end [16/16] 0.0, 128
        %v589 = vpop.trf.xlu0
        %v590 = vpop.trf.xlu0
        %v591 = vpop.trf.xlu0
        %v592 = vpop.trf.xlu0
        %v593 = vpop.trf.xlu0
        %v594 = vpop.trf.xlu0
        %v595 = vpop.trf.xlu0
        %v596 = vpop.trf.xlu0
        %v597 = vpop.trf.xlu0
        %v598 = vpop.trf.xlu0
        %v599 = vpop.trf.xlu0
        %v600 = vpop.trf.xlu0
        %v601 = vpop.trf.xlu0
        %v602 = vpop.trf.xlu0
        %v603 = vpop.trf.xlu0
        %v604 = vpop.trf.xlu0
        %605 = vxpose.xlu0.b32.start [1/16] %v226, 128
        %606 = vxpose.xlu0.b32.cont [2/16] 0.0, 128
        %607 = vxpose.xlu0.b32.cont [3/16] 0.0, 128
        %608 = vxpose.xlu0.b32.cont [4/16] 0.0, 128
        %609 = vxpose.xlu0.b32.cont [5/16] 0.0, 128
        %610 = vxpose.xlu0.b32.cont [6/16] 0.0, 128
        %611 = vxpose.xlu0.b32.cont [7/16] 0.0, 128
        %612 = vxpose.xlu0.b32.cont [8/16] 0.0, 128
        %613 = vxpose.xlu0.b32.cont [9/16] 0.0, 128
        %614 = vxpose.xlu0.b32.cont [10/16] 0.0, 128
        %615 = vxpose.xlu0.b32.cont [11/16] 0.0, 128
        %616 = vxpose.xlu0.b32.cont [12/16] 0.0, 128
        %617 = vxpose.xlu0.b32.cont [13/16] 0.0, 128
        %618 = vxpose.xlu0.b32.cont [14/16] 0.0, 128
        %619 = vxpose.xlu0.b32.cont [15/16] 0.0, 128
        %620 = vxpose.xlu0.b32.end [16/16] 0.0, 128
        %v621 = vpop.trf.xlu0
        %v622 = vpop.trf.xlu0
        %v623 = vpop.trf.xlu0
        %v624 = vpop.trf.xlu0
        %v625 = vpop.trf.xlu0
        %v626 = vpop.trf.xlu0
        %v627 = vpop.trf.xlu0
        %v628 = vpop.trf.xlu0
        %v629 = vpop.trf.xlu0
        %v630 = vpop.trf.xlu0
        %v631 = vpop.trf.xlu0
        %v632 = vpop.trf.xlu0
        %v633 = vpop.trf.xlu0
        %v634 = vpop.trf.xlu0
        %v635 = vpop.trf.xlu0
        %v636 = vpop.trf.xlu0
        %637 = vxpose.xlu0.b32.start [1/16] %v194, 128
        %638 = vxpose.xlu0.b32.cont [2/16] 0.0, 128
        %639 = vxpose.xlu0.b32.cont [3/16] 0.0, 128
        %640 = vxpose.xlu0.b32.cont [4/16] 0.0, 128
        %641 = vxpose.xlu0.b32.cont [5/16] 0.0, 128
        %642 = vxpose.xlu0.b32.cont [6/16] 0.0, 128
        %643 = vxpose.xlu0.b32.cont [7/16] 0.0, 128
        %644 = vxpose.xlu0.b32.cont [8/16] 0.0, 128
        %645 = vxpose.xlu0.b32.cont [9/16] 0.0, 128
        %646 = vxpose.xlu0.b32.cont [10/16] 0.0, 128
        %647 = vxpose.xlu0.b32.cont [11/16] 0.0, 128
        %648 = vxpose.xlu0.b32.cont [12/16] 0.0, 128
        %649 = vxpose.xlu0.b32.cont [13/16] 0.0, 128
        %650 = vxpose.xlu0.b32.cont [14/16] 0.0, 128
        %651 = vxpose.xlu0.b32.cont [15/16] 0.0, 128
        %652 = vxpose.xlu0.b32.end [16/16] 0.0, 128
        %v653 = vpop.trf.xlu0
        %v654 = vpop.trf.xlu0
        %v655 = vpop.trf.xlu0
        %v656 = vpop.trf.xlu0
        %v657 = vpop.trf.xlu0
        %v658 = vpop.trf.xlu0
        %v659 = vpop.trf.xlu0
        %v660 = vpop.trf.xlu0
        %v661 = vpop.trf.xlu0
        %v662 = vpop.trf.xlu0
        %v663 = vpop.trf.xlu0
        %v664 = vpop.trf.xlu0
        %v665 = vpop.trf.xlu0
        %v666 = vpop.trf.xlu0
        %v667 = vpop.trf.xlu0
        %v668 = vpop.trf.xlu0
        %669 = vxpose.xlu0.b32.start [1/16] %v227, 128
        %670 = vxpose.xlu0.b32.cont [2/16] 0.0, 128
        %671 = vxpose.xlu0.b32.cont [3/16] 0.0, 128
        %672 = vxpose.xlu0.b32.cont [4/16] 0.0, 128
        %673 = vxpose.xlu0.b32.cont [5/16] 0.0, 128
        %674 = vxpose.xlu0.b32.cont [6/16] 0.0, 128
        %675 = vxpose.xlu0.b32.cont [7/16] 0.0, 128
        %676 = vxpose.xlu0.b32.cont [8/16] 0.0, 128
        %677 = vxpose.xlu0.b32.cont [9/16] 0.0, 128
        %678 = vxpose.xlu0.b32.cont [10/16] 0.0, 128
        %679 = vxpose.xlu0.b32.cont [11/16] 0.0, 128
        %680 = vxpose.xlu0.b32.cont [12/16] 0.0, 128
        %681 = vxpose.xlu0.b32.cont [13/16] 0.0, 128
        %682 = vxpose.xlu0.b32.cont [14/16] 0.0, 128
        %683 = vxpose.xlu0.b32.cont [15/16] 0.0, 128
        %684 = vxpose.xlu0.b32.end [16/16] 0.0, 128
        %v685 = vpop.trf.xlu0
        %v686 = vpop.trf.xlu0
        %v687 = vpop.trf.xlu0
        %v688 = vpop.trf.xlu0
        %v689 = vpop.trf.xlu0
        %v690 = vpop.trf.xlu0
        %v691 = vpop.trf.xlu0
        %v692 = vpop.trf.xlu0
        %v693 = vpop.trf.xlu0
        %v694 = vpop.trf.xlu0
        %v695 = vpop.trf.xlu0
        %v696 = vpop.trf.xlu0
        %v697 = vpop.trf.xlu0
        %v698 = vpop.trf.xlu0
        %v699 = vpop.trf.xlu0
        %v700 = vpop.trf.xlu0
        %701 = vxpose.xlu0.b32.start [1/16] %v196, 128
        %702 = vxpose.xlu0.b32.cont [2/16] 0.0, 128
        %703 = vxpose.xlu0.b32.cont [3/16] 0.0, 128
        %704 = vxpose.xlu0.b32.cont [4/16] 0.0, 128
        %705 = vxpose.xlu0.b32.cont [5/16] 0.0, 128
        %706 = vxpose.xlu0.b32.cont [6/16] 0.0, 128
        %707 = vxpose.xlu0.b32.cont [7/16] 0.0, 128
        %708 = vxpose.xlu0.b32.cont [8/16] 0.0, 128
        %709 = vxpose.xlu0.b32.cont [9/16] 0.0, 128
        %710 = vxpose.xlu0.b32.cont [10/16] 0.0, 128
        %711 = vxpose.xlu0.b32.cont [11/16] 0.0, 128
        %712 = vxpose.xlu0.b32.cont [12/16] 0.0, 128
        %713 = vxpose.xlu0.b32.cont [13/16] 0.0, 128
        %714 = vxpose.xlu0.b32.cont [14/16] 0.0, 128
        %715 = vxpose.xlu0.b32.cont [15/16] 0.0, 128
        %716 = vxpose.xlu0.b32.end [16/16] 0.0, 128
        %v717 = vpop.trf.xlu0
        %v718 = vpop.trf.xlu0
        %v719 = vpop.trf.xlu0
        %v720 = vpop.trf.xlu0
        %v721 = vpop.trf.xlu0
        %v722 = vpop.trf.xlu0
        %v723 = vpop.trf.xlu0
        %v724 = vpop.trf.xlu0
        %v725 = vpop.trf.xlu0
        %v726 = vpop.trf.xlu0
        %v727 = vpop.trf.xlu0
        %v728 = vpop.trf.xlu0
        %v729 = vpop.trf.xlu0
        %v730 = vpop.trf.xlu0
        %v731 = vpop.trf.xlu0
        %v732 = vpop.trf.xlu0
        %733 = vxpose.xlu0.b32.start [1/16] %v228, 128
        %734 = vxpose.xlu0.b32.cont [2/16] 0.0, 128
        %735 = vxpose.xlu0.b32.cont [3/16] 0.0, 128
        %736 = vxpose.xlu0.b32.cont [4/16] 0.0, 128
        %737 = vxpose.xlu0.b32.cont [5/16] 0.0, 128
        %738 = vxpose.xlu0.b32.cont [6/16] 0.0, 128
        %739 = vxpose.xlu0.b32.cont [7/16] 0.0, 128
        %740 = vxpose.xlu0.b32.cont [8/16] 0.0, 128
        %741 = vxpose.xlu0.b32.cont [9/16] 0.0, 128
        %742 = vxpose.xlu0.b32.cont [10/16] 0.0, 128
        %743 = vxpose.xlu0.b32.cont [11/16] 0.0, 128
        %744 = vxpose.xlu0.b32.cont [12/16] 0.0, 128
        %745 = vxpose.xlu0.b32.cont [13/16] 0.0, 128
        %746 = vxpose.xlu0.b32.cont [14/16] 0.0, 128
        %747 = vxpose.xlu0.b32.cont [15/16] 0.0, 128
        %748 = vxpose.xlu0.b32.end [16/16] 0.0, 128
        %v749 = vpop.trf.xlu0
        %v750 = vpop.trf.xlu0
        %v751 = vpop.trf.xlu0
        %v752 = vpop.trf.xlu0
        %v753 = vpop.trf.xlu0
        %v754 = vpop.trf.xlu0
        %v755 = vpop.trf.xlu0
        %v756 = vpop.trf.xlu0
        %v757 = vpop.trf.xlu0
        %v758 = vpop.trf.xlu0
        %v759 = vpop.trf.xlu0
        %v760 = vpop.trf.xlu0
        %v761 = vpop.trf.xlu0
        %v762 = vpop.trf.xlu0
        %v763 = vpop.trf.xlu0
        %v764 = vpop.trf.xlu0
        %765 = vxpose.xlu0.b32.start [1/16] %v197, 128
        %766 = vxpose.xlu0.b32.cont [2/16] 0.0, 128
        %767 = vxpose.xlu0.b32.cont [3/16] 0.0, 128
        %768 = vxpose.xlu0.b32.cont [4/16] 0.0, 128
        %769 = vxpose.xlu0.b32.cont [5/16] 0.0, 128
        %770 = vxpose.xlu0.b32.cont [6/16] 0.0, 128
        %771 = vxpose.xlu0.b32.cont [7/16] 0.0, 128
        %772 = vxpose.xlu0.b32.cont [8/16] 0.0, 128
        %773 = vxpose.xlu0.b32.cont [9/16] 0.0, 128
        %774 = vxpose.xlu0.b32.cont [10/16] 0.0, 128
        %775 = vxpose.xlu0.b32.cont [11/16] 0.0, 128
        %776 = vxpose.xlu0.b32.cont [12/16] 0.0, 128
        %777 = vxpose.xlu0.b32.cont [13/16] 0.0, 128
        %778 = vxpose.xlu0.b32.cont [14/16] 0.0, 128
        %779 = vxpose.xlu0.b32.cont [15/16] 0.0, 128
        %780 = vxpose.xlu0.b32.end [16/16] 0.0, 128
        %v781 = vpop.trf.xlu0
        %v782 = vpop.trf.xlu0
        %v783 = vpop.trf.xlu0
        %v784 = vpop.trf.xlu0
        %v785 = vpop.trf.xlu0
        %v786 = vpop.trf.xlu0
        %v787 = vpop.trf.xlu0
        %v788 = vpop.trf.xlu0
        %v789 = vpop.trf.xlu0
        %v790 = vpop.trf.xlu0
        %v791 = vpop.trf.xlu0
        %v792 = vpop.trf.xlu0
        %v793 = vpop.trf.xlu0
        %v794 = vpop.trf.xlu0
        %v795 = vpop.trf.xlu0
        %v796 = vpop.trf.xlu0
        %797 = vxpose.xlu0.b32.start [1/16] %v229, 128
        %798 = vxpose.xlu0.b32.cont [2/16] 0.0, 128
        %799 = vxpose.xlu0.b32.cont [3/16] 0.0, 128
        %800 = vxpose.xlu0.b32.cont [4/16] 0.0, 128
        %801 = vxpose.xlu0.b32.cont [5/16] 0.0, 128
        %802 = vxpose.xlu0.b32.cont [6/16] 0.0, 128
        %803 = vxpose.xlu0.b32.cont [7/16] 0.0, 128
        %804 = vxpose.xlu0.b32.cont [8/16] 0.0, 128
        %805 = vxpose.xlu0.b32.cont [9/16] 0.0, 128
        %806 = vxpose.xlu0.b32.cont [10/16] 0.0, 128
        %807 = vxpose.xlu0.b32.cont [11/16] 0.0, 128
        %808 = vxpose.xlu0.b32.cont [12/16] 0.0, 128
        %809 = vxpose.xlu0.b32.cont [13/16] 0.0, 128
        %810 = vxpose.xlu0.b32.cont [14/16] 0.0, 128
        %811 = vxpose.xlu0.b32.cont [15/16] 0.0, 128
        %812 = vxpose.xlu0.b32.end [16/16] 0.0, 128
        %v813 = vpop.trf.xlu0
        %v814 = vpop.trf.xlu0
        %v815 = vpop.trf.xlu0
        %v816 = vpop.trf.xlu0
        %v817 = vpop.trf.xlu0
        %v818 = vpop.trf.xlu0
        %v819 = vpop.trf.xlu0
        %v820 = vpop.trf.xlu0
        %v821 = vpop.trf.xlu0
        %v822 = vpop.trf.xlu0
        %v823 = vpop.trf.xlu0
        %v824 = vpop.trf.xlu0
        %v825 = vpop.trf.xlu0
        %v826 = vpop.trf.xlu0
        %v827 = vpop.trf.xlu0
        %v828 = vpop.trf.xlu0
        %829 = vxpose.xlu0.b32.start [1/16] %v199, 128
        %830 = vxpose.xlu0.b32.cont [2/16] 0.0, 128
        %831 = vxpose.xlu0.b32.cont [3/16] 0.0, 128
        %832 = vxpose.xlu0.b32.cont [4/16] 0.0, 128
        %833 = vxpose.xlu0.b32.cont [5/16] 0.0, 128
        %834 = vxpose.xlu0.b32.cont [6/16] 0.0, 128
        %835 = vxpose.xlu0.b32.cont [7/16] 0.0, 128
        %836 = vxpose.xlu0.b32.cont [8/16] 0.0, 128
        %837 = vxpose.xlu0.b32.cont [9/16] 0.0, 128
        %838 = vxpose.xlu0.b32.cont [10/16] 0.0, 128
        %839 = vxpose.xlu0.b32.cont [11/16] 0.0, 128
        %840 = vxpose.xlu0.b32.cont [12/16] 0.0, 128
        %841 = vxpose.xlu0.b32.cont [13/16] 0.0, 128
        %842 = vxpose.xlu0.b32.cont [14/16] 0.0, 128
        %843 = vxpose.xlu0.b32.cont [15/16] 0.0, 128
        %844 = vxpose.xlu0.b32.end [16/16] 0.0, 128
        %v845 = vpop.trf.xlu0
        %v846 = vpop.trf.xlu0
        %v847 = vpop.trf.xlu0
        %v848 = vpop.trf.xlu0
        %v849 = vpop.trf.xlu0
        %v850 = vpop.trf.xlu0
        %v851 = vpop.trf.xlu0
        %v852 = vpop.trf.xlu0
        %v853 = vpop.trf.xlu0
        %v854 = vpop.trf.xlu0
        %v855 = vpop.trf.xlu0
        %v856 = vpop.trf.xlu0
        %v857 = vpop.trf.xlu0
        %v858 = vpop.trf.xlu0
        %v859 = vpop.trf.xlu0
        %v860 = vpop.trf.xlu0
        %861 = vxpose.xlu0.b32.start [1/16] %v230, 128
        %862 = vxpose.xlu0.b32.cont [2/16] 0.0, 128
        %863 = vxpose.xlu0.b32.cont [3/16] 0.0, 128
        %864 = vxpose.xlu0.b32.cont [4/16] 0.0, 128
        %865 = vxpose.xlu0.b32.cont [5/16] 0.0, 128
        %866 = vxpose.xlu0.b32.cont [6/16] 0.0, 128
        %867 = vxpose.xlu0.b32.cont [7/16] 0.0, 128
        %868 = vxpose.xlu0.b32.cont [8/16] 0.0, 128
        %869 = vxpose.xlu0.b32.cont [9/16] 0.0, 128
        %870 = vxpose.xlu0.b32.cont [10/16] 0.0, 128
        %871 = vxpose.xlu0.b32.cont [11/16] 0.0, 128
        %872 = vxpose.xlu0.b32.cont [12/16] 0.0, 128
        %873 = vxpose.xlu0.b32.cont [13/16] 0.0, 128
        %874 = vxpose.xlu0.b32.cont [14/16] 0.0, 128
        %875 = vxpose.xlu0.b32.cont [15/16] 0.0, 128
        %876 = vxpose.xlu0.b32.end [16/16] 0.0, 128
        %v877 = vpop.trf.xlu0
        %v878 = vpop.trf.xlu0
        %v879 = vpop.trf.xlu0
        %v880 = vpop.trf.xlu0
        %v881 = vpop.trf.xlu0
        %v882 = vpop.trf.xlu0
        %v883 = vpop.trf.xlu0
        %v884 = vpop.trf.xlu0
        %v885 = vpop.trf.xlu0
        %v886 = vpop.trf.xlu0
        %v887 = vpop.trf.xlu0
        %v888 = vpop.trf.xlu0
        %v889 = vpop.trf.xlu0
        %v890 = vpop.trf.xlu0
        %v891 = vpop.trf.xlu0
        %v892 = vpop.trf.xlu0
        %893 = vxpose.xlu0.b32.start [1/16] %v198, 128
        %894 = vxpose.xlu0.b32.cont [2/16] 0.0, 128
        %895 = vxpose.xlu0.b32.cont [3/16] 0.0, 128
        %896 = vxpose.xlu0.b32.cont [4/16] 0.0, 128
        %897 = vxpose.xlu0.b32.cont [5/16] 0.0, 128
        %898 = vxpose.xlu0.b32.cont [6/16] 0.0, 128
        %899 = vxpose.xlu0.b32.cont [7/16] 0.0, 128
        %900 = vxpose.xlu0.b32.cont [8/16] 0.0, 128
        %901 = vxpose.xlu0.b32.cont [9/16] 0.0, 128
        %902 = vxpose.xlu0.b32.cont [10/16] 0.0, 128
        %903 = vxpose.xlu0.b32.cont [11/16] 0.0, 128
        %904 = vxpose.xlu0.b32.cont [12/16] 0.0, 128
        %905 = vxpose.xlu0.b32.cont [13/16] 0.0, 128
        %906 = vxpose.xlu0.b32.cont [14/16] 0.0, 128
        %907 = vxpose.xlu0.b32.cont [15/16] 0.0, 128
        %908 = vxpose.xlu0.b32.end [16/16] 0.0, 128
        %v909 = vpop.trf.xlu0
        %v910 = vpop.trf.xlu0
        %v911 = vpop.trf.xlu0
        %v912 = vpop.trf.xlu0
        %v913 = vpop.trf.xlu0
        %v914 = vpop.trf.xlu0
        %v915 = vpop.trf.xlu0
        %v916 = vpop.trf.xlu0
        %v917 = vpop.trf.xlu0
        %v918 = vpop.trf.xlu0
        %v919 = vpop.trf.xlu0
        %v920 = vpop.trf.xlu0
        %v921 = vpop.trf.xlu0
        %v922 = vpop.trf.xlu0
        %v923 = vpop.trf.xlu0
        %v924 = vpop.trf.xlu0
        %925 = vxpose.xlu0.b32.start [1/16] %v231, 128
        %926 = vxpose.xlu0.b32.cont [2/16] 0.0, 128
        %927 = vxpose.xlu0.b32.cont [3/16] 0.0, 128
        %928 = vxpose.xlu0.b32.cont [4/16] 0.0, 128
        %929 = vxpose.xlu0.b32.cont [5/16] 0.0, 128
        %930 = vxpose.xlu0.b32.cont [6/16] 0.0, 128
        %931 = vxpose.xlu0.b32.cont [7/16] 0.0, 128
        %932 = vxpose.xlu0.b32.cont [8/16] 0.0, 128
        %933 = vxpose.xlu0.b32.cont [9/16] 0.0, 128
        %934 = vxpose.xlu0.b32.cont [10/16] 0.0, 128
        %935 = vxpose.xlu0.b32.cont [11/16] 0.0, 128
        %936 = vxpose.xlu0.b32.cont [12/16] 0.0, 128
        %937 = vxpose.xlu0.b32.cont [13/16] 0.0, 128
        %938 = vxpose.xlu0.b32.cont [14/16] 0.0, 128
        %939 = vxpose.xlu0.b32.cont [15/16] 0.0, 128
        %940 = vxpose.xlu0.b32.end [16/16] 0.0, 128
        %v941 = vpop.trf.xlu0
        %v942 = vpop.trf.xlu0
        %v943 = vpop.trf.xlu0
        %v944 = vpop.trf.xlu0
        %v945 = vpop.trf.xlu0
        %v946 = vpop.trf.xlu0
        %v947 = vpop.trf.xlu0
        %v948 = vpop.trf.xlu0
        %v949 = vpop.trf.xlu0
        %v950 = vpop.trf.xlu0
        %v951 = vpop.trf.xlu0
        %v952 = vpop.trf.xlu0
        %v953 = vpop.trf.xlu0
        %v954 = vpop.trf.xlu0
        %v955 = vpop.trf.xlu0
        %v956 = vpop.trf.xlu0
        %957 = vxpose.xlu0.b32.start [1/16] %v200, 128
        %958 = vxpose.xlu0.b32.cont [2/16] 0.0, 128
        %959 = vxpose.xlu0.b32.cont [3/16] 0.0, 128
        %960 = vxpose.xlu0.b32.cont [4/16] 0.0, 128
        %961 = vxpose.xlu0.b32.cont [5/16] 0.0, 128
        %962 = vxpose.xlu0.b32.cont [6/16] 0.0, 128
        %963 = vxpose.xlu0.b32.cont [7/16] 0.0, 128
        %964 = vxpose.xlu0.b32.cont [8/16] 0.0, 128
        %965 = vxpose.xlu0.b32.cont [9/16] 0.0, 128
        %966 = vxpose.xlu0.b32.cont [10/16] 0.0, 128
        %967 = vxpose.xlu0.b32.cont [11/16] 0.0, 128
        %968 = vxpose.xlu0.b32.cont [12/16] 0.0, 128
        %969 = vxpose.xlu0.b32.cont [13/16] 0.0, 128
        %970 = vxpose.xlu0.b32.cont [14/16] 0.0, 128
        %971 = vxpose.xlu0.b32.cont [15/16] 0.0, 128
        %972 = vxpose.xlu0.b32.end [16/16] 0.0, 128
        %v973 = vpop.trf.xlu0
        %v974 = vpop.trf.xlu0
        %v975 = vpop.trf.xlu0
        %v976 = vpop.trf.xlu0
        %v977 = vpop.trf.xlu0
        %v978 = vpop.trf.xlu0
        %v979 = vpop.trf.xlu0
        %v980 = vpop.trf.xlu0
        %v981 = vpop.trf.xlu0
        %v982 = vpop.trf.xlu0
        %v983 = vpop.trf.xlu0
        %v984 = vpop.trf.xlu0
        %v985 = vpop.trf.xlu0
        %v986 = vpop.trf.xlu0
        %v987 = vpop.trf.xlu0
        %v988 = vpop.trf.xlu0
        %989 = vxpose.xlu0.b32.start [1/16] %v232, 128
        %990 = vxpose.xlu0.b32.cont [2/16] 0.0, 128
        %991 = vxpose.xlu0.b32.cont [3/16] 0.0, 128
        %992 = vxpose.xlu0.b32.cont [4/16] 0.0, 128
        %993 = vxpose.xlu0.b32.cont [5/16] 0.0, 128
        %994 = vxpose.xlu0.b32.cont [6/16] 0.0, 128
        %995 = vxpose.xlu0.b32.cont [7/16] 0.0, 128
        %996 = vxpose.xlu0.b32.cont [8/16] 0.0, 128
        %997 = vxpose.xlu0.b32.cont [9/16] 0.0, 128
        %998 = vxpose.xlu0.b32.cont [10/16] 0.0, 128
        %999 = vxpose.xlu0.b32.cont [11/16] 0.0, 128
        %1000 = vxpose.xlu0.b32.cont [12/16] 0.0, 128
        %1001 = vxpose.xlu0.b32.cont [13/16] 0.0, 128
        %1002 = vxpose.xlu0.b32.cont [14/16] 0.0, 128
        %1003 = vxpose.xlu0.b32.cont [15/16] 0.0, 128
        %1004 = vxpose.xlu0.b32.end [16/16] 0.0, 128
        %v1005 = vpop.trf.xlu0
        %v1006 = vpop.trf.xlu0
        %v1007 = vpop.trf.xlu0
        %v1008 = vpop.trf.xlu0
        %v1009 = vpop.trf.xlu0
        %v1010 = vpop.trf.xlu0
        %v1011 = vpop.trf.xlu0
        %v1012 = vpop.trf.xlu0
        %v1013 = vpop.trf.xlu0
        %v1014 = vpop.trf.xlu0
        %v1015 = vpop.trf.xlu0
        %v1016 = vpop.trf.xlu0
        %v1017 = vpop.trf.xlu0
        %v1018 = vpop.trf.xlu0
        %v1019 = vpop.trf.xlu0
        %v1020 = vpop.trf.xlu0
        %1021 = vxpose.xlu0.b32.start [1/16] %v201, 128
        %1022 = vxpose.xlu0.b32.cont [2/16] 0.0, 128
        %1023 = vxpose.xlu0.b32.cont [3/16] 0.0, 128
        %1024 = vxpose.xlu0.b32.cont [4/16] 0.0, 128
        %1025 = vxpose.xlu0.b32.cont [5/16] 0.0, 128
        %1026 = vxpose.xlu0.b32.cont [6/16] 0.0, 128
        %1027 = vxpose.xlu0.b32.cont [7/16] 0.0, 128
        %1028 = vxpose.xlu0.b32.cont [8/16] 0.0, 128
        %1029 = vxpose.xlu0.b32.cont [9/16] 0.0, 128
        %1030 = vxpose.xlu0.b32.cont [10/16] 0.0, 128
        %1031 = vxpose.xlu0.b32.cont [11/16] 0.0, 128
        %1032 = vxpose.xlu0.b32.cont [12/16] 0.0, 128
        %1033 = vxpose.xlu0.b32.cont [13/16] 0.0, 128
        %1034 = vxpose.xlu0.b32.cont [14/16] 0.0, 128
        %1035 = vxpose.xlu0.b32.cont [15/16] 0.0, 128
        %1036 = vxpose.xlu0.b32.end [16/16] 0.0, 128
        %v1037 = vpop.trf.xlu0
        %v1038 = vpop.trf.xlu0
        %v1039 = vpop.trf.xlu0
        %v1040 = vpop.trf.xlu0
        %v1041 = vpop.trf.xlu0
        %v1042 = vpop.trf.xlu0
        %v1043 = vpop.trf.xlu0
        %v1044 = vpop.trf.xlu0
        %v1045 = vpop.trf.xlu0
        %v1046 = vpop.trf.xlu0
        %v1047 = vpop.trf.xlu0
        %v1048 = vpop.trf.xlu0
        %v1049 = vpop.trf.xlu0
        %v1050 = vpop.trf.xlu0
        %v1051 = vpop.trf.xlu0
        %v1052 = vpop.trf.xlu0
        %1053 = vxpose.xlu0.b32.start [1/16] %v233, 128
        %1054 = vxpose.xlu0.b32.cont [2/16] 0.0, 128
        %1055 = vxpose.xlu0.b32.cont [3/16] 0.0, 128
        %1056 = vxpose.xlu0.b32.cont [4/16] 0.0, 128
        %1057 = vxpose.xlu0.b32.cont [5/16] 0.0, 128
        %1058 = vxpose.xlu0.b32.cont [6/16] 0.0, 128
        %1059 = vxpose.xlu0.b32.cont [7/16] 0.0, 128
        %1060 = vxpose.xlu0.b32.cont [8/16] 0.0, 128
        %1061 = vxpose.xlu0.b32.cont [9/16] 0.0, 128
        %1062 = vxpose.xlu0.b32.cont [10/16] 0.0, 128
        %1063 = vxpose.xlu0.b32.cont [11/16] 0.0, 128
        %1064 = vxpose.xlu0.b32.cont [12/16] 0.0, 128
        %1065 = vxpose.xlu0.b32.cont [13/16] 0.0, 128
        %1066 = vxpose.xlu0.b32.cont [14/16] 0.0, 128
        %1067 = vxpose.xlu0.b32.cont [15/16] 0.0, 128
        %1068 = vxpose.xlu0.b32.end [16/16] 0.0, 128
        %v1069 = vpop.trf.xlu0
        %v1070 = vpop.trf.xlu0
        %v1071 = vpop.trf.xlu0
        %v1072 = vpop.trf.xlu0
        %v1073 = vpop.trf.xlu0
        %v1074 = vpop.trf.xlu0
        %v1075 = vpop.trf.xlu0
        %v1076 = vpop.trf.xlu0
        %v1077 = vpop.trf.xlu0
        %v1078 = vpop.trf.xlu0
        %v1079 = vpop.trf.xlu0
        %v1080 = vpop.trf.xlu0
        %v1081 = vpop.trf.xlu0
        %v1082 = vpop.trf.xlu0
        %v1083 = vpop.trf.xlu0
        %v1084 = vpop.trf.xlu0
        %1085 = vxpose.xlu0.b32.start [1/16] %v203, 128
        %1086 = vxpose.xlu0.b32.cont [2/16] 0.0, 128
        %1087 = vxpose.xlu0.b32.cont [3/16] 0.0, 128
        %1088 = vxpose.xlu0.b32.cont [4/16] 0.0, 128
        %1089 = vxpose.xlu0.b32.cont [5/16] 0.0, 128
        %1090 = vxpose.xlu0.b32.cont [6/16] 0.0, 128
        %1091 = vxpose.xlu0.b32.cont [7/16] 0.0, 128
        %1092 = vxpose.xlu0.b32.cont [8/16] 0.0, 128
        %1093 = vxpose.xlu0.b32.cont [9/16] 0.0, 128
        %1094 = vxpose.xlu0.b32.cont [10/16] 0.0, 128
        %1095 = vxpose.xlu0.b32.cont [11/16] 0.0, 128
        %1096 = vxpose.xlu0.b32.cont [12/16] 0.0, 128
        %1097 = vxpose.xlu0.b32.cont [13/16] 0.0, 128
        %1098 = vxpose.xlu0.b32.cont [14/16] 0.0, 128
        %1099 = vxpose.xlu0.b32.cont [15/16] 0.0, 128
        %1100 = vxpose.xlu0.b32.end [16/16] 0.0, 128
        %v1101 = vpop.trf.xlu0
        %v1102 = vpop.trf.xlu0
        %v1103 = vpop.trf.xlu0
        %v1104 = vpop.trf.xlu0
        %v1105 = vpop.trf.xlu0
        %v1106 = vpop.trf.xlu0
        %v1107 = vpop.trf.xlu0
        %v1108 = vpop.trf.xlu0
        %v1109 = vpop.trf.xlu0
        %v1110 = vpop.trf.xlu0
        %v1111 = vpop.trf.xlu0
        %v1112 = vpop.trf.xlu0
        %v1113 = vpop.trf.xlu0
        %v1114 = vpop.trf.xlu0
        %v1115 = vpop.trf.xlu0
        %v1116 = vpop.trf.xlu0
        %1117 = vxpose.xlu0.b32.start [1/16] %v234, 128
        %1118 = vxpose.xlu0.b32.cont [2/16] 0.0, 128
        %1119 = vxpose.xlu0.b32.cont [3/16] 0.0, 128
        %1120 = vxpose.xlu0.b32.cont [4/16] 0.0, 128
        %1121 = vxpose.xlu0.b32.cont [5/16] 0.0, 128
        %1122 = vxpose.xlu0.b32.cont [6/16] 0.0, 128
        %1123 = vxpose.xlu0.b32.cont [7/16] 0.0, 128
        %1124 = vxpose.xlu0.b32.cont [8/16] 0.0, 128
        %1125 = vxpose.xlu0.b32.cont [9/16] 0.0, 128
        %1126 = vxpose.xlu0.b32.cont [10/16] 0.0, 128
        %1127 = vxpose.xlu0.b32.cont [11/16] 0.0, 128
        %1128 = vxpose.xlu0.b32.cont [12/16] 0.0, 128
        %1129 = vxpose.xlu0.b32.cont [13/16] 0.0, 128
        %1130 = vxpose.xlu0.b32.cont [14/16] 0.0, 128
        %1131 = vxpose.xlu0.b32.cont [15/16] 0.0, 128
        %1132 = vxpose.xlu0.b32.end [16/16] 0.0, 128
        %v1133 = vpop.trf.xlu0
        %v1134 = vpop.trf.xlu0
        %v1135 = vpop.trf.xlu0
        %v1136 = vpop.trf.xlu0
        %v1137 = vpop.trf.xlu0
        %v1138 = vpop.trf.xlu0
        %v1139 = vpop.trf.xlu0
        %v1140 = vpop.trf.xlu0
        %v1141 = vpop.trf.xlu0
        %v1142 = vpop.trf.xlu0
        %v1143 = vpop.trf.xlu0
        %v1144 = vpop.trf.xlu0
        %v1145 = vpop.trf.xlu0
        %v1146 = vpop.trf.xlu0
        %v1147 = vpop.trf.xlu0
        %v1148 = vpop.trf.xlu0
        %1149 = vxpose.xlu0.b32.start [1/16] %v202, 128
        %1150 = vxpose.xlu0.b32.cont [2/16] 0.0, 128
        %1151 = vxpose.xlu0.b32.cont [3/16] 0.0, 128
        %1152 = vxpose.xlu0.b32.cont [4/16] 0.0, 128
        %1153 = vxpose.xlu0.b32.cont [5/16] 0.0, 128
        %1154 = vxpose.xlu0.b32.cont [6/16] 0.0, 128
        %1155 = vxpose.xlu0.b32.cont [7/16] 0.0, 128
        %1156 = vxpose.xlu0.b32.cont [8/16] 0.0, 128
        %1157 = vxpose.xlu0.b32.cont [9/16] 0.0, 128
        %1158 = vxpose.xlu0.b32.cont [10/16] 0.0, 128
        %1159 = vxpose.xlu0.b32.cont [11/16] 0.0, 128
        %1160 = vxpose.xlu0.b32.cont [12/16] 0.0, 128
        %1161 = vxpose.xlu0.b32.cont [13/16] 0.0, 128
        %1162 = vxpose.xlu0.b32.cont [14/16] 0.0, 128
        %1163 = vxpose.xlu0.b32.cont [15/16] 0.0, 128
        %1164 = vxpose.xlu0.b32.end [16/16] 0.0, 128
        %v1165 = vpop.trf.xlu0
        %v1166 = vpop.trf.xlu0
        %v1167 = vpop.trf.xlu0
        %v1168 = vpop.trf.xlu0
        %v1169 = vpop.trf.xlu0
        %v1170 = vpop.trf.xlu0
        %v1171 = vpop.trf.xlu0
        %v1172 = vpop.trf.xlu0
        %v1173 = vpop.trf.xlu0
        %v1174 = vpop.trf.xlu0
        %v1175 = vpop.trf.xlu0
        %v1176 = vpop.trf.xlu0
        %v1177 = vpop.trf.xlu0
        %v1178 = vpop.trf.xlu0
        %v1179 = vpop.trf.xlu0
        %v1180 = vpop.trf.xlu0
        %1181 = vxpose.xlu0.b32.start [1/16] %v235, 128
        %1182 = vxpose.xlu0.b32.cont [2/16] 0.0, 128
        %1183 = vxpose.xlu0.b32.cont [3/16] 0.0, 128
        %1184 = vxpose.xlu0.b32.cont [4/16] 0.0, 128
        %1185 = vxpose.xlu0.b32.cont [5/16] 0.0, 128
        %1186 = vxpose.xlu0.b32.cont [6/16] 0.0, 128
        %1187 = vxpose.xlu0.b32.cont [7/16] 0.0, 128
        %1188 = vxpose.xlu0.b32.cont [8/16] 0.0, 128
        %1189 = vxpose.xlu0.b32.cont [9/16] 0.0, 128
        %1190 = vxpose.xlu0.b32.cont [10/16] 0.0, 128
        %1191 = vxpose.xlu0.b32.cont [11/16] 0.0, 128
        %1192 = vxpose.xlu0.b32.cont [12/16] 0.0, 128
        %1193 = vxpose.xlu0.b32.cont [13/16] 0.0, 128
        %1194 = vxpose.xlu0.b32.cont [14/16] 0.0, 128
        %1195 = vxpose.xlu0.b32.cont [15/16] 0.0, 128
        %1196 = vxpose.xlu0.b32.end [16/16] 0.0, 128
        %v1197 = vpop.trf.xlu0
        %v1198 = vpop.trf.xlu0
        %v1199 = vpop.trf.xlu0
        %v1200 = vpop.trf.xlu0
        %v1201 = vpop.trf.xlu0
        %v1202 = vpop.trf.xlu0
        %v1203 = vpop.trf.xlu0
        %v1204 = vpop.trf.xlu0
        %v1205 = vpop.trf.xlu0
        %v1206 = vpop.trf.xlu0
        %v1207 = vpop.trf.xlu0
        %v1208 = vpop.trf.xlu0
        %v1209 = vpop.trf.xlu0
        %v1210 = vpop.trf.xlu0
        %v1211 = vpop.trf.xlu0
        %v1212 = vpop.trf.xlu0
        %1213 = vxpose.xlu0.b32.start [1/16] %v204, 128
        %1214 = vxpose.xlu0.b32.cont [2/16] 0.0, 128
        %1215 = vxpose.xlu0.b32.cont [3/16] 0.0, 128
        %1216 = vxpose.xlu0.b32.cont [4/16] 0.0, 128
        %1217 = vxpose.xlu0.b32.cont [5/16] 0.0, 128
        %1218 = vxpose.xlu0.b32.cont [6/16] 0.0, 128
        %1219 = vxpose.xlu0.b32.cont [7/16] 0.0, 128
        %1220 = vxpose.xlu0.b32.cont [8/16] 0.0, 128
        %1221 = vxpose.xlu0.b32.cont [9/16] 0.0, 128
        %1222 = vxpose.xlu0.b32.cont [10/16] 0.0, 128
        %1223 = vxpose.xlu0.b32.cont [11/16] 0.0, 128
        %1224 = vxpose.xlu0.b32.cont [12/16] 0.0, 128
        %1225 = vxpose.xlu0.b32.cont [13/16] 0.0, 128
        %1226 = vxpose.xlu0.b32.cont [14/16] 0.0, 128
        %1227 = vxpose.xlu0.b32.cont [15/16] 0.0, 128
        %1228 = vxpose.xlu0.b32.end [16/16] 0.0, 128
        %v1229 = vpop.trf.xlu0
        %v1230 = vpop.trf.xlu0
        %v1231 = vpop.trf.xlu0
        %v1232 = vpop.trf.xlu0
        %v1233 = vpop.trf.xlu0
        %v1234 = vpop.trf.xlu0
        %v1235 = vpop.trf.xlu0
        %v1236 = vpop.trf.xlu0
        %v1237 = vpop.trf.xlu0
        %v1238 = vpop.trf.xlu0
        %v1239 = vpop.trf.xlu0
        %v1240 = vpop.trf.xlu0
        %v1241 = vpop.trf.xlu0
        %v1242 = vpop.trf.xlu0
        %v1243 = vpop.trf.xlu0
        %v1244 = vpop.trf.xlu0
        %1245 = vxpose.xlu0.b32.start [1/16] %v236, 128
        %1246 = vxpose.xlu0.b32.cont [2/16] 0.0, 128
        %1247 = vxpose.xlu0.b32.cont [3/16] 0.0, 128
        %1248 = vxpose.xlu0.b32.cont [4/16] 0.0, 128
        %1249 = vxpose.xlu0.b32.cont [5/16] 0.0, 128
        %1250 = vxpose.xlu0.b32.cont [6/16] 0.0, 128
        %1251 = vxpose.xlu0.b32.cont [7/16] 0.0, 128
        %1252 = vxpose.xlu0.b32.cont [8/16] 0.0, 128
        %1253 = vxpose.xlu0.b32.cont [9/16] 0.0, 128
        %1254 = vxpose.xlu0.b32.cont [10/16] 0.0, 128
        %1255 = vxpose.xlu0.b32.cont [11/16] 0.0, 128
        %1256 = vxpose.xlu0.b32.cont [12/16] 0.0, 128
        %1257 = vxpose.xlu0.b32.cont [13/16] 0.0, 128
        %1258 = vxpose.xlu0.b32.cont [14/16] 0.0, 128
        %1259 = vxpose.xlu0.b32.cont [15/16] 0.0, 128
        %1260 = vxpose.xlu0.b32.end [16/16] 0.0, 128
        %v1261 = vpop.trf.xlu0
        %v1262 = vpop.trf.xlu0
        %v1263 = vpop.trf.xlu0
        %v1264 = vpop.trf.xlu0
        %v1265 = vpop.trf.xlu0
        %v1266 = vpop.trf.xlu0
        %v1267 = vpop.trf.xlu0
        %v1268 = vpop.trf.xlu0
        %v1269 = vpop.trf.xlu0
        %v1270 = vpop.trf.xlu0
        %v1271 = vpop.trf.xlu0
        %v1272 = vpop.trf.xlu0
        %v1273 = vpop.trf.xlu0
        %v1274 = vpop.trf.xlu0
        %v1275 = vpop.trf.xlu0
        %v1276 = vpop.trf.xlu0
        %v1277 = vcombine.low %v269, %v525
        %v1278 = vcombine.high %v269, %v525
        %v1280 = vunpack.c.l.s4 1983009808
        %v1281 = vunpack.c.0.s8 %v1280
        %v1282 = vlaneseq
        %v1283 = vshrl.u32 %v1282, 7
        %v1284 = vsub.s32 %v1281, %v1283
        %v1285 = vrot.slane %v1277, %v1284
        %v1287 = vunpack.c.l.s4 1983009808
        %v1288 = vunpack.c.0.s8 %v1287
        %v1289 = vlaneseq
        %v1290 = vshrl.u32 %v1289, 7
        %v1291 = vsub.s32 %v1288, %v1290
        %v1292 = vrot.slane %v1278, %v1291
        %v1293 = vcombine.low %v397, %v653
        %v1294 = vcombine.high %v397, %v653
        %v1296 = vunpack.c.l.s4 1983009808
        %v1297 = vunpack.c.0.s8 %v1296
        %v1298 = vlaneseq
        %v1299 = vshrl.u32 %v1298, 7
        %v1300 = vsub.s32 %v1297, %v1299
        %v1301 = vrot.slane %v1293, %v1300
        %v1303 = vunpack.c.l.s4 1983009808
        %v1304 = vunpack.c.0.s8 %v1303
        %v1305 = vlaneseq
        %v1306 = vshrl.u32 %v1305, 7
        %v1307 = vsub.s32 %v1304, %v1306
        %v1308 = vrot.slane %v1294, %v1307
        %v1309 = vcombine.low %v781, %v1037
        %v1310 = vcombine.high %v781, %v1037
        %v1312 = vunpack.c.l.s4 1983009808
        %v1313 = vunpack.c.0.s8 %v1312
        %v1314 = vlaneseq
        %v1315 = vshrl.u32 %v1314, 7
        %v1316 = vsub.s32 %v1313, %v1315
        %v1317 = vrot.slane %v1309, %v1316
        %v1319 = vunpack.c.l.s4 1983009808
        %v1320 = vunpack.c.0.s8 %v1319
        %v1321 = vlaneseq
        %v1322 = vshrl.u32 %v1321, 7
        %v1323 = vsub.s32 %v1320, %v1322
        %v1324 = vrot.slane %v1310, %v1323
        %v1325 = vcombine.low %v909, %v1165
        %v1326 = vcombine.high %v909, %v1165
        %v1328 = vunpack.c.l.s4 1983009808
        %v1329 = vunpack.c.0.s8 %v1328
        %v1330 = vlaneseq
        %v1331 = vshrl.u32 %v1330, 7
        %v1332 = vsub.s32 %v1329, %v1331
        %v1333 = vrot.slane %v1325, %v1332
        %v1335 = vunpack.c.l.s4 1983009808
        %v1336 = vunpack.c.0.s8 %v1335
        %v1337 = vlaneseq
        %v1338 = vshrl.u32 %v1337, 7
        %v1339 = vsub.s32 %v1336, %v1338
        %v1340 = vrot.slane %v1326, %v1339
        %v1341 = vcombine.low %v1285, %v1301
        %v1342 = vcombine.high %v1285, %v1301
        %v1344 = vunpack.c.l.s4 1934713408
        %v1345 = vunpack.c.0.s8 %v1344
        %v1346 = vlaneseq
        %v1347 = vshrl.u32 %v1346, 7
        %v1348 = vsub.s32 %v1345, %v1347
        %v1349 = vrot.slane %v1341, %v1348
        %v1351 = vunpack.c.l.s4 1934713408
        %v1352 = vunpack.c.0.s8 %v1351
        %v1353 = vlaneseq
        %v1354 = vshrl.u32 %v1353, 7
        %v1355 = vsub.s32 %v1352, %v1354
        %v1356 = vrot.slane %v1342, %v1355
        %v1357 = vcombine.low %v1292, %v1308
        %v1358 = vcombine.high %v1292, %v1308
        %v1360 = vunpack.c.l.s4 1934713408
        %v1361 = vunpack.c.0.s8 %v1360
        %v1362 = vlaneseq
        %v1363 = vshrl.u32 %v1362, 7
        %v1364 = vsub.s32 %v1361, %v1363
        %v1365 = vrot.slane %v1357, %v1364
        %v1367 = vunpack.c.l.s4 1934713408
        %v1368 = vunpack.c.0.s8 %v1367
        %v1369 = vlaneseq
        %v1370 = vshrl.u32 %v1369, 7
        %v1371 = vsub.s32 %v1368, %v1370
        %v1372 = vrot.slane %v1358, %v1371
        %v1373 = vcombine.low %v1317, %v1333
        %v1374 = vcombine.high %v1317, %v1333
        %v1376 = vunpack.c.l.s4 1934713408
        %v1377 = vunpack.c.0.s8 %v1376
        %v1378 = vlaneseq
        %v1379 = vshrl.u32 %v1378, 7
        %v1380 = vsub.s32 %v1377, %v1379
        %v1381 = vrot.slane %v1373, %v1380
        %v1383 = vunpack.c.l.s4 1934713408
        %v1384 = vunpack.c.0.s8 %v1383
        %v1385 = vlaneseq
        %v1386 = vshrl.u32 %v1385, 7
        %v1387 = vsub.s32 %v1384, %v1386
        %v1388 = vrot.slane %v1374, %v1387
        %v1389 = vcombine.low %v1324, %v1340
        %v1390 = vcombine.high %v1324, %v1340
        %v1392 = vunpack.c.l.s4 1934713408
        %v1393 = vunpack.c.0.s8 %v1392
        %v1394 = vlaneseq
        %v1395 = vshrl.u32 %v1394, 7
        %v1396 = vsub.s32 %v1393, %v1395
        %v1397 = vrot.slane %v1389, %v1396
        %v1399 = vunpack.c.l.s4 1934713408
        %v1400 = vunpack.c.0.s8 %v1399
        %v1401 = vlaneseq
        %v1402 = vshrl.u32 %v1401, 7
        %v1403 = vsub.s32 %v1400, %v1402
        %v1404 = vrot.slane %v1390, %v1403
        %v1405 = vcombine.low %v1349, %v1381
        %v1406 = vcombine.high %v1349, %v1381
        %v1407 = vcombine.low %v1356, %v1388
        %v1408 = vcombine.high %v1356, %v1388
        %v1409 = vcombine.low %v1365, %v1397
        %v1410 = vcombine.high %v1365, %v1397
        %v1411 = vcombine.low %v1372, %v1404
        %v1412 = vcombine.high %v1372, %v1404
        %v1413 = vcombine.low %v270, %v526
        %v1414 = vcombine.high %v270, %v526
        %v1416 = vunpack.c.l.s4 1983009808
        %v1417 = vunpack.c.0.s8 %v1416
        %v1418 = vlaneseq
        %v1419 = vshrl.u32 %v1418, 7
        %v1420 = vsub.s32 %v1417, %v1419
        %v1421 = vrot.slane %v1413, %v1420
        %v1423 = vunpack.c.l.s4 1983009808
        %v1424 = vunpack.c.0.s8 %v1423
        %v1425 = vlaneseq
        %v1426 = vshrl.u32 %v1425, 7
        %v1427 = vsub.s32 %v1424, %v1426
        %v1428 = vrot.slane %v1414, %v1427
        %v1429 = vcombine.low %v398, %v654
        %v1430 = vcombine.high %v398, %v654
        %v1432 = vunpack.c.l.s4 1983009808
        %v1433 = vunpack.c.0.s8 %v1432
        %v1434 = vlaneseq
        %v1435 = vshrl.u32 %v1434, 7
        %v1436 = vsub.s32 %v1433, %v1435
        %v1437 = vrot.slane %v1429, %v1436
        %v1439 = vunpack.c.l.s4 1983009808
        %v1440 = vunpack.c.0.s8 %v1439
        %v1441 = vlaneseq
        %v1442 = vshrl.u32 %v1441, 7
        %v1443 = vsub.s32 %v1440, %v1442
        %v1444 = vrot.slane %v1430, %v1443
        %v1445 = vcombine.low %v782, %v1038
        %v1446 = vcombine.high %v782, %v1038
        %v1448 = vunpack.c.l.s4 1983009808
        %v1449 = vunpack.c.0.s8 %v1448
        %v1450 = vlaneseq
        %v1451 = vshrl.u32 %v1450, 7
        %v1452 = vsub.s32 %v1449, %v1451
        %v1453 = vrot.slane %v1445, %v1452
        %v1455 = vunpack.c.l.s4 1983009808
        %v1456 = vunpack.c.0.s8 %v1455
        %v1457 = vlaneseq
        %v1458 = vshrl.u32 %v1457, 7
        %v1459 = vsub.s32 %v1456, %v1458
        %v1460 = vrot.slane %v1446, %v1459
        %v1461 = vcombine.low %v910, %v1166
        %v1462 = vcombine.high %v910, %v1166
        %v1464 = vunpack.c.l.s4 1983009808
        %v1465 = vunpack.c.0.s8 %v1464
        %v1466 = vlaneseq
        %v1467 = vshrl.u32 %v1466, 7
        %v1468 = vsub.s32 %v1465, %v1467
        %v1469 = vrot.slane %v1461, %v1468
        %v1471 = vunpack.c.l.s4 1983009808
        %v1472 = vunpack.c.0.s8 %v1471
        %v1473 = vlaneseq
        %v1474 = vshrl.u32 %v1473, 7
        %v1475 = vsub.s32 %v1472, %v1474
        %v1476 = vrot.slane %v1462, %v1475
        %v1477 = vcombine.low %v1421, %v1437
        %v1478 = vcombine.high %v1421, %v1437
        %v1480 = vunpack.c.l.s4 1934713408
        %v1481 = vunpack.c.0.s8 %v1480
        %v1482 = vlaneseq
        %v1483 = vshrl.u32 %v1482, 7
        %v1484 = vsub.s32 %v1481, %v1483
        %v1485 = vrot.slane %v1477, %v1484
        %v1487 = vunpack.c.l.s4 1934713408
        %v1488 = vunpack.c.0.s8 %v1487
        %v1489 = vlaneseq
        %v1490 = vshrl.u32 %v1489, 7
        %v1491 = vsub.s32 %v1488, %v1490
        %v1492 = vrot.slane %v1478, %v1491
        %v1493 = vcombine.low %v1428, %v1444
        %v1494 = vcombine.high %v1428, %v1444
        %v1496 = vunpack.c.l.s4 1934713408
        %v1497 = vunpack.c.0.s8 %v1496
        %v1498 = vlaneseq
        %v1499 = vshrl.u32 %v1498, 7
        %v1500 = vsub.s32 %v1497, %v1499
        %v1501 = vrot.slane %v1493, %v1500
        %v1503 = vunpack.c.l.s4 1934713408
        %v1504 = vunpack.c.0.s8 %v1503
        %v1505 = vlaneseq
        %v1506 = vshrl.u32 %v1505, 7
        %v1507 = vsub.s32 %v1504, %v1506
        %v1508 = vrot.slane %v1494, %v1507
        %v1509 = vcombine.low %v1453, %v1469
        %v1510 = vcombine.high %v1453, %v1469
        %v1512 = vunpack.c.l.s4 1934713408
        %v1513 = vunpack.c.0.s8 %v1512
        %v1514 = vlaneseq
        %v1515 = vshrl.u32 %v1514, 7
        %v1516 = vsub.s32 %v1513, %v1515
        %v1517 = vrot.slane %v1509, %v1516
        %v1519 = vunpack.c.l.s4 1934713408
        %v1520 = vunpack.c.0.s8 %v1519
        %v1521 = vlaneseq
        %v1522 = vshrl.u32 %v1521, 7
        %v1523 = vsub.s32 %v1520, %v1522
        %v1524 = vrot.slane %v1510, %v1523
        %v1525 = vcombine.low %v1460, %v1476
        %v1526 = vcombine.high %v1460, %v1476
        %v1528 = vunpack.c.l.s4 1934713408
        %v1529 = vunpack.c.0.s8 %v1528
        %v1530 = vlaneseq
        %v1531 = vshrl.u32 %v1530, 7
        %v1532 = vsub.s32 %v1529, %v1531
        %v1533 = vrot.slane %v1525, %v1532
        %v1535 = vunpack.c.l.s4 1934713408
        %v1536 = vunpack.c.0.s8 %v1535
        %v1537 = vlaneseq
        %v1538 = vshrl.u32 %v1537, 7
        %v1539 = vsub.s32 %v1536, %v1538
        %v1540 = vrot.slane %v1526, %v1539
        %v1541 = vcombine.low %v1485, %v1517
        %v1542 = vcombine.high %v1485, %v1517
        %v1543 = vcombine.low %v1492, %v1524
        %v1544 = vcombine.high %v1492, %v1524
        %v1545 = vcombine.low %v1501, %v1533
        %v1546 = vcombine.high %v1501, %v1533
        %v1547 = vcombine.low %v1508, %v1540
        %v1548 = vcombine.high %v1508, %v1540
        %v1549 = vcombine.low %v271, %v527
        %v1550 = vcombine.high %v271, %v527
        %v1552 = vunpack.c.l.s4 1983009808
        %v1553 = vunpack.c.0.s8 %v1552
        %v1554 = vlaneseq
        %v1555 = vshrl.u32 %v1554, 7
        %v1556 = vsub.s32 %v1553, %v1555
        %v1557 = vrot.slane %v1549, %v1556
        %v1559 = vunpack.c.l.s4 1983009808
        %v1560 = vunpack.c.0.s8 %v1559
        %v1561 = vlaneseq
        %v1562 = vshrl.u32 %v1561, 7
        %v1563 = vsub.s32 %v1560, %v1562
        %v1564 = vrot.slane %v1550, %v1563
        %v1565 = vcombine.low %v399, %v655
        %v1566 = vcombine.high %v399, %v655
        %v1568 = vunpack.c.l.s4 1983009808
        %v1569 = vunpack.c.0.s8 %v1568
        %v1570 = vlaneseq
        %v1571 = vshrl.u32 %v1570, 7
        %v1572 = vsub.s32 %v1569, %v1571
        %v1573 = vrot.slane %v1565, %v1572
        %v1575 = vunpack.c.l.s4 1983009808
        %v1576 = vunpack.c.0.s8 %v1575
        %v1577 = vlaneseq
        %v1578 = vshrl.u32 %v1577, 7
        %v1579 = vsub.s32 %v1576, %v1578
        %v1580 = vrot.slane %v1566, %v1579
        %v1581 = vcombine.low %v783, %v1039
        %v1582 = vcombine.high %v783, %v1039
        %v1584 = vunpack.c.l.s4 1983009808
        %v1585 = vunpack.c.0.s8 %v1584
        %v1586 = vlaneseq
        %v1587 = vshrl.u32 %v1586, 7
        %v1588 = vsub.s32 %v1585, %v1587
        %v1589 = vrot.slane %v1581, %v1588
        %v1591 = vunpack.c.l.s4 1983009808
        %v1592 = vunpack.c.0.s8 %v1591
        %v1593 = vlaneseq
        %v1594 = vshrl.u32 %v1593, 7
        %v1595 = vsub.s32 %v1592, %v1594
        %v1596 = vrot.slane %v1582, %v1595
        %v1597 = vcombine.low %v911, %v1167
        %v1598 = vcombine.high %v911, %v1167
        %v1600 = vunpack.c.l.s4 1983009808
        %v1601 = vunpack.c.0.s8 %v1600
        %v1602 = vlaneseq
        %v1603 = vshrl.u32 %v1602, 7
        %v1604 = vsub.s32 %v1601, %v1603
        %v1605 = vrot.slane %v1597, %v1604
        %v1607 = vunpack.c.l.s4 1983009808
        %v1608 = vunpack.c.0.s8 %v1607
        %v1609 = vlaneseq
        %v1610 = vshrl.u32 %v1609, 7
        %v1611 = vsub.s32 %v1608, %v1610
        %v1612 = vrot.slane %v1598, %v1611
        %v1613 = vcombine.low %v1557, %v1573
        %v1614 = vcombine.high %v1557, %v1573
        %v1616 = vunpack.c.l.s4 1934713408
        %v1617 = vunpack.c.0.s8 %v1616
        %v1618 = vlaneseq
        %v1619 = vshrl.u32 %v1618, 7
        %v1620 = vsub.s32 %v1617, %v1619
        %v1621 = vrot.slane %v1613, %v1620
        %v1623 = vunpack.c.l.s4 1934713408
        %v1624 = vunpack.c.0.s8 %v1623
        %v1625 = vlaneseq
        %v1626 = vshrl.u32 %v1625, 7
        %v1627 = vsub.s32 %v1624, %v1626
        %v1628 = vrot.slane %v1614, %v1627
        %v1629 = vcombine.low %v1564, %v1580
        %v1630 = vcombine.high %v1564, %v1580
        %v1632 = vunpack.c.l.s4 1934713408
        %v1633 = vunpack.c.0.s8 %v1632
        %v1634 = vlaneseq
        %v1635 = vshrl.u32 %v1634, 7
        %v1636 = vsub.s32 %v1633, %v1635
        %v1637 = vrot.slane %v1629, %v1636
        %v1639 = vunpack.c.l.s4 1934713408
        %v1640 = vunpack.c.0.s8 %v1639
        %v1641 = vlaneseq
        %v1642 = vshrl.u32 %v1641, 7
        %v1643 = vsub.s32 %v1640, %v1642
        %v1644 = vrot.slane %v1630, %v1643
        %v1645 = vcombine.low %v1589, %v1605
        %v1646 = vcombine.high %v1589, %v1605
        %v1648 = vunpack.c.l.s4 1934713408
        %v1649 = vunpack.c.0.s8 %v1648
        %v1650 = vlaneseq
        %v1651 = vshrl.u32 %v1650, 7
        %v1652 = vsub.s32 %v1649, %v1651
        %v1653 = vrot.slane %v1645, %v1652
        %v1655 = vunpack.c.l.s4 1934713408
        %v1656 = vunpack.c.0.s8 %v1655
        %v1657 = vlaneseq
        %v1658 = vshrl.u32 %v1657, 7
        %v1659 = vsub.s32 %v1656, %v1658
        %v1660 = vrot.slane %v1646, %v1659
        %v1661 = vcombine.low %v1596, %v1612
        %v1662 = vcombine.high %v1596, %v1612
        %v1664 = vunpack.c.l.s4 1934713408
        %v1665 = vunpack.c.0.s8 %v1664
        %v1666 = vlaneseq
        %v1667 = vshrl.u32 %v1666, 7
        %v1668 = vsub.s32 %v1665, %v1667
        %v1669 = vrot.slane %v1661, %v1668
        %v1671 = vunpack.c.l.s4 1934713408
        %v1672 = vunpack.c.0.s8 %v1671
        %v1673 = vlaneseq
        %v1674 = vshrl.u32 %v1673, 7
        %v1675 = vsub.s32 %v1672, %v1674
        %v1676 = vrot.slane %v1662, %v1675
        %v1677 = vcombine.low %v1621, %v1653
        %v1678 = vcombine.high %v1621, %v1653
        %v1679 = vcombine.low %v1628, %v1660
        %v1680 = vcombine.high %v1628, %v1660
        %v1681 = vcombine.low %v1637, %v1669
        %v1682 = vcombine.high %v1637, %v1669
        %v1683 = vcombine.low %v1644, %v1676
        %v1684 = vcombine.high %v1644, %v1676
        %v1685 = vcombine.low %v272, %v528
        %v1686 = vcombine.high %v272, %v528
        %v1688 = vunpack.c.l.s4 1983009808
        %v1689 = vunpack.c.0.s8 %v1688
        %v1690 = vlaneseq
        %v1691 = vshrl.u32 %v1690, 7
        %v1692 = vsub.s32 %v1689, %v1691
        %v1693 = vrot.slane %v1685, %v1692
        %v1695 = vunpack.c.l.s4 1983009808
        %v1696 = vunpack.c.0.s8 %v1695
        %v1697 = vlaneseq
        %v1698 = vshrl.u32 %v1697, 7
        %v1699 = vsub.s32 %v1696, %v1698
        %v1700 = vrot.slane %v1686, %v1699
        %v1701 = vcombine.low %v400, %v656
        %v1702 = vcombine.high %v400, %v656
        %v1704 = vunpack.c.l.s4 1983009808
        %v1705 = vunpack.c.0.s8 %v1704
        %v1706 = vlaneseq
        %v1707 = vshrl.u32 %v1706, 7
        %v1708 = vsub.s32 %v1705, %v1707
        %v1709 = vrot.slane %v1701, %v1708
        %v1711 = vunpack.c.l.s4 1983009808
        %v1712 = vunpack.c.0.s8 %v1711
        %v1713 = vlaneseq
        %v1714 = vshrl.u32 %v1713, 7
        %v1715 = vsub.s32 %v1712, %v1714
        %v1716 = vrot.slane %v1702, %v1715
        %v1717 = vcombine.low %v784, %v1040
        %v1718 = vcombine.high %v784, %v1040
        %v1720 = vunpack.c.l.s4 1983009808
        %v1721 = vunpack.c.0.s8 %v1720
        %v1722 = vlaneseq
        %v1723 = vshrl.u32 %v1722, 7
        %v1724 = vsub.s32 %v1721, %v1723
        %v1725 = vrot.slane %v1717, %v1724
        %v1727 = vunpack.c.l.s4 1983009808
        %v1728 = vunpack.c.0.s8 %v1727
        %v1729 = vlaneseq
        %v1730 = vshrl.u32 %v1729, 7
        %v1731 = vsub.s32 %v1728, %v1730
        %v1732 = vrot.slane %v1718, %v1731
        %v1733 = vcombine.low %v912, %v1168
        %v1734 = vcombine.high %v912, %v1168
        %v1736 = vunpack.c.l.s4 1983009808
        %v1737 = vunpack.c.0.s8 %v1736
        %v1738 = vlaneseq
        %v1739 = vshrl.u32 %v1738, 7
        %v1740 = vsub.s32 %v1737, %v1739
        %v1741 = vrot.slane %v1733, %v1740
        %v1743 = vunpack.c.l.s4 1983009808
        %v1744 = vunpack.c.0.s8 %v1743
        %v1745 = vlaneseq
        %v1746 = vshrl.u32 %v1745, 7
        %v1747 = vsub.s32 %v1744, %v1746
        %v1748 = vrot.slane %v1734, %v1747
        %v1749 = vcombine.low %v1693, %v1709
        %v1750 = vcombine.high %v1693, %v1709
        %v1752 = vunpack.c.l.s4 1934713408
        %v1753 = vunpack.c.0.s8 %v1752
        %v1754 = vlaneseq
        %v1755 = vshrl.u32 %v1754, 7
        %v1756 = vsub.s32 %v1753, %v1755
        %v1757 = vrot.slane %v1749, %v1756
        %v1759 = vunpack.c.l.s4 1934713408
        %v1760 = vunpack.c.0.s8 %v1759
        %v1761 = vlaneseq
        %v1762 = vshrl.u32 %v1761, 7
        %v1763 = vsub.s32 %v1760, %v1762
        %v1764 = vrot.slane %v1750, %v1763
        %v1765 = vcombine.low %v1700, %v1716
        %v1766 = vcombine.high %v1700, %v1716
        %v1768 = vunpack.c.l.s4 1934713408
        %v1769 = vunpack.c.0.s8 %v1768
        %v1770 = vlaneseq
        %v1771 = vshrl.u32 %v1770, 7
        %v1772 = vsub.s32 %v1769, %v1771
        %v1773 = vrot.slane %v1765, %v1772
        %v1775 = vunpack.c.l.s4 1934713408
        %v1776 = vunpack.c.0.s8 %v1775
        %v1777 = vlaneseq
        %v1778 = vshrl.u32 %v1777, 7
        %v1779 = vsub.s32 %v1776, %v1778
        %v1780 = vrot.slane %v1766, %v1779
        %v1781 = vcombine.low %v1725, %v1741
        %v1782 = vcombine.high %v1725, %v1741
        %v1784 = vunpack.c.l.s4 1934713408
        %v1785 = vunpack.c.0.s8 %v1784
        %v1786 = vlaneseq
        %v1787 = vshrl.u32 %v1786, 7
        %v1788 = vsub.s32 %v1785, %v1787
        %v1789 = vrot.slane %v1781, %v1788
        %v1791 = vunpack.c.l.s4 1934713408
        %v1792 = vunpack.c.0.s8 %v1791
        %v1793 = vlaneseq
        %v1794 = vshrl.u32 %v1793, 7
        %v1795 = vsub.s32 %v1792, %v1794
        %v1796 = vrot.slane %v1782, %v1795
        %v1797 = vcombine.low %v1732, %v1748
        %v1798 = vcombine.high %v1732, %v1748
        %v1800 = vunpack.c.l.s4 1934713408
        %v1801 = vunpack.c.0.s8 %v1800
        %v1802 = vlaneseq
        %v1803 = vshrl.u32 %v1802, 7
        %v1804 = vsub.s32 %v1801, %v1803
        %v1805 = vrot.slane %v1797, %v1804
        %v1807 = vunpack.c.l.s4 1934713408
        %v1808 = vunpack.c.0.s8 %v1807
        %v1809 = vlaneseq
        %v1810 = vshrl.u32 %v1809, 7
        %v1811 = vsub.s32 %v1808, %v1810
        %v1812 = vrot.slane %v1798, %v1811
        %v1813 = vcombine.low %v1757, %v1789
        %v1814 = vcombine.high %v1757, %v1789
        %v1815 = vcombine.low %v1764, %v1796
        %v1816 = vcombine.high %v1764, %v1796
        %v1817 = vcombine.low %v1773, %v1805
        %v1818 = vcombine.high %v1773, %v1805
        %v1819 = vcombine.low %v1780, %v1812
        %v1820 = vcombine.high %v1780, %v1812
        %v1821 = vcombine.low %v273, %v529
        %v1822 = vcombine.high %v273, %v529
        %v1824 = vunpack.c.l.s4 1983009808
        %v1825 = vunpack.c.0.s8 %v1824
        %v1826 = vlaneseq
        %v1827 = vshrl.u32 %v1826, 7
        %v1828 = vsub.s32 %v1825, %v1827
        %v1829 = vrot.slane %v1821, %v1828
        %v1831 = vunpack.c.l.s4 1983009808
        %v1832 = vunpack.c.0.s8 %v1831
        %v1833 = vlaneseq
        %v1834 = vshrl.u32 %v1833, 7
        %v1835 = vsub.s32 %v1832, %v1834
        %v1836 = vrot.slane %v1822, %v1835
        %v1837 = vcombine.low %v401, %v657
        %v1838 = vcombine.high %v401, %v657
        %v1840 = vunpack.c.l.s4 1983009808
        %v1841 = vunpack.c.0.s8 %v1840
        %v1842 = vlaneseq
        %v1843 = vshrl.u32 %v1842, 7
        %v1844 = vsub.s32 %v1841, %v1843
        %v1845 = vrot.slane %v1837, %v1844
        %v1847 = vunpack.c.l.s4 1983009808
        %v1848 = vunpack.c.0.s8 %v1847
        %v1849 = vlaneseq
        %v1850 = vshrl.u32 %v1849, 7
        %v1851 = vsub.s32 %v1848, %v1850
        %v1852 = vrot.slane %v1838, %v1851
        %v1853 = vcombine.low %v785, %v1041
        %v1854 = vcombine.high %v785, %v1041
        %v1856 = vunpack.c.l.s4 1983009808
        %v1857 = vunpack.c.0.s8 %v1856
        %v1858 = vlaneseq
        %v1859 = vshrl.u32 %v1858, 7
        %v1860 = vsub.s32 %v1857, %v1859
        %v1861 = vrot.slane %v1853, %v1860
        %v1863 = vunpack.c.l.s4 1983009808
        %v1864 = vunpack.c.0.s8 %v1863
        %v1865 = vlaneseq
        %v1866 = vshrl.u32 %v1865, 7
        %v1867 = vsub.s32 %v1864, %v1866
        %v1868 = vrot.slane %v1854, %v1867
        %v1869 = vcombine.low %v913, %v1169
        %v1870 = vcombine.high %v913, %v1169
        %v1872 = vunpack.c.l.s4 1983009808
        %v1873 = vunpack.c.0.s8 %v1872
        %v1874 = vlaneseq
        %v1875 = vshrl.u32 %v1874, 7
        %v1876 = vsub.s32 %v1873, %v1875
        %v1877 = vrot.slane %v1869, %v1876
        %v1879 = vunpack.c.l.s4 1983009808
        %v1880 = vunpack.c.0.s8 %v1879
        %v1881 = vlaneseq
        %v1882 = vshrl.u32 %v1881, 7
        %v1883 = vsub.s32 %v1880, %v1882
        %v1884 = vrot.slane %v1870, %v1883
        %v1885 = vcombine.low %v1829, %v1845
        %v1886 = vcombine.high %v1829, %v1845
        %v1888 = vunpack.c.l.s4 1934713408
        %v1889 = vunpack.c.0.s8 %v1888
        %v1890 = vlaneseq
        %v1891 = vshrl.u32 %v1890, 7
        %v1892 = vsub.s32 %v1889, %v1891
        %v1893 = vrot.slane %v1885, %v1892
        %v1895 = vunpack.c.l.s4 1934713408
        %v1896 = vunpack.c.0.s8 %v1895
        %v1897 = vlaneseq
        %v1898 = vshrl.u32 %v1897, 7
        %v1899 = vsub.s32 %v1896, %v1898
        %v1900 = vrot.slane %v1886, %v1899
        %v1901 = vcombine.low %v1836, %v1852
        %v1902 = vcombine.high %v1836, %v1852
        %v1904 = vunpack.c.l.s4 1934713408
        %v1905 = vunpack.c.0.s8 %v1904
        %v1906 = vlaneseq
        %v1907 = vshrl.u32 %v1906, 7
        %v1908 = vsub.s32 %v1905, %v1907
        %v1909 = vrot.slane %v1901, %v1908
        %v1911 = vunpack.c.l.s4 1934713408
        %v1912 = vunpack.c.0.s8 %v1911
        %v1913 = vlaneseq
        %v1914 = vshrl.u32 %v1913, 7
        %v1915 = vsub.s32 %v1912, %v1914
        %v1916 = vrot.slane %v1902, %v1915
        %v1917 = vcombine.low %v1861, %v1877
        %v1918 = vcombine.high %v1861, %v1877
        %v1920 = vunpack.c.l.s4 1934713408
        %v1921 = vunpack.c.0.s8 %v1920
        %v1922 = vlaneseq
        %v1923 = vshrl.u32 %v1922, 7
        %v1924 = vsub.s32 %v1921, %v1923
        %v1925 = vrot.slane %v1917, %v1924
        %v1927 = vunpack.c.l.s4 1934713408
        %v1928 = vunpack.c.0.s8 %v1927
        %v1929 = vlaneseq
        %v1930 = vshrl.u32 %v1929, 7
        %v1931 = vsub.s32 %v1928, %v1930
        %v1932 = vrot.slane %v1918, %v1931
        %v1933 = vcombine.low %v1868, %v1884
        %v1934 = vcombine.high %v1868, %v1884
        %v1936 = vunpack.c.l.s4 1934713408
        %v1937 = vunpack.c.0.s8 %v1936
        %v1938 = vlaneseq
        %v1939 = vshrl.u32 %v1938, 7
        %v1940 = vsub.s32 %v1937, %v1939
        %v1941 = vrot.slane %v1933, %v1940
        %v1943 = vunpack.c.l.s4 1934713408
        %v1944 = vunpack.c.0.s8 %v1943
        %v1945 = vlaneseq
        %v1946 = vshrl.u32 %v1945, 7
        %v1947 = vsub.s32 %v1944, %v1946
        %v1948 = vrot.slane %v1934, %v1947
        %v1949 = vcombine.low %v1893, %v1925
        %v1950 = vcombine.high %v1893, %v1925
        %v1951 = vcombine.low %v1900, %v1932
        %v1952 = vcombine.high %v1900, %v1932
        %v1953 = vcombine.low %v1909, %v1941
        %v1954 = vcombine.high %v1909, %v1941
        %v1955 = vcombine.low %v1916, %v1948
        %v1956 = vcombine.high %v1916, %v1948
        %v1957 = vcombine.low %v274, %v530
        %v1958 = vcombine.high %v274, %v530
        %v1960 = vunpack.c.l.s4 1983009808
        %v1961 = vunpack.c.0.s8 %v1960
        %v1962 = vlaneseq
        %v1963 = vshrl.u32 %v1962, 7
        %v1964 = vsub.s32 %v1961, %v1963
        %v1965 = vrot.slane %v1957, %v1964
        %v1967 = vunpack.c.l.s4 1983009808
        %v1968 = vunpack.c.0.s8 %v1967
        %v1969 = vlaneseq
        %v1970 = vshrl.u32 %v1969, 7
        %v1971 = vsub.s32 %v1968, %v1970
        %v1972 = vrot.slane %v1958, %v1971
        %v1973 = vcombine.low %v402, %v658
        %v1974 = vcombine.high %v402, %v658
        %v1976 = vunpack.c.l.s4 1983009808
        %v1977 = vunpack.c.0.s8 %v1976
        %v1978 = vlaneseq
        %v1979 = vshrl.u32 %v1978, 7
        %v1980 = vsub.s32 %v1977, %v1979
        %v1981 = vrot.slane %v1973, %v1980
        %v1983 = vunpack.c.l.s4 1983009808
        %v1984 = vunpack.c.0.s8 %v1983
        %v1985 = vlaneseq
        %v1986 = vshrl.u32 %v1985, 7
        %v1987 = vsub.s32 %v1984, %v1986
        %v1988 = vrot.slane %v1974, %v1987
        %v1989 = vcombine.low %v786, %v1042
        %v1990 = vcombine.high %v786, %v1042
        %v1992 = vunpack.c.l.s4 1983009808
        %v1993 = vunpack.c.0.s8 %v1992
        %v1994 = vlaneseq
        %v1995 = vshrl.u32 %v1994, 7
        %v1996 = vsub.s32 %v1993, %v1995
        %v1997 = vrot.slane %v1989, %v1996
        %v1999 = vunpack.c.l.s4 1983009808
        %v2000 = vunpack.c.0.s8 %v1999
        %v2001 = vlaneseq
        %v2002 = vshrl.u32 %v2001, 7
        %v2003 = vsub.s32 %v2000, %v2002
        %v2004 = vrot.slane %v1990, %v2003
        %v2005 = vcombine.low %v914, %v1170
        %v2006 = vcombine.high %v914, %v1170
        %v2008 = vunpack.c.l.s4 1983009808
        %v2009 = vunpack.c.0.s8 %v2008
        %v2010 = vlaneseq
        %v2011 = vshrl.u32 %v2010, 7
        %v2012 = vsub.s32 %v2009, %v2011
        %v2013 = vrot.slane %v2005, %v2012
        %v2015 = vunpack.c.l.s4 1983009808
        %v2016 = vunpack.c.0.s8 %v2015
        %v2017 = vlaneseq
        %v2018 = vshrl.u32 %v2017, 7
        %v2019 = vsub.s32 %v2016, %v2018
        %v2020 = vrot.slane %v2006, %v2019
        %v2021 = vcombine.low %v1965, %v1981
        %v2022 = vcombine.high %v1965, %v1981
        %v2024 = vunpack.c.l.s4 1934713408
        %v2025 = vunpack.c.0.s8 %v2024
        %v2026 = vlaneseq
        %v2027 = vshrl.u32 %v2026, 7
        %v2028 = vsub.s32 %v2025, %v2027
        %v2029 = vrot.slane %v2021, %v2028
        %v2031 = vunpack.c.l.s4 1934713408
        %v2032 = vunpack.c.0.s8 %v2031
        %v2033 = vlaneseq
        %v2034 = vshrl.u32 %v2033, 7
        %v2035 = vsub.s32 %v2032, %v2034
        %v2036 = vrot.slane %v2022, %v2035
        %v2037 = vcombine.low %v1972, %v1988
        %v2038 = vcombine.high %v1972, %v1988
        %v2040 = vunpack.c.l.s4 1934713408
        %v2041 = vunpack.c.0.s8 %v2040
        %v2042 = vlaneseq
        %v2043 = vshrl.u32 %v2042, 7
        %v2044 = vsub.s32 %v2041, %v2043
        %v2045 = vrot.slane %v2037, %v2044
        %v2047 = vunpack.c.l.s4 1934713408
        %v2048 = vunpack.c.0.s8 %v2047
        %v2049 = vlaneseq
        %v2050 = vshrl.u32 %v2049, 7
        %v2051 = vsub.s32 %v2048, %v2050
        %v2052 = vrot.slane %v2038, %v2051
        %v2053 = vcombine.low %v1997, %v2013
        %v2054 = vcombine.high %v1997, %v2013
        %v2056 = vunpack.c.l.s4 1934713408
        %v2057 = vunpack.c.0.s8 %v2056
        %v2058 = vlaneseq
        %v2059 = vshrl.u32 %v2058, 7
        %v2060 = vsub.s32 %v2057, %v2059
        %v2061 = vrot.slane %v2053, %v2060
        %v2063 = vunpack.c.l.s4 1934713408
        %v2064 = vunpack.c.0.s8 %v2063
        %v2065 = vlaneseq
        %v2066 = vshrl.u32 %v2065, 7
        %v2067 = vsub.s32 %v2064, %v2066
        %v2068 = vrot.slane %v2054, %v2067
        %v2069 = vcombine.low %v2004, %v2020
        %v2070 = vcombine.high %v2004, %v2020
        %v2072 = vunpack.c.l.s4 1934713408
        %v2073 = vunpack.c.0.s8 %v2072
        %v2074 = vlaneseq
        %v2075 = vshrl.u32 %v2074, 7
        %v2076 = vsub.s32 %v2073, %v2075
        %v2077 = vrot.slane %v2069, %v2076
        %v2079 = vunpack.c.l.s4 1934713408
        %v2080 = vunpack.c.0.s8 %v2079
        %v2081 = vlaneseq
        %v2082 = vshrl.u32 %v2081, 7
        %v2083 = vsub.s32 %v2080, %v2082
        %v2084 = vrot.slane %v2070, %v2083
        %v2085 = vcombine.low %v2029, %v2061
        %v2086 = vcombine.high %v2029, %v2061
        %v2087 = vcombine.low %v2036, %v2068
        %v2088 = vcombine.high %v2036, %v2068
        %v2089 = vcombine.low %v2045, %v2077
        %v2090 = vcombine.high %v2045, %v2077
        %v2091 = vcombine.low %v2052, %v2084
        %v2092 = vcombine.high %v2052, %v2084
        %v2093 = vcombine.low %v275, %v531
        %v2094 = vcombine.high %v275, %v531
        %v2096 = vunpack.c.l.s4 1983009808
        %v2097 = vunpack.c.0.s8 %v2096
        %v2098 = vlaneseq
        %v2099 = vshrl.u32 %v2098, 7
        %v2100 = vsub.s32 %v2097, %v2099
        %v2101 = vrot.slane %v2093, %v2100
        %v2103 = vunpack.c.l.s4 1983009808
        %v2104 = vunpack.c.0.s8 %v2103
        %v2105 = vlaneseq
        %v2106 = vshrl.u32 %v2105, 7
        %v2107 = vsub.s32 %v2104, %v2106
        %v2108 = vrot.slane %v2094, %v2107
        %v2109 = vcombine.low %v403, %v659
        %v2110 = vcombine.high %v403, %v659
        %v2112 = vunpack.c.l.s4 1983009808
        %v2113 = vunpack.c.0.s8 %v2112
        %v2114 = vlaneseq
        %v2115 = vshrl.u32 %v2114, 7
        %v2116 = vsub.s32 %v2113, %v2115
        %v2117 = vrot.slane %v2109, %v2116
        %v2119 = vunpack.c.l.s4 1983009808
        %v2120 = vunpack.c.0.s8 %v2119
        %v2121 = vlaneseq
        %v2122 = vshrl.u32 %v2121, 7
        %v2123 = vsub.s32 %v2120, %v2122
        %v2124 = vrot.slane %v2110, %v2123
        %v2125 = vcombine.low %v787, %v1043
        %v2126 = vcombine.high %v787, %v1043
        %v2128 = vunpack.c.l.s4 1983009808
        %v2129 = vunpack.c.0.s8 %v2128
        %v2130 = vlaneseq
        %v2131 = vshrl.u32 %v2130, 7
        %v2132 = vsub.s32 %v2129, %v2131
        %v2133 = vrot.slane %v2125, %v2132
        %v2135 = vunpack.c.l.s4 1983009808
        %v2136 = vunpack.c.0.s8 %v2135
        %v2137 = vlaneseq
        %v2138 = vshrl.u32 %v2137, 7
        %v2139 = vsub.s32 %v2136, %v2138
        %v2140 = vrot.slane %v2126, %v2139
        %v2141 = vcombine.low %v915, %v1171
        %v2142 = vcombine.high %v915, %v1171
        %v2144 = vunpack.c.l.s4 1983009808
        %v2145 = vunpack.c.0.s8 %v2144
        %v2146 = vlaneseq
        %v2147 = vshrl.u32 %v2146, 7
        %v2148 = vsub.s32 %v2145, %v2147
        %v2149 = vrot.slane %v2141, %v2148
        %v2151 = vunpack.c.l.s4 1983009808
        %v2152 = vunpack.c.0.s8 %v2151
        %v2153 = vlaneseq
        %v2154 = vshrl.u32 %v2153, 7
        %v2155 = vsub.s32 %v2152, %v2154
        %v2156 = vrot.slane %v2142, %v2155
        %v2157 = vcombine.low %v2101, %v2117
        %v2158 = vcombine.high %v2101, %v2117
        %v2160 = vunpack.c.l.s4 1934713408
        %v2161 = vunpack.c.0.s8 %v2160
        %v2162 = vlaneseq
        %v2163 = vshrl.u32 %v2162, 7
        %v2164 = vsub.s32 %v2161, %v2163
        %v2165 = vrot.slane %v2157, %v2164
        %v2167 = vunpack.c.l.s4 1934713408
        %v2168 = vunpack.c.0.s8 %v2167
        %v2169 = vlaneseq
        %v2170 = vshrl.u32 %v2169, 7
        %v2171 = vsub.s32 %v2168, %v2170
        %v2172 = vrot.slane %v2158, %v2171
        %v2173 = vcombine.low %v2108, %v2124
        %v2174 = vcombine.high %v2108, %v2124
        %v2176 = vunpack.c.l.s4 1934713408
        %v2177 = vunpack.c.0.s8 %v2176
        %v2178 = vlaneseq
        %v2179 = vshrl.u32 %v2178, 7
        %v2180 = vsub.s32 %v2177, %v2179
        %v2181 = vrot.slane %v2173, %v2180
        %v2183 = vunpack.c.l.s4 1934713408
        %v2184 = vunpack.c.0.s8 %v2183
        %v2185 = vlaneseq
        %v2186 = vshrl.u32 %v2185, 7
        %v2187 = vsub.s32 %v2184, %v2186
        %v2188 = vrot.slane %v2174, %v2187
        %v2189 = vcombine.low %v2133, %v2149
        %v2190 = vcombine.high %v2133, %v2149
        %v2192 = vunpack.c.l.s4 1934713408
        %v2193 = vunpack.c.0.s8 %v2192
        %v2194 = vlaneseq
        %v2195 = vshrl.u32 %v2194, 7
        %v2196 = vsub.s32 %v2193, %v2195
        %v2197 = vrot.slane %v2189, %v2196
        %v2199 = vunpack.c.l.s4 1934713408
        %v2200 = vunpack.c.0.s8 %v2199
        %v2201 = vlaneseq
        %v2202 = vshrl.u32 %v2201, 7
        %v2203 = vsub.s32 %v2200, %v2202
        %v2204 = vrot.slane %v2190, %v2203
        %v2205 = vcombine.low %v2140, %v2156
        %v2206 = vcombine.high %v2140, %v2156
        %v2208 = vunpack.c.l.s4 1934713408
        %v2209 = vunpack.c.0.s8 %v2208
        %v2210 = vlaneseq
        %v2211 = vshrl.u32 %v2210, 7
        %v2212 = vsub.s32 %v2209, %v2211
        %v2213 = vrot.slane %v2205, %v2212
        %v2215 = vunpack.c.l.s4 1934713408
        %v2216 = vunpack.c.0.s8 %v2215
        %v2217 = vlaneseq
        %v2218 = vshrl.u32 %v2217, 7
        %v2219 = vsub.s32 %v2216, %v2218
        %v2220 = vrot.slane %v2206, %v2219
        %v2221 = vcombine.low %v2165, %v2197
        %v2222 = vcombine.high %v2165, %v2197
        %v2223 = vcombine.low %v2172, %v2204
        %v2224 = vcombine.high %v2172, %v2204
        %v2225 = vcombine.low %v2181, %v2213
        %v2226 = vcombine.high %v2181, %v2213
        %v2227 = vcombine.low %v2188, %v2220
        %v2228 = vcombine.high %v2188, %v2220
        %v2229 = vcombine.low %v276, %v532
        %v2230 = vcombine.high %v276, %v532
        %v2232 = vunpack.c.l.s4 1983009808
        %v2233 = vunpack.c.0.s8 %v2232
        %v2234 = vlaneseq
        %v2235 = vshrl.u32 %v2234, 7
        %v2236 = vsub.s32 %v2233, %v2235
        %v2237 = vrot.slane %v2229, %v2236
        %v2239 = vunpack.c.l.s4 1983009808
        %v2240 = vunpack.c.0.s8 %v2239
        %v2241 = vlaneseq
        %v2242 = vshrl.u32 %v2241, 7
        %v2243 = vsub.s32 %v2240, %v2242
        %v2244 = vrot.slane %v2230, %v2243
        %v2245 = vcombine.low %v404, %v660
        %v2246 = vcombine.high %v404, %v660
        %v2248 = vunpack.c.l.s4 1983009808
        %v2249 = vunpack.c.0.s8 %v2248
        %v2250 = vlaneseq
        %v2251 = vshrl.u32 %v2250, 7
        %v2252 = vsub.s32 %v2249, %v2251
        %v2253 = vrot.slane %v2245, %v2252
        %v2255 = vunpack.c.l.s4 1983009808
        %v2256 = vunpack.c.0.s8 %v2255
        %v2257 = vlaneseq
        %v2258 = vshrl.u32 %v2257, 7
        %v2259 = vsub.s32 %v2256, %v2258
        %v2260 = vrot.slane %v2246, %v2259
        %v2261 = vcombine.low %v788, %v1044
        %v2262 = vcombine.high %v788, %v1044
        %v2264 = vunpack.c.l.s4 1983009808
        %v2265 = vunpack.c.0.s8 %v2264
        %v2266 = vlaneseq
        %v2267 = vshrl.u32 %v2266, 7
        %v2268 = vsub.s32 %v2265, %v2267
        %v2269 = vrot.slane %v2261, %v2268
        %v2271 = vunpack.c.l.s4 1983009808
        %v2272 = vunpack.c.0.s8 %v2271
        %v2273 = vlaneseq
        %v2274 = vshrl.u32 %v2273, 7
        %v2275 = vsub.s32 %v2272, %v2274
        %v2276 = vrot.slane %v2262, %v2275
        %v2277 = vcombine.low %v916, %v1172
        %v2278 = vcombine.high %v916, %v1172
        %v2280 = vunpack.c.l.s4 1983009808
        %v2281 = vunpack.c.0.s8 %v2280
        %v2282 = vlaneseq
        %v2283 = vshrl.u32 %v2282, 7
        %v2284 = vsub.s32 %v2281, %v2283
        %v2285 = vrot.slane %v2277, %v2284
        %v2287 = vunpack.c.l.s4 1983009808
        %v2288 = vunpack.c.0.s8 %v2287
        %v2289 = vlaneseq
        %v2290 = vshrl.u32 %v2289, 7
        %v2291 = vsub.s32 %v2288, %v2290
        %v2292 = vrot.slane %v2278, %v2291
        %v2293 = vcombine.low %v2237, %v2253
        %v2294 = vcombine.high %v2237, %v2253
        %v2296 = vunpack.c.l.s4 1934713408
        %v2297 = vunpack.c.0.s8 %v2296
        %v2298 = vlaneseq
        %v2299 = vshrl.u32 %v2298, 7
        %v2300 = vsub.s32 %v2297, %v2299
        %v2301 = vrot.slane %v2293, %v2300
        %v2303 = vunpack.c.l.s4 1934713408
        %v2304 = vunpack.c.0.s8 %v2303
        %v2305 = vlaneseq
        %v2306 = vshrl.u32 %v2305, 7
        %v2307 = vsub.s32 %v2304, %v2306
        %v2308 = vrot.slane %v2294, %v2307
        %v2309 = vcombine.low %v2244, %v2260
        %v2310 = vcombine.high %v2244, %v2260
        %v2312 = vunpack.c.l.s4 1934713408
        %v2313 = vunpack.c.0.s8 %v2312
        %v2314 = vlaneseq
        %v2315 = vshrl.u32 %v2314, 7
        %v2316 = vsub.s32 %v2313, %v2315
        %v2317 = vrot.slane %v2309, %v2316
        %v2319 = vunpack.c.l.s4 1934713408
        %v2320 = vunpack.c.0.s8 %v2319
        %v2321 = vlaneseq
        %v2322 = vshrl.u32 %v2321, 7
        %v2323 = vsub.s32 %v2320, %v2322
        %v2324 = vrot.slane %v2310, %v2323
        %v2325 = vcombine.low %v2269, %v2285
        %v2326 = vcombine.high %v2269, %v2285
        %v2328 = vunpack.c.l.s4 1934713408
        %v2329 = vunpack.c.0.s8 %v2328
        %v2330 = vlaneseq
        %v2331 = vshrl.u32 %v2330, 7
        %v2332 = vsub.s32 %v2329, %v2331
        %v2333 = vrot.slane %v2325, %v2332
        %v2335 = vunpack.c.l.s4 1934713408
        %v2336 = vunpack.c.0.s8 %v2335
        %v2337 = vlaneseq
        %v2338 = vshrl.u32 %v2337, 7
        %v2339 = vsub.s32 %v2336, %v2338
        %v2340 = vrot.slane %v2326, %v2339
        %v2341 = vcombine.low %v2276, %v2292
        %v2342 = vcombine.high %v2276, %v2292
        %v2344 = vunpack.c.l.s4 1934713408
        %v2345 = vunpack.c.0.s8 %v2344
        %v2346 = vlaneseq
        %v2347 = vshrl.u32 %v2346, 7
        %v2348 = vsub.s32 %v2345, %v2347
        %v2349 = vrot.slane %v2341, %v2348
        %v2351 = vunpack.c.l.s4 1934713408
        %v2352 = vunpack.c.0.s8 %v2351
        %v2353 = vlaneseq
        %v2354 = vshrl.u32 %v2353, 7
        %v2355 = vsub.s32 %v2352, %v2354
        %v2356 = vrot.slane %v2342, %v2355
        %v2357 = vcombine.low %v2301, %v2333
        %v2358 = vcombine.high %v2301, %v2333
        %v2359 = vcombine.low %v2308, %v2340
        %v2360 = vcombine.high %v2308, %v2340
        %v2361 = vcombine.low %v2317, %v2349
        %v2362 = vcombine.high %v2317, %v2349
        %v2363 = vcombine.low %v2324, %v2356
        %v2364 = vcombine.high %v2324, %v2356
        %v2365 = vcombine.low %v277, %v533
        %v2366 = vcombine.high %v277, %v533
        %v2368 = vunpack.c.l.s4 1983009808
        %v2369 = vunpack.c.0.s8 %v2368
        %v2370 = vlaneseq
        %v2371 = vshrl.u32 %v2370, 7
        %v2372 = vsub.s32 %v2369, %v2371
        %v2373 = vrot.slane %v2365, %v2372
        %v2375 = vunpack.c.l.s4 1983009808
        %v2376 = vunpack.c.0.s8 %v2375
        %v2377 = vlaneseq
        %v2378 = vshrl.u32 %v2377, 7
        %v2379 = vsub.s32 %v2376, %v2378
        %v2380 = vrot.slane %v2366, %v2379
        %v2381 = vcombine.low %v405, %v661
        %v2382 = vcombine.high %v405, %v661
        %v2384 = vunpack.c.l.s4 1983009808
        %v2385 = vunpack.c.0.s8 %v2384
        %v2386 = vlaneseq
        %v2387 = vshrl.u32 %v2386, 7
        %v2388 = vsub.s32 %v2385, %v2387
        %v2389 = vrot.slane %v2381, %v2388
        %v2391 = vunpack.c.l.s4 1983009808
        %v2392 = vunpack.c.0.s8 %v2391
        %v2393 = vlaneseq
        %v2394 = vshrl.u32 %v2393, 7
        %v2395 = vsub.s32 %v2392, %v2394
        %v2396 = vrot.slane %v2382, %v2395
        %v2397 = vcombine.low %v789, %v1045
        %v2398 = vcombine.high %v789, %v1045
        %v2400 = vunpack.c.l.s4 1983009808
        %v2401 = vunpack.c.0.s8 %v2400
        %v2402 = vlaneseq
        %v2403 = vshrl.u32 %v2402, 7
        %v2404 = vsub.s32 %v2401, %v2403
        %v2405 = vrot.slane %v2397, %v2404
        %v2407 = vunpack.c.l.s4 1983009808
        %v2408 = vunpack.c.0.s8 %v2407
        %v2409 = vlaneseq
        %v2410 = vshrl.u32 %v2409, 7
        %v2411 = vsub.s32 %v2408, %v2410
        %v2412 = vrot.slane %v2398, %v2411
        %v2413 = vcombine.low %v917, %v1173
        %v2414 = vcombine.high %v917, %v1173
        %v2416 = vunpack.c.l.s4 1983009808
        %v2417 = vunpack.c.0.s8 %v2416
        %v2418 = vlaneseq
        %v2419 = vshrl.u32 %v2418, 7
        %v2420 = vsub.s32 %v2417, %v2419
        %v2421 = vrot.slane %v2413, %v2420
        %v2423 = vunpack.c.l.s4 1983009808
        %v2424 = vunpack.c.0.s8 %v2423
        %v2425 = vlaneseq
        %v2426 = vshrl.u32 %v2425, 7
        %v2427 = vsub.s32 %v2424, %v2426
        %v2428 = vrot.slane %v2414, %v2427
        %v2429 = vcombine.low %v2373, %v2389
        %v2430 = vcombine.high %v2373, %v2389
        %v2432 = vunpack.c.l.s4 1934713408
        %v2433 = vunpack.c.0.s8 %v2432
        %v2434 = vlaneseq
        %v2435 = vshrl.u32 %v2434, 7
        %v2436 = vsub.s32 %v2433, %v2435
        %v2437 = vrot.slane %v2429, %v2436
        %v2439 = vunpack.c.l.s4 1934713408
        %v2440 = vunpack.c.0.s8 %v2439
        %v2441 = vlaneseq
        %v2442 = vshrl.u32 %v2441, 7
        %v2443 = vsub.s32 %v2440, %v2442
        %v2444 = vrot.slane %v2430, %v2443
        %v2445 = vcombine.low %v2380, %v2396
        %v2446 = vcombine.high %v2380, %v2396
        %v2448 = vunpack.c.l.s4 1934713408
        %v2449 = vunpack.c.0.s8 %v2448
        %v2450 = vlaneseq
        %v2451 = vshrl.u32 %v2450, 7
        %v2452 = vsub.s32 %v2449, %v2451
        %v2453 = vrot.slane %v2445, %v2452
        %v2455 = vunpack.c.l.s4 1934713408
        %v2456 = vunpack.c.0.s8 %v2455
        %v2457 = vlaneseq
        %v2458 = vshrl.u32 %v2457, 7
        %v2459 = vsub.s32 %v2456, %v2458
        %v2460 = vrot.slane %v2446, %v2459
        %v2461 = vcombine.low %v2405, %v2421
        %v2462 = vcombine.high %v2405, %v2421
        %v2464 = vunpack.c.l.s4 1934713408
        %v2465 = vunpack.c.0.s8 %v2464
        %v2466 = vlaneseq
        %v2467 = vshrl.u32 %v2466, 7
        %v2468 = vsub.s32 %v2465, %v2467
        %v2469 = vrot.slane %v2461, %v2468
        %v2471 = vunpack.c.l.s4 1934713408
        %v2472 = vunpack.c.0.s8 %v2471
        %v2473 = vlaneseq
        %v2474 = vshrl.u32 %v2473, 7
        %v2475 = vsub.s32 %v2472, %v2474
        %v2476 = vrot.slane %v2462, %v2475
        %v2477 = vcombine.low %v2412, %v2428
        %v2478 = vcombine.high %v2412, %v2428
        %v2480 = vunpack.c.l.s4 1934713408
        %v2481 = vunpack.c.0.s8 %v2480
        %v2482 = vlaneseq
        %v2483 = vshrl.u32 %v2482, 7
        %v2484 = vsub.s32 %v2481, %v2483
        %v2485 = vrot.slane %v2477, %v2484
        %v2487 = vunpack.c.l.s4 1934713408
        %v2488 = vunpack.c.0.s8 %v2487
        %v2489 = vlaneseq
        %v2490 = vshrl.u32 %v2489, 7
        %v2491 = vsub.s32 %v2488, %v2490
        %v2492 = vrot.slane %v2478, %v2491
        %v2493 = vcombine.low %v2437, %v2469
        %v2494 = vcombine.high %v2437, %v2469
        %v2495 = vcombine.low %v2444, %v2476
        %v2496 = vcombine.high %v2444, %v2476
        %v2497 = vcombine.low %v2453, %v2485
        %v2498 = vcombine.high %v2453, %v2485
        %v2499 = vcombine.low %v2460, %v2492
        %v2500 = vcombine.high %v2460, %v2492
        %v2501 = vcombine.low %v278, %v534
        %v2502 = vcombine.high %v278, %v534
        %v2504 = vunpack.c.l.s4 1983009808
        %v2505 = vunpack.c.0.s8 %v2504
        %v2506 = vlaneseq
        %v2507 = vshrl.u32 %v2506, 7
        %v2508 = vsub.s32 %v2505, %v2507
        %v2509 = vrot.slane %v2501, %v2508
        %v2511 = vunpack.c.l.s4 1983009808
        %v2512 = vunpack.c.0.s8 %v2511
        %v2513 = vlaneseq
        %v2514 = vshrl.u32 %v2513, 7
        %v2515 = vsub.s32 %v2512, %v2514
        %v2516 = vrot.slane %v2502, %v2515
        %v2517 = vcombine.low %v406, %v662
        %v2518 = vcombine.high %v406, %v662
        %v2520 = vunpack.c.l.s4 1983009808
        %v2521 = vunpack.c.0.s8 %v2520
        %v2522 = vlaneseq
        %v2523 = vshrl.u32 %v2522, 7
        %v2524 = vsub.s32 %v2521, %v2523
        %v2525 = vrot.slane %v2517, %v2524
        %v2527 = vunpack.c.l.s4 1983009808
        %v2528 = vunpack.c.0.s8 %v2527
        %v2529 = vlaneseq
        %v2530 = vshrl.u32 %v2529, 7
        %v2531 = vsub.s32 %v2528, %v2530
        %v2532 = vrot.slane %v2518, %v2531
        %v2533 = vcombine.low %v790, %v1046
        %v2534 = vcombine.high %v790, %v1046
        %v2536 = vunpack.c.l.s4 1983009808
        %v2537 = vunpack.c.0.s8 %v2536
        %v2538 = vlaneseq
        %v2539 = vshrl.u32 %v2538, 7
        %v2540 = vsub.s32 %v2537, %v2539
        %v2541 = vrot.slane %v2533, %v2540
        %v2543 = vunpack.c.l.s4 1983009808
        %v2544 = vunpack.c.0.s8 %v2543
        %v2545 = vlaneseq
        %v2546 = vshrl.u32 %v2545, 7
        %v2547 = vsub.s32 %v2544, %v2546
        %v2548 = vrot.slane %v2534, %v2547
        %v2549 = vcombine.low %v918, %v1174
        %v2550 = vcombine.high %v918, %v1174
        %v2552 = vunpack.c.l.s4 1983009808
        %v2553 = vunpack.c.0.s8 %v2552
        %v2554 = vlaneseq
        %v2555 = vshrl.u32 %v2554, 7
        %v2556 = vsub.s32 %v2553, %v2555
        %v2557 = vrot.slane %v2549, %v2556
        %v2559 = vunpack.c.l.s4 1983009808
        %v2560 = vunpack.c.0.s8 %v2559
        %v2561 = vlaneseq
        %v2562 = vshrl.u32 %v2561, 7
        %v2563 = vsub.s32 %v2560, %v2562
        %v2564 = vrot.slane %v2550, %v2563
        %v2565 = vcombine.low %v2509, %v2525
        %v2566 = vcombine.high %v2509, %v2525
        %v2568 = vunpack.c.l.s4 1934713408
        %v2569 = vunpack.c.0.s8 %v2568
        %v2570 = vlaneseq
        %v2571 = vshrl.u32 %v2570, 7
        %v2572 = vsub.s32 %v2569, %v2571
        %v2573 = vrot.slane %v2565, %v2572
        %v2575 = vunpack.c.l.s4 1934713408
        %v2576 = vunpack.c.0.s8 %v2575
        %v2577 = vlaneseq
        %v2578 = vshrl.u32 %v2577, 7
        %v2579 = vsub.s32 %v2576, %v2578
        %v2580 = vrot.slane %v2566, %v2579
        %v2581 = vcombine.low %v2516, %v2532
        %v2582 = vcombine.high %v2516, %v2532
        %v2584 = vunpack.c.l.s4 1934713408
        %v2585 = vunpack.c.0.s8 %v2584
        %v2586 = vlaneseq
        %v2587 = vshrl.u32 %v2586, 7
        %v2588 = vsub.s32 %v2585, %v2587
        %v2589 = vrot.slane %v2581, %v2588
        %v2591 = vunpack.c.l.s4 1934713408
        %v2592 = vunpack.c.0.s8 %v2591
        %v2593 = vlaneseq
        %v2594 = vshrl.u32 %v2593, 7
        %v2595 = vsub.s32 %v2592, %v2594
        %v2596 = vrot.slane %v2582, %v2595
        %v2597 = vcombine.low %v2541, %v2557
        %v2598 = vcombine.high %v2541, %v2557
        %v2600 = vunpack.c.l.s4 1934713408
        %v2601 = vunpack.c.0.s8 %v2600
        %v2602 = vlaneseq
        %v2603 = vshrl.u32 %v2602, 7
        %v2604 = vsub.s32 %v2601, %v2603
        %v2605 = vrot.slane %v2597, %v2604
        %v2607 = vunpack.c.l.s4 1934713408
        %v2608 = vunpack.c.0.s8 %v2607
        %v2609 = vlaneseq
        %v2610 = vshrl.u32 %v2609, 7
        %v2611 = vsub.s32 %v2608, %v2610
        %v2612 = vrot.slane %v2598, %v2611
        %v2613 = vcombine.low %v2548, %v2564
        %v2614 = vcombine.high %v2548, %v2564
        %v2616 = vunpack.c.l.s4 1934713408
        %v2617 = vunpack.c.0.s8 %v2616
        %v2618 = vlaneseq
        %v2619 = vshrl.u32 %v2618, 7
        %v2620 = vsub.s32 %v2617, %v2619
        %v2621 = vrot.slane %v2613, %v2620
        %v2623 = vunpack.c.l.s4 1934713408
        %v2624 = vunpack.c.0.s8 %v2623
        %v2625 = vlaneseq
        %v2626 = vshrl.u32 %v2625, 7
        %v2627 = vsub.s32 %v2624, %v2626
        %v2628 = vrot.slane %v2614, %v2627
        %v2629 = vcombine.low %v2573, %v2605
        %v2630 = vcombine.high %v2573, %v2605
        %v2631 = vcombine.low %v2580, %v2612
        %v2632 = vcombine.high %v2580, %v2612
        %v2633 = vcombine.low %v2589, %v2621
        %v2634 = vcombine.high %v2589, %v2621
        %v2635 = vcombine.low %v2596, %v2628
        %v2636 = vcombine.high %v2596, %v2628
        %v2637 = vcombine.low %v279, %v535
        %v2638 = vcombine.high %v279, %v535
        %v2640 = vunpack.c.l.s4 1983009808
        %v2641 = vunpack.c.0.s8 %v2640
        %v2642 = vlaneseq
        %v2643 = vshrl.u32 %v2642, 7
        %v2644 = vsub.s32 %v2641, %v2643
        %v2645 = vrot.slane %v2637, %v2644
        %v2647 = vunpack.c.l.s4 1983009808
        %v2648 = vunpack.c.0.s8 %v2647
        %v2649 = vlaneseq
        %v2650 = vshrl.u32 %v2649, 7
        %v2651 = vsub.s32 %v2648, %v2650
        %v2652 = vrot.slane %v2638, %v2651
        %v2653 = vcombine.low %v407, %v663
        %v2654 = vcombine.high %v407, %v663
        %v2656 = vunpack.c.l.s4 1983009808
        %v2657 = vunpack.c.0.s8 %v2656
        %v2658 = vlaneseq
        %v2659 = vshrl.u32 %v2658, 7
        %v2660 = vsub.s32 %v2657, %v2659
        %v2661 = vrot.slane %v2653, %v2660
        %v2663 = vunpack.c.l.s4 1983009808
        %v2664 = vunpack.c.0.s8 %v2663
        %v2665 = vlaneseq
        %v2666 = vshrl.u32 %v2665, 7
        %v2667 = vsub.s32 %v2664, %v2666
        %v2668 = vrot.slane %v2654, %v2667
        %v2669 = vcombine.low %v791, %v1047
        %v2670 = vcombine.high %v791, %v1047
        %v2672 = vunpack.c.l.s4 1983009808
        %v2673 = vunpack.c.0.s8 %v2672
        %v2674 = vlaneseq
        %v2675 = vshrl.u32 %v2674, 7
        %v2676 = vsub.s32 %v2673, %v2675
        %v2677 = vrot.slane %v2669, %v2676
        %v2679 = vunpack.c.l.s4 1983009808
        %v2680 = vunpack.c.0.s8 %v2679
        %v2681 = vlaneseq
        %v2682 = vshrl.u32 %v2681, 7
        %v2683 = vsub.s32 %v2680, %v2682
        %v2684 = vrot.slane %v2670, %v2683
        %v2685 = vcombine.low %v919, %v1175
        %v2686 = vcombine.high %v919, %v1175
        %v2688 = vunpack.c.l.s4 1983009808
        %v2689 = vunpack.c.0.s8 %v2688
        %v2690 = vlaneseq
        %v2691 = vshrl.u32 %v2690, 7
        %v2692 = vsub.s32 %v2689, %v2691
        %v2693 = vrot.slane %v2685, %v2692
        %v2695 = vunpack.c.l.s4 1983009808
        %v2696 = vunpack.c.0.s8 %v2695
        %v2697 = vlaneseq
        %v2698 = vshrl.u32 %v2697, 7
        %v2699 = vsub.s32 %v2696, %v2698
        %v2700 = vrot.slane %v2686, %v2699
        %v2701 = vcombine.low %v2645, %v2661
        %v2702 = vcombine.high %v2645, %v2661
        %v2704 = vunpack.c.l.s4 1934713408
        %v2705 = vunpack.c.0.s8 %v2704
        %v2706 = vlaneseq
        %v2707 = vshrl.u32 %v2706, 7
        %v2708 = vsub.s32 %v2705, %v2707
        %v2709 = vrot.slane %v2701, %v2708
        %v2711 = vunpack.c.l.s4 1934713408
        %v2712 = vunpack.c.0.s8 %v2711
        %v2713 = vlaneseq
        %v2714 = vshrl.u32 %v2713, 7
        %v2715 = vsub.s32 %v2712, %v2714
        %v2716 = vrot.slane %v2702, %v2715
        %v2717 = vcombine.low %v2652, %v2668
        %v2718 = vcombine.high %v2652, %v2668
        %v2720 = vunpack.c.l.s4 1934713408
        %v2721 = vunpack.c.0.s8 %v2720
        %v2722 = vlaneseq
        %v2723 = vshrl.u32 %v2722, 7
        %v2724 = vsub.s32 %v2721, %v2723
        %v2725 = vrot.slane %v2717, %v2724
        %v2727 = vunpack.c.l.s4 1934713408
        %v2728 = vunpack.c.0.s8 %v2727
        %v2729 = vlaneseq
        %v2730 = vshrl.u32 %v2729, 7
        %v2731 = vsub.s32 %v2728, %v2730
        %v2732 = vrot.slane %v2718, %v2731
        %v2733 = vcombine.low %v2677, %v2693
        %v2734 = vcombine.high %v2677, %v2693
        %v2736 = vunpack.c.l.s4 1934713408
        %v2737 = vunpack.c.0.s8 %v2736
        %v2738 = vlaneseq
        %v2739 = vshrl.u32 %v2738, 7
        %v2740 = vsub.s32 %v2737, %v2739
        %v2741 = vrot.slane %v2733, %v2740
        %v2743 = vunpack.c.l.s4 1934713408
        %v2744 = vunpack.c.0.s8 %v2743
        %v2745 = vlaneseq
        %v2746 = vshrl.u32 %v2745, 7
        %v2747 = vsub.s32 %v2744, %v2746
        %v2748 = vrot.slane %v2734, %v2747
        %v2749 = vcombine.low %v2684, %v2700
        %v2750 = vcombine.high %v2684, %v2700
        %v2752 = vunpack.c.l.s4 1934713408
        %v2753 = vunpack.c.0.s8 %v2752
        %v2754 = vlaneseq
        %v2755 = vshrl.u32 %v2754, 7
        %v2756 = vsub.s32 %v2753, %v2755
        %v2757 = vrot.slane %v2749, %v2756
        %v2759 = vunpack.c.l.s4 1934713408
        %v2760 = vunpack.c.0.s8 %v2759
        %v2761 = vlaneseq
        %v2762 = vshrl.u32 %v2761, 7
        %v2763 = vsub.s32 %v2760, %v2762
        %v2764 = vrot.slane %v2750, %v2763
        %v2765 = vcombine.low %v2709, %v2741
        %v2766 = vcombine.high %v2709, %v2741
        %v2767 = vcombine.low %v2716, %v2748
        %v2768 = vcombine.high %v2716, %v2748
        %v2769 = vcombine.low %v2725, %v2757
        %v2770 = vcombine.high %v2725, %v2757
        %v2771 = vcombine.low %v2732, %v2764
        %v2772 = vcombine.high %v2732, %v2764
        %v2773 = vcombine.low %v280, %v536
        %v2774 = vcombine.high %v280, %v536
        %v2776 = vunpack.c.l.s4 1983009808
        %v2777 = vunpack.c.0.s8 %v2776
        %v2778 = vlaneseq
        %v2779 = vshrl.u32 %v2778, 7
        %v2780 = vsub.s32 %v2777, %v2779
        %v2781 = vrot.slane %v2773, %v2780
        %v2783 = vunpack.c.l.s4 1983009808
        %v2784 = vunpack.c.0.s8 %v2783
        %v2785 = vlaneseq
        %v2786 = vshrl.u32 %v2785, 7
        %v2787 = vsub.s32 %v2784, %v2786
        %v2788 = vrot.slane %v2774, %v2787
        %v2789 = vcombine.low %v408, %v664
        %v2790 = vcombine.high %v408, %v664
        %v2792 = vunpack.c.l.s4 1983009808
        %v2793 = vunpack.c.0.s8 %v2792
        %v2794 = vlaneseq
        %v2795 = vshrl.u32 %v2794, 7
        %v2796 = vsub.s32 %v2793, %v2795
        %v2797 = vrot.slane %v2789, %v2796
        %v2799 = vunpack.c.l.s4 1983009808
        %v2800 = vunpack.c.0.s8 %v2799
        %v2801 = vlaneseq
        %v2802 = vshrl.u32 %v2801, 7
        %v2803 = vsub.s32 %v2800, %v2802
        %v2804 = vrot.slane %v2790, %v2803
        %v2805 = vcombine.low %v792, %v1048
        %v2806 = vcombine.high %v792, %v1048
        %v2808 = vunpack.c.l.s4 1983009808
        %v2809 = vunpack.c.0.s8 %v2808
        %v2810 = vlaneseq
        %v2811 = vshrl.u32 %v2810, 7
        %v2812 = vsub.s32 %v2809, %v2811
        %v2813 = vrot.slane %v2805, %v2812
        %v2815 = vunpack.c.l.s4 1983009808
        %v2816 = vunpack.c.0.s8 %v2815
        %v2817 = vlaneseq
        %v2818 = vshrl.u32 %v2817, 7
        %v2819 = vsub.s32 %v2816, %v2818
        %v2820 = vrot.slane %v2806, %v2819
        %v2821 = vcombine.low %v920, %v1176
        %v2822 = vcombine.high %v920, %v1176
        %v2824 = vunpack.c.l.s4 1983009808
        %v2825 = vunpack.c.0.s8 %v2824
        %v2826 = vlaneseq
        %v2827 = vshrl.u32 %v2826, 7
        %v2828 = vsub.s32 %v2825, %v2827
        %v2829 = vrot.slane %v2821, %v2828
        %v2831 = vunpack.c.l.s4 1983009808
        %v2832 = vunpack.c.0.s8 %v2831
        %v2833 = vlaneseq
        %v2834 = vshrl.u32 %v2833, 7
        %v2835 = vsub.s32 %v2832, %v2834
        %v2836 = vrot.slane %v2822, %v2835
        %v2837 = vcombine.low %v2781, %v2797
        %v2838 = vcombine.high %v2781, %v2797
        %v2840 = vunpack.c.l.s4 1934713408
        %v2841 = vunpack.c.0.s8 %v2840
        %v2842 = vlaneseq
        %v2843 = vshrl.u32 %v2842, 7
        %v2844 = vsub.s32 %v2841, %v2843
        %v2845 = vrot.slane %v2837, %v2844
        %v2847 = vunpack.c.l.s4 1934713408
        %v2848 = vunpack.c.0.s8 %v2847
        %v2849 = vlaneseq
        %v2850 = vshrl.u32 %v2849, 7
        %v2851 = vsub.s32 %v2848, %v2850
        %v2852 = vrot.slane %v2838, %v2851
        %v2853 = vcombine.low %v2788, %v2804
        %v2854 = vcombine.high %v2788, %v2804
        %v2856 = vunpack.c.l.s4 1934713408
        %v2857 = vunpack.c.0.s8 %v2856
        %v2858 = vlaneseq
        %v2859 = vshrl.u32 %v2858, 7
        %v2860 = vsub.s32 %v2857, %v2859
        %v2861 = vrot.slane %v2853, %v2860
        %v2863 = vunpack.c.l.s4 1934713408
        %v2864 = vunpack.c.0.s8 %v2863
        %v2865 = vlaneseq
        %v2866 = vshrl.u32 %v2865, 7
        %v2867 = vsub.s32 %v2864, %v2866
        %v2868 = vrot.slane %v2854, %v2867
        %v2869 = vcombine.low %v2813, %v2829
        %v2870 = vcombine.high %v2813, %v2829
        %v2872 = vunpack.c.l.s4 1934713408
        %v2873 = vunpack.c.0.s8 %v2872
        %v2874 = vlaneseq
        %v2875 = vshrl.u32 %v2874, 7
        %v2876 = vsub.s32 %v2873, %v2875
        %v2877 = vrot.slane %v2869, %v2876
        %v2879 = vunpack.c.l.s4 1934713408
        %v2880 = vunpack.c.0.s8 %v2879
        %v2881 = vlaneseq
        %v2882 = vshrl.u32 %v2881, 7
        %v2883 = vsub.s32 %v2880, %v2882
        %v2884 = vrot.slane %v2870, %v2883
        %v2885 = vcombine.low %v2820, %v2836
        %v2886 = vcombine.high %v2820, %v2836
        %v2888 = vunpack.c.l.s4 1934713408
        %v2889 = vunpack.c.0.s8 %v2888
        %v2890 = vlaneseq
        %v2891 = vshrl.u32 %v2890, 7
        %v2892 = vsub.s32 %v2889, %v2891
        %v2893 = vrot.slane %v2885, %v2892
        %v2895 = vunpack.c.l.s4 1934713408
        %v2896 = vunpack.c.0.s8 %v2895
        %v2897 = vlaneseq
        %v2898 = vshrl.u32 %v2897, 7
        %v2899 = vsub.s32 %v2896, %v2898
        %v2900 = vrot.slane %v2886, %v2899
        %v2901 = vcombine.low %v2845, %v2877
        %v2902 = vcombine.high %v2845, %v2877
        %v2903 = vcombine.low %v2852, %v2884
        %v2904 = vcombine.high %v2852, %v2884
        %v2905 = vcombine.low %v2861, %v2893
        %v2906 = vcombine.high %v2861, %v2893
        %v2907 = vcombine.low %v2868, %v2900
        %v2908 = vcombine.high %v2868, %v2900
        %v2909 = vcombine.low %v281, %v537
        %v2910 = vcombine.high %v281, %v537
        %v2912 = vunpack.c.l.s4 1983009808
        %v2913 = vunpack.c.0.s8 %v2912
        %v2914 = vlaneseq
        %v2915 = vshrl.u32 %v2914, 7
        %v2916 = vsub.s32 %v2913, %v2915
        %v2917 = vrot.slane %v2909, %v2916
        %v2919 = vunpack.c.l.s4 1983009808
        %v2920 = vunpack.c.0.s8 %v2919
        %v2921 = vlaneseq
        %v2922 = vshrl.u32 %v2921, 7
        %v2923 = vsub.s32 %v2920, %v2922
        %v2924 = vrot.slane %v2910, %v2923
        %v2925 = vcombine.low %v409, %v665
        %v2926 = vcombine.high %v409, %v665
        %v2928 = vunpack.c.l.s4 1983009808
        %v2929 = vunpack.c.0.s8 %v2928
        %v2930 = vlaneseq
        %v2931 = vshrl.u32 %v2930, 7
        %v2932 = vsub.s32 %v2929, %v2931
        %v2933 = vrot.slane %v2925, %v2932
        %v2935 = vunpack.c.l.s4 1983009808
        %v2936 = vunpack.c.0.s8 %v2935
        %v2937 = vlaneseq
        %v2938 = vshrl.u32 %v2937, 7
        %v2939 = vsub.s32 %v2936, %v2938
        %v2940 = vrot.slane %v2926, %v2939
        %v2941 = vcombine.low %v793, %v1049
        %v2942 = vcombine.high %v793, %v1049
        %v2944 = vunpack.c.l.s4 1983009808
        %v2945 = vunpack.c.0.s8 %v2944
        %v2946 = vlaneseq
        %v2947 = vshrl.u32 %v2946, 7
        %v2948 = vsub.s32 %v2945, %v2947
        %v2949 = vrot.slane %v2941, %v2948
        %v2951 = vunpack.c.l.s4 1983009808
        %v2952 = vunpack.c.0.s8 %v2951
        %v2953 = vlaneseq
        %v2954 = vshrl.u32 %v2953, 7
        %v2955 = vsub.s32 %v2952, %v2954
        %v2956 = vrot.slane %v2942, %v2955
        %v2957 = vcombine.low %v921, %v1177
        %v2958 = vcombine.high %v921, %v1177
        %v2960 = vunpack.c.l.s4 1983009808
        %v2961 = vunpack.c.0.s8 %v2960
        %v2962 = vlaneseq
        %v2963 = vshrl.u32 %v2962, 7
        %v2964 = vsub.s32 %v2961, %v2963
        %v2965 = vrot.slane %v2957, %v2964
        %v2967 = vunpack.c.l.s4 1983009808
        %v2968 = vunpack.c.0.s8 %v2967
        %v2969 = vlaneseq
        %v2970 = vshrl.u32 %v2969, 7
        %v2971 = vsub.s32 %v2968, %v2970
        %v2972 = vrot.slane %v2958, %v2971
        %v2973 = vcombine.low %v2917, %v2933
        %v2974 = vcombine.high %v2917, %v2933
        %v2976 = vunpack.c.l.s4 1934713408
        %v2977 = vunpack.c.0.s8 %v2976
        %v2978 = vlaneseq
        %v2979 = vshrl.u32 %v2978, 7
        %v2980 = vsub.s32 %v2977, %v2979
        %v2981 = vrot.slane %v2973, %v2980
        %v2983 = vunpack.c.l.s4 1934713408
        %v2984 = vunpack.c.0.s8 %v2983
        %v2985 = vlaneseq
        %v2986 = vshrl.u32 %v2985, 7
        %v2987 = vsub.s32 %v2984, %v2986
        %v2988 = vrot.slane %v2974, %v2987
        %v2989 = vcombine.low %v2924, %v2940
        %v2990 = vcombine.high %v2924, %v2940
        %v2992 = vunpack.c.l.s4 1934713408
        %v2993 = vunpack.c.0.s8 %v2992
        %v2994 = vlaneseq
        %v2995 = vshrl.u32 %v2994, 7
        %v2996 = vsub.s32 %v2993, %v2995
        %v2997 = vrot.slane %v2989, %v2996
        %v2999 = vunpack.c.l.s4 1934713408
        %v3000 = vunpack.c.0.s8 %v2999
        %v3001 = vlaneseq
        %v3002 = vshrl.u32 %v3001, 7
        %v3003 = vsub.s32 %v3000, %v3002
        %v3004 = vrot.slane %v2990, %v3003
        %v3005 = vcombine.low %v2949, %v2965
        %v3006 = vcombine.high %v2949, %v2965
        %v3008 = vunpack.c.l.s4 1934713408
        %v3009 = vunpack.c.0.s8 %v3008
        %v3010 = vlaneseq
        %v3011 = vshrl.u32 %v3010, 7
        %v3012 = vsub.s32 %v3009, %v3011
        %v3013 = vrot.slane %v3005, %v3012
        %v3015 = vunpack.c.l.s4 1934713408
        %v3016 = vunpack.c.0.s8 %v3015
        %v3017 = vlaneseq
        %v3018 = vshrl.u32 %v3017, 7
        %v3019 = vsub.s32 %v3016, %v3018
        %v3020 = vrot.slane %v3006, %v3019
        %v3021 = vcombine.low %v2956, %v2972
        %v3022 = vcombine.high %v2956, %v2972
        %v3024 = vunpack.c.l.s4 1934713408
        %v3025 = vunpack.c.0.s8 %v3024
        %v3026 = vlaneseq
        %v3027 = vshrl.u32 %v3026, 7
        %v3028 = vsub.s32 %v3025, %v3027
        %v3029 = vrot.slane %v3021, %v3028
        %v3031 = vunpack.c.l.s4 1934713408
        %v3032 = vunpack.c.0.s8 %v3031
        %v3033 = vlaneseq
        %v3034 = vshrl.u32 %v3033, 7
        %v3035 = vsub.s32 %v3032, %v3034
        %v3036 = vrot.slane %v3022, %v3035
        %v3037 = vcombine.low %v2981, %v3013
        %v3038 = vcombine.high %v2981, %v3013
        %v3039 = vcombine.low %v2988, %v3020
        %v3040 = vcombine.high %v2988, %v3020
        %v3041 = vcombine.low %v2997, %v3029
        %v3042 = vcombine.high %v2997, %v3029
        %v3043 = vcombine.low %v3004, %v3036
        %v3044 = vcombine.high %v3004, %v3036
        %v3045 = vcombine.low %v282, %v538
        %v3046 = vcombine.high %v282, %v538
        %v3048 = vunpack.c.l.s4 1983009808
        %v3049 = vunpack.c.0.s8 %v3048
        %v3050 = vlaneseq
        %v3051 = vshrl.u32 %v3050, 7
        %v3052 = vsub.s32 %v3049, %v3051
        %v3053 = vrot.slane %v3045, %v3052
        %v3055 = vunpack.c.l.s4 1983009808
        %v3056 = vunpack.c.0.s8 %v3055
        %v3057 = vlaneseq
        %v3058 = vshrl.u32 %v3057, 7
        %v3059 = vsub.s32 %v3056, %v3058
        %v3060 = vrot.slane %v3046, %v3059
        %v3061 = vcombine.low %v410, %v666
        %v3062 = vcombine.high %v410, %v666
        %v3064 = vunpack.c.l.s4 1983009808
        %v3065 = vunpack.c.0.s8 %v3064
        %v3066 = vlaneseq
        %v3067 = vshrl.u32 %v3066, 7
        %v3068 = vsub.s32 %v3065, %v3067
        %v3069 = vrot.slane %v3061, %v3068
        %v3071 = vunpack.c.l.s4 1983009808
        %v3072 = vunpack.c.0.s8 %v3071
        %v3073 = vlaneseq
        %v3074 = vshrl.u32 %v3073, 7
        %v3075 = vsub.s32 %v3072, %v3074
        %v3076 = vrot.slane %v3062, %v3075
        %v3077 = vcombine.low %v794, %v1050
        %v3078 = vcombine.high %v794, %v1050
        %v3080 = vunpack.c.l.s4 1983009808
        %v3081 = vunpack.c.0.s8 %v3080
        %v3082 = vlaneseq
        %v3083 = vshrl.u32 %v3082, 7
        %v3084 = vsub.s32 %v3081, %v3083
        %v3085 = vrot.slane %v3077, %v3084
        %v3087 = vunpack.c.l.s4 1983009808
        %v3088 = vunpack.c.0.s8 %v3087
        %v3089 = vlaneseq
        %v3090 = vshrl.u32 %v3089, 7
        %v3091 = vsub.s32 %v3088, %v3090
        %v3092 = vrot.slane %v3078, %v3091
        %v3093 = vcombine.low %v922, %v1178
        %v3094 = vcombine.high %v922, %v1178
        %v3096 = vunpack.c.l.s4 1983009808
        %v3097 = vunpack.c.0.s8 %v3096
        %v3098 = vlaneseq
        %v3099 = vshrl.u32 %v3098, 7
        %v3100 = vsub.s32 %v3097, %v3099
        %v3101 = vrot.slane %v3093, %v3100
        %v3103 = vunpack.c.l.s4 1983009808
        %v3104 = vunpack.c.0.s8 %v3103
        %v3105 = vlaneseq
        %v3106 = vshrl.u32 %v3105, 7
        %v3107 = vsub.s32 %v3104, %v3106
        %v3108 = vrot.slane %v3094, %v3107
        %v3109 = vcombine.low %v3053, %v3069
        %v3110 = vcombine.high %v3053, %v3069
        %v3112 = vunpack.c.l.s4 1934713408
        %v3113 = vunpack.c.0.s8 %v3112
        %v3114 = vlaneseq
        %v3115 = vshrl.u32 %v3114, 7
        %v3116 = vsub.s32 %v3113, %v3115
        %v3117 = vrot.slane %v3109, %v3116
        %v3119 = vunpack.c.l.s4 1934713408
        %v3120 = vunpack.c.0.s8 %v3119
        %v3121 = vlaneseq
        %v3122 = vshrl.u32 %v3121, 7
        %v3123 = vsub.s32 %v3120, %v3122
        %v3124 = vrot.slane %v3110, %v3123
        %v3125 = vcombine.low %v3060, %v3076
        %v3126 = vcombine.high %v3060, %v3076
        %v3128 = vunpack.c.l.s4 1934713408
        %v3129 = vunpack.c.0.s8 %v3128
        %v3130 = vlaneseq
        %v3131 = vshrl.u32 %v3130, 7
        %v3132 = vsub.s32 %v3129, %v3131
        %v3133 = vrot.slane %v3125, %v3132
        %v3135 = vunpack.c.l.s4 1934713408
        %v3136 = vunpack.c.0.s8 %v3135
        %v3137 = vlaneseq
        %v3138 = vshrl.u32 %v3137, 7
        %v3139 = vsub.s32 %v3136, %v3138
        %v3140 = vrot.slane %v3126, %v3139
        %v3141 = vcombine.low %v3085, %v3101
        %v3142 = vcombine.high %v3085, %v3101
        %v3144 = vunpack.c.l.s4 1934713408
        %v3145 = vunpack.c.0.s8 %v3144
        %v3146 = vlaneseq
        %v3147 = vshrl.u32 %v3146, 7
        %v3148 = vsub.s32 %v3145, %v3147
        %v3149 = vrot.slane %v3141, %v3148
        %v3151 = vunpack.c.l.s4 1934713408
        %v3152 = vunpack.c.0.s8 %v3151
        %v3153 = vlaneseq
        %v3154 = vshrl.u32 %v3153, 7
        %v3155 = vsub.s32 %v3152, %v3154
        %v3156 = vrot.slane %v3142, %v3155
        %v3157 = vcombine.low %v3092, %v3108
        %v3158 = vcombine.high %v3092, %v3108
        %v3160 = vunpack.c.l.s4 1934713408
        %v3161 = vunpack.c.0.s8 %v3160
        %v3162 = vlaneseq
        %v3163 = vshrl.u32 %v3162, 7
        %v3164 = vsub.s32 %v3161, %v3163
        %v3165 = vrot.slane %v3157, %v3164
        %v3167 = vunpack.c.l.s4 1934713408
        %v3168 = vunpack.c.0.s8 %v3167
        %v3169 = vlaneseq
        %v3170 = vshrl.u32 %v3169, 7
        %v3171 = vsub.s32 %v3168, %v3170
        %v3172 = vrot.slane %v3158, %v3171
        %v3173 = vcombine.low %v3117, %v3149
        %v3174 = vcombine.high %v3117, %v3149
        %v3175 = vcombine.low %v3124, %v3156
        %v3176 = vcombine.high %v3124, %v3156
        %v3177 = vcombine.low %v3133, %v3165
        %v3178 = vcombine.high %v3133, %v3165
        %v3179 = vcombine.low %v3140, %v3172
        %v3180 = vcombine.high %v3140, %v3172
        %v3181 = vcombine.low %v283, %v539
        %v3182 = vcombine.high %v283, %v539
        %v3184 = vunpack.c.l.s4 1983009808
        %v3185 = vunpack.c.0.s8 %v3184
        %v3186 = vlaneseq
        %v3187 = vshrl.u32 %v3186, 7
        %v3188 = vsub.s32 %v3185, %v3187
        %v3189 = vrot.slane %v3181, %v3188
        %v3191 = vunpack.c.l.s4 1983009808
        %v3192 = vunpack.c.0.s8 %v3191
        %v3193 = vlaneseq
        %v3194 = vshrl.u32 %v3193, 7
        %v3195 = vsub.s32 %v3192, %v3194
        %v3196 = vrot.slane %v3182, %v3195
        %v3197 = vcombine.low %v411, %v667
        %v3198 = vcombine.high %v411, %v667
        %v3200 = vunpack.c.l.s4 1983009808
        %v3201 = vunpack.c.0.s8 %v3200
        %v3202 = vlaneseq
        %v3203 = vshrl.u32 %v3202, 7
        %v3204 = vsub.s32 %v3201, %v3203
        %v3205 = vrot.slane %v3197, %v3204
        %v3207 = vunpack.c.l.s4 1983009808
        %v3208 = vunpack.c.0.s8 %v3207
        %v3209 = vlaneseq
        %v3210 = vshrl.u32 %v3209, 7
        %v3211 = vsub.s32 %v3208, %v3210
        %v3212 = vrot.slane %v3198, %v3211
        %v3213 = vcombine.low %v795, %v1051
        %v3214 = vcombine.high %v795, %v1051
        %v3216 = vunpack.c.l.s4 1983009808
        %v3217 = vunpack.c.0.s8 %v3216
        %v3218 = vlaneseq
        %v3219 = vshrl.u32 %v3218, 7
        %v3220 = vsub.s32 %v3217, %v3219
        %v3221 = vrot.slane %v3213, %v3220
        %v3223 = vunpack.c.l.s4 1983009808
        %v3224 = vunpack.c.0.s8 %v3223
        %v3225 = vlaneseq
        %v3226 = vshrl.u32 %v3225, 7
        %v3227 = vsub.s32 %v3224, %v3226
        %v3228 = vrot.slane %v3214, %v3227
        %v3229 = vcombine.low %v923, %v1179
        %v3230 = vcombine.high %v923, %v1179
        %v3232 = vunpack.c.l.s4 1983009808
        %v3233 = vunpack.c.0.s8 %v3232
        %v3234 = vlaneseq
        %v3235 = vshrl.u32 %v3234, 7
        %v3236 = vsub.s32 %v3233, %v3235
        %v3237 = vrot.slane %v3229, %v3236
        %v3239 = vunpack.c.l.s4 1983009808
        %v3240 = vunpack.c.0.s8 %v3239
        %v3241 = vlaneseq
        %v3242 = vshrl.u32 %v3241, 7
        %v3243 = vsub.s32 %v3240, %v3242
        %v3244 = vrot.slane %v3230, %v3243
        %v3245 = vcombine.low %v3189, %v3205
        %v3246 = vcombine.high %v3189, %v3205
        %v3248 = vunpack.c.l.s4 1934713408
        %v3249 = vunpack.c.0.s8 %v3248
        %v3250 = vlaneseq
        %v3251 = vshrl.u32 %v3250, 7
        %v3252 = vsub.s32 %v3249, %v3251
        %v3253 = vrot.slane %v3245, %v3252
        %v3255 = vunpack.c.l.s4 1934713408
        %v3256 = vunpack.c.0.s8 %v3255
        %v3257 = vlaneseq
        %v3258 = vshrl.u32 %v3257, 7
        %v3259 = vsub.s32 %v3256, %v3258
        %v3260 = vrot.slane %v3246, %v3259
        %v3261 = vcombine.low %v3196, %v3212
        %v3262 = vcombine.high %v3196, %v3212
        %v3264 = vunpack.c.l.s4 1934713408
        %v3265 = vunpack.c.0.s8 %v3264
        %v3266 = vlaneseq
        %v3267 = vshrl.u32 %v3266, 7
        %v3268 = vsub.s32 %v3265, %v3267
        %v3269 = vrot.slane %v3261, %v3268
        %v3271 = vunpack.c.l.s4 1934713408
        %v3272 = vunpack.c.0.s8 %v3271
        %v3273 = vlaneseq
        %v3274 = vshrl.u32 %v3273, 7
        %v3275 = vsub.s32 %v3272, %v3274
        %v3276 = vrot.slane %v3262, %v3275
        %v3277 = vcombine.low %v3221, %v3237
        %v3278 = vcombine.high %v3221, %v3237
        %v3280 = vunpack.c.l.s4 1934713408
        %v3281 = vunpack.c.0.s8 %v3280
        %v3282 = vlaneseq
        %v3283 = vshrl.u32 %v3282, 7
        %v3284 = vsub.s32 %v3281, %v3283
        %v3285 = vrot.slane %v3277, %v3284
        %v3287 = vunpack.c.l.s4 1934713408
        %v3288 = vunpack.c.0.s8 %v3287
        %v3289 = vlaneseq
        %v3290 = vshrl.u32 %v3289, 7
        %v3291 = vsub.s32 %v3288, %v3290
        %v3292 = vrot.slane %v3278, %v3291
        %v3293 = vcombine.low %v3228, %v3244
        %v3294 = vcombine.high %v3228, %v3244
        %v3296 = vunpack.c.l.s4 1934713408
        %v3297 = vunpack.c.0.s8 %v3296
        %v3298 = vlaneseq
        %v3299 = vshrl.u32 %v3298, 7
        %v3300 = vsub.s32 %v3297, %v3299
        %v3301 = vrot.slane %v3293, %v3300
        %v3303 = vunpack.c.l.s4 1934713408
        %v3304 = vunpack.c.0.s8 %v3303
        %v3305 = vlaneseq
        %v3306 = vshrl.u32 %v3305, 7
        %v3307 = vsub.s32 %v3304, %v3306
        %v3308 = vrot.slane %v3294, %v3307
        %v3309 = vcombine.low %v3253, %v3285
        %v3310 = vcombine.high %v3253, %v3285
        %v3311 = vcombine.low %v3260, %v3292
        %v3312 = vcombine.high %v3260, %v3292
        %v3313 = vcombine.low %v3269, %v3301
        %v3314 = vcombine.high %v3269, %v3301
        %v3315 = vcombine.low %v3276, %v3308
        %v3316 = vcombine.high %v3276, %v3308
        %v3317 = vcombine.low %v284, %v540
        %v3318 = vcombine.high %v284, %v540
        %v3320 = vunpack.c.l.s4 1983009808
        %v3321 = vunpack.c.0.s8 %v3320
        %v3322 = vlaneseq
        %v3323 = vshrl.u32 %v3322, 7
        %v3324 = vsub.s32 %v3321, %v3323
        %v3325 = vrot.slane %v3317, %v3324
        %v3327 = vunpack.c.l.s4 1983009808
        %v3328 = vunpack.c.0.s8 %v3327
        %v3329 = vlaneseq
        %v3330 = vshrl.u32 %v3329, 7
        %v3331 = vsub.s32 %v3328, %v3330
        %v3332 = vrot.slane %v3318, %v3331
        %v3333 = vcombine.low %v412, %v668
        %v3334 = vcombine.high %v412, %v668
        %v3336 = vunpack.c.l.s4 1983009808
        %v3337 = vunpack.c.0.s8 %v3336
        %v3338 = vlaneseq
        %v3339 = vshrl.u32 %v3338, 7
        %v3340 = vsub.s32 %v3337, %v3339
        %v3341 = vrot.slane %v3333, %v3340
        %v3343 = vunpack.c.l.s4 1983009808
        %v3344 = vunpack.c.0.s8 %v3343
        %v3345 = vlaneseq
        %v3346 = vshrl.u32 %v3345, 7
        %v3347 = vsub.s32 %v3344, %v3346
        %v3348 = vrot.slane %v3334, %v3347
        %v3349 = vcombine.low %v796, %v1052
        %v3350 = vcombine.high %v796, %v1052
        %v3352 = vunpack.c.l.s4 1983009808
        %v3353 = vunpack.c.0.s8 %v3352
        %v3354 = vlaneseq
        %v3355 = vshrl.u32 %v3354, 7
        %v3356 = vsub.s32 %v3353, %v3355
        %v3357 = vrot.slane %v3349, %v3356
        %v3359 = vunpack.c.l.s4 1983009808
        %v3360 = vunpack.c.0.s8 %v3359
        %v3361 = vlaneseq
        %v3362 = vshrl.u32 %v3361, 7
        %v3363 = vsub.s32 %v3360, %v3362
        %v3364 = vrot.slane %v3350, %v3363
        %v3365 = vcombine.low %v924, %v1180
        %v3366 = vcombine.high %v924, %v1180
        %v3368 = vunpack.c.l.s4 1983009808
        %v3369 = vunpack.c.0.s8 %v3368
        %v3370 = vlaneseq
        %v3371 = vshrl.u32 %v3370, 7
        %v3372 = vsub.s32 %v3369, %v3371
        %v3373 = vrot.slane %v3365, %v3372
        %v3375 = vunpack.c.l.s4 1983009808
        %v3376 = vunpack.c.0.s8 %v3375
        %v3377 = vlaneseq
        %v3378 = vshrl.u32 %v3377, 7
        %v3379 = vsub.s32 %v3376, %v3378
        %v3380 = vrot.slane %v3366, %v3379
        %v3381 = vcombine.low %v3325, %v3341
        %v3382 = vcombine.high %v3325, %v3341
        %v3384 = vunpack.c.l.s4 1934713408
        %v3385 = vunpack.c.0.s8 %v3384
        %v3386 = vlaneseq
        %v3387 = vshrl.u32 %v3386, 7
        %v3388 = vsub.s32 %v3385, %v3387
        %v3389 = vrot.slane %v3381, %v3388
        %v3391 = vunpack.c.l.s4 1934713408
        %v3392 = vunpack.c.0.s8 %v3391
        %v3393 = vlaneseq
        %v3394 = vshrl.u32 %v3393, 7
        %v3395 = vsub.s32 %v3392, %v3394
        %v3396 = vrot.slane %v3382, %v3395
        %v3397 = vcombine.low %v3332, %v3348
        %v3398 = vcombine.high %v3332, %v3348
        %v3400 = vunpack.c.l.s4 1934713408
        %v3401 = vunpack.c.0.s8 %v3400
        %v3402 = vlaneseq
        %v3403 = vshrl.u32 %v3402, 7
        %v3404 = vsub.s32 %v3401, %v3403
        %v3405 = vrot.slane %v3397, %v3404
        %v3407 = vunpack.c.l.s4 1934713408
        %v3408 = vunpack.c.0.s8 %v3407
        %v3409 = vlaneseq
        %v3410 = vshrl.u32 %v3409, 7
        %v3411 = vsub.s32 %v3408, %v3410
        %v3412 = vrot.slane %v3398, %v3411
        %v3413 = vcombine.low %v3357, %v3373
        %v3414 = vcombine.high %v3357, %v3373
        %v3416 = vunpack.c.l.s4 1934713408
        %v3417 = vunpack.c.0.s8 %v3416
        %v3418 = vlaneseq
        %v3419 = vshrl.u32 %v3418, 7
        %v3420 = vsub.s32 %v3417, %v3419
        %v3421 = vrot.slane %v3413, %v3420
        %v3423 = vunpack.c.l.s4 1934713408
        %v3424 = vunpack.c.0.s8 %v3423
        %v3425 = vlaneseq
        %v3426 = vshrl.u32 %v3425, 7
        %v3427 = vsub.s32 %v3424, %v3426
        %v3428 = vrot.slane %v3414, %v3427
        %v3429 = vcombine.low %v3364, %v3380
        %v3430 = vcombine.high %v3364, %v3380
        %v3432 = vunpack.c.l.s4 1934713408
        %v3433 = vunpack.c.0.s8 %v3432
        %v3434 = vlaneseq
        %v3435 = vshrl.u32 %v3434, 7
        %v3436 = vsub.s32 %v3433, %v3435
        %v3437 = vrot.slane %v3429, %v3436
        %v3439 = vunpack.c.l.s4 1934713408
        %v3440 = vunpack.c.0.s8 %v3439
        %v3441 = vlaneseq
        %v3442 = vshrl.u32 %v3441, 7
        %v3443 = vsub.s32 %v3440, %v3442
        %v3444 = vrot.slane %v3430, %v3443
        %v3445 = vcombine.low %v3389, %v3421
        %v3446 = vcombine.high %v3389, %v3421
        %v3447 = vcombine.low %v3396, %v3428
        %v3448 = vcombine.high %v3396, %v3428
        %v3449 = vcombine.low %v3405, %v3437
        %v3450 = vcombine.high %v3405, %v3437
        %v3451 = vcombine.low %v3412, %v3444
        %v3452 = vcombine.high %v3412, %v3444
        %v3453 = vcombine.low %v301, %v557
        %v3454 = vcombine.high %v301, %v557
        %v3456 = vunpack.c.l.s4 1983009808
        %v3457 = vunpack.c.0.s8 %v3456
        %v3458 = vlaneseq
        %v3459 = vshrl.u32 %v3458, 7
        %v3460 = vsub.s32 %v3457, %v3459
        %v3461 = vrot.slane %v3453, %v3460
        %v3463 = vunpack.c.l.s4 1983009808
        %v3464 = vunpack.c.0.s8 %v3463
        %v3465 = vlaneseq
        %v3466 = vshrl.u32 %v3465, 7
        %v3467 = vsub.s32 %v3464, %v3466
        %v3468 = vrot.slane %v3454, %v3467
        %v3469 = vcombine.low %v429, %v685
        %v3470 = vcombine.high %v429, %v685
        %v3472 = vunpack.c.l.s4 1983009808
        %v3473 = vunpack.c.0.s8 %v3472
        %v3474 = vlaneseq
        %v3475 = vshrl.u32 %v3474, 7
        %v3476 = vsub.s32 %v3473, %v3475
        %v3477 = vrot.slane %v3469, %v3476
        %v3479 = vunpack.c.l.s4 1983009808
        %v3480 = vunpack.c.0.s8 %v3479
        %v3481 = vlaneseq
        %v3482 = vshrl.u32 %v3481, 7
        %v3483 = vsub.s32 %v3480, %v3482
        %v3484 = vrot.slane %v3470, %v3483
        %v3485 = vcombine.low %v813, %v1069
        %v3486 = vcombine.high %v813, %v1069
        %v3488 = vunpack.c.l.s4 1983009808
        %v3489 = vunpack.c.0.s8 %v3488
        %v3490 = vlaneseq
        %v3491 = vshrl.u32 %v3490, 7
        %v3492 = vsub.s32 %v3489, %v3491
        %v3493 = vrot.slane %v3485, %v3492
        %v3495 = vunpack.c.l.s4 1983009808
        %v3496 = vunpack.c.0.s8 %v3495
        %v3497 = vlaneseq
        %v3498 = vshrl.u32 %v3497, 7
        %v3499 = vsub.s32 %v3496, %v3498
        %v3500 = vrot.slane %v3486, %v3499
        %v3501 = vcombine.low %v941, %v1197
        %v3502 = vcombine.high %v941, %v1197
        %v3504 = vunpack.c.l.s4 1983009808
        %v3505 = vunpack.c.0.s8 %v3504
        %v3506 = vlaneseq
        %v3507 = vshrl.u32 %v3506, 7
        %v3508 = vsub.s32 %v3505, %v3507
        %v3509 = vrot.slane %v3501, %v3508
        %v3511 = vunpack.c.l.s4 1983009808
        %v3512 = vunpack.c.0.s8 %v3511
        %v3513 = vlaneseq
        %v3514 = vshrl.u32 %v3513, 7
        %v3515 = vsub.s32 %v3512, %v3514
        %v3516 = vrot.slane %v3502, %v3515
        %v3517 = vcombine.low %v3461, %v3477
        %v3518 = vcombine.high %v3461, %v3477
        %v3520 = vunpack.c.l.s4 1934713408
        %v3521 = vunpack.c.0.s8 %v3520
        %v3522 = vlaneseq
        %v3523 = vshrl.u32 %v3522, 7
        %v3524 = vsub.s32 %v3521, %v3523
        %v3525 = vrot.slane %v3517, %v3524
        %v3527 = vunpack.c.l.s4 1934713408
        %v3528 = vunpack.c.0.s8 %v3527
        %v3529 = vlaneseq
        %v3530 = vshrl.u32 %v3529, 7
        %v3531 = vsub.s32 %v3528, %v3530
        %v3532 = vrot.slane %v3518, %v3531
        %v3533 = vcombine.low %v3468, %v3484
        %v3534 = vcombine.high %v3468, %v3484
        %v3536 = vunpack.c.l.s4 1934713408
        %v3537 = vunpack.c.0.s8 %v3536
        %v3538 = vlaneseq
        %v3539 = vshrl.u32 %v3538, 7
        %v3540 = vsub.s32 %v3537, %v3539
        %v3541 = vrot.slane %v3533, %v3540
        %v3543 = vunpack.c.l.s4 1934713408
        %v3544 = vunpack.c.0.s8 %v3543
        %v3545 = vlaneseq
        %v3546 = vshrl.u32 %v3545, 7
        %v3547 = vsub.s32 %v3544, %v3546
        %v3548 = vrot.slane %v3534, %v3547
        %v3549 = vcombine.low %v3493, %v3509
        %v3550 = vcombine.high %v3493, %v3509
        %v3552 = vunpack.c.l.s4 1934713408
        %v3553 = vunpack.c.0.s8 %v3552
        %v3554 = vlaneseq
        %v3555 = vshrl.u32 %v3554, 7
        %v3556 = vsub.s32 %v3553, %v3555
        %v3557 = vrot.slane %v3549, %v3556
        %v3559 = vunpack.c.l.s4 1934713408
        %v3560 = vunpack.c.0.s8 %v3559
        %v3561 = vlaneseq
        %v3562 = vshrl.u32 %v3561, 7
        %v3563 = vsub.s32 %v3560, %v3562
        %v3564 = vrot.slane %v3550, %v3563
        %v3565 = vcombine.low %v3500, %v3516
        %v3566 = vcombine.high %v3500, %v3516
        %v3568 = vunpack.c.l.s4 1934713408
        %v3569 = vunpack.c.0.s8 %v3568
        %v3570 = vlaneseq
        %v3571 = vshrl.u32 %v3570, 7
        %v3572 = vsub.s32 %v3569, %v3571
        %v3573 = vrot.slane %v3565, %v3572
        %v3575 = vunpack.c.l.s4 1934713408
        %v3576 = vunpack.c.0.s8 %v3575
        %v3577 = vlaneseq
        %v3578 = vshrl.u32 %v3577, 7
        %v3579 = vsub.s32 %v3576, %v3578
        %v3580 = vrot.slane %v3566, %v3579
        %v3581 = vcombine.low %v3525, %v3557
        %v3582 = vcombine.high %v3525, %v3557
        %v3583 = vcombine.low %v3532, %v3564
        %v3584 = vcombine.high %v3532, %v3564
        %v3585 = vcombine.low %v3541, %v3573
        %v3586 = vcombine.high %v3541, %v3573
        %v3587 = vcombine.low %v3548, %v3580
        %v3588 = vcombine.high %v3548, %v3580
        %v3589 = vcombine.low %v302, %v558
        %v3590 = vcombine.high %v302, %v558
        %v3592 = vunpack.c.l.s4 1983009808
        %v3593 = vunpack.c.0.s8 %v3592
        %v3594 = vlaneseq
        %v3595 = vshrl.u32 %v3594, 7
        %v3596 = vsub.s32 %v3593, %v3595
        %v3597 = vrot.slane %v3589, %v3596
        %v3599 = vunpack.c.l.s4 1983009808
        %v3600 = vunpack.c.0.s8 %v3599
        %v3601 = vlaneseq
        %v3602 = vshrl.u32 %v3601, 7
        %v3603 = vsub.s32 %v3600, %v3602
        %v3604 = vrot.slane %v3590, %v3603
        %v3605 = vcombine.low %v430, %v686
        %v3606 = vcombine.high %v430, %v686
        %v3608 = vunpack.c.l.s4 1983009808
        %v3609 = vunpack.c.0.s8 %v3608
        %v3610 = vlaneseq
        %v3611 = vshrl.u32 %v3610, 7
        %v3612 = vsub.s32 %v3609, %v3611
        %v3613 = vrot.slane %v3605, %v3612
        %v3615 = vunpack.c.l.s4 1983009808
        %v3616 = vunpack.c.0.s8 %v3615
        %v3617 = vlaneseq
        %v3618 = vshrl.u32 %v3617, 7
        %v3619 = vsub.s32 %v3616, %v3618
        %v3620 = vrot.slane %v3606, %v3619
        %v3621 = vcombine.low %v814, %v1070
        %v3622 = vcombine.high %v814, %v1070
        %v3624 = vunpack.c.l.s4 1983009808
        %v3625 = vunpack.c.0.s8 %v3624
        %v3626 = vlaneseq
        %v3627 = vshrl.u32 %v3626, 7
        %v3628 = vsub.s32 %v3625, %v3627
        %v3629 = vrot.slane %v3621, %v3628
        %v3631 = vunpack.c.l.s4 1983009808
        %v3632 = vunpack.c.0.s8 %v3631
        %v3633 = vlaneseq
        %v3634 = vshrl.u32 %v3633, 7
        %v3635 = vsub.s32 %v3632, %v3634
        %v3636 = vrot.slane %v3622, %v3635
        %v3637 = vcombine.low %v942, %v1198
        %v3638 = vcombine.high %v942, %v1198
        %v3640 = vunpack.c.l.s4 1983009808
        %v3641 = vunpack.c.0.s8 %v3640
        %v3642 = vlaneseq
        %v3643 = vshrl.u32 %v3642, 7
        %v3644 = vsub.s32 %v3641, %v3643
        %v3645 = vrot.slane %v3637, %v3644
        %v3647 = vunpack.c.l.s4 1983009808
        %v3648 = vunpack.c.0.s8 %v3647
        %v3649 = vlaneseq
        %v3650 = vshrl.u32 %v3649, 7
        %v3651 = vsub.s32 %v3648, %v3650
        %v3652 = vrot.slane %v3638, %v3651
        %v3653 = vcombine.low %v3597, %v3613
        %v3654 = vcombine.high %v3597, %v3613
        %v3656 = vunpack.c.l.s4 1934713408
        %v3657 = vunpack.c.0.s8 %v3656
        %v3658 = vlaneseq
        %v3659 = vshrl.u32 %v3658, 7
        %v3660 = vsub.s32 %v3657, %v3659
        %v3661 = vrot.slane %v3653, %v3660
        %v3663 = vunpack.c.l.s4 1934713408
        %v3664 = vunpack.c.0.s8 %v3663
        %v3665 = vlaneseq
        %v3666 = vshrl.u32 %v3665, 7
        %v3667 = vsub.s32 %v3664, %v3666
        %v3668 = vrot.slane %v3654, %v3667
        %v3669 = vcombine.low %v3604, %v3620
        %v3670 = vcombine.high %v3604, %v3620
        %v3672 = vunpack.c.l.s4 1934713408
        %v3673 = vunpack.c.0.s8 %v3672
        %v3674 = vlaneseq
        %v3675 = vshrl.u32 %v3674, 7
        %v3676 = vsub.s32 %v3673, %v3675
        %v3677 = vrot.slane %v3669, %v3676
        %v3679 = vunpack.c.l.s4 1934713408
        %v3680 = vunpack.c.0.s8 %v3679
        %v3681 = vlaneseq
        %v3682 = vshrl.u32 %v3681, 7
        %v3683 = vsub.s32 %v3680, %v3682
        %v3684 = vrot.slane %v3670, %v3683
        %v3685 = vcombine.low %v3629, %v3645
        %v3686 = vcombine.high %v3629, %v3645
        %v3688 = vunpack.c.l.s4 1934713408
        %v3689 = vunpack.c.0.s8 %v3688
        %v3690 = vlaneseq
        %v3691 = vshrl.u32 %v3690, 7
        %v3692 = vsub.s32 %v3689, %v3691
        %v3693 = vrot.slane %v3685, %v3692
        %v3695 = vunpack.c.l.s4 1934713408
        %v3696 = vunpack.c.0.s8 %v3695
        %v3697 = vlaneseq
        %v3698 = vshrl.u32 %v3697, 7
        %v3699 = vsub.s32 %v3696, %v3698
        %v3700 = vrot.slane %v3686, %v3699
        %v3701 = vcombine.low %v3636, %v3652
        %v3702 = vcombine.high %v3636, %v3652
        %v3704 = vunpack.c.l.s4 1934713408
        %v3705 = vunpack.c.0.s8 %v3704
        %v3706 = vlaneseq
        %v3707 = vshrl.u32 %v3706, 7
        %v3708 = vsub.s32 %v3705, %v3707
        %v3709 = vrot.slane %v3701, %v3708
        %v3711 = vunpack.c.l.s4 1934713408
        %v3712 = vunpack.c.0.s8 %v3711
        %v3713 = vlaneseq
        %v3714 = vshrl.u32 %v3713, 7
        %v3715 = vsub.s32 %v3712, %v3714
        %v3716 = vrot.slane %v3702, %v3715
        %v3717 = vcombine.low %v3661, %v3693
        %v3718 = vcombine.high %v3661, %v3693
        %v3719 = vcombine.low %v3668, %v3700
        %v3720 = vcombine.high %v3668, %v3700
        %v3721 = vcombine.low %v3677, %v3709
        %v3722 = vcombine.high %v3677, %v3709
        %v3723 = vcombine.low %v3684, %v3716
        %v3724 = vcombine.high %v3684, %v3716
        %v3725 = vcombine.low %v303, %v559
        %v3726 = vcombine.high %v303, %v559
        %v3728 = vunpack.c.l.s4 1983009808
        %v3729 = vunpack.c.0.s8 %v3728
        %v3730 = vlaneseq
        %v3731 = vshrl.u32 %v3730, 7
        %v3732 = vsub.s32 %v3729, %v3731
        %v3733 = vrot.slane %v3725, %v3732
        %v3735 = vunpack.c.l.s4 1983009808
        %v3736 = vunpack.c.0.s8 %v3735
        %v3737 = vlaneseq
        %v3738 = vshrl.u32 %v3737, 7
        %v3739 = vsub.s32 %v3736, %v3738
        %v3740 = vrot.slane %v3726, %v3739
        %v3741 = vcombine.low %v431, %v687
        %v3742 = vcombine.high %v431, %v687
        %v3744 = vunpack.c.l.s4 1983009808
        %v3745 = vunpack.c.0.s8 %v3744
        %v3746 = vlaneseq
        %v3747 = vshrl.u32 %v3746, 7
        %v3748 = vsub.s32 %v3745, %v3747
        %v3749 = vrot.slane %v3741, %v3748
        %v3751 = vunpack.c.l.s4 1983009808
        %v3752 = vunpack.c.0.s8 %v3751
        %v3753 = vlaneseq
        %v3754 = vshrl.u32 %v3753, 7
        %v3755 = vsub.s32 %v3752, %v3754
        %v3756 = vrot.slane %v3742, %v3755
        %v3757 = vcombine.low %v815, %v1071
        %v3758 = vcombine.high %v815, %v1071
        %v3760 = vunpack.c.l.s4 1983009808
        %v3761 = vunpack.c.0.s8 %v3760
        %v3762 = vlaneseq
        %v3763 = vshrl.u32 %v3762, 7
        %v3764 = vsub.s32 %v3761, %v3763
        %v3765 = vrot.slane %v3757, %v3764
        %v3767 = vunpack.c.l.s4 1983009808
        %v3768 = vunpack.c.0.s8 %v3767
        %v3769 = vlaneseq
        %v3770 = vshrl.u32 %v3769, 7
        %v3771 = vsub.s32 %v3768, %v3770
        %v3772 = vrot.slane %v3758, %v3771
        %v3773 = vcombine.low %v943, %v1199
        %v3774 = vcombine.high %v943, %v1199
        %v3776 = vunpack.c.l.s4 1983009808
        %v3777 = vunpack.c.0.s8 %v3776
        %v3778 = vlaneseq
        %v3779 = vshrl.u32 %v3778, 7
        %v3780 = vsub.s32 %v3777, %v3779
        %v3781 = vrot.slane %v3773, %v3780
        %v3783 = vunpack.c.l.s4 1983009808
        %v3784 = vunpack.c.0.s8 %v3783
        %v3785 = vlaneseq
        %v3786 = vshrl.u32 %v3785, 7
        %v3787 = vsub.s32 %v3784, %v3786
        %v3788 = vrot.slane %v3774, %v3787
        %v3789 = vcombine.low %v3733, %v3749
        %v3790 = vcombine.high %v3733, %v3749
        %v3792 = vunpack.c.l.s4 1934713408
        %v3793 = vunpack.c.0.s8 %v3792
        %v3794 = vlaneseq
        %v3795 = vshrl.u32 %v3794, 7
        %v3796 = vsub.s32 %v3793, %v3795
        %v3797 = vrot.slane %v3789, %v3796
        %v3799 = vunpack.c.l.s4 1934713408
        %v3800 = vunpack.c.0.s8 %v3799
        %v3801 = vlaneseq
        %v3802 = vshrl.u32 %v3801, 7
        %v3803 = vsub.s32 %v3800, %v3802
        %v3804 = vrot.slane %v3790, %v3803
        %v3805 = vcombine.low %v3740, %v3756
        %v3806 = vcombine.high %v3740, %v3756
        %v3808 = vunpack.c.l.s4 1934713408
        %v3809 = vunpack.c.0.s8 %v3808
        %v3810 = vlaneseq
        %v3811 = vshrl.u32 %v3810, 7
        %v3812 = vsub.s32 %v3809, %v3811
        %v3813 = vrot.slane %v3805, %v3812
        %v3815 = vunpack.c.l.s4 1934713408
        %v3816 = vunpack.c.0.s8 %v3815
        %v3817 = vlaneseq
        %v3818 = vshrl.u32 %v3817, 7
        %v3819 = vsub.s32 %v3816, %v3818
        %v3820 = vrot.slane %v3806, %v3819
        %v3821 = vcombine.low %v3765, %v3781
        %v3822 = vcombine.high %v3765, %v3781
        %v3824 = vunpack.c.l.s4 1934713408
        %v3825 = vunpack.c.0.s8 %v3824
        %v3826 = vlaneseq
        %v3827 = vshrl.u32 %v3826, 7
        %v3828 = vsub.s32 %v3825, %v3827
        %v3829 = vrot.slane %v3821, %v3828
        %v3831 = vunpack.c.l.s4 1934713408
        %v3832 = vunpack.c.0.s8 %v3831
        %v3833 = vlaneseq
        %v3834 = vshrl.u32 %v3833, 7
        %v3835 = vsub.s32 %v3832, %v3834
        %v3836 = vrot.slane %v3822, %v3835
        %v3837 = vcombine.low %v3772, %v3788
        %v3838 = vcombine.high %v3772, %v3788
        %v3840 = vunpack.c.l.s4 1934713408
        %v3841 = vunpack.c.0.s8 %v3840
        %v3842 = vlaneseq
        %v3843 = vshrl.u32 %v3842, 7
        %v3844 = vsub.s32 %v3841, %v3843
        %v3845 = vrot.slane %v3837, %v3844
        %v3847 = vunpack.c.l.s4 1934713408
        %v3848 = vunpack.c.0.s8 %v3847
        %v3849 = vlaneseq
        %v3850 = vshrl.u32 %v3849, 7
        %v3851 = vsub.s32 %v3848, %v3850
        %v3852 = vrot.slane %v3838, %v3851
        %v3853 = vcombine.low %v3797, %v3829
        %v3854 = vcombine.high %v3797, %v3829
        %v3855 = vcombine.low %v3804, %v3836
        %v3856 = vcombine.high %v3804, %v3836
        %v3857 = vcombine.low %v3813, %v3845
        %v3858 = vcombine.high %v3813, %v3845
        %v3859 = vcombine.low %v3820, %v3852
        %v3860 = vcombine.high %v3820, %v3852
        %v3861 = vcombine.low %v304, %v560
        %v3862 = vcombine.high %v304, %v560
        %v3864 = vunpack.c.l.s4 1983009808
        %v3865 = vunpack.c.0.s8 %v3864
        %v3866 = vlaneseq
        %v3867 = vshrl.u32 %v3866, 7
        %v3868 = vsub.s32 %v3865, %v3867
        %v3869 = vrot.slane %v3861, %v3868
        %v3871 = vunpack.c.l.s4 1983009808
        %v3872 = vunpack.c.0.s8 %v3871
        %v3873 = vlaneseq
        %v3874 = vshrl.u32 %v3873, 7
        %v3875 = vsub.s32 %v3872, %v3874
        %v3876 = vrot.slane %v3862, %v3875
        %v3877 = vcombine.low %v432, %v688
        %v3878 = vcombine.high %v432, %v688
        %v3880 = vunpack.c.l.s4 1983009808
        %v3881 = vunpack.c.0.s8 %v3880
        %v3882 = vlaneseq
        %v3883 = vshrl.u32 %v3882, 7
        %v3884 = vsub.s32 %v3881, %v3883
        %v3885 = vrot.slane %v3877, %v3884
        %v3887 = vunpack.c.l.s4 1983009808
        %v3888 = vunpack.c.0.s8 %v3887
        %v3889 = vlaneseq
        %v3890 = vshrl.u32 %v3889, 7
        %v3891 = vsub.s32 %v3888, %v3890
        %v3892 = vrot.slane %v3878, %v3891
        %v3893 = vcombine.low %v816, %v1072
        %v3894 = vcombine.high %v816, %v1072
        %v3896 = vunpack.c.l.s4 1983009808
        %v3897 = vunpack.c.0.s8 %v3896
        %v3898 = vlaneseq
        %v3899 = vshrl.u32 %v3898, 7
        %v3900 = vsub.s32 %v3897, %v3899
        %v3901 = vrot.slane %v3893, %v3900
        %v3903 = vunpack.c.l.s4 1983009808
        %v3904 = vunpack.c.0.s8 %v3903
        %v3905 = vlaneseq
        %v3906 = vshrl.u32 %v3905, 7
        %v3907 = vsub.s32 %v3904, %v3906
        %v3908 = vrot.slane %v3894, %v3907
        %v3909 = vcombine.low %v944, %v1200
        %v3910 = vcombine.high %v944, %v1200
        %v3912 = vunpack.c.l.s4 1983009808
        %v3913 = vunpack.c.0.s8 %v3912
        %v3914 = vlaneseq
        %v3915 = vshrl.u32 %v3914, 7
        %v3916 = vsub.s32 %v3913, %v3915
        %v3917 = vrot.slane %v3909, %v3916
        %v3919 = vunpack.c.l.s4 1983009808
        %v3920 = vunpack.c.0.s8 %v3919
        %v3921 = vlaneseq
        %v3922 = vshrl.u32 %v3921, 7
        %v3923 = vsub.s32 %v3920, %v3922
        %v3924 = vrot.slane %v3910, %v3923
        %v3925 = vcombine.low %v3869, %v3885
        %v3926 = vcombine.high %v3869, %v3885
        %v3928 = vunpack.c.l.s4 1934713408
        %v3929 = vunpack.c.0.s8 %v3928
        %v3930 = vlaneseq
        %v3931 = vshrl.u32 %v3930, 7
        %v3932 = vsub.s32 %v3929, %v3931
        %v3933 = vrot.slane %v3925, %v3932
        %v3935 = vunpack.c.l.s4 1934713408
        %v3936 = vunpack.c.0.s8 %v3935
        %v3937 = vlaneseq
        %v3938 = vshrl.u32 %v3937, 7
        %v3939 = vsub.s32 %v3936, %v3938
        %v3940 = vrot.slane %v3926, %v3939
        %v3941 = vcombine.low %v3876, %v3892
        %v3942 = vcombine.high %v3876, %v3892
        %v3944 = vunpack.c.l.s4 1934713408
        %v3945 = vunpack.c.0.s8 %v3944
        %v3946 = vlaneseq
        %v3947 = vshrl.u32 %v3946, 7
        %v3948 = vsub.s32 %v3945, %v3947
        %v3949 = vrot.slane %v3941, %v3948
        %v3951 = vunpack.c.l.s4 1934713408
        %v3952 = vunpack.c.0.s8 %v3951
        %v3953 = vlaneseq
        %v3954 = vshrl.u32 %v3953, 7
        %v3955 = vsub.s32 %v3952, %v3954
        %v3956 = vrot.slane %v3942, %v3955
        %v3957 = vcombine.low %v3901, %v3917
        %v3958 = vcombine.high %v3901, %v3917
        %v3960 = vunpack.c.l.s4 1934713408
        %v3961 = vunpack.c.0.s8 %v3960
        %v3962 = vlaneseq
        %v3963 = vshrl.u32 %v3962, 7
        %v3964 = vsub.s32 %v3961, %v3963
        %v3965 = vrot.slane %v3957, %v3964
        %v3967 = vunpack.c.l.s4 1934713408
        %v3968 = vunpack.c.0.s8 %v3967
        %v3969 = vlaneseq
        %v3970 = vshrl.u32 %v3969, 7
        %v3971 = vsub.s32 %v3968, %v3970
        %v3972 = vrot.slane %v3958, %v3971
        %v3973 = vcombine.low %v3908, %v3924
        %v3974 = vcombine.high %v3908, %v3924
        %v3976 = vunpack.c.l.s4 1934713408
        %v3977 = vunpack.c.0.s8 %v3976
        %v3978 = vlaneseq
        %v3979 = vshrl.u32 %v3978, 7
        %v3980 = vsub.s32 %v3977, %v3979
        %v3981 = vrot.slane %v3973, %v3980
        %v3983 = vunpack.c.l.s4 1934713408
        %v3984 = vunpack.c.0.s8 %v3983
        %v3985 = vlaneseq
        %v3986 = vshrl.u32 %v3985, 7
        %v3987 = vsub.s32 %v3984, %v3986
        %v3988 = vrot.slane %v3974, %v3987
        %v3989 = vcombine.low %v3933, %v3965
        %v3990 = vcombine.high %v3933, %v3965
        %v3991 = vcombine.low %v3940, %v3972
        %v3992 = vcombine.high %v3940, %v3972
        %v3993 = vcombine.low %v3949, %v3981
        %v3994 = vcombine.high %v3949, %v3981
        %v3995 = vcombine.low %v3956, %v3988
        %v3996 = vcombine.high %v3956, %v3988
        %v3997 = vcombine.low %v305, %v561
        %v3998 = vcombine.high %v305, %v561
        %v4000 = vunpack.c.l.s4 1983009808
        %v4001 = vunpack.c.0.s8 %v4000
        %v4002 = vlaneseq
        %v4003 = vshrl.u32 %v4002, 7
        %v4004 = vsub.s32 %v4001, %v4003
        %v4005 = vrot.slane %v3997, %v4004
        %v4007 = vunpack.c.l.s4 1983009808
        %v4008 = vunpack.c.0.s8 %v4007
        %v4009 = vlaneseq
        %v4010 = vshrl.u32 %v4009, 7
        %v4011 = vsub.s32 %v4008, %v4010
        %v4012 = vrot.slane %v3998, %v4011
        %v4013 = vcombine.low %v433, %v689
        %v4014 = vcombine.high %v433, %v689
        %v4016 = vunpack.c.l.s4 1983009808
        %v4017 = vunpack.c.0.s8 %v4016
        %v4018 = vlaneseq
        %v4019 = vshrl.u32 %v4018, 7
        %v4020 = vsub.s32 %v4017, %v4019
        %v4021 = vrot.slane %v4013, %v4020
        %v4023 = vunpack.c.l.s4 1983009808
        %v4024 = vunpack.c.0.s8 %v4023
        %v4025 = vlaneseq
        %v4026 = vshrl.u32 %v4025, 7
        %v4027 = vsub.s32 %v4024, %v4026
        %v4028 = vrot.slane %v4014, %v4027
        %v4029 = vcombine.low %v817, %v1073
        %v4030 = vcombine.high %v817, %v1073
        %v4032 = vunpack.c.l.s4 1983009808
        %v4033 = vunpack.c.0.s8 %v4032
        %v4034 = vlaneseq
        %v4035 = vshrl.u32 %v4034, 7
        %v4036 = vsub.s32 %v4033, %v4035
        %v4037 = vrot.slane %v4029, %v4036
        %v4039 = vunpack.c.l.s4 1983009808
        %v4040 = vunpack.c.0.s8 %v4039
        %v4041 = vlaneseq
        %v4042 = vshrl.u32 %v4041, 7
        %v4043 = vsub.s32 %v4040, %v4042
        %v4044 = vrot.slane %v4030, %v4043
        %v4045 = vcombine.low %v945, %v1201
        %v4046 = vcombine.high %v945, %v1201
        %v4048 = vunpack.c.l.s4 1983009808
        %v4049 = vunpack.c.0.s8 %v4048
        %v4050 = vlaneseq
        %v4051 = vshrl.u32 %v4050, 7
        %v4052 = vsub.s32 %v4049, %v4051
        %v4053 = vrot.slane %v4045, %v4052
        %v4055 = vunpack.c.l.s4 1983009808
        %v4056 = vunpack.c.0.s8 %v4055
        %v4057 = vlaneseq
        %v4058 = vshrl.u32 %v4057, 7
        %v4059 = vsub.s32 %v4056, %v4058
        %v4060 = vrot.slane %v4046, %v4059
        %v4061 = vcombine.low %v4005, %v4021
        %v4062 = vcombine.high %v4005, %v4021
        %v4064 = vunpack.c.l.s4 1934713408
        %v4065 = vunpack.c.0.s8 %v4064
        %v4066 = vlaneseq
        %v4067 = vshrl.u32 %v4066, 7
        %v4068 = vsub.s32 %v4065, %v4067
        %v4069 = vrot.slane %v4061, %v4068
        %v4071 = vunpack.c.l.s4 1934713408
        %v4072 = vunpack.c.0.s8 %v4071
        %v4073 = vlaneseq
        %v4074 = vshrl.u32 %v4073, 7
        %v4075 = vsub.s32 %v4072, %v4074
        %v4076 = vrot.slane %v4062, %v4075
        %v4077 = vcombine.low %v4012, %v4028
        %v4078 = vcombine.high %v4012, %v4028
        %v4080 = vunpack.c.l.s4 1934713408
        %v4081 = vunpack.c.0.s8 %v4080
        %v4082 = vlaneseq
        %v4083 = vshrl.u32 %v4082, 7
        %v4084 = vsub.s32 %v4081, %v4083
        %v4085 = vrot.slane %v4077, %v4084
        %v4087 = vunpack.c.l.s4 1934713408
        %v4088 = vunpack.c.0.s8 %v4087
        %v4089 = vlaneseq
        %v4090 = vshrl.u32 %v4089, 7
        %v4091 = vsub.s32 %v4088, %v4090
        %v4092 = vrot.slane %v4078, %v4091
        %v4093 = vcombine.low %v4037, %v4053
        %v4094 = vcombine.high %v4037, %v4053
        %v4096 = vunpack.c.l.s4 1934713408
        %v4097 = vunpack.c.0.s8 %v4096
        %v4098 = vlaneseq
        %v4099 = vshrl.u32 %v4098, 7
        %v4100 = vsub.s32 %v4097, %v4099
        %v4101 = vrot.slane %v4093, %v4100
        %v4103 = vunpack.c.l.s4 1934713408
        %v4104 = vunpack.c.0.s8 %v4103
        %v4105 = vlaneseq
        %v4106 = vshrl.u32 %v4105, 7
        %v4107 = vsub.s32 %v4104, %v4106
        %v4108 = vrot.slane %v4094, %v4107
        %v4109 = vcombine.low %v4044, %v4060
        %v4110 = vcombine.high %v4044, %v4060
        %v4112 = vunpack.c.l.s4 1934713408
        %v4113 = vunpack.c.0.s8 %v4112
        %v4114 = vlaneseq
        %v4115 = vshrl.u32 %v4114, 7
        %v4116 = vsub.s32 %v4113, %v4115
        %v4117 = vrot.slane %v4109, %v4116
        %v4119 = vunpack.c.l.s4 1934713408
        %v4120 = vunpack.c.0.s8 %v4119
        %v4121 = vlaneseq
        %v4122 = vshrl.u32 %v4121, 7
        %v4123 = vsub.s32 %v4120, %v4122
        %v4124 = vrot.slane %v4110, %v4123
        %v4125 = vcombine.low %v4069, %v4101
        %v4126 = vcombine.high %v4069, %v4101
        %v4127 = vcombine.low %v4076, %v4108
        %v4128 = vcombine.high %v4076, %v4108
        %v4129 = vcombine.low %v4085, %v4117
        %v4130 = vcombine.high %v4085, %v4117
        %v4131 = vcombine.low %v4092, %v4124
        %v4132 = vcombine.high %v4092, %v4124
        %v4133 = vcombine.low %v306, %v562
        %v4134 = vcombine.high %v306, %v562
        %v4136 = vunpack.c.l.s4 1983009808
        %v4137 = vunpack.c.0.s8 %v4136
        %v4138 = vlaneseq
        %v4139 = vshrl.u32 %v4138, 7
        %v4140 = vsub.s32 %v4137, %v4139
        %v4141 = vrot.slane %v4133, %v4140
        %v4143 = vunpack.c.l.s4 1983009808
        %v4144 = vunpack.c.0.s8 %v4143
        %v4145 = vlaneseq
        %v4146 = vshrl.u32 %v4145, 7
        %v4147 = vsub.s32 %v4144, %v4146
        %v4148 = vrot.slane %v4134, %v4147
        %v4149 = vcombine.low %v434, %v690
        %v4150 = vcombine.high %v434, %v690
        %v4152 = vunpack.c.l.s4 1983009808
        %v4153 = vunpack.c.0.s8 %v4152
        %v4154 = vlaneseq
        %v4155 = vshrl.u32 %v4154, 7
        %v4156 = vsub.s32 %v4153, %v4155
        %v4157 = vrot.slane %v4149, %v4156
        %v4159 = vunpack.c.l.s4 1983009808
        %v4160 = vunpack.c.0.s8 %v4159
        %v4161 = vlaneseq
        %v4162 = vshrl.u32 %v4161, 7
        %v4163 = vsub.s32 %v4160, %v4162
        %v4164 = vrot.slane %v4150, %v4163
        %v4165 = vcombine.low %v818, %v1074
        %v4166 = vcombine.high %v818, %v1074
        %v4168 = vunpack.c.l.s4 1983009808
        %v4169 = vunpack.c.0.s8 %v4168
        %v4170 = vlaneseq
        %v4171 = vshrl.u32 %v4170, 7
        %v4172 = vsub.s32 %v4169, %v4171
        %v4173 = vrot.slane %v4165, %v4172
        %v4175 = vunpack.c.l.s4 1983009808
        %v4176 = vunpack.c.0.s8 %v4175
        %v4177 = vlaneseq
        %v4178 = vshrl.u32 %v4177, 7
        %v4179 = vsub.s32 %v4176, %v4178
        %v4180 = vrot.slane %v4166, %v4179
        %v4181 = vcombine.low %v946, %v1202
        %v4182 = vcombine.high %v946, %v1202
        %v4184 = vunpack.c.l.s4 1983009808
        %v4185 = vunpack.c.0.s8 %v4184
        %v4186 = vlaneseq
        %v4187 = vshrl.u32 %v4186, 7
        %v4188 = vsub.s32 %v4185, %v4187
        %v4189 = vrot.slane %v4181, %v4188
        %v4191 = vunpack.c.l.s4 1983009808
        %v4192 = vunpack.c.0.s8 %v4191
        %v4193 = vlaneseq
        %v4194 = vshrl.u32 %v4193, 7
        %v4195 = vsub.s32 %v4192, %v4194
        %v4196 = vrot.slane %v4182, %v4195
        %v4197 = vcombine.low %v4141, %v4157
        %v4198 = vcombine.high %v4141, %v4157
        %v4200 = vunpack.c.l.s4 1934713408
        %v4201 = vunpack.c.0.s8 %v4200
        %v4202 = vlaneseq
        %v4203 = vshrl.u32 %v4202, 7
        %v4204 = vsub.s32 %v4201, %v4203
        %v4205 = vrot.slane %v4197, %v4204
        %v4207 = vunpack.c.l.s4 1934713408
        %v4208 = vunpack.c.0.s8 %v4207
        %v4209 = vlaneseq
        %v4210 = vshrl.u32 %v4209, 7
        %v4211 = vsub.s32 %v4208, %v4210
        %v4212 = vrot.slane %v4198, %v4211
        %v4213 = vcombine.low %v4148, %v4164
        %v4214 = vcombine.high %v4148, %v4164
        %v4216 = vunpack.c.l.s4 1934713408
        %v4217 = vunpack.c.0.s8 %v4216
        %v4218 = vlaneseq
        %v4219 = vshrl.u32 %v4218, 7
        %v4220 = vsub.s32 %v4217, %v4219
        %v4221 = vrot.slane %v4213, %v4220
        %v4223 = vunpack.c.l.s4 1934713408
        %v4224 = vunpack.c.0.s8 %v4223
        %v4225 = vlaneseq
        %v4226 = vshrl.u32 %v4225, 7
        %v4227 = vsub.s32 %v4224, %v4226
        %v4228 = vrot.slane %v4214, %v4227
        %v4229 = vcombine.low %v4173, %v4189
        %v4230 = vcombine.high %v4173, %v4189
        %v4232 = vunpack.c.l.s4 1934713408
        %v4233 = vunpack.c.0.s8 %v4232
        %v4234 = vlaneseq
        %v4235 = vshrl.u32 %v4234, 7
        %v4236 = vsub.s32 %v4233, %v4235
        %v4237 = vrot.slane %v4229, %v4236
        %v4239 = vunpack.c.l.s4 1934713408
        %v4240 = vunpack.c.0.s8 %v4239
        %v4241 = vlaneseq
        %v4242 = vshrl.u32 %v4241, 7
        %v4243 = vsub.s32 %v4240, %v4242
        %v4244 = vrot.slane %v4230, %v4243
        %v4245 = vcombine.low %v4180, %v4196
        %v4246 = vcombine.high %v4180, %v4196
        %v4248 = vunpack.c.l.s4 1934713408
        %v4249 = vunpack.c.0.s8 %v4248
        %v4250 = vlaneseq
        %v4251 = vshrl.u32 %v4250, 7
        %v4252 = vsub.s32 %v4249, %v4251
        %v4253 = vrot.slane %v4245, %v4252
        %v4255 = vunpack.c.l.s4 1934713408
        %v4256 = vunpack.c.0.s8 %v4255
        %v4257 = vlaneseq
        %v4258 = vshrl.u32 %v4257, 7
        %v4259 = vsub.s32 %v4256, %v4258
        %v4260 = vrot.slane %v4246, %v4259
        %v4261 = vcombine.low %v4205, %v4237
        %v4262 = vcombine.high %v4205, %v4237
        %v4263 = vcombine.low %v4212, %v4244
        %v4264 = vcombine.high %v4212, %v4244
        %v4265 = vcombine.low %v4221, %v4253
        %v4266 = vcombine.high %v4221, %v4253
        %v4267 = vcombine.low %v4228, %v4260
        %v4268 = vcombine.high %v4228, %v4260
        %v4269 = vcombine.low %v307, %v563
        %v4270 = vcombine.high %v307, %v563
        %v4272 = vunpack.c.l.s4 1983009808
        %v4273 = vunpack.c.0.s8 %v4272
        %v4274 = vlaneseq
        %v4275 = vshrl.u32 %v4274, 7
        %v4276 = vsub.s32 %v4273, %v4275
        %v4277 = vrot.slane %v4269, %v4276
        %v4279 = vunpack.c.l.s4 1983009808
        %v4280 = vunpack.c.0.s8 %v4279
        %v4281 = vlaneseq
        %v4282 = vshrl.u32 %v4281, 7
        %v4283 = vsub.s32 %v4280, %v4282
        %v4284 = vrot.slane %v4270, %v4283
        %v4285 = vcombine.low %v435, %v691
        %v4286 = vcombine.high %v435, %v691
        %v4288 = vunpack.c.l.s4 1983009808
        %v4289 = vunpack.c.0.s8 %v4288
        %v4290 = vlaneseq
        %v4291 = vshrl.u32 %v4290, 7
        %v4292 = vsub.s32 %v4289, %v4291
        %v4293 = vrot.slane %v4285, %v4292
        %v4295 = vunpack.c.l.s4 1983009808
        %v4296 = vunpack.c.0.s8 %v4295
        %v4297 = vlaneseq
        %v4298 = vshrl.u32 %v4297, 7
        %v4299 = vsub.s32 %v4296, %v4298
        %v4300 = vrot.slane %v4286, %v4299
        %v4301 = vcombine.low %v819, %v1075
        %v4302 = vcombine.high %v819, %v1075
        %v4304 = vunpack.c.l.s4 1983009808
        %v4305 = vunpack.c.0.s8 %v4304
        %v4306 = vlaneseq
        %v4307 = vshrl.u32 %v4306, 7
        %v4308 = vsub.s32 %v4305, %v4307
        %v4309 = vrot.slane %v4301, %v4308
        %v4311 = vunpack.c.l.s4 1983009808
        %v4312 = vunpack.c.0.s8 %v4311
        %v4313 = vlaneseq
        %v4314 = vshrl.u32 %v4313, 7
        %v4315 = vsub.s32 %v4312, %v4314
        %v4316 = vrot.slane %v4302, %v4315
        %v4317 = vcombine.low %v947, %v1203
        %v4318 = vcombine.high %v947, %v1203
        %v4320 = vunpack.c.l.s4 1983009808
        %v4321 = vunpack.c.0.s8 %v4320
        %v4322 = vlaneseq
        %v4323 = vshrl.u32 %v4322, 7
        %v4324 = vsub.s32 %v4321, %v4323
        %v4325 = vrot.slane %v4317, %v4324
        %v4327 = vunpack.c.l.s4 1983009808
        %v4328 = vunpack.c.0.s8 %v4327
        %v4329 = vlaneseq
        %v4330 = vshrl.u32 %v4329, 7
        %v4331 = vsub.s32 %v4328, %v4330
        %v4332 = vrot.slane %v4318, %v4331
        %v4333 = vcombine.low %v4277, %v4293
        %v4334 = vcombine.high %v4277, %v4293
        %v4336 = vunpack.c.l.s4 1934713408
        %v4337 = vunpack.c.0.s8 %v4336
        %v4338 = vlaneseq
        %v4339 = vshrl.u32 %v4338, 7
        %v4340 = vsub.s32 %v4337, %v4339
        %v4341 = vrot.slane %v4333, %v4340
        %v4343 = vunpack.c.l.s4 1934713408
        %v4344 = vunpack.c.0.s8 %v4343
        %v4345 = vlaneseq
        %v4346 = vshrl.u32 %v4345, 7
        %v4347 = vsub.s32 %v4344, %v4346
        %v4348 = vrot.slane %v4334, %v4347
        %v4349 = vcombine.low %v4284, %v4300
        %v4350 = vcombine.high %v4284, %v4300
        %v4352 = vunpack.c.l.s4 1934713408
        %v4353 = vunpack.c.0.s8 %v4352
        %v4354 = vlaneseq
        %v4355 = vshrl.u32 %v4354, 7
        %v4356 = vsub.s32 %v4353, %v4355
        %v4357 = vrot.slane %v4349, %v4356
        %v4359 = vunpack.c.l.s4 1934713408
        %v4360 = vunpack.c.0.s8 %v4359
        %v4361 = vlaneseq
        %v4362 = vshrl.u32 %v4361, 7
        %v4363 = vsub.s32 %v4360, %v4362
        %v4364 = vrot.slane %v4350, %v4363
        %v4365 = vcombine.low %v4309, %v4325
        %v4366 = vcombine.high %v4309, %v4325
        %v4368 = vunpack.c.l.s4 1934713408
        %v4369 = vunpack.c.0.s8 %v4368
        %v4370 = vlaneseq
        %v4371 = vshrl.u32 %v4370, 7
        %v4372 = vsub.s32 %v4369, %v4371
        %v4373 = vrot.slane %v4365, %v4372
        %v4375 = vunpack.c.l.s4 1934713408
        %v4376 = vunpack.c.0.s8 %v4375
        %v4377 = vlaneseq
        %v4378 = vshrl.u32 %v4377, 7
        %v4379 = vsub.s32 %v4376, %v4378
        %v4380 = vrot.slane %v4366, %v4379
        %v4381 = vcombine.low %v4316, %v4332
        %v4382 = vcombine.high %v4316, %v4332
        %v4384 = vunpack.c.l.s4 1934713408
        %v4385 = vunpack.c.0.s8 %v4384
        %v4386 = vlaneseq
        %v4387 = vshrl.u32 %v4386, 7
        %v4388 = vsub.s32 %v4385, %v4387
        %v4389 = vrot.slane %v4381, %v4388
        %v4391 = vunpack.c.l.s4 1934713408
        %v4392 = vunpack.c.0.s8 %v4391
        %v4393 = vlaneseq
        %v4394 = vshrl.u32 %v4393, 7
        %v4395 = vsub.s32 %v4392, %v4394
        %v4396 = vrot.slane %v4382, %v4395
        %v4397 = vcombine.low %v4341, %v4373
        %v4398 = vcombine.high %v4341, %v4373
        %v4399 = vcombine.low %v4348, %v4380
        %v4400 = vcombine.high %v4348, %v4380
        %v4401 = vcombine.low %v4357, %v4389
        %v4402 = vcombine.high %v4357, %v4389
        %v4403 = vcombine.low %v4364, %v4396
        %v4404 = vcombine.high %v4364, %v4396
        %v4405 = vcombine.low %v308, %v564
        %v4406 = vcombine.high %v308, %v564
        %v4408 = vunpack.c.l.s4 1983009808
        %v4409 = vunpack.c.0.s8 %v4408
        %v4410 = vlaneseq
        %v4411 = vshrl.u32 %v4410, 7
        %v4412 = vsub.s32 %v4409, %v4411
        %v4413 = vrot.slane %v4405, %v4412
        %v4415 = vunpack.c.l.s4 1983009808
        %v4416 = vunpack.c.0.s8 %v4415
        %v4417 = vlaneseq
        %v4418 = vshrl.u32 %v4417, 7
        %v4419 = vsub.s32 %v4416, %v4418
        %v4420 = vrot.slane %v4406, %v4419
        %v4421 = vcombine.low %v436, %v692
        %v4422 = vcombine.high %v436, %v692
        %v4424 = vunpack.c.l.s4 1983009808
        %v4425 = vunpack.c.0.s8 %v4424
        %v4426 = vlaneseq
        %v4427 = vshrl.u32 %v4426, 7
        %v4428 = vsub.s32 %v4425, %v4427
        %v4429 = vrot.slane %v4421, %v4428
        %v4431 = vunpack.c.l.s4 1983009808
        %v4432 = vunpack.c.0.s8 %v4431
        %v4433 = vlaneseq
        %v4434 = vshrl.u32 %v4433, 7
        %v4435 = vsub.s32 %v4432, %v4434
        %v4436 = vrot.slane %v4422, %v4435
        %v4437 = vcombine.low %v820, %v1076
        %v4438 = vcombine.high %v820, %v1076
        %v4440 = vunpack.c.l.s4 1983009808
        %v4441 = vunpack.c.0.s8 %v4440
        %v4442 = vlaneseq
        %v4443 = vshrl.u32 %v4442, 7
        %v4444 = vsub.s32 %v4441, %v4443
        %v4445 = vrot.slane %v4437, %v4444
        %v4447 = vunpack.c.l.s4 1983009808
        %v4448 = vunpack.c.0.s8 %v4447
        %v4449 = vlaneseq
        %v4450 = vshrl.u32 %v4449, 7
        %v4451 = vsub.s32 %v4448, %v4450
        %v4452 = vrot.slane %v4438, %v4451
        %v4453 = vcombine.low %v948, %v1204
        %v4454 = vcombine.high %v948, %v1204
        %v4456 = vunpack.c.l.s4 1983009808
        %v4457 = vunpack.c.0.s8 %v4456
        %v4458 = vlaneseq
        %v4459 = vshrl.u32 %v4458, 7
        %v4460 = vsub.s32 %v4457, %v4459
        %v4461 = vrot.slane %v4453, %v4460
        %v4463 = vunpack.c.l.s4 1983009808
        %v4464 = vunpack.c.0.s8 %v4463
        %v4465 = vlaneseq
        %v4466 = vshrl.u32 %v4465, 7
        %v4467 = vsub.s32 %v4464, %v4466
        %v4468 = vrot.slane %v4454, %v4467
        %v4469 = vcombine.low %v4413, %v4429
        %v4470 = vcombine.high %v4413, %v4429
        %v4472 = vunpack.c.l.s4 1934713408
        %v4473 = vunpack.c.0.s8 %v4472
        %v4474 = vlaneseq
        %v4475 = vshrl.u32 %v4474, 7
        %v4476 = vsub.s32 %v4473, %v4475
        %v4477 = vrot.slane %v4469, %v4476
        %v4479 = vunpack.c.l.s4 1934713408
        %v4480 = vunpack.c.0.s8 %v4479
        %v4481 = vlaneseq
        %v4482 = vshrl.u32 %v4481, 7
        %v4483 = vsub.s32 %v4480, %v4482
        %v4484 = vrot.slane %v4470, %v4483
        %v4485 = vcombine.low %v4420, %v4436
        %v4486 = vcombine.high %v4420, %v4436
        %v4488 = vunpack.c.l.s4 1934713408
        %v4489 = vunpack.c.0.s8 %v4488
        %v4490 = vlaneseq
        %v4491 = vshrl.u32 %v4490, 7
        %v4492 = vsub.s32 %v4489, %v4491
        %v4493 = vrot.slane %v4485, %v4492
        %v4495 = vunpack.c.l.s4 1934713408
        %v4496 = vunpack.c.0.s8 %v4495
        %v4497 = vlaneseq
        %v4498 = vshrl.u32 %v4497, 7
        %v4499 = vsub.s32 %v4496, %v4498
        %v4500 = vrot.slane %v4486, %v4499
        %v4501 = vcombine.low %v4445, %v4461
        %v4502 = vcombine.high %v4445, %v4461
        %v4504 = vunpack.c.l.s4 1934713408
        %v4505 = vunpack.c.0.s8 %v4504
        %v4506 = vlaneseq
        %v4507 = vshrl.u32 %v4506, 7
        %v4508 = vsub.s32 %v4505, %v4507
        %v4509 = vrot.slane %v4501, %v4508
        %v4511 = vunpack.c.l.s4 1934713408
        %v4512 = vunpack.c.0.s8 %v4511
        %v4513 = vlaneseq
        %v4514 = vshrl.u32 %v4513, 7
        %v4515 = vsub.s32 %v4512, %v4514
        %v4516 = vrot.slane %v4502, %v4515
        %v4517 = vcombine.low %v4452, %v4468
        %v4518 = vcombine.high %v4452, %v4468
        %v4520 = vunpack.c.l.s4 1934713408
        %v4521 = vunpack.c.0.s8 %v4520
        %v4522 = vlaneseq
        %v4523 = vshrl.u32 %v4522, 7
        %v4524 = vsub.s32 %v4521, %v4523
        %v4525 = vrot.slane %v4517, %v4524
        %v4527 = vunpack.c.l.s4 1934713408
        %v4528 = vunpack.c.0.s8 %v4527
        %v4529 = vlaneseq
        %v4530 = vshrl.u32 %v4529, 7
        %v4531 = vsub.s32 %v4528, %v4530
        %v4532 = vrot.slane %v4518, %v4531
        %v4533 = vcombine.low %v4477, %v4509
        %v4534 = vcombine.high %v4477, %v4509
        %v4535 = vcombine.low %v4484, %v4516
        %v4536 = vcombine.high %v4484, %v4516
        %v4537 = vcombine.low %v4493, %v4525
        %v4538 = vcombine.high %v4493, %v4525
        %v4539 = vcombine.low %v4500, %v4532
        %v4540 = vcombine.high %v4500, %v4532
        %v4541 = vcombine.low %v309, %v565
        %v4542 = vcombine.high %v309, %v565
        %v4544 = vunpack.c.l.s4 1983009808
        %v4545 = vunpack.c.0.s8 %v4544
        %v4546 = vlaneseq
        %v4547 = vshrl.u32 %v4546, 7
        %v4548 = vsub.s32 %v4545, %v4547
        %v4549 = vrot.slane %v4541, %v4548
        %v4551 = vunpack.c.l.s4 1983009808
        %v4552 = vunpack.c.0.s8 %v4551
        %v4553 = vlaneseq
        %v4554 = vshrl.u32 %v4553, 7
        %v4555 = vsub.s32 %v4552, %v4554
        %v4556 = vrot.slane %v4542, %v4555
        %v4557 = vcombine.low %v437, %v693
        %v4558 = vcombine.high %v437, %v693
        %v4560 = vunpack.c.l.s4 1983009808
        %v4561 = vunpack.c.0.s8 %v4560
        %v4562 = vlaneseq
        %v4563 = vshrl.u32 %v4562, 7
        %v4564 = vsub.s32 %v4561, %v4563
        %v4565 = vrot.slane %v4557, %v4564
        %v4567 = vunpack.c.l.s4 1983009808
        %v4568 = vunpack.c.0.s8 %v4567
        %v4569 = vlaneseq
        %v4570 = vshrl.u32 %v4569, 7
        %v4571 = vsub.s32 %v4568, %v4570
        %v4572 = vrot.slane %v4558, %v4571
        %v4573 = vcombine.low %v821, %v1077
        %v4574 = vcombine.high %v821, %v1077
        %v4576 = vunpack.c.l.s4 1983009808
        %v4577 = vunpack.c.0.s8 %v4576
        %v4578 = vlaneseq
        %v4579 = vshrl.u32 %v4578, 7
        %v4580 = vsub.s32 %v4577, %v4579
        %v4581 = vrot.slane %v4573, %v4580
        %v4583 = vunpack.c.l.s4 1983009808
        %v4584 = vunpack.c.0.s8 %v4583
        %v4585 = vlaneseq
        %v4586 = vshrl.u32 %v4585, 7
        %v4587 = vsub.s32 %v4584, %v4586
        %v4588 = vrot.slane %v4574, %v4587
        %v4589 = vcombine.low %v949, %v1205
        %v4590 = vcombine.high %v949, %v1205
        %v4592 = vunpack.c.l.s4 1983009808
        %v4593 = vunpack.c.0.s8 %v4592
        %v4594 = vlaneseq
        %v4595 = vshrl.u32 %v4594, 7
        %v4596 = vsub.s32 %v4593, %v4595
        %v4597 = vrot.slane %v4589, %v4596
        %v4599 = vunpack.c.l.s4 1983009808
        %v4600 = vunpack.c.0.s8 %v4599
        %v4601 = vlaneseq
        %v4602 = vshrl.u32 %v4601, 7
        %v4603 = vsub.s32 %v4600, %v4602
        %v4604 = vrot.slane %v4590, %v4603
        %v4605 = vcombine.low %v4549, %v4565
        %v4606 = vcombine.high %v4549, %v4565
        %v4608 = vunpack.c.l.s4 1934713408
        %v4609 = vunpack.c.0.s8 %v4608
        %v4610 = vlaneseq
        %v4611 = vshrl.u32 %v4610, 7
        %v4612 = vsub.s32 %v4609, %v4611
        %v4613 = vrot.slane %v4605, %v4612
        %v4615 = vunpack.c.l.s4 1934713408
        %v4616 = vunpack.c.0.s8 %v4615
        %v4617 = vlaneseq
        %v4618 = vshrl.u32 %v4617, 7
        %v4619 = vsub.s32 %v4616, %v4618
        %v4620 = vrot.slane %v4606, %v4619
        %v4621 = vcombine.low %v4556, %v4572
        %v4622 = vcombine.high %v4556, %v4572
        %v4624 = vunpack.c.l.s4 1934713408
        %v4625 = vunpack.c.0.s8 %v4624
        %v4626 = vlaneseq
        %v4627 = vshrl.u32 %v4626, 7
        %v4628 = vsub.s32 %v4625, %v4627
        %v4629 = vrot.slane %v4621, %v4628
        %v4631 = vunpack.c.l.s4 1934713408
        %v4632 = vunpack.c.0.s8 %v4631
        %v4633 = vlaneseq
        %v4634 = vshrl.u32 %v4633, 7
        %v4635 = vsub.s32 %v4632, %v4634
        %v4636 = vrot.slane %v4622, %v4635
        %v4637 = vcombine.low %v4581, %v4597
        %v4638 = vcombine.high %v4581, %v4597
        %v4640 = vunpack.c.l.s4 1934713408
        %v4641 = vunpack.c.0.s8 %v4640
        %v4642 = vlaneseq
        %v4643 = vshrl.u32 %v4642, 7
        %v4644 = vsub.s32 %v4641, %v4643
        %v4645 = vrot.slane %v4637, %v4644
        %v4647 = vunpack.c.l.s4 1934713408
        %v4648 = vunpack.c.0.s8 %v4647
        %v4649 = vlaneseq
        %v4650 = vshrl.u32 %v4649, 7
        %v4651 = vsub.s32 %v4648, %v4650
        %v4652 = vrot.slane %v4638, %v4651
        %v4653 = vcombine.low %v4588, %v4604
        %v4654 = vcombine.high %v4588, %v4604
        %v4656 = vunpack.c.l.s4 1934713408
        %v4657 = vunpack.c.0.s8 %v4656
        %v4658 = vlaneseq
        %v4659 = vshrl.u32 %v4658, 7
        %v4660 = vsub.s32 %v4657, %v4659
        %v4661 = vrot.slane %v4653, %v4660
        %v4663 = vunpack.c.l.s4 1934713408
        %v4664 = vunpack.c.0.s8 %v4663
        %v4665 = vlaneseq
        %v4666 = vshrl.u32 %v4665, 7
        %v4667 = vsub.s32 %v4664, %v4666
        %v4668 = vrot.slane %v4654, %v4667
        %v4669 = vcombine.low %v4613, %v4645
        %v4670 = vcombine.high %v4613, %v4645
        %v4671 = vcombine.low %v4620, %v4652
        %v4672 = vcombine.high %v4620, %v4652
        %v4673 = vcombine.low %v4629, %v4661
        %v4674 = vcombine.high %v4629, %v4661
        %v4675 = vcombine.low %v4636, %v4668
        %v4676 = vcombine.high %v4636, %v4668
        %v4677 = vcombine.low %v310, %v566
        %v4678 = vcombine.high %v310, %v566
        %v4680 = vunpack.c.l.s4 1983009808
        %v4681 = vunpack.c.0.s8 %v4680
        %v4682 = vlaneseq
        %v4683 = vshrl.u32 %v4682, 7
        %v4684 = vsub.s32 %v4681, %v4683
        %v4685 = vrot.slane %v4677, %v4684
        %v4687 = vunpack.c.l.s4 1983009808
        %v4688 = vunpack.c.0.s8 %v4687
        %v4689 = vlaneseq
        %v4690 = vshrl.u32 %v4689, 7
        %v4691 = vsub.s32 %v4688, %v4690
        %v4692 = vrot.slane %v4678, %v4691
        %v4693 = vcombine.low %v438, %v694
        %v4694 = vcombine.high %v438, %v694
        %v4696 = vunpack.c.l.s4 1983009808
        %v4697 = vunpack.c.0.s8 %v4696
        %v4698 = vlaneseq
        %v4699 = vshrl.u32 %v4698, 7
        %v4700 = vsub.s32 %v4697, %v4699
        %v4701 = vrot.slane %v4693, %v4700
        %v4703 = vunpack.c.l.s4 1983009808
        %v4704 = vunpack.c.0.s8 %v4703
        %v4705 = vlaneseq
        %v4706 = vshrl.u32 %v4705, 7
        %v4707 = vsub.s32 %v4704, %v4706
        %v4708 = vrot.slane %v4694, %v4707
        %v4709 = vcombine.low %v822, %v1078
        %v4710 = vcombine.high %v822, %v1078
        %v4712 = vunpack.c.l.s4 1983009808
        %v4713 = vunpack.c.0.s8 %v4712
        %v4714 = vlaneseq
        %v4715 = vshrl.u32 %v4714, 7
        %v4716 = vsub.s32 %v4713, %v4715
        %v4717 = vrot.slane %v4709, %v4716
        %v4719 = vunpack.c.l.s4 1983009808
        %v4720 = vunpack.c.0.s8 %v4719
        %v4721 = vlaneseq
        %v4722 = vshrl.u32 %v4721, 7
        %v4723 = vsub.s32 %v4720, %v4722
        %v4724 = vrot.slane %v4710, %v4723
        %v4725 = vcombine.low %v950, %v1206
        %v4726 = vcombine.high %v950, %v1206
        %v4728 = vunpack.c.l.s4 1983009808
        %v4729 = vunpack.c.0.s8 %v4728
        %v4730 = vlaneseq
        %v4731 = vshrl.u32 %v4730, 7
        %v4732 = vsub.s32 %v4729, %v4731
        %v4733 = vrot.slane %v4725, %v4732
        %v4735 = vunpack.c.l.s4 1983009808
        %v4736 = vunpack.c.0.s8 %v4735
        %v4737 = vlaneseq
        %v4738 = vshrl.u32 %v4737, 7
        %v4739 = vsub.s32 %v4736, %v4738
        %v4740 = vrot.slane %v4726, %v4739
        %v4741 = vcombine.low %v4685, %v4701
        %v4742 = vcombine.high %v4685, %v4701
        %v4744 = vunpack.c.l.s4 1934713408
        %v4745 = vunpack.c.0.s8 %v4744
        %v4746 = vlaneseq
        %v4747 = vshrl.u32 %v4746, 7
        %v4748 = vsub.s32 %v4745, %v4747
        %v4749 = vrot.slane %v4741, %v4748
        %v4751 = vunpack.c.l.s4 1934713408
        %v4752 = vunpack.c.0.s8 %v4751
        %v4753 = vlaneseq
        %v4754 = vshrl.u32 %v4753, 7
        %v4755 = vsub.s32 %v4752, %v4754
        %v4756 = vrot.slane %v4742, %v4755
        %v4757 = vcombine.low %v4692, %v4708
        %v4758 = vcombine.high %v4692, %v4708
        %v4760 = vunpack.c.l.s4 1934713408
        %v4761 = vunpack.c.0.s8 %v4760
        %v4762 = vlaneseq
        %v4763 = vshrl.u32 %v4762, 7
        %v4764 = vsub.s32 %v4761, %v4763
        %v4765 = vrot.slane %v4757, %v4764
        %v4767 = vunpack.c.l.s4 1934713408
        %v4768 = vunpack.c.0.s8 %v4767
        %v4769 = vlaneseq
        %v4770 = vshrl.u32 %v4769, 7
        %v4771 = vsub.s32 %v4768, %v4770
        %v4772 = vrot.slane %v4758, %v4771
        %v4773 = vcombine.low %v4717, %v4733
        %v4774 = vcombine.high %v4717, %v4733
        %v4776 = vunpack.c.l.s4 1934713408
        %v4777 = vunpack.c.0.s8 %v4776
        %v4778 = vlaneseq
        %v4779 = vshrl.u32 %v4778, 7
        %v4780 = vsub.s32 %v4777, %v4779
        %v4781 = vrot.slane %v4773, %v4780
        %v4783 = vunpack.c.l.s4 1934713408
        %v4784 = vunpack.c.0.s8 %v4783
        %v4785 = vlaneseq
        %v4786 = vshrl.u32 %v4785, 7
        %v4787 = vsub.s32 %v4784, %v4786
        %v4788 = vrot.slane %v4774, %v4787
        %v4789 = vcombine.low %v4724, %v4740
        %v4790 = vcombine.high %v4724, %v4740
        %v4792 = vunpack.c.l.s4 1934713408
        %v4793 = vunpack.c.0.s8 %v4792
        %v4794 = vlaneseq
        %v4795 = vshrl.u32 %v4794, 7
        %v4796 = vsub.s32 %v4793, %v4795
        %v4797 = vrot.slane %v4789, %v4796
        %v4799 = vunpack.c.l.s4 1934713408
        %v4800 = vunpack.c.0.s8 %v4799
        %v4801 = vlaneseq
        %v4802 = vshrl.u32 %v4801, 7
        %v4803 = vsub.s32 %v4800, %v4802
        %v4804 = vrot.slane %v4790, %v4803
        %v4805 = vcombine.low %v4749, %v4781
        %v4806 = vcombine.high %v4749, %v4781
        %v4807 = vcombine.low %v4756, %v4788
        %v4808 = vcombine.high %v4756, %v4788
        %v4809 = vcombine.low %v4765, %v4797
        %v4810 = vcombine.high %v4765, %v4797
        %v4811 = vcombine.low %v4772, %v4804
        %v4812 = vcombine.high %v4772, %v4804
        %v4813 = vcombine.low %v311, %v567
        %v4814 = vcombine.high %v311, %v567
        %v4816 = vunpack.c.l.s4 1983009808
        %v4817 = vunpack.c.0.s8 %v4816
        %v4818 = vlaneseq
        %v4819 = vshrl.u32 %v4818, 7
        %v4820 = vsub.s32 %v4817, %v4819
        %v4821 = vrot.slane %v4813, %v4820
        %v4823 = vunpack.c.l.s4 1983009808
        %v4824 = vunpack.c.0.s8 %v4823
        %v4825 = vlaneseq
        %v4826 = vshrl.u32 %v4825, 7
        %v4827 = vsub.s32 %v4824, %v4826
        %v4828 = vrot.slane %v4814, %v4827
        %v4829 = vcombine.low %v439, %v695
        %v4830 = vcombine.high %v439, %v695
        %v4832 = vunpack.c.l.s4 1983009808
        %v4833 = vunpack.c.0.s8 %v4832
        %v4834 = vlaneseq
        %v4835 = vshrl.u32 %v4834, 7
        %v4836 = vsub.s32 %v4833, %v4835
        %v4837 = vrot.slane %v4829, %v4836
        %v4839 = vunpack.c.l.s4 1983009808
        %v4840 = vunpack.c.0.s8 %v4839
        %v4841 = vlaneseq
        %v4842 = vshrl.u32 %v4841, 7
        %v4843 = vsub.s32 %v4840, %v4842
        %v4844 = vrot.slane %v4830, %v4843
        %v4845 = vcombine.low %v823, %v1079
        %v4846 = vcombine.high %v823, %v1079
        %v4848 = vunpack.c.l.s4 1983009808
        %v4849 = vunpack.c.0.s8 %v4848
        %v4850 = vlaneseq
        %v4851 = vshrl.u32 %v4850, 7
        %v4852 = vsub.s32 %v4849, %v4851
        %v4853 = vrot.slane %v4845, %v4852
        %v4855 = vunpack.c.l.s4 1983009808
        %v4856 = vunpack.c.0.s8 %v4855
        %v4857 = vlaneseq
        %v4858 = vshrl.u32 %v4857, 7
        %v4859 = vsub.s32 %v4856, %v4858
        %v4860 = vrot.slane %v4846, %v4859
        %v4861 = vcombine.low %v951, %v1207
        %v4862 = vcombine.high %v951, %v1207
        %v4864 = vunpack.c.l.s4 1983009808
        %v4865 = vunpack.c.0.s8 %v4864
        %v4866 = vlaneseq
        %v4867 = vshrl.u32 %v4866, 7
        %v4868 = vsub.s32 %v4865, %v4867
        %v4869 = vrot.slane %v4861, %v4868
        %v4871 = vunpack.c.l.s4 1983009808
        %v4872 = vunpack.c.0.s8 %v4871
        %v4873 = vlaneseq
        %v4874 = vshrl.u32 %v4873, 7
        %v4875 = vsub.s32 %v4872, %v4874
        %v4876 = vrot.slane %v4862, %v4875
        %v4877 = vcombine.low %v4821, %v4837
        %v4878 = vcombine.high %v4821, %v4837
        %v4880 = vunpack.c.l.s4 1934713408
        %v4881 = vunpack.c.0.s8 %v4880
        %v4882 = vlaneseq
        %v4883 = vshrl.u32 %v4882, 7
        %v4884 = vsub.s32 %v4881, %v4883
        %v4885 = vrot.slane %v4877, %v4884
        %v4887 = vunpack.c.l.s4 1934713408
        %v4888 = vunpack.c.0.s8 %v4887
        %v4889 = vlaneseq
        %v4890 = vshrl.u32 %v4889, 7
        %v4891 = vsub.s32 %v4888, %v4890
        %v4892 = vrot.slane %v4878, %v4891
        %v4893 = vcombine.low %v4828, %v4844
        %v4894 = vcombine.high %v4828, %v4844
        %v4896 = vunpack.c.l.s4 1934713408
        %v4897 = vunpack.c.0.s8 %v4896
        %v4898 = vlaneseq
        %v4899 = vshrl.u32 %v4898, 7
        %v4900 = vsub.s32 %v4897, %v4899
        %v4901 = vrot.slane %v4893, %v4900
        %v4903 = vunpack.c.l.s4 1934713408
        %v4904 = vunpack.c.0.s8 %v4903
        %v4905 = vlaneseq
        %v4906 = vshrl.u32 %v4905, 7
        %v4907 = vsub.s32 %v4904, %v4906
        %v4908 = vrot.slane %v4894, %v4907
        %v4909 = vcombine.low %v4853, %v4869
        %v4910 = vcombine.high %v4853, %v4869
        %v4912 = vunpack.c.l.s4 1934713408
        %v4913 = vunpack.c.0.s8 %v4912
        %v4914 = vlaneseq
        %v4915 = vshrl.u32 %v4914, 7
        %v4916 = vsub.s32 %v4913, %v4915
        %v4917 = vrot.slane %v4909, %v4916
        %v4919 = vunpack.c.l.s4 1934713408
        %v4920 = vunpack.c.0.s8 %v4919
        %v4921 = vlaneseq
        %v4922 = vshrl.u32 %v4921, 7
        %v4923 = vsub.s32 %v4920, %v4922
        %v4924 = vrot.slane %v4910, %v4923
        %v4925 = vcombine.low %v4860, %v4876
        %v4926 = vcombine.high %v4860, %v4876
        %v4928 = vunpack.c.l.s4 1934713408
        %v4929 = vunpack.c.0.s8 %v4928
        %v4930 = vlaneseq
        %v4931 = vshrl.u32 %v4930, 7
        %v4932 = vsub.s32 %v4929, %v4931
        %v4933 = vrot.slane %v4925, %v4932
        %v4935 = vunpack.c.l.s4 1934713408
        %v4936 = vunpack.c.0.s8 %v4935
        %v4937 = vlaneseq
        %v4938 = vshrl.u32 %v4937, 7
        %v4939 = vsub.s32 %v4936, %v4938
        %v4940 = vrot.slane %v4926, %v4939
        %v4941 = vcombine.low %v4885, %v4917
        %v4942 = vcombine.high %v4885, %v4917
        %v4943 = vcombine.low %v4892, %v4924
        %v4944 = vcombine.high %v4892, %v4924
        %v4945 = vcombine.low %v4901, %v4933
        %v4946 = vcombine.high %v4901, %v4933
        %v4947 = vcombine.low %v4908, %v4940
        %v4948 = vcombine.high %v4908, %v4940
        %v4949 = vcombine.low %v312, %v568
        %v4950 = vcombine.high %v312, %v568
        %v4952 = vunpack.c.l.s4 1983009808
        %v4953 = vunpack.c.0.s8 %v4952
        %v4954 = vlaneseq
        %v4955 = vshrl.u32 %v4954, 7
        %v4956 = vsub.s32 %v4953, %v4955
        %v4957 = vrot.slane %v4949, %v4956
        %v4959 = vunpack.c.l.s4 1983009808
        %v4960 = vunpack.c.0.s8 %v4959
        %v4961 = vlaneseq
        %v4962 = vshrl.u32 %v4961, 7
        %v4963 = vsub.s32 %v4960, %v4962
        %v4964 = vrot.slane %v4950, %v4963
        %v4965 = vcombine.low %v440, %v696
        %v4966 = vcombine.high %v440, %v696
        %v4968 = vunpack.c.l.s4 1983009808
        %v4969 = vunpack.c.0.s8 %v4968
        %v4970 = vlaneseq
        %v4971 = vshrl.u32 %v4970, 7
        %v4972 = vsub.s32 %v4969, %v4971
        %v4973 = vrot.slane %v4965, %v4972
        %v4975 = vunpack.c.l.s4 1983009808
        %v4976 = vunpack.c.0.s8 %v4975
        %v4977 = vlaneseq
        %v4978 = vshrl.u32 %v4977, 7
        %v4979 = vsub.s32 %v4976, %v4978
        %v4980 = vrot.slane %v4966, %v4979
        %v4981 = vcombine.low %v824, %v1080
        %v4982 = vcombine.high %v824, %v1080
        %v4984 = vunpack.c.l.s4 1983009808
        %v4985 = vunpack.c.0.s8 %v4984
        %v4986 = vlaneseq
        %v4987 = vshrl.u32 %v4986, 7
        %v4988 = vsub.s32 %v4985, %v4987
        %v4989 = vrot.slane %v4981, %v4988
        %v4991 = vunpack.c.l.s4 1983009808
        %v4992 = vunpack.c.0.s8 %v4991
        %v4993 = vlaneseq
        %v4994 = vshrl.u32 %v4993, 7
        %v4995 = vsub.s32 %v4992, %v4994
        %v4996 = vrot.slane %v4982, %v4995
        %v4997 = vcombine.low %v952, %v1208
        %v4998 = vcombine.high %v952, %v1208
        %v5000 = vunpack.c.l.s4 1983009808
        %v5001 = vunpack.c.0.s8 %v5000
        %v5002 = vlaneseq
        %v5003 = vshrl.u32 %v5002, 7
        %v5004 = vsub.s32 %v5001, %v5003
        %v5005 = vrot.slane %v4997, %v5004
        %v5007 = vunpack.c.l.s4 1983009808
        %v5008 = vunpack.c.0.s8 %v5007
        %v5009 = vlaneseq
        %v5010 = vshrl.u32 %v5009, 7
        %v5011 = vsub.s32 %v5008, %v5010
        %v5012 = vrot.slane %v4998, %v5011
        %v5013 = vcombine.low %v4957, %v4973
        %v5014 = vcombine.high %v4957, %v4973
        %v5016 = vunpack.c.l.s4 1934713408
        %v5017 = vunpack.c.0.s8 %v5016
        %v5018 = vlaneseq
        %v5019 = vshrl.u32 %v5018, 7
        %v5020 = vsub.s32 %v5017, %v5019
        %v5021 = vrot.slane %v5013, %v5020
        %v5023 = vunpack.c.l.s4 1934713408
        %v5024 = vunpack.c.0.s8 %v5023
        %v5025 = vlaneseq
        %v5026 = vshrl.u32 %v5025, 7
        %v5027 = vsub.s32 %v5024, %v5026
        %v5028 = vrot.slane %v5014, %v5027
        %v5029 = vcombine.low %v4964, %v4980
        %v5030 = vcombine.high %v4964, %v4980
        %v5032 = vunpack.c.l.s4 1934713408
        %v5033 = vunpack.c.0.s8 %v5032
        %v5034 = vlaneseq
        %v5035 = vshrl.u32 %v5034, 7
        %v5036 = vsub.s32 %v5033, %v5035
        %v5037 = vrot.slane %v5029, %v5036
        %v5039 = vunpack.c.l.s4 1934713408
        %v5040 = vunpack.c.0.s8 %v5039
        %v5041 = vlaneseq
        %v5042 = vshrl.u32 %v5041, 7
        %v5043 = vsub.s32 %v5040, %v5042
        %v5044 = vrot.slane %v5030, %v5043
        %v5045 = vcombine.low %v4989, %v5005
        %v5046 = vcombine.high %v4989, %v5005
        %v5048 = vunpack.c.l.s4 1934713408
        %v5049 = vunpack.c.0.s8 %v5048
        %v5050 = vlaneseq
        %v5051 = vshrl.u32 %v5050, 7
        %v5052 = vsub.s32 %v5049, %v5051
        %v5053 = vrot.slane %v5045, %v5052
        %v5055 = vunpack.c.l.s4 1934713408
        %v5056 = vunpack.c.0.s8 %v5055
        %v5057 = vlaneseq
        %v5058 = vshrl.u32 %v5057, 7
        %v5059 = vsub.s32 %v5056, %v5058
        %v5060 = vrot.slane %v5046, %v5059
        %v5061 = vcombine.low %v4996, %v5012
        %v5062 = vcombine.high %v4996, %v5012
        %v5064 = vunpack.c.l.s4 1934713408
        %v5065 = vunpack.c.0.s8 %v5064
        %v5066 = vlaneseq
        %v5067 = vshrl.u32 %v5066, 7
        %v5068 = vsub.s32 %v5065, %v5067
        %v5069 = vrot.slane %v5061, %v5068
        %v5071 = vunpack.c.l.s4 1934713408
        %v5072 = vunpack.c.0.s8 %v5071
        %v5073 = vlaneseq
        %v5074 = vshrl.u32 %v5073, 7
        %v5075 = vsub.s32 %v5072, %v5074
        %v5076 = vrot.slane %v5062, %v5075
        %v5077 = vcombine.low %v5021, %v5053
        %v5078 = vcombine.high %v5021, %v5053
        %v5079 = vcombine.low %v5028, %v5060
        %v5080 = vcombine.high %v5028, %v5060
        %v5081 = vcombine.low %v5037, %v5069
        %v5082 = vcombine.high %v5037, %v5069
        %v5083 = vcombine.low %v5044, %v5076
        %v5084 = vcombine.high %v5044, %v5076
        %v5085 = vcombine.low %v313, %v569
        %v5086 = vcombine.high %v313, %v569
        %v5088 = vunpack.c.l.s4 1983009808
        %v5089 = vunpack.c.0.s8 %v5088
        %v5090 = vlaneseq
        %v5091 = vshrl.u32 %v5090, 7
        %v5092 = vsub.s32 %v5089, %v5091
        %v5093 = vrot.slane %v5085, %v5092
        %v5095 = vunpack.c.l.s4 1983009808
        %v5096 = vunpack.c.0.s8 %v5095
        %v5097 = vlaneseq
        %v5098 = vshrl.u32 %v5097, 7
        %v5099 = vsub.s32 %v5096, %v5098
        %v5100 = vrot.slane %v5086, %v5099
        %v5101 = vcombine.low %v441, %v697
        %v5102 = vcombine.high %v441, %v697
        %v5104 = vunpack.c.l.s4 1983009808
        %v5105 = vunpack.c.0.s8 %v5104
        %v5106 = vlaneseq
        %v5107 = vshrl.u32 %v5106, 7
        %v5108 = vsub.s32 %v5105, %v5107
        %v5109 = vrot.slane %v5101, %v5108
        %v5111 = vunpack.c.l.s4 1983009808
        %v5112 = vunpack.c.0.s8 %v5111
        %v5113 = vlaneseq
        %v5114 = vshrl.u32 %v5113, 7
        %v5115 = vsub.s32 %v5112, %v5114
        %v5116 = vrot.slane %v5102, %v5115
        %v5117 = vcombine.low %v825, %v1081
        %v5118 = vcombine.high %v825, %v1081
        %v5120 = vunpack.c.l.s4 1983009808
        %v5121 = vunpack.c.0.s8 %v5120
        %v5122 = vlaneseq
        %v5123 = vshrl.u32 %v5122, 7
        %v5124 = vsub.s32 %v5121, %v5123
        %v5125 = vrot.slane %v5117, %v5124
        %v5127 = vunpack.c.l.s4 1983009808
        %v5128 = vunpack.c.0.s8 %v5127
        %v5129 = vlaneseq
        %v5130 = vshrl.u32 %v5129, 7
        %v5131 = vsub.s32 %v5128, %v5130
        %v5132 = vrot.slane %v5118, %v5131
        %v5133 = vcombine.low %v953, %v1209
        %v5134 = vcombine.high %v953, %v1209
        %v5136 = vunpack.c.l.s4 1983009808
        %v5137 = vunpack.c.0.s8 %v5136
        %v5138 = vlaneseq
        %v5139 = vshrl.u32 %v5138, 7
        %v5140 = vsub.s32 %v5137, %v5139
        %v5141 = vrot.slane %v5133, %v5140
        %v5143 = vunpack.c.l.s4 1983009808
        %v5144 = vunpack.c.0.s8 %v5143
        %v5145 = vlaneseq
        %v5146 = vshrl.u32 %v5145, 7
        %v5147 = vsub.s32 %v5144, %v5146
        %v5148 = vrot.slane %v5134, %v5147
        %v5149 = vcombine.low %v5093, %v5109
        %v5150 = vcombine.high %v5093, %v5109
        %v5152 = vunpack.c.l.s4 1934713408
        %v5153 = vunpack.c.0.s8 %v5152
        %v5154 = vlaneseq
        %v5155 = vshrl.u32 %v5154, 7
        %v5156 = vsub.s32 %v5153, %v5155
        %v5157 = vrot.slane %v5149, %v5156
        %v5159 = vunpack.c.l.s4 1934713408
        %v5160 = vunpack.c.0.s8 %v5159
        %v5161 = vlaneseq
        %v5162 = vshrl.u32 %v5161, 7
        %v5163 = vsub.s32 %v5160, %v5162
        %v5164 = vrot.slane %v5150, %v5163
        %v5165 = vcombine.low %v5100, %v5116
        %v5166 = vcombine.high %v5100, %v5116
        %v5168 = vunpack.c.l.s4 1934713408
        %v5169 = vunpack.c.0.s8 %v5168
        %v5170 = vlaneseq
        %v5171 = vshrl.u32 %v5170, 7
        %v5172 = vsub.s32 %v5169, %v5171
        %v5173 = vrot.slane %v5165, %v5172
        %v5175 = vunpack.c.l.s4 1934713408
        %v5176 = vunpack.c.0.s8 %v5175
        %v5177 = vlaneseq
        %v5178 = vshrl.u32 %v5177, 7
        %v5179 = vsub.s32 %v5176, %v5178
        %v5180 = vrot.slane %v5166, %v5179
        %v5181 = vcombine.low %v5125, %v5141
        %v5182 = vcombine.high %v5125, %v5141
        %v5184 = vunpack.c.l.s4 1934713408
        %v5185 = vunpack.c.0.s8 %v5184
        %v5186 = vlaneseq
        %v5187 = vshrl.u32 %v5186, 7
        %v5188 = vsub.s32 %v5185, %v5187
        %v5189 = vrot.slane %v5181, %v5188
        %v5191 = vunpack.c.l.s4 1934713408
        %v5192 = vunpack.c.0.s8 %v5191
        %v5193 = vlaneseq
        %v5194 = vshrl.u32 %v5193, 7
        %v5195 = vsub.s32 %v5192, %v5194
        %v5196 = vrot.slane %v5182, %v5195
        %v5197 = vcombine.low %v5132, %v5148
        %v5198 = vcombine.high %v5132, %v5148
        %v5200 = vunpack.c.l.s4 1934713408
        %v5201 = vunpack.c.0.s8 %v5200
        %v5202 = vlaneseq
        %v5203 = vshrl.u32 %v5202, 7
        %v5204 = vsub.s32 %v5201, %v5203
        %v5205 = vrot.slane %v5197, %v5204
        %v5207 = vunpack.c.l.s4 1934713408
        %v5208 = vunpack.c.0.s8 %v5207
        %v5209 = vlaneseq
        %v5210 = vshrl.u32 %v5209, 7
        %v5211 = vsub.s32 %v5208, %v5210
        %v5212 = vrot.slane %v5198, %v5211
        %v5213 = vcombine.low %v5157, %v5189
        %v5214 = vcombine.high %v5157, %v5189
        %v5215 = vcombine.low %v5164, %v5196
        %v5216 = vcombine.high %v5164, %v5196
        %v5217 = vcombine.low %v5173, %v5205
        %v5218 = vcombine.high %v5173, %v5205
        %v5219 = vcombine.low %v5180, %v5212
        %v5220 = vcombine.high %v5180, %v5212
        %v5221 = vcombine.low %v314, %v570
        %v5222 = vcombine.high %v314, %v570
        %v5224 = vunpack.c.l.s4 1983009808
        %v5225 = vunpack.c.0.s8 %v5224
        %v5226 = vlaneseq
        %v5227 = vshrl.u32 %v5226, 7
        %v5228 = vsub.s32 %v5225, %v5227
        %v5229 = vrot.slane %v5221, %v5228
        %v5231 = vunpack.c.l.s4 1983009808
        %v5232 = vunpack.c.0.s8 %v5231
        %v5233 = vlaneseq
        %v5234 = vshrl.u32 %v5233, 7
        %v5235 = vsub.s32 %v5232, %v5234
        %v5236 = vrot.slane %v5222, %v5235
        %v5237 = vcombine.low %v442, %v698
        %v5238 = vcombine.high %v442, %v698
        %v5240 = vunpack.c.l.s4 1983009808
        %v5241 = vunpack.c.0.s8 %v5240
        %v5242 = vlaneseq
        %v5243 = vshrl.u32 %v5242, 7
        %v5244 = vsub.s32 %v5241, %v5243
        %v5245 = vrot.slane %v5237, %v5244
        %v5247 = vunpack.c.l.s4 1983009808
        %v5248 = vunpack.c.0.s8 %v5247
        %v5249 = vlaneseq
        %v5250 = vshrl.u32 %v5249, 7
        %v5251 = vsub.s32 %v5248, %v5250
        %v5252 = vrot.slane %v5238, %v5251
        %v5253 = vcombine.low %v826, %v1082
        %v5254 = vcombine.high %v826, %v1082
        %v5256 = vunpack.c.l.s4 1983009808
        %v5257 = vunpack.c.0.s8 %v5256
        %v5258 = vlaneseq
        %v5259 = vshrl.u32 %v5258, 7
        %v5260 = vsub.s32 %v5257, %v5259
        %v5261 = vrot.slane %v5253, %v5260
        %v5263 = vunpack.c.l.s4 1983009808
        %v5264 = vunpack.c.0.s8 %v5263
        %v5265 = vlaneseq
        %v5266 = vshrl.u32 %v5265, 7
        %v5267 = vsub.s32 %v5264, %v5266
        %v5268 = vrot.slane %v5254, %v5267
        %v5269 = vcombine.low %v954, %v1210
        %v5270 = vcombine.high %v954, %v1210
        %v5272 = vunpack.c.l.s4 1983009808
        %v5273 = vunpack.c.0.s8 %v5272
        %v5274 = vlaneseq
        %v5275 = vshrl.u32 %v5274, 7
        %v5276 = vsub.s32 %v5273, %v5275
        %v5277 = vrot.slane %v5269, %v5276
        %v5279 = vunpack.c.l.s4 1983009808
        %v5280 = vunpack.c.0.s8 %v5279
        %v5281 = vlaneseq
        %v5282 = vshrl.u32 %v5281, 7
        %v5283 = vsub.s32 %v5280, %v5282
        %v5284 = vrot.slane %v5270, %v5283
        %v5285 = vcombine.low %v5229, %v5245
        %v5286 = vcombine.high %v5229, %v5245
        %v5288 = vunpack.c.l.s4 1934713408
        %v5289 = vunpack.c.0.s8 %v5288
        %v5290 = vlaneseq
        %v5291 = vshrl.u32 %v5290, 7
        %v5292 = vsub.s32 %v5289, %v5291
        %v5293 = vrot.slane %v5285, %v5292
        %v5295 = vunpack.c.l.s4 1934713408
        %v5296 = vunpack.c.0.s8 %v5295
        %v5297 = vlaneseq
        %v5298 = vshrl.u32 %v5297, 7
        %v5299 = vsub.s32 %v5296, %v5298
        %v5300 = vrot.slane %v5286, %v5299
        %v5301 = vcombine.low %v5236, %v5252
        %v5302 = vcombine.high %v5236, %v5252
        %v5304 = vunpack.c.l.s4 1934713408
        %v5305 = vunpack.c.0.s8 %v5304
        %v5306 = vlaneseq
        %v5307 = vshrl.u32 %v5306, 7
        %v5308 = vsub.s32 %v5305, %v5307
        %v5309 = vrot.slane %v5301, %v5308
        %v5311 = vunpack.c.l.s4 1934713408
        %v5312 = vunpack.c.0.s8 %v5311
        %v5313 = vlaneseq
        %v5314 = vshrl.u32 %v5313, 7
        %v5315 = vsub.s32 %v5312, %v5314
        %v5316 = vrot.slane %v5302, %v5315
        %v5317 = vcombine.low %v5261, %v5277
        %v5318 = vcombine.high %v5261, %v5277
        %v5320 = vunpack.c.l.s4 1934713408
        %v5321 = vunpack.c.0.s8 %v5320
        %v5322 = vlaneseq
        %v5323 = vshrl.u32 %v5322, 7
        %v5324 = vsub.s32 %v5321, %v5323
        %v5325 = vrot.slane %v5317, %v5324
        %v5327 = vunpack.c.l.s4 1934713408
        %v5328 = vunpack.c.0.s8 %v5327
        %v5329 = vlaneseq
        %v5330 = vshrl.u32 %v5329, 7
        %v5331 = vsub.s32 %v5328, %v5330
        %v5332 = vrot.slane %v5318, %v5331
        %v5333 = vcombine.low %v5268, %v5284
        %v5334 = vcombine.high %v5268, %v5284
        %v5336 = vunpack.c.l.s4 1934713408
        %v5337 = vunpack.c.0.s8 %v5336
        %v5338 = vlaneseq
        %v5339 = vshrl.u32 %v5338, 7
        %v5340 = vsub.s32 %v5337, %v5339
        %v5341 = vrot.slane %v5333, %v5340
        %v5343 = vunpack.c.l.s4 1934713408
        %v5344 = vunpack.c.0.s8 %v5343
        %v5345 = vlaneseq
        %v5346 = vshrl.u32 %v5345, 7
        %v5347 = vsub.s32 %v5344, %v5346
        %v5348 = vrot.slane %v5334, %v5347
        %v5349 = vcombine.low %v5293, %v5325
        %v5350 = vcombine.high %v5293, %v5325
        %v5351 = vcombine.low %v5300, %v5332
        %v5352 = vcombine.high %v5300, %v5332
        %v5353 = vcombine.low %v5309, %v5341
        %v5354 = vcombine.high %v5309, %v5341
        %v5355 = vcombine.low %v5316, %v5348
        %v5356 = vcombine.high %v5316, %v5348
        %v5357 = vcombine.low %v315, %v571
        %v5358 = vcombine.high %v315, %v571
        %v5360 = vunpack.c.l.s4 1983009808
        %v5361 = vunpack.c.0.s8 %v5360
        %v5362 = vlaneseq
        %v5363 = vshrl.u32 %v5362, 7
        %v5364 = vsub.s32 %v5361, %v5363
        %v5365 = vrot.slane %v5357, %v5364
        %v5367 = vunpack.c.l.s4 1983009808
        %v5368 = vunpack.c.0.s8 %v5367
        %v5369 = vlaneseq
        %v5370 = vshrl.u32 %v5369, 7
        %v5371 = vsub.s32 %v5368, %v5370
        %v5372 = vrot.slane %v5358, %v5371
        %v5373 = vcombine.low %v443, %v699
        %v5374 = vcombine.high %v443, %v699
        %v5376 = vunpack.c.l.s4 1983009808
        %v5377 = vunpack.c.0.s8 %v5376
        %v5378 = vlaneseq
        %v5379 = vshrl.u32 %v5378, 7
        %v5380 = vsub.s32 %v5377, %v5379
        %v5381 = vrot.slane %v5373, %v5380
        %v5383 = vunpack.c.l.s4 1983009808
        %v5384 = vunpack.c.0.s8 %v5383
        %v5385 = vlaneseq
        %v5386 = vshrl.u32 %v5385, 7
        %v5387 = vsub.s32 %v5384, %v5386
        %v5388 = vrot.slane %v5374, %v5387
        %v5389 = vcombine.low %v827, %v1083
        %v5390 = vcombine.high %v827, %v1083
        %v5392 = vunpack.c.l.s4 1983009808
        %v5393 = vunpack.c.0.s8 %v5392
        %v5394 = vlaneseq
        %v5395 = vshrl.u32 %v5394, 7
        %v5396 = vsub.s32 %v5393, %v5395
        %v5397 = vrot.slane %v5389, %v5396
        %v5399 = vunpack.c.l.s4 1983009808
        %v5400 = vunpack.c.0.s8 %v5399
        %v5401 = vlaneseq
        %v5402 = vshrl.u32 %v5401, 7
        %v5403 = vsub.s32 %v5400, %v5402
        %v5404 = vrot.slane %v5390, %v5403
        %v5405 = vcombine.low %v955, %v1211
        %v5406 = vcombine.high %v955, %v1211
        %v5408 = vunpack.c.l.s4 1983009808
        %v5409 = vunpack.c.0.s8 %v5408
        %v5410 = vlaneseq
        %v5411 = vshrl.u32 %v5410, 7
        %v5412 = vsub.s32 %v5409, %v5411
        %v5413 = vrot.slane %v5405, %v5412
        %v5415 = vunpack.c.l.s4 1983009808
        %v5416 = vunpack.c.0.s8 %v5415
        %v5417 = vlaneseq
        %v5418 = vshrl.u32 %v5417, 7
        %v5419 = vsub.s32 %v5416, %v5418
        %v5420 = vrot.slane %v5406, %v5419
        %v5421 = vcombine.low %v5365, %v5381
        %v5422 = vcombine.high %v5365, %v5381
        %v5424 = vunpack.c.l.s4 1934713408
        %v5425 = vunpack.c.0.s8 %v5424
        %v5426 = vlaneseq
        %v5427 = vshrl.u32 %v5426, 7
        %v5428 = vsub.s32 %v5425, %v5427
        %v5429 = vrot.slane %v5421, %v5428
        %v5431 = vunpack.c.l.s4 1934713408
        %v5432 = vunpack.c.0.s8 %v5431
        %v5433 = vlaneseq
        %v5434 = vshrl.u32 %v5433, 7
        %v5435 = vsub.s32 %v5432, %v5434
        %v5436 = vrot.slane %v5422, %v5435
        %v5437 = vcombine.low %v5372, %v5388
        %v5438 = vcombine.high %v5372, %v5388
        %v5440 = vunpack.c.l.s4 1934713408
        %v5441 = vunpack.c.0.s8 %v5440
        %v5442 = vlaneseq
        %v5443 = vshrl.u32 %v5442, 7
        %v5444 = vsub.s32 %v5441, %v5443
        %v5445 = vrot.slane %v5437, %v5444
        %v5447 = vunpack.c.l.s4 1934713408
        %v5448 = vunpack.c.0.s8 %v5447
        %v5449 = vlaneseq
        %v5450 = vshrl.u32 %v5449, 7
        %v5451 = vsub.s32 %v5448, %v5450
        %v5452 = vrot.slane %v5438, %v5451
        %v5453 = vcombine.low %v5397, %v5413
        %v5454 = vcombine.high %v5397, %v5413
        %v5456 = vunpack.c.l.s4 1934713408
        %v5457 = vunpack.c.0.s8 %v5456
        %v5458 = vlaneseq
        %v5459 = vshrl.u32 %v5458, 7
        %v5460 = vsub.s32 %v5457, %v5459
        %v5461 = vrot.slane %v5453, %v5460
        %v5463 = vunpack.c.l.s4 1934713408
        %v5464 = vunpack.c.0.s8 %v5463
        %v5465 = vlaneseq
        %v5466 = vshrl.u32 %v5465, 7
        %v5467 = vsub.s32 %v5464, %v5466
        %v5468 = vrot.slane %v5454, %v5467
        %v5469 = vcombine.low %v5404, %v5420
        %v5470 = vcombine.high %v5404, %v5420
        %v5472 = vunpack.c.l.s4 1934713408
        %v5473 = vunpack.c.0.s8 %v5472
        %v5474 = vlaneseq
        %v5475 = vshrl.u32 %v5474, 7
        %v5476 = vsub.s32 %v5473, %v5475
        %v5477 = vrot.slane %v5469, %v5476
        %v5479 = vunpack.c.l.s4 1934713408
        %v5480 = vunpack.c.0.s8 %v5479
        %v5481 = vlaneseq
        %v5482 = vshrl.u32 %v5481, 7
        %v5483 = vsub.s32 %v5480, %v5482
        %v5484 = vrot.slane %v5470, %v5483
        %v5485 = vcombine.low %v5429, %v5461
        %v5486 = vcombine.high %v5429, %v5461
        %v5487 = vcombine.low %v5436, %v5468
        %v5488 = vcombine.high %v5436, %v5468
        %v5489 = vcombine.low %v5445, %v5477
        %v5490 = vcombine.high %v5445, %v5477
        %v5491 = vcombine.low %v5452, %v5484
        %v5492 = vcombine.high %v5452, %v5484
        %v5493 = vcombine.low %v316, %v572
        %v5494 = vcombine.high %v316, %v572
        %v5496 = vunpack.c.l.s4 1983009808
        %v5497 = vunpack.c.0.s8 %v5496
        %v5498 = vlaneseq
        %v5499 = vshrl.u32 %v5498, 7
        %v5500 = vsub.s32 %v5497, %v5499
        %v5501 = vrot.slane %v5493, %v5500
        %v5503 = vunpack.c.l.s4 1983009808
        %v5504 = vunpack.c.0.s8 %v5503
        %v5505 = vlaneseq
        %v5506 = vshrl.u32 %v5505, 7
        %v5507 = vsub.s32 %v5504, %v5506
        %v5508 = vrot.slane %v5494, %v5507
        %v5509 = vcombine.low %v444, %v700
        %v5510 = vcombine.high %v444, %v700
        %v5512 = vunpack.c.l.s4 1983009808
        %v5513 = vunpack.c.0.s8 %v5512
        %v5514 = vlaneseq
        %v5515 = vshrl.u32 %v5514, 7
        %v5516 = vsub.s32 %v5513, %v5515
        %v5517 = vrot.slane %v5509, %v5516
        %v5519 = vunpack.c.l.s4 1983009808
        %v5520 = vunpack.c.0.s8 %v5519
        %v5521 = vlaneseq
        %v5522 = vshrl.u32 %v5521, 7
        %v5523 = vsub.s32 %v5520, %v5522
        %v5524 = vrot.slane %v5510, %v5523
        %v5525 = vcombine.low %v828, %v1084
        %v5526 = vcombine.high %v828, %v1084
        %v5528 = vunpack.c.l.s4 1983009808
        %v5529 = vunpack.c.0.s8 %v5528
        %v5530 = vlaneseq
        %v5531 = vshrl.u32 %v5530, 7
        %v5532 = vsub.s32 %v5529, %v5531
        %v5533 = vrot.slane %v5525, %v5532
        %v5535 = vunpack.c.l.s4 1983009808
        %v5536 = vunpack.c.0.s8 %v5535
        %v5537 = vlaneseq
        %v5538 = vshrl.u32 %v5537, 7
        %v5539 = vsub.s32 %v5536, %v5538
        %v5540 = vrot.slane %v5526, %v5539
        %v5541 = vcombine.low %v956, %v1212
        %v5542 = vcombine.high %v956, %v1212
        %v5544 = vunpack.c.l.s4 1983009808
        %v5545 = vunpack.c.0.s8 %v5544
        %v5546 = vlaneseq
        %v5547 = vshrl.u32 %v5546, 7
        %v5548 = vsub.s32 %v5545, %v5547
        %v5549 = vrot.slane %v5541, %v5548
        %v5551 = vunpack.c.l.s4 1983009808
        %v5552 = vunpack.c.0.s8 %v5551
        %v5553 = vlaneseq
        %v5554 = vshrl.u32 %v5553, 7
        %v5555 = vsub.s32 %v5552, %v5554
        %v5556 = vrot.slane %v5542, %v5555
        %v5557 = vcombine.low %v5501, %v5517
        %v5558 = vcombine.high %v5501, %v5517
        %v5560 = vunpack.c.l.s4 1934713408
        %v5561 = vunpack.c.0.s8 %v5560
        %v5562 = vlaneseq
        %v5563 = vshrl.u32 %v5562, 7
        %v5564 = vsub.s32 %v5561, %v5563
        %v5565 = vrot.slane %v5557, %v5564
        %v5567 = vunpack.c.l.s4 1934713408
        %v5568 = vunpack.c.0.s8 %v5567
        %v5569 = vlaneseq
        %v5570 = vshrl.u32 %v5569, 7
        %v5571 = vsub.s32 %v5568, %v5570
        %v5572 = vrot.slane %v5558, %v5571
        %v5573 = vcombine.low %v5508, %v5524
        %v5574 = vcombine.high %v5508, %v5524
        %v5576 = vunpack.c.l.s4 1934713408
        %v5577 = vunpack.c.0.s8 %v5576
        %v5578 = vlaneseq
        %v5579 = vshrl.u32 %v5578, 7
        %v5580 = vsub.s32 %v5577, %v5579
        %v5581 = vrot.slane %v5573, %v5580
        %v5583 = vunpack.c.l.s4 1934713408
        %v5584 = vunpack.c.0.s8 %v5583
        %v5585 = vlaneseq
        %v5586 = vshrl.u32 %v5585, 7
        %v5587 = vsub.s32 %v5584, %v5586
        %v5588 = vrot.slane %v5574, %v5587
        %v5589 = vcombine.low %v5533, %v5549
        %v5590 = vcombine.high %v5533, %v5549
        %v5592 = vunpack.c.l.s4 1934713408
        %v5593 = vunpack.c.0.s8 %v5592
        %v5594 = vlaneseq
        %v5595 = vshrl.u32 %v5594, 7
        %v5596 = vsub.s32 %v5593, %v5595
        %v5597 = vrot.slane %v5589, %v5596
        %v5599 = vunpack.c.l.s4 1934713408
        %v5600 = vunpack.c.0.s8 %v5599
        %v5601 = vlaneseq
        %v5602 = vshrl.u32 %v5601, 7
        %v5603 = vsub.s32 %v5600, %v5602
        %v5604 = vrot.slane %v5590, %v5603
        %v5605 = vcombine.low %v5540, %v5556
        %v5606 = vcombine.high %v5540, %v5556
        %v5608 = vunpack.c.l.s4 1934713408
        %v5609 = vunpack.c.0.s8 %v5608
        %v5610 = vlaneseq
        %v5611 = vshrl.u32 %v5610, 7
        %v5612 = vsub.s32 %v5609, %v5611
        %v5613 = vrot.slane %v5605, %v5612
        %v5615 = vunpack.c.l.s4 1934713408
        %v5616 = vunpack.c.0.s8 %v5615
        %v5617 = vlaneseq
        %v5618 = vshrl.u32 %v5617, 7
        %v5619 = vsub.s32 %v5616, %v5618
        %v5620 = vrot.slane %v5606, %v5619
        %v5621 = vcombine.low %v5565, %v5597
        %v5622 = vcombine.high %v5565, %v5597
        %v5623 = vcombine.low %v5572, %v5604
        %v5624 = vcombine.high %v5572, %v5604
        %v5625 = vcombine.low %v5581, %v5613
        %v5626 = vcombine.high %v5581, %v5613
        %v5627 = vcombine.low %v5588, %v5620
        %v5628 = vcombine.high %v5588, %v5620
        %v5629 = vcombine.low %v333, %v589
        %v5630 = vcombine.high %v333, %v589
        %v5632 = vunpack.c.l.s4 1983009808
        %v5633 = vunpack.c.0.s8 %v5632
        %v5634 = vlaneseq
        %v5635 = vshrl.u32 %v5634, 7
        %v5636 = vsub.s32 %v5633, %v5635
        %v5637 = vrot.slane %v5629, %v5636
        %v5639 = vunpack.c.l.s4 1983009808
        %v5640 = vunpack.c.0.s8 %v5639
        %v5641 = vlaneseq
        %v5642 = vshrl.u32 %v5641, 7
        %v5643 = vsub.s32 %v5640, %v5642
        %v5644 = vrot.slane %v5630, %v5643
        %v5645 = vcombine.low %v461, %v717
        %v5646 = vcombine.high %v461, %v717
        %v5648 = vunpack.c.l.s4 1983009808
        %v5649 = vunpack.c.0.s8 %v5648
        %v5650 = vlaneseq
        %v5651 = vshrl.u32 %v5650, 7
        %v5652 = vsub.s32 %v5649, %v5651
        %v5653 = vrot.slane %v5645, %v5652
        %v5655 = vunpack.c.l.s4 1983009808
        %v5656 = vunpack.c.0.s8 %v5655
        %v5657 = vlaneseq
        %v5658 = vshrl.u32 %v5657, 7
        %v5659 = vsub.s32 %v5656, %v5658
        %v5660 = vrot.slane %v5646, %v5659
        %v5661 = vcombine.low %v845, %v1101
        %v5662 = vcombine.high %v845, %v1101
        %v5664 = vunpack.c.l.s4 1983009808
        %v5665 = vunpack.c.0.s8 %v5664
        %v5666 = vlaneseq
        %v5667 = vshrl.u32 %v5666, 7
        %v5668 = vsub.s32 %v5665, %v5667
        %v5669 = vrot.slane %v5661, %v5668
        %v5671 = vunpack.c.l.s4 1983009808
        %v5672 = vunpack.c.0.s8 %v5671
        %v5673 = vlaneseq
        %v5674 = vshrl.u32 %v5673, 7
        %v5675 = vsub.s32 %v5672, %v5674
        %v5676 = vrot.slane %v5662, %v5675
        %v5677 = vcombine.low %v973, %v1229
        %v5678 = vcombine.high %v973, %v1229
        %v5680 = vunpack.c.l.s4 1983009808
        %v5681 = vunpack.c.0.s8 %v5680
        %v5682 = vlaneseq
        %v5683 = vshrl.u32 %v5682, 7
        %v5684 = vsub.s32 %v5681, %v5683
        %v5685 = vrot.slane %v5677, %v5684
        %v5687 = vunpack.c.l.s4 1983009808
        %v5688 = vunpack.c.0.s8 %v5687
        %v5689 = vlaneseq
        %v5690 = vshrl.u32 %v5689, 7
        %v5691 = vsub.s32 %v5688, %v5690
        %v5692 = vrot.slane %v5678, %v5691
        %v5693 = vcombine.low %v5637, %v5653
        %v5694 = vcombine.high %v5637, %v5653
        %v5696 = vunpack.c.l.s4 1934713408
        %v5697 = vunpack.c.0.s8 %v5696
        %v5698 = vlaneseq
        %v5699 = vshrl.u32 %v5698, 7
        %v5700 = vsub.s32 %v5697, %v5699
        %v5701 = vrot.slane %v5693, %v5700
        %v5703 = vunpack.c.l.s4 1934713408
        %v5704 = vunpack.c.0.s8 %v5703
        %v5705 = vlaneseq
        %v5706 = vshrl.u32 %v5705, 7
        %v5707 = vsub.s32 %v5704, %v5706
        %v5708 = vrot.slane %v5694, %v5707
        %v5709 = vcombine.low %v5644, %v5660
        %v5710 = vcombine.high %v5644, %v5660
        %v5712 = vunpack.c.l.s4 1934713408
        %v5713 = vunpack.c.0.s8 %v5712
        %v5714 = vlaneseq
        %v5715 = vshrl.u32 %v5714, 7
        %v5716 = vsub.s32 %v5713, %v5715
        %v5717 = vrot.slane %v5709, %v5716
        %v5719 = vunpack.c.l.s4 1934713408
        %v5720 = vunpack.c.0.s8 %v5719
        %v5721 = vlaneseq
        %v5722 = vshrl.u32 %v5721, 7
        %v5723 = vsub.s32 %v5720, %v5722
        %v5724 = vrot.slane %v5710, %v5723
        %v5725 = vcombine.low %v5669, %v5685
        %v5726 = vcombine.high %v5669, %v5685
        %v5728 = vunpack.c.l.s4 1934713408
        %v5729 = vunpack.c.0.s8 %v5728
        %v5730 = vlaneseq
        %v5731 = vshrl.u32 %v5730, 7
        %v5732 = vsub.s32 %v5729, %v5731
        %v5733 = vrot.slane %v5725, %v5732
        %v5735 = vunpack.c.l.s4 1934713408
        %v5736 = vunpack.c.0.s8 %v5735
        %v5737 = vlaneseq
        %v5738 = vshrl.u32 %v5737, 7
        %v5739 = vsub.s32 %v5736, %v5738
        %v5740 = vrot.slane %v5726, %v5739
        %v5741 = vcombine.low %v5676, %v5692
        %v5742 = vcombine.high %v5676, %v5692
        %v5744 = vunpack.c.l.s4 1934713408
        %v5745 = vunpack.c.0.s8 %v5744
        %v5746 = vlaneseq
        %v5747 = vshrl.u32 %v5746, 7
        %v5748 = vsub.s32 %v5745, %v5747
        %v5749 = vrot.slane %v5741, %v5748
        %v5751 = vunpack.c.l.s4 1934713408
        %v5752 = vunpack.c.0.s8 %v5751
        %v5753 = vlaneseq
        %v5754 = vshrl.u32 %v5753, 7
        %v5755 = vsub.s32 %v5752, %v5754
        %v5756 = vrot.slane %v5742, %v5755
        %v5757 = vcombine.low %v5701, %v5733
        %v5758 = vcombine.high %v5701, %v5733
        %v5759 = vcombine.low %v5708, %v5740
        %v5760 = vcombine.high %v5708, %v5740
        %v5761 = vcombine.low %v5717, %v5749
        %v5762 = vcombine.high %v5717, %v5749
        %v5763 = vcombine.low %v5724, %v5756
        %v5764 = vcombine.high %v5724, %v5756
        %v5765 = vcombine.low %v334, %v590
        %v5766 = vcombine.high %v334, %v590
        %v5768 = vunpack.c.l.s4 1983009808
        %v5769 = vunpack.c.0.s8 %v5768
        %v5770 = vlaneseq
        %v5771 = vshrl.u32 %v5770, 7
        %v5772 = vsub.s32 %v5769, %v5771
        %v5773 = vrot.slane %v5765, %v5772
        %v5775 = vunpack.c.l.s4 1983009808
        %v5776 = vunpack.c.0.s8 %v5775
        %v5777 = vlaneseq
        %v5778 = vshrl.u32 %v5777, 7
        %v5779 = vsub.s32 %v5776, %v5778
        %v5780 = vrot.slane %v5766, %v5779
        %v5781 = vcombine.low %v462, %v718
        %v5782 = vcombine.high %v462, %v718
        %v5784 = vunpack.c.l.s4 1983009808
        %v5785 = vunpack.c.0.s8 %v5784
        %v5786 = vlaneseq
        %v5787 = vshrl.u32 %v5786, 7
        %v5788 = vsub.s32 %v5785, %v5787
        %v5789 = vrot.slane %v5781, %v5788
        %v5791 = vunpack.c.l.s4 1983009808
        %v5792 = vunpack.c.0.s8 %v5791
        %v5793 = vlaneseq
        %v5794 = vshrl.u32 %v5793, 7
        %v5795 = vsub.s32 %v5792, %v5794
        %v5796 = vrot.slane %v5782, %v5795
        %v5797 = vcombine.low %v846, %v1102
        %v5798 = vcombine.high %v846, %v1102
        %v5800 = vunpack.c.l.s4 1983009808
        %v5801 = vunpack.c.0.s8 %v5800
        %v5802 = vlaneseq
        %v5803 = vshrl.u32 %v5802, 7
        %v5804 = vsub.s32 %v5801, %v5803
        %v5805 = vrot.slane %v5797, %v5804
        %v5807 = vunpack.c.l.s4 1983009808
        %v5808 = vunpack.c.0.s8 %v5807
        %v5809 = vlaneseq
        %v5810 = vshrl.u32 %v5809, 7
        %v5811 = vsub.s32 %v5808, %v5810
        %v5812 = vrot.slane %v5798, %v5811
        %v5813 = vcombine.low %v974, %v1230
        %v5814 = vcombine.high %v974, %v1230
        %v5816 = vunpack.c.l.s4 1983009808
        %v5817 = vunpack.c.0.s8 %v5816
        %v5818 = vlaneseq
        %v5819 = vshrl.u32 %v5818, 7
        %v5820 = vsub.s32 %v5817, %v5819
        %v5821 = vrot.slane %v5813, %v5820
        %v5823 = vunpack.c.l.s4 1983009808
        %v5824 = vunpack.c.0.s8 %v5823
        %v5825 = vlaneseq
        %v5826 = vshrl.u32 %v5825, 7
        %v5827 = vsub.s32 %v5824, %v5826
        %v5828 = vrot.slane %v5814, %v5827
        %v5829 = vcombine.low %v5773, %v5789
        %v5830 = vcombine.high %v5773, %v5789
        %v5832 = vunpack.c.l.s4 1934713408
        %v5833 = vunpack.c.0.s8 %v5832
        %v5834 = vlaneseq
        %v5835 = vshrl.u32 %v5834, 7
        %v5836 = vsub.s32 %v5833, %v5835
        %v5837 = vrot.slane %v5829, %v5836
        %v5839 = vunpack.c.l.s4 1934713408
        %v5840 = vunpack.c.0.s8 %v5839
        %v5841 = vlaneseq
        %v5842 = vshrl.u32 %v5841, 7
        %v5843 = vsub.s32 %v5840, %v5842
        %v5844 = vrot.slane %v5830, %v5843
        %v5845 = vcombine.low %v5780, %v5796
        %v5846 = vcombine.high %v5780, %v5796
        %v5848 = vunpack.c.l.s4 1934713408
        %v5849 = vunpack.c.0.s8 %v5848
        %v5850 = vlaneseq
        %v5851 = vshrl.u32 %v5850, 7
        %v5852 = vsub.s32 %v5849, %v5851
        %v5853 = vrot.slane %v5845, %v5852
        %v5855 = vunpack.c.l.s4 1934713408
        %v5856 = vunpack.c.0.s8 %v5855
        %v5857 = vlaneseq
        %v5858 = vshrl.u32 %v5857, 7
        %v5859 = vsub.s32 %v5856, %v5858
        %v5860 = vrot.slane %v5846, %v5859
        %v5861 = vcombine.low %v5805, %v5821
        %v5862 = vcombine.high %v5805, %v5821
        %v5864 = vunpack.c.l.s4 1934713408
        %v5865 = vunpack.c.0.s8 %v5864
        %v5866 = vlaneseq
        %v5867 = vshrl.u32 %v5866, 7
        %v5868 = vsub.s32 %v5865, %v5867
        %v5869 = vrot.slane %v5861, %v5868
        %v5871 = vunpack.c.l.s4 1934713408
        %v5872 = vunpack.c.0.s8 %v5871
        %v5873 = vlaneseq
        %v5874 = vshrl.u32 %v5873, 7
        %v5875 = vsub.s32 %v5872, %v5874
        %v5876 = vrot.slane %v5862, %v5875
        %v5877 = vcombine.low %v5812, %v5828
        %v5878 = vcombine.high %v5812, %v5828
        %v5880 = vunpack.c.l.s4 1934713408
        %v5881 = vunpack.c.0.s8 %v5880
        %v5882 = vlaneseq
        %v5883 = vshrl.u32 %v5882, 7
        %v5884 = vsub.s32 %v5881, %v5883
        %v5885 = vrot.slane %v5877, %v5884
        %v5887 = vunpack.c.l.s4 1934713408
        %v5888 = vunpack.c.0.s8 %v5887
        %v5889 = vlaneseq
        %v5890 = vshrl.u32 %v5889, 7
        %v5891 = vsub.s32 %v5888, %v5890
        %v5892 = vrot.slane %v5878, %v5891
        %v5893 = vcombine.low %v5837, %v5869
        %v5894 = vcombine.high %v5837, %v5869
        %v5895 = vcombine.low %v5844, %v5876
        %v5896 = vcombine.high %v5844, %v5876
        %v5897 = vcombine.low %v5853, %v5885
        %v5898 = vcombine.high %v5853, %v5885
        %v5899 = vcombine.low %v5860, %v5892
        %v5900 = vcombine.high %v5860, %v5892
        %v5901 = vcombine.low %v335, %v591
        %v5902 = vcombine.high %v335, %v591
        %v5904 = vunpack.c.l.s4 1983009808
        %v5905 = vunpack.c.0.s8 %v5904
        %v5906 = vlaneseq
        %v5907 = vshrl.u32 %v5906, 7
        %v5908 = vsub.s32 %v5905, %v5907
        %v5909 = vrot.slane %v5901, %v5908
        %v5911 = vunpack.c.l.s4 1983009808
        %v5912 = vunpack.c.0.s8 %v5911
        %v5913 = vlaneseq
        %v5914 = vshrl.u32 %v5913, 7
        %v5915 = vsub.s32 %v5912, %v5914
        %v5916 = vrot.slane %v5902, %v5915
        %v5917 = vcombine.low %v463, %v719
        %v5918 = vcombine.high %v463, %v719
        %v5920 = vunpack.c.l.s4 1983009808
        %v5921 = vunpack.c.0.s8 %v5920
        %v5922 = vlaneseq
        %v5923 = vshrl.u32 %v5922, 7
        %v5924 = vsub.s32 %v5921, %v5923
        %v5925 = vrot.slane %v5917, %v5924
        %v5927 = vunpack.c.l.s4 1983009808
        %v5928 = vunpack.c.0.s8 %v5927
        %v5929 = vlaneseq
        %v5930 = vshrl.u32 %v5929, 7
        %v5931 = vsub.s32 %v5928, %v5930
        %v5932 = vrot.slane %v5918, %v5931
        %v5933 = vcombine.low %v847, %v1103
        %v5934 = vcombine.high %v847, %v1103
        %v5936 = vunpack.c.l.s4 1983009808
        %v5937 = vunpack.c.0.s8 %v5936
        %v5938 = vlaneseq
        %v5939 = vshrl.u32 %v5938, 7
        %v5940 = vsub.s32 %v5937, %v5939
        %v5941 = vrot.slane %v5933, %v5940
        %v5943 = vunpack.c.l.s4 1983009808
        %v5944 = vunpack.c.0.s8 %v5943
        %v5945 = vlaneseq
        %v5946 = vshrl.u32 %v5945, 7
        %v5947 = vsub.s32 %v5944, %v5946
        %v5948 = vrot.slane %v5934, %v5947
        %v5949 = vcombine.low %v975, %v1231
        %v5950 = vcombine.high %v975, %v1231
        %v5952 = vunpack.c.l.s4 1983009808
        %v5953 = vunpack.c.0.s8 %v5952
        %v5954 = vlaneseq
        %v5955 = vshrl.u32 %v5954, 7
        %v5956 = vsub.s32 %v5953, %v5955
        %v5957 = vrot.slane %v5949, %v5956
        %v5959 = vunpack.c.l.s4 1983009808
        %v5960 = vunpack.c.0.s8 %v5959
        %v5961 = vlaneseq
        %v5962 = vshrl.u32 %v5961, 7
        %v5963 = vsub.s32 %v5960, %v5962
        %v5964 = vrot.slane %v5950, %v5963
        %v5965 = vcombine.low %v5909, %v5925
        %v5966 = vcombine.high %v5909, %v5925
        %v5968 = vunpack.c.l.s4 1934713408
        %v5969 = vunpack.c.0.s8 %v5968
        %v5970 = vlaneseq
        %v5971 = vshrl.u32 %v5970, 7
        %v5972 = vsub.s32 %v5969, %v5971
        %v5973 = vrot.slane %v5965, %v5972
        %v5975 = vunpack.c.l.s4 1934713408
        %v5976 = vunpack.c.0.s8 %v5975
        %v5977 = vlaneseq
        %v5978 = vshrl.u32 %v5977, 7
        %v5979 = vsub.s32 %v5976, %v5978
        %v5980 = vrot.slane %v5966, %v5979
        %v5981 = vcombine.low %v5916, %v5932
        %v5982 = vcombine.high %v5916, %v5932
        %v5984 = vunpack.c.l.s4 1934713408
        %v5985 = vunpack.c.0.s8 %v5984
        %v5986 = vlaneseq
        %v5987 = vshrl.u32 %v5986, 7
        %v5988 = vsub.s32 %v5985, %v5987
        %v5989 = vrot.slane %v5981, %v5988
        %v5991 = vunpack.c.l.s4 1934713408
        %v5992 = vunpack.c.0.s8 %v5991
        %v5993 = vlaneseq
        %v5994 = vshrl.u32 %v5993, 7
        %v5995 = vsub.s32 %v5992, %v5994
        %v5996 = vrot.slane %v5982, %v5995
        %v5997 = vcombine.low %v5941, %v5957
        %v5998 = vcombine.high %v5941, %v5957
        %v6000 = vunpack.c.l.s4 1934713408
        %v6001 = vunpack.c.0.s8 %v6000
        %v6002 = vlaneseq
        %v6003 = vshrl.u32 %v6002, 7
        %v6004 = vsub.s32 %v6001, %v6003
        %v6005 = vrot.slane %v5997, %v6004
        %v6007 = vunpack.c.l.s4 1934713408
        %v6008 = vunpack.c.0.s8 %v6007
        %v6009 = vlaneseq
        %v6010 = vshrl.u32 %v6009, 7
        %v6011 = vsub.s32 %v6008, %v6010
        %v6012 = vrot.slane %v5998, %v6011
        %v6013 = vcombine.low %v5948, %v5964
        %v6014 = vcombine.high %v5948, %v5964
        %v6016 = vunpack.c.l.s4 1934713408
        %v6017 = vunpack.c.0.s8 %v6016
        %v6018 = vlaneseq
        %v6019 = vshrl.u32 %v6018, 7
        %v6020 = vsub.s32 %v6017, %v6019
        %v6021 = vrot.slane %v6013, %v6020
        %v6023 = vunpack.c.l.s4 1934713408
        %v6024 = vunpack.c.0.s8 %v6023
        %v6025 = vlaneseq
        %v6026 = vshrl.u32 %v6025, 7
        %v6027 = vsub.s32 %v6024, %v6026
        %v6028 = vrot.slane %v6014, %v6027
        %v6029 = vcombine.low %v5973, %v6005
        %v6030 = vcombine.high %v5973, %v6005
        %v6031 = vcombine.low %v5980, %v6012
        %v6032 = vcombine.high %v5980, %v6012
        %v6033 = vcombine.low %v5989, %v6021
        %v6034 = vcombine.high %v5989, %v6021
        %v6035 = vcombine.low %v5996, %v6028
        %v6036 = vcombine.high %v5996, %v6028
        %v6037 = vcombine.low %v336, %v592
        %v6038 = vcombine.high %v336, %v592
        %v6040 = vunpack.c.l.s4 1983009808
        %v6041 = vunpack.c.0.s8 %v6040
        %v6042 = vlaneseq
        %v6043 = vshrl.u32 %v6042, 7
        %v6044 = vsub.s32 %v6041, %v6043
        %v6045 = vrot.slane %v6037, %v6044
        %v6047 = vunpack.c.l.s4 1983009808
        %v6048 = vunpack.c.0.s8 %v6047
        %v6049 = vlaneseq
        %v6050 = vshrl.u32 %v6049, 7
        %v6051 = vsub.s32 %v6048, %v6050
        %v6052 = vrot.slane %v6038, %v6051
        %v6053 = vcombine.low %v464, %v720
        %v6054 = vcombine.high %v464, %v720
        %v6056 = vunpack.c.l.s4 1983009808
        %v6057 = vunpack.c.0.s8 %v6056
        %v6058 = vlaneseq
        %v6059 = vshrl.u32 %v6058, 7
        %v6060 = vsub.s32 %v6057, %v6059
        %v6061 = vrot.slane %v6053, %v6060
        %v6063 = vunpack.c.l.s4 1983009808
        %v6064 = vunpack.c.0.s8 %v6063
        %v6065 = vlaneseq
        %v6066 = vshrl.u32 %v6065, 7
        %v6067 = vsub.s32 %v6064, %v6066
        %v6068 = vrot.slane %v6054, %v6067
        %v6069 = vcombine.low %v848, %v1104
        %v6070 = vcombine.high %v848, %v1104
        %v6072 = vunpack.c.l.s4 1983009808
        %v6073 = vunpack.c.0.s8 %v6072
        %v6074 = vlaneseq
        %v6075 = vshrl.u32 %v6074, 7
        %v6076 = vsub.s32 %v6073, %v6075
        %v6077 = vrot.slane %v6069, %v6076
        %v6079 = vunpack.c.l.s4 1983009808
        %v6080 = vunpack.c.0.s8 %v6079
        %v6081 = vlaneseq
        %v6082 = vshrl.u32 %v6081, 7
        %v6083 = vsub.s32 %v6080, %v6082
        %v6084 = vrot.slane %v6070, %v6083
        %v6085 = vcombine.low %v976, %v1232
        %v6086 = vcombine.high %v976, %v1232
        %v6088 = vunpack.c.l.s4 1983009808
        %v6089 = vunpack.c.0.s8 %v6088
        %v6090 = vlaneseq
        %v6091 = vshrl.u32 %v6090, 7
        %v6092 = vsub.s32 %v6089, %v6091
        %v6093 = vrot.slane %v6085, %v6092
        %v6095 = vunpack.c.l.s4 1983009808
        %v6096 = vunpack.c.0.s8 %v6095
        %v6097 = vlaneseq
        %v6098 = vshrl.u32 %v6097, 7
        %v6099 = vsub.s32 %v6096, %v6098
        %v6100 = vrot.slane %v6086, %v6099
        %v6101 = vcombine.low %v6045, %v6061
        %v6102 = vcombine.high %v6045, %v6061
        %v6104 = vunpack.c.l.s4 1934713408
        %v6105 = vunpack.c.0.s8 %v6104
        %v6106 = vlaneseq
        %v6107 = vshrl.u32 %v6106, 7
        %v6108 = vsub.s32 %v6105, %v6107
        %v6109 = vrot.slane %v6101, %v6108
        %v6111 = vunpack.c.l.s4 1934713408
        %v6112 = vunpack.c.0.s8 %v6111
        %v6113 = vlaneseq
        %v6114 = vshrl.u32 %v6113, 7
        %v6115 = vsub.s32 %v6112, %v6114
        %v6116 = vrot.slane %v6102, %v6115
        %v6117 = vcombine.low %v6052, %v6068
        %v6118 = vcombine.high %v6052, %v6068
        %v6120 = vunpack.c.l.s4 1934713408
        %v6121 = vunpack.c.0.s8 %v6120
        %v6122 = vlaneseq
        %v6123 = vshrl.u32 %v6122, 7
        %v6124 = vsub.s32 %v6121, %v6123
        %v6125 = vrot.slane %v6117, %v6124
        %v6127 = vunpack.c.l.s4 1934713408
        %v6128 = vunpack.c.0.s8 %v6127
        %v6129 = vlaneseq
        %v6130 = vshrl.u32 %v6129, 7
        %v6131 = vsub.s32 %v6128, %v6130
        %v6132 = vrot.slane %v6118, %v6131
        %v6133 = vcombine.low %v6077, %v6093
        %v6134 = vcombine.high %v6077, %v6093
        %v6136 = vunpack.c.l.s4 1934713408
        %v6137 = vunpack.c.0.s8 %v6136
        %v6138 = vlaneseq
        %v6139 = vshrl.u32 %v6138, 7
        %v6140 = vsub.s32 %v6137, %v6139
        %v6141 = vrot.slane %v6133, %v6140
        %v6143 = vunpack.c.l.s4 1934713408
        %v6144 = vunpack.c.0.s8 %v6143
        %v6145 = vlaneseq
        %v6146 = vshrl.u32 %v6145, 7
        %v6147 = vsub.s32 %v6144, %v6146
        %v6148 = vrot.slane %v6134, %v6147
        %v6149 = vcombine.low %v6084, %v6100
        %v6150 = vcombine.high %v6084, %v6100
        %v6152 = vunpack.c.l.s4 1934713408
        %v6153 = vunpack.c.0.s8 %v6152
        %v6154 = vlaneseq
        %v6155 = vshrl.u32 %v6154, 7
        %v6156 = vsub.s32 %v6153, %v6155
        %v6157 = vrot.slane %v6149, %v6156
        %v6159 = vunpack.c.l.s4 1934713408
        %v6160 = vunpack.c.0.s8 %v6159
        %v6161 = vlaneseq
        %v6162 = vshrl.u32 %v6161, 7
        %v6163 = vsub.s32 %v6160, %v6162
        %v6164 = vrot.slane %v6150, %v6163
        %v6165 = vcombine.low %v6109, %v6141
        %v6166 = vcombine.high %v6109, %v6141
        %v6167 = vcombine.low %v6116, %v6148
        %v6168 = vcombine.high %v6116, %v6148
        %v6169 = vcombine.low %v6125, %v6157
        %v6170 = vcombine.high %v6125, %v6157
        %v6171 = vcombine.low %v6132, %v6164
        %v6172 = vcombine.high %v6132, %v6164
        %v6173 = vcombine.low %v337, %v593
        %v6174 = vcombine.high %v337, %v593
        %v6176 = vunpack.c.l.s4 1983009808
        %v6177 = vunpack.c.0.s8 %v6176
        %v6178 = vlaneseq
        %v6179 = vshrl.u32 %v6178, 7
        %v6180 = vsub.s32 %v6177, %v6179
        %v6181 = vrot.slane %v6173, %v6180
        %v6183 = vunpack.c.l.s4 1983009808
        %v6184 = vunpack.c.0.s8 %v6183
        %v6185 = vlaneseq
        %v6186 = vshrl.u32 %v6185, 7
        %v6187 = vsub.s32 %v6184, %v6186
        %v6188 = vrot.slane %v6174, %v6187
        %v6189 = vcombine.low %v465, %v721
        %v6190 = vcombine.high %v465, %v721
        %v6192 = vunpack.c.l.s4 1983009808
        %v6193 = vunpack.c.0.s8 %v6192
        %v6194 = vlaneseq
        %v6195 = vshrl.u32 %v6194, 7
        %v6196 = vsub.s32 %v6193, %v6195
        %v6197 = vrot.slane %v6189, %v6196
        %v6199 = vunpack.c.l.s4 1983009808
        %v6200 = vunpack.c.0.s8 %v6199
        %v6201 = vlaneseq
        %v6202 = vshrl.u32 %v6201, 7
        %v6203 = vsub.s32 %v6200, %v6202
        %v6204 = vrot.slane %v6190, %v6203
        %v6205 = vcombine.low %v849, %v1105
        %v6206 = vcombine.high %v849, %v1105
        %v6208 = vunpack.c.l.s4 1983009808
        %v6209 = vunpack.c.0.s8 %v6208
        %v6210 = vlaneseq
        %v6211 = vshrl.u32 %v6210, 7
        %v6212 = vsub.s32 %v6209, %v6211
        %v6213 = vrot.slane %v6205, %v6212
        %v6215 = vunpack.c.l.s4 1983009808
        %v6216 = vunpack.c.0.s8 %v6215
        %v6217 = vlaneseq
        %v6218 = vshrl.u32 %v6217, 7
        %v6219 = vsub.s32 %v6216, %v6218
        %v6220 = vrot.slane %v6206, %v6219
        %v6221 = vcombine.low %v977, %v1233
        %v6222 = vcombine.high %v977, %v1233
        %v6224 = vunpack.c.l.s4 1983009808
        %v6225 = vunpack.c.0.s8 %v6224
        %v6226 = vlaneseq
        %v6227 = vshrl.u32 %v6226, 7
        %v6228 = vsub.s32 %v6225, %v6227
        %v6229 = vrot.slane %v6221, %v6228
        %v6231 = vunpack.c.l.s4 1983009808
        %v6232 = vunpack.c.0.s8 %v6231
        %v6233 = vlaneseq
        %v6234 = vshrl.u32 %v6233, 7
        %v6235 = vsub.s32 %v6232, %v6234
        %v6236 = vrot.slane %v6222, %v6235
        %v6237 = vcombine.low %v6181, %v6197
        %v6238 = vcombine.high %v6181, %v6197
        %v6240 = vunpack.c.l.s4 1934713408
        %v6241 = vunpack.c.0.s8 %v6240
        %v6242 = vlaneseq
        %v6243 = vshrl.u32 %v6242, 7
        %v6244 = vsub.s32 %v6241, %v6243
        %v6245 = vrot.slane %v6237, %v6244
        %v6247 = vunpack.c.l.s4 1934713408
        %v6248 = vunpack.c.0.s8 %v6247
        %v6249 = vlaneseq
        %v6250 = vshrl.u32 %v6249, 7
        %v6251 = vsub.s32 %v6248, %v6250
        %v6252 = vrot.slane %v6238, %v6251
        %v6253 = vcombine.low %v6188, %v6204
        %v6254 = vcombine.high %v6188, %v6204
        %v6256 = vunpack.c.l.s4 1934713408
        %v6257 = vunpack.c.0.s8 %v6256
        %v6258 = vlaneseq
        %v6259 = vshrl.u32 %v6258, 7
        %v6260 = vsub.s32 %v6257, %v6259
        %v6261 = vrot.slane %v6253, %v6260
        %v6263 = vunpack.c.l.s4 1934713408
        %v6264 = vunpack.c.0.s8 %v6263
        %v6265 = vlaneseq
        %v6266 = vshrl.u32 %v6265, 7
        %v6267 = vsub.s32 %v6264, %v6266
        %v6268 = vrot.slane %v6254, %v6267
        %v6269 = vcombine.low %v6213, %v6229
        %v6270 = vcombine.high %v6213, %v6229
        %v6272 = vunpack.c.l.s4 1934713408
        %v6273 = vunpack.c.0.s8 %v6272
        %v6274 = vlaneseq
        %v6275 = vshrl.u32 %v6274, 7
        %v6276 = vsub.s32 %v6273, %v6275
        %v6277 = vrot.slane %v6269, %v6276
        %v6279 = vunpack.c.l.s4 1934713408
        %v6280 = vunpack.c.0.s8 %v6279
        %v6281 = vlaneseq
        %v6282 = vshrl.u32 %v6281, 7
        %v6283 = vsub.s32 %v6280, %v6282
        %v6284 = vrot.slane %v6270, %v6283
        %v6285 = vcombine.low %v6220, %v6236
        %v6286 = vcombine.high %v6220, %v6236
        %v6288 = vunpack.c.l.s4 1934713408
        %v6289 = vunpack.c.0.s8 %v6288
        %v6290 = vlaneseq
        %v6291 = vshrl.u32 %v6290, 7
        %v6292 = vsub.s32 %v6289, %v6291
        %v6293 = vrot.slane %v6285, %v6292
        %v6295 = vunpack.c.l.s4 1934713408
        %v6296 = vunpack.c.0.s8 %v6295
        %v6297 = vlaneseq
        %v6298 = vshrl.u32 %v6297, 7
        %v6299 = vsub.s32 %v6296, %v6298
        %v6300 = vrot.slane %v6286, %v6299
        %v6301 = vcombine.low %v6245, %v6277
        %v6302 = vcombine.high %v6245, %v6277
        %v6303 = vcombine.low %v6252, %v6284
        %v6304 = vcombine.high %v6252, %v6284
        %v6305 = vcombine.low %v6261, %v6293
        %v6306 = vcombine.high %v6261, %v6293
        %v6307 = vcombine.low %v6268, %v6300
        %v6308 = vcombine.high %v6268, %v6300
        %v6309 = vcombine.low %v338, %v594
        %v6310 = vcombine.high %v338, %v594
        %v6312 = vunpack.c.l.s4 1983009808
        %v6313 = vunpack.c.0.s8 %v6312
        %v6314 = vlaneseq
        %v6315 = vshrl.u32 %v6314, 7
        %v6316 = vsub.s32 %v6313, %v6315
        %v6317 = vrot.slane %v6309, %v6316
        %v6319 = vunpack.c.l.s4 1983009808
        %v6320 = vunpack.c.0.s8 %v6319
        %v6321 = vlaneseq
        %v6322 = vshrl.u32 %v6321, 7
        %v6323 = vsub.s32 %v6320, %v6322
        %v6324 = vrot.slane %v6310, %v6323
        %v6325 = vcombine.low %v466, %v722
        %v6326 = vcombine.high %v466, %v722
        %v6328 = vunpack.c.l.s4 1983009808
        %v6329 = vunpack.c.0.s8 %v6328
        %v6330 = vlaneseq
        %v6331 = vshrl.u32 %v6330, 7
        %v6332 = vsub.s32 %v6329, %v6331
        %v6333 = vrot.slane %v6325, %v6332
        %v6335 = vunpack.c.l.s4 1983009808
        %v6336 = vunpack.c.0.s8 %v6335
        %v6337 = vlaneseq
        %v6338 = vshrl.u32 %v6337, 7
        %v6339 = vsub.s32 %v6336, %v6338
        %v6340 = vrot.slane %v6326, %v6339
        %v6341 = vcombine.low %v850, %v1106
        %v6342 = vcombine.high %v850, %v1106
        %v6344 = vunpack.c.l.s4 1983009808
        %v6345 = vunpack.c.0.s8 %v6344
        %v6346 = vlaneseq
        %v6347 = vshrl.u32 %v6346, 7
        %v6348 = vsub.s32 %v6345, %v6347
        %v6349 = vrot.slane %v6341, %v6348
        %v6351 = vunpack.c.l.s4 1983009808
        %v6352 = vunpack.c.0.s8 %v6351
        %v6353 = vlaneseq
        %v6354 = vshrl.u32 %v6353, 7
        %v6355 = vsub.s32 %v6352, %v6354
        %v6356 = vrot.slane %v6342, %v6355
        %v6357 = vcombine.low %v978, %v1234
        %v6358 = vcombine.high %v978, %v1234
        %v6360 = vunpack.c.l.s4 1983009808
        %v6361 = vunpack.c.0.s8 %v6360
        %v6362 = vlaneseq
        %v6363 = vshrl.u32 %v6362, 7
        %v6364 = vsub.s32 %v6361, %v6363
        %v6365 = vrot.slane %v6357, %v6364
        %v6367 = vunpack.c.l.s4 1983009808
        %v6368 = vunpack.c.0.s8 %v6367
        %v6369 = vlaneseq
        %v6370 = vshrl.u32 %v6369, 7
        %v6371 = vsub.s32 %v6368, %v6370
        %v6372 = vrot.slane %v6358, %v6371
        %v6373 = vcombine.low %v6317, %v6333
        %v6374 = vcombine.high %v6317, %v6333
        %v6376 = vunpack.c.l.s4 1934713408
        %v6377 = vunpack.c.0.s8 %v6376
        %v6378 = vlaneseq
        %v6379 = vshrl.u32 %v6378, 7
        %v6380 = vsub.s32 %v6377, %v6379
        %v6381 = vrot.slane %v6373, %v6380
        %v6383 = vunpack.c.l.s4 1934713408
        %v6384 = vunpack.c.0.s8 %v6383
        %v6385 = vlaneseq
        %v6386 = vshrl.u32 %v6385, 7
        %v6387 = vsub.s32 %v6384, %v6386
        %v6388 = vrot.slane %v6374, %v6387
        %v6389 = vcombine.low %v6324, %v6340
        %v6390 = vcombine.high %v6324, %v6340
        %v6392 = vunpack.c.l.s4 1934713408
        %v6393 = vunpack.c.0.s8 %v6392
        %v6394 = vlaneseq
        %v6395 = vshrl.u32 %v6394, 7
        %v6396 = vsub.s32 %v6393, %v6395
        %v6397 = vrot.slane %v6389, %v6396
        %v6399 = vunpack.c.l.s4 1934713408
        %v6400 = vunpack.c.0.s8 %v6399
        %v6401 = vlaneseq
        %v6402 = vshrl.u32 %v6401, 7
        %v6403 = vsub.s32 %v6400, %v6402
        %v6404 = vrot.slane %v6390, %v6403
        %v6405 = vcombine.low %v6349, %v6365
        %v6406 = vcombine.high %v6349, %v6365
        %v6408 = vunpack.c.l.s4 1934713408
        %v6409 = vunpack.c.0.s8 %v6408
        %v6410 = vlaneseq
        %v6411 = vshrl.u32 %v6410, 7
        %v6412 = vsub.s32 %v6409, %v6411
        %v6413 = vrot.slane %v6405, %v6412
        %v6415 = vunpack.c.l.s4 1934713408
        %v6416 = vunpack.c.0.s8 %v6415
        %v6417 = vlaneseq
        %v6418 = vshrl.u32 %v6417, 7
        %v6419 = vsub.s32 %v6416, %v6418
        %v6420 = vrot.slane %v6406, %v6419
        %v6421 = vcombine.low %v6356, %v6372
        %v6422 = vcombine.high %v6356, %v6372
        %v6424 = vunpack.c.l.s4 1934713408
        %v6425 = vunpack.c.0.s8 %v6424
        %v6426 = vlaneseq
        %v6427 = vshrl.u32 %v6426, 7
        %v6428 = vsub.s32 %v6425, %v6427
        %v6429 = vrot.slane %v6421, %v6428
        %v6431 = vunpack.c.l.s4 1934713408
        %v6432 = vunpack.c.0.s8 %v6431
        %v6433 = vlaneseq
        %v6434 = vshrl.u32 %v6433, 7
        %v6435 = vsub.s32 %v6432, %v6434
        %v6436 = vrot.slane %v6422, %v6435
        %v6437 = vcombine.low %v6381, %v6413
        %v6438 = vcombine.high %v6381, %v6413
        %v6439 = vcombine.low %v6388, %v6420
        %v6440 = vcombine.high %v6388, %v6420
        %v6441 = vcombine.low %v6397, %v6429
        %v6442 = vcombine.high %v6397, %v6429
        %v6443 = vcombine.low %v6404, %v6436
        %v6444 = vcombine.high %v6404, %v6436
        %v6445 = vcombine.low %v339, %v595
        %v6446 = vcombine.high %v339, %v595
        %v6448 = vunpack.c.l.s4 1983009808
        %v6449 = vunpack.c.0.s8 %v6448
        %v6450 = vlaneseq
        %v6451 = vshrl.u32 %v6450, 7
        %v6452 = vsub.s32 %v6449, %v6451
        %v6453 = vrot.slane %v6445, %v6452
        %v6455 = vunpack.c.l.s4 1983009808
        %v6456 = vunpack.c.0.s8 %v6455
        %v6457 = vlaneseq
        %v6458 = vshrl.u32 %v6457, 7
        %v6459 = vsub.s32 %v6456, %v6458
        %v6460 = vrot.slane %v6446, %v6459
        %v6461 = vcombine.low %v467, %v723
        %v6462 = vcombine.high %v467, %v723
        %v6464 = vunpack.c.l.s4 1983009808
        %v6465 = vunpack.c.0.s8 %v6464
        %v6466 = vlaneseq
        %v6467 = vshrl.u32 %v6466, 7
        %v6468 = vsub.s32 %v6465, %v6467
        %v6469 = vrot.slane %v6461, %v6468
        %v6471 = vunpack.c.l.s4 1983009808
        %v6472 = vunpack.c.0.s8 %v6471
        %v6473 = vlaneseq
        %v6474 = vshrl.u32 %v6473, 7
        %v6475 = vsub.s32 %v6472, %v6474
        %v6476 = vrot.slane %v6462, %v6475
        %v6477 = vcombine.low %v851, %v1107
        %v6478 = vcombine.high %v851, %v1107
        %v6480 = vunpack.c.l.s4 1983009808
        %v6481 = vunpack.c.0.s8 %v6480
        %v6482 = vlaneseq
        %v6483 = vshrl.u32 %v6482, 7
        %v6484 = vsub.s32 %v6481, %v6483
        %v6485 = vrot.slane %v6477, %v6484
        %v6487 = vunpack.c.l.s4 1983009808
        %v6488 = vunpack.c.0.s8 %v6487
        %v6489 = vlaneseq
        %v6490 = vshrl.u32 %v6489, 7
        %v6491 = vsub.s32 %v6488, %v6490
        %v6492 = vrot.slane %v6478, %v6491
        %v6493 = vcombine.low %v979, %v1235
        %v6494 = vcombine.high %v979, %v1235
        %v6496 = vunpack.c.l.s4 1983009808
        %v6497 = vunpack.c.0.s8 %v6496
        %v6498 = vlaneseq
        %v6499 = vshrl.u32 %v6498, 7
        %v6500 = vsub.s32 %v6497, %v6499
        %v6501 = vrot.slane %v6493, %v6500
        %v6503 = vunpack.c.l.s4 1983009808
        %v6504 = vunpack.c.0.s8 %v6503
        %v6505 = vlaneseq
        %v6506 = vshrl.u32 %v6505, 7
        %v6507 = vsub.s32 %v6504, %v6506
        %v6508 = vrot.slane %v6494, %v6507
        %v6509 = vcombine.low %v6453, %v6469
        %v6510 = vcombine.high %v6453, %v6469
        %v6512 = vunpack.c.l.s4 1934713408
        %v6513 = vunpack.c.0.s8 %v6512
        %v6514 = vlaneseq
        %v6515 = vshrl.u32 %v6514, 7
        %v6516 = vsub.s32 %v6513, %v6515
        %v6517 = vrot.slane %v6509, %v6516
        %v6519 = vunpack.c.l.s4 1934713408
        %v6520 = vunpack.c.0.s8 %v6519
        %v6521 = vlaneseq
        %v6522 = vshrl.u32 %v6521, 7
        %v6523 = vsub.s32 %v6520, %v6522
        %v6524 = vrot.slane %v6510, %v6523
        %v6525 = vcombine.low %v6460, %v6476
        %v6526 = vcombine.high %v6460, %v6476
        %v6528 = vunpack.c.l.s4 1934713408
        %v6529 = vunpack.c.0.s8 %v6528
        %v6530 = vlaneseq
        %v6531 = vshrl.u32 %v6530, 7
        %v6532 = vsub.s32 %v6529, %v6531
        %v6533 = vrot.slane %v6525, %v6532
        %v6535 = vunpack.c.l.s4 1934713408
        %v6536 = vunpack.c.0.s8 %v6535
        %v6537 = vlaneseq
        %v6538 = vshrl.u32 %v6537, 7
        %v6539 = vsub.s32 %v6536, %v6538
        %v6540 = vrot.slane %v6526, %v6539
        %v6541 = vcombine.low %v6485, %v6501
        %v6542 = vcombine.high %v6485, %v6501
        %v6544 = vunpack.c.l.s4 1934713408
        %v6545 = vunpack.c.0.s8 %v6544
        %v6546 = vlaneseq
        %v6547 = vshrl.u32 %v6546, 7
        %v6548 = vsub.s32 %v6545, %v6547
        %v6549 = vrot.slane %v6541, %v6548
        %v6551 = vunpack.c.l.s4 1934713408
        %v6552 = vunpack.c.0.s8 %v6551
        %v6553 = vlaneseq
        %v6554 = vshrl.u32 %v6553, 7
        %v6555 = vsub.s32 %v6552, %v6554
        %v6556 = vrot.slane %v6542, %v6555
        %v6557 = vcombine.low %v6492, %v6508
        %v6558 = vcombine.high %v6492, %v6508
        %v6560 = vunpack.c.l.s4 1934713408
        %v6561 = vunpack.c.0.s8 %v6560
        %v6562 = vlaneseq
        %v6563 = vshrl.u32 %v6562, 7
        %v6564 = vsub.s32 %v6561, %v6563
        %v6565 = vrot.slane %v6557, %v6564
        %v6567 = vunpack.c.l.s4 1934713408
        %v6568 = vunpack.c.0.s8 %v6567
        %v6569 = vlaneseq
        %v6570 = vshrl.u32 %v6569, 7
        %v6571 = vsub.s32 %v6568, %v6570
        %v6572 = vrot.slane %v6558, %v6571
        %v6573 = vcombine.low %v6517, %v6549
        %v6574 = vcombine.high %v6517, %v6549
        %v6575 = vcombine.low %v6524, %v6556
        %v6576 = vcombine.high %v6524, %v6556
        %v6577 = vcombine.low %v6533, %v6565
        %v6578 = vcombine.high %v6533, %v6565
        %v6579 = vcombine.low %v6540, %v6572
        %v6580 = vcombine.high %v6540, %v6572
        %v6581 = vcombine.low %v340, %v596
        %v6582 = vcombine.high %v340, %v596
        %v6584 = vunpack.c.l.s4 1983009808
        %v6585 = vunpack.c.0.s8 %v6584
        %v6586 = vlaneseq
        %v6587 = vshrl.u32 %v6586, 7
        %v6588 = vsub.s32 %v6585, %v6587
        %v6589 = vrot.slane %v6581, %v6588
        %v6591 = vunpack.c.l.s4 1983009808
        %v6592 = vunpack.c.0.s8 %v6591
        %v6593 = vlaneseq
        %v6594 = vshrl.u32 %v6593, 7
        %v6595 = vsub.s32 %v6592, %v6594
        %v6596 = vrot.slane %v6582, %v6595
        %v6597 = vcombine.low %v468, %v724
        %v6598 = vcombine.high %v468, %v724
        %v6600 = vunpack.c.l.s4 1983009808
        %v6601 = vunpack.c.0.s8 %v6600
        %v6602 = vlaneseq
        %v6603 = vshrl.u32 %v6602, 7
        %v6604 = vsub.s32 %v6601, %v6603
        %v6605 = vrot.slane %v6597, %v6604
        %v6607 = vunpack.c.l.s4 1983009808
        %v6608 = vunpack.c.0.s8 %v6607
        %v6609 = vlaneseq
        %v6610 = vshrl.u32 %v6609, 7
        %v6611 = vsub.s32 %v6608, %v6610
        %v6612 = vrot.slane %v6598, %v6611
        %v6613 = vcombine.low %v852, %v1108
        %v6614 = vcombine.high %v852, %v1108
        %v6616 = vunpack.c.l.s4 1983009808
        %v6617 = vunpack.c.0.s8 %v6616
        %v6618 = vlaneseq
        %v6619 = vshrl.u32 %v6618, 7
        %v6620 = vsub.s32 %v6617, %v6619
        %v6621 = vrot.slane %v6613, %v6620
        %v6623 = vunpack.c.l.s4 1983009808
        %v6624 = vunpack.c.0.s8 %v6623
        %v6625 = vlaneseq
        %v6626 = vshrl.u32 %v6625, 7
        %v6627 = vsub.s32 %v6624, %v6626
        %v6628 = vrot.slane %v6614, %v6627
        %v6629 = vcombine.low %v980, %v1236
        %v6630 = vcombine.high %v980, %v1236
        %v6632 = vunpack.c.l.s4 1983009808
        %v6633 = vunpack.c.0.s8 %v6632
        %v6634 = vlaneseq
        %v6635 = vshrl.u32 %v6634, 7
        %v6636 = vsub.s32 %v6633, %v6635
        %v6637 = vrot.slane %v6629, %v6636
        %v6639 = vunpack.c.l.s4 1983009808
        %v6640 = vunpack.c.0.s8 %v6639
        %v6641 = vlaneseq
        %v6642 = vshrl.u32 %v6641, 7
        %v6643 = vsub.s32 %v6640, %v6642
        %v6644 = vrot.slane %v6630, %v6643
        %v6645 = vcombine.low %v6589, %v6605
        %v6646 = vcombine.high %v6589, %v6605
        %v6648 = vunpack.c.l.s4 1934713408
        %v6649 = vunpack.c.0.s8 %v6648
        %v6650 = vlaneseq
        %v6651 = vshrl.u32 %v6650, 7
        %v6652 = vsub.s32 %v6649, %v6651
        %v6653 = vrot.slane %v6645, %v6652
        %v6655 = vunpack.c.l.s4 1934713408
        %v6656 = vunpack.c.0.s8 %v6655
        %v6657 = vlaneseq
        %v6658 = vshrl.u32 %v6657, 7
        %v6659 = vsub.s32 %v6656, %v6658
        %v6660 = vrot.slane %v6646, %v6659
        %v6661 = vcombine.low %v6596, %v6612
        %v6662 = vcombine.high %v6596, %v6612
        %v6664 = vunpack.c.l.s4 1934713408
        %v6665 = vunpack.c.0.s8 %v6664
        %v6666 = vlaneseq
        %v6667 = vshrl.u32 %v6666, 7
        %v6668 = vsub.s32 %v6665, %v6667
        %v6669 = vrot.slane %v6661, %v6668
        %v6671 = vunpack.c.l.s4 1934713408
        %v6672 = vunpack.c.0.s8 %v6671
        %v6673 = vlaneseq
        %v6674 = vshrl.u32 %v6673, 7
        %v6675 = vsub.s32 %v6672, %v6674
        %v6676 = vrot.slane %v6662, %v6675
        %v6677 = vcombine.low %v6621, %v6637
        %v6678 = vcombine.high %v6621, %v6637
        %v6680 = vunpack.c.l.s4 1934713408
        %v6681 = vunpack.c.0.s8 %v6680
        %v6682 = vlaneseq
        %v6683 = vshrl.u32 %v6682, 7
        %v6684 = vsub.s32 %v6681, %v6683
        %v6685 = vrot.slane %v6677, %v6684
        %v6687 = vunpack.c.l.s4 1934713408
        %v6688 = vunpack.c.0.s8 %v6687
        %v6689 = vlaneseq
        %v6690 = vshrl.u32 %v6689, 7
        %v6691 = vsub.s32 %v6688, %v6690
        %v6692 = vrot.slane %v6678, %v6691
        %v6693 = vcombine.low %v6628, %v6644
        %v6694 = vcombine.high %v6628, %v6644
        %v6696 = vunpack.c.l.s4 1934713408
        %v6697 = vunpack.c.0.s8 %v6696
        %v6698 = vlaneseq
        %v6699 = vshrl.u32 %v6698, 7
        %v6700 = vsub.s32 %v6697, %v6699
        %v6701 = vrot.slane %v6693, %v6700
        %v6703 = vunpack.c.l.s4 1934713408
        %v6704 = vunpack.c.0.s8 %v6703
        %v6705 = vlaneseq
        %v6706 = vshrl.u32 %v6705, 7
        %v6707 = vsub.s32 %v6704, %v6706
        %v6708 = vrot.slane %v6694, %v6707
        %v6709 = vcombine.low %v6653, %v6685
        %v6710 = vcombine.high %v6653, %v6685
        %v6711 = vcombine.low %v6660, %v6692
        %v6712 = vcombine.high %v6660, %v6692
        %v6713 = vcombine.low %v6669, %v6701
        %v6714 = vcombine.high %v6669, %v6701
        %v6715 = vcombine.low %v6676, %v6708
        %v6716 = vcombine.high %v6676, %v6708
        %v6717 = vcombine.low %v341, %v597
        %v6718 = vcombine.high %v341, %v597
        %v6720 = vunpack.c.l.s4 1983009808
        %v6721 = vunpack.c.0.s8 %v6720
        %v6722 = vlaneseq
        %v6723 = vshrl.u32 %v6722, 7
        %v6724 = vsub.s32 %v6721, %v6723
        %v6725 = vrot.slane %v6717, %v6724
        %v6727 = vunpack.c.l.s4 1983009808
        %v6728 = vunpack.c.0.s8 %v6727
        %v6729 = vlaneseq
        %v6730 = vshrl.u32 %v6729, 7
        %v6731 = vsub.s32 %v6728, %v6730
        %v6732 = vrot.slane %v6718, %v6731
        %v6733 = vcombine.low %v469, %v725
        %v6734 = vcombine.high %v469, %v725
        %v6736 = vunpack.c.l.s4 1983009808
        %v6737 = vunpack.c.0.s8 %v6736
        %v6738 = vlaneseq
        %v6739 = vshrl.u32 %v6738, 7
        %v6740 = vsub.s32 %v6737, %v6739
        %v6741 = vrot.slane %v6733, %v6740
        %v6743 = vunpack.c.l.s4 1983009808
        %v6744 = vunpack.c.0.s8 %v6743
        %v6745 = vlaneseq
        %v6746 = vshrl.u32 %v6745, 7
        %v6747 = vsub.s32 %v6744, %v6746
        %v6748 = vrot.slane %v6734, %v6747
        %v6749 = vcombine.low %v853, %v1109
        %v6750 = vcombine.high %v853, %v1109
        %v6752 = vunpack.c.l.s4 1983009808
        %v6753 = vunpack.c.0.s8 %v6752
        %v6754 = vlaneseq
        %v6755 = vshrl.u32 %v6754, 7
        %v6756 = vsub.s32 %v6753, %v6755
        %v6757 = vrot.slane %v6749, %v6756
        %v6759 = vunpack.c.l.s4 1983009808
        %v6760 = vunpack.c.0.s8 %v6759
        %v6761 = vlaneseq
        %v6762 = vshrl.u32 %v6761, 7
        %v6763 = vsub.s32 %v6760, %v6762
        %v6764 = vrot.slane %v6750, %v6763
        %v6765 = vcombine.low %v981, %v1237
        %v6766 = vcombine.high %v981, %v1237
        %v6768 = vunpack.c.l.s4 1983009808
        %v6769 = vunpack.c.0.s8 %v6768
        %v6770 = vlaneseq
        %v6771 = vshrl.u32 %v6770, 7
        %v6772 = vsub.s32 %v6769, %v6771
        %v6773 = vrot.slane %v6765, %v6772
        %v6775 = vunpack.c.l.s4 1983009808
        %v6776 = vunpack.c.0.s8 %v6775
        %v6777 = vlaneseq
        %v6778 = vshrl.u32 %v6777, 7
        %v6779 = vsub.s32 %v6776, %v6778
        %v6780 = vrot.slane %v6766, %v6779
        %v6781 = vcombine.low %v6725, %v6741
        %v6782 = vcombine.high %v6725, %v6741
        %v6784 = vunpack.c.l.s4 1934713408
        %v6785 = vunpack.c.0.s8 %v6784
        %v6786 = vlaneseq
        %v6787 = vshrl.u32 %v6786, 7
        %v6788 = vsub.s32 %v6785, %v6787
        %v6789 = vrot.slane %v6781, %v6788
        %v6791 = vunpack.c.l.s4 1934713408
        %v6792 = vunpack.c.0.s8 %v6791
        %v6793 = vlaneseq
        %v6794 = vshrl.u32 %v6793, 7
        %v6795 = vsub.s32 %v6792, %v6794
        %v6796 = vrot.slane %v6782, %v6795
        %v6797 = vcombine.low %v6732, %v6748
        %v6798 = vcombine.high %v6732, %v6748
        %v6800 = vunpack.c.l.s4 1934713408
        %v6801 = vunpack.c.0.s8 %v6800
        %v6802 = vlaneseq
        %v6803 = vshrl.u32 %v6802, 7
        %v6804 = vsub.s32 %v6801, %v6803
        %v6805 = vrot.slane %v6797, %v6804
        %v6807 = vunpack.c.l.s4 1934713408
        %v6808 = vunpack.c.0.s8 %v6807
        %v6809 = vlaneseq
        %v6810 = vshrl.u32 %v6809, 7
        %v6811 = vsub.s32 %v6808, %v6810
        %v6812 = vrot.slane %v6798, %v6811
        %v6813 = vcombine.low %v6757, %v6773
        %v6814 = vcombine.high %v6757, %v6773
        %v6816 = vunpack.c.l.s4 1934713408
        %v6817 = vunpack.c.0.s8 %v6816
        %v6818 = vlaneseq
        %v6819 = vshrl.u32 %v6818, 7
        %v6820 = vsub.s32 %v6817, %v6819
        %v6821 = vrot.slane %v6813, %v6820
        %v6823 = vunpack.c.l.s4 1934713408
        %v6824 = vunpack.c.0.s8 %v6823
        %v6825 = vlaneseq
        %v6826 = vshrl.u32 %v6825, 7
        %v6827 = vsub.s32 %v6824, %v6826
        %v6828 = vrot.slane %v6814, %v6827
        %v6829 = vcombine.low %v6764, %v6780
        %v6830 = vcombine.high %v6764, %v6780
        %v6832 = vunpack.c.l.s4 1934713408
        %v6833 = vunpack.c.0.s8 %v6832
        %v6834 = vlaneseq
        %v6835 = vshrl.u32 %v6834, 7
        %v6836 = vsub.s32 %v6833, %v6835
        %v6837 = vrot.slane %v6829, %v6836
        %v6839 = vunpack.c.l.s4 1934713408
        %v6840 = vunpack.c.0.s8 %v6839
        %v6841 = vlaneseq
        %v6842 = vshrl.u32 %v6841, 7
        %v6843 = vsub.s32 %v6840, %v6842
        %v6844 = vrot.slane %v6830, %v6843
        %v6845 = vcombine.low %v6789, %v6821
        %v6846 = vcombine.high %v6789, %v6821
        %v6847 = vcombine.low %v6796, %v6828
        %v6848 = vcombine.high %v6796, %v6828
        %v6849 = vcombine.low %v6805, %v6837
        %v6850 = vcombine.high %v6805, %v6837
        %v6851 = vcombine.low %v6812, %v6844
        %v6852 = vcombine.high %v6812, %v6844
        %v6853 = vcombine.low %v342, %v598
        %v6854 = vcombine.high %v342, %v598
        %v6856 = vunpack.c.l.s4 1983009808
        %v6857 = vunpack.c.0.s8 %v6856
        %v6858 = vlaneseq
        %v6859 = vshrl.u32 %v6858, 7
        %v6860 = vsub.s32 %v6857, %v6859
        %v6861 = vrot.slane %v6853, %v6860
        %v6863 = vunpack.c.l.s4 1983009808
        %v6864 = vunpack.c.0.s8 %v6863
        %v6865 = vlaneseq
        %v6866 = vshrl.u32 %v6865, 7
        %v6867 = vsub.s32 %v6864, %v6866
        %v6868 = vrot.slane %v6854, %v6867
        %v6869 = vcombine.low %v470, %v726
        %v6870 = vcombine.high %v470, %v726
        %v6872 = vunpack.c.l.s4 1983009808
        %v6873 = vunpack.c.0.s8 %v6872
        %v6874 = vlaneseq
        %v6875 = vshrl.u32 %v6874, 7
        %v6876 = vsub.s32 %v6873, %v6875
        %v6877 = vrot.slane %v6869, %v6876
        %v6879 = vunpack.c.l.s4 1983009808
        %v6880 = vunpack.c.0.s8 %v6879
        %v6881 = vlaneseq
        %v6882 = vshrl.u32 %v6881, 7
        %v6883 = vsub.s32 %v6880, %v6882
        %v6884 = vrot.slane %v6870, %v6883
        %v6885 = vcombine.low %v854, %v1110
        %v6886 = vcombine.high %v854, %v1110
        %v6888 = vunpack.c.l.s4 1983009808
        %v6889 = vunpack.c.0.s8 %v6888
        %v6890 = vlaneseq
        %v6891 = vshrl.u32 %v6890, 7
        %v6892 = vsub.s32 %v6889, %v6891
        %v6893 = vrot.slane %v6885, %v6892
        %v6895 = vunpack.c.l.s4 1983009808
        %v6896 = vunpack.c.0.s8 %v6895
        %v6897 = vlaneseq
        %v6898 = vshrl.u32 %v6897, 7
        %v6899 = vsub.s32 %v6896, %v6898
        %v6900 = vrot.slane %v6886, %v6899
        %v6901 = vcombine.low %v982, %v1238
        %v6902 = vcombine.high %v982, %v1238
        %v6904 = vunpack.c.l.s4 1983009808
        %v6905 = vunpack.c.0.s8 %v6904
        %v6906 = vlaneseq
        %v6907 = vshrl.u32 %v6906, 7
        %v6908 = vsub.s32 %v6905, %v6907
        %v6909 = vrot.slane %v6901, %v6908
        %v6911 = vunpack.c.l.s4 1983009808
        %v6912 = vunpack.c.0.s8 %v6911
        %v6913 = vlaneseq
        %v6914 = vshrl.u32 %v6913, 7
        %v6915 = vsub.s32 %v6912, %v6914
        %v6916 = vrot.slane %v6902, %v6915
        %v6917 = vcombine.low %v6861, %v6877
        %v6918 = vcombine.high %v6861, %v6877
        %v6920 = vunpack.c.l.s4 1934713408
        %v6921 = vunpack.c.0.s8 %v6920
        %v6922 = vlaneseq
        %v6923 = vshrl.u32 %v6922, 7
        %v6924 = vsub.s32 %v6921, %v6923
        %v6925 = vrot.slane %v6917, %v6924
        %v6927 = vunpack.c.l.s4 1934713408
        %v6928 = vunpack.c.0.s8 %v6927
        %v6929 = vlaneseq
        %v6930 = vshrl.u32 %v6929, 7
        %v6931 = vsub.s32 %v6928, %v6930
        %v6932 = vrot.slane %v6918, %v6931
        %v6933 = vcombine.low %v6868, %v6884
        %v6934 = vcombine.high %v6868, %v6884
        %v6936 = vunpack.c.l.s4 1934713408
        %v6937 = vunpack.c.0.s8 %v6936
        %v6938 = vlaneseq
        %v6939 = vshrl.u32 %v6938, 7
        %v6940 = vsub.s32 %v6937, %v6939
        %v6941 = vrot.slane %v6933, %v6940
        %v6943 = vunpack.c.l.s4 1934713408
        %v6944 = vunpack.c.0.s8 %v6943
        %v6945 = vlaneseq
        %v6946 = vshrl.u32 %v6945, 7
        %v6947 = vsub.s32 %v6944, %v6946
        %v6948 = vrot.slane %v6934, %v6947
        %v6949 = vcombine.low %v6893, %v6909
        %v6950 = vcombine.high %v6893, %v6909
        %v6952 = vunpack.c.l.s4 1934713408
        %v6953 = vunpack.c.0.s8 %v6952
        %v6954 = vlaneseq
        %v6955 = vshrl.u32 %v6954, 7
        %v6956 = vsub.s32 %v6953, %v6955
        %v6957 = vrot.slane %v6949, %v6956
        %v6959 = vunpack.c.l.s4 1934713408
        %v6960 = vunpack.c.0.s8 %v6959
        %v6961 = vlaneseq
        %v6962 = vshrl.u32 %v6961, 7
        %v6963 = vsub.s32 %v6960, %v6962
        %v6964 = vrot.slane %v6950, %v6963
        %v6965 = vcombine.low %v6900, %v6916
        %v6966 = vcombine.high %v6900, %v6916
        %v6968 = vunpack.c.l.s4 1934713408
        %v6969 = vunpack.c.0.s8 %v6968
        %v6970 = vlaneseq
        %v6971 = vshrl.u32 %v6970, 7
        %v6972 = vsub.s32 %v6969, %v6971
        %v6973 = vrot.slane %v6965, %v6972
        %v6975 = vunpack.c.l.s4 1934713408
        %v6976 = vunpack.c.0.s8 %v6975
        %v6977 = vlaneseq
        %v6978 = vshrl.u32 %v6977, 7
        %v6979 = vsub.s32 %v6976, %v6978
        %v6980 = vrot.slane %v6966, %v6979
        %v6981 = vcombine.low %v6925, %v6957
        %v6982 = vcombine.high %v6925, %v6957
        %v6983 = vcombine.low %v6932, %v6964
        %v6984 = vcombine.high %v6932, %v6964
        %v6985 = vcombine.low %v6941, %v6973
        %v6986 = vcombine.high %v6941, %v6973
        %v6987 = vcombine.low %v6948, %v6980
        %v6988 = vcombine.high %v6948, %v6980
        %v6989 = vcombine.low %v343, %v599
        %v6990 = vcombine.high %v343, %v599
        %v6992 = vunpack.c.l.s4 1983009808
        %v6993 = vunpack.c.0.s8 %v6992
        %v6994 = vlaneseq
        %v6995 = vshrl.u32 %v6994, 7
        %v6996 = vsub.s32 %v6993, %v6995
        %v6997 = vrot.slane %v6989, %v6996
        %v6999 = vunpack.c.l.s4 1983009808
        %v7000 = vunpack.c.0.s8 %v6999
        %v7001 = vlaneseq
        %v7002 = vshrl.u32 %v7001, 7
        %v7003 = vsub.s32 %v7000, %v7002
        %v7004 = vrot.slane %v6990, %v7003
        %v7005 = vcombine.low %v471, %v727
        %v7006 = vcombine.high %v471, %v727
        %v7008 = vunpack.c.l.s4 1983009808
        %v7009 = vunpack.c.0.s8 %v7008
        %v7010 = vlaneseq
        %v7011 = vshrl.u32 %v7010, 7
        %v7012 = vsub.s32 %v7009, %v7011
        %v7013 = vrot.slane %v7005, %v7012
        %v7015 = vunpack.c.l.s4 1983009808
        %v7016 = vunpack.c.0.s8 %v7015
        %v7017 = vlaneseq
        %v7018 = vshrl.u32 %v7017, 7
        %v7019 = vsub.s32 %v7016, %v7018
        %v7020 = vrot.slane %v7006, %v7019
        %v7021 = vcombine.low %v855, %v1111
        %v7022 = vcombine.high %v855, %v1111
        %v7024 = vunpack.c.l.s4 1983009808
        %v7025 = vunpack.c.0.s8 %v7024
        %v7026 = vlaneseq
        %v7027 = vshrl.u32 %v7026, 7
        %v7028 = vsub.s32 %v7025, %v7027
        %v7029 = vrot.slane %v7021, %v7028
        %v7031 = vunpack.c.l.s4 1983009808
        %v7032 = vunpack.c.0.s8 %v7031
        %v7033 = vlaneseq
        %v7034 = vshrl.u32 %v7033, 7
        %v7035 = vsub.s32 %v7032, %v7034
        %v7036 = vrot.slane %v7022, %v7035
        %v7037 = vcombine.low %v983, %v1239
        %v7038 = vcombine.high %v983, %v1239
        %v7040 = vunpack.c.l.s4 1983009808
        %v7041 = vunpack.c.0.s8 %v7040
        %v7042 = vlaneseq
        %v7043 = vshrl.u32 %v7042, 7
        %v7044 = vsub.s32 %v7041, %v7043
        %v7045 = vrot.slane %v7037, %v7044
        %v7047 = vunpack.c.l.s4 1983009808
        %v7048 = vunpack.c.0.s8 %v7047
        %v7049 = vlaneseq
        %v7050 = vshrl.u32 %v7049, 7
        %v7051 = vsub.s32 %v7048, %v7050
        %v7052 = vrot.slane %v7038, %v7051
        %v7053 = vcombine.low %v6997, %v7013
        %v7054 = vcombine.high %v6997, %v7013
        %v7056 = vunpack.c.l.s4 1934713408
        %v7057 = vunpack.c.0.s8 %v7056
        %v7058 = vlaneseq
        %v7059 = vshrl.u32 %v7058, 7
        %v7060 = vsub.s32 %v7057, %v7059
        %v7061 = vrot.slane %v7053, %v7060
        %v7063 = vunpack.c.l.s4 1934713408
        %v7064 = vunpack.c.0.s8 %v7063
        %v7065 = vlaneseq
        %v7066 = vshrl.u32 %v7065, 7
        %v7067 = vsub.s32 %v7064, %v7066
        %v7068 = vrot.slane %v7054, %v7067
        %v7069 = vcombine.low %v7004, %v7020
        %v7070 = vcombine.high %v7004, %v7020
        %v7072 = vunpack.c.l.s4 1934713408
        %v7073 = vunpack.c.0.s8 %v7072
        %v7074 = vlaneseq
        %v7075 = vshrl.u32 %v7074, 7
        %v7076 = vsub.s32 %v7073, %v7075
        %v7077 = vrot.slane %v7069, %v7076
        %v7079 = vunpack.c.l.s4 1934713408
        %v7080 = vunpack.c.0.s8 %v7079
        %v7081 = vlaneseq
        %v7082 = vshrl.u32 %v7081, 7
        %v7083 = vsub.s32 %v7080, %v7082
        %v7084 = vrot.slane %v7070, %v7083
        %v7085 = vcombine.low %v7029, %v7045
        %v7086 = vcombine.high %v7029, %v7045
        %v7088 = vunpack.c.l.s4 1934713408
        %v7089 = vunpack.c.0.s8 %v7088
        %v7090 = vlaneseq
        %v7091 = vshrl.u32 %v7090, 7
        %v7092 = vsub.s32 %v7089, %v7091
        %v7093 = vrot.slane %v7085, %v7092
        %v7095 = vunpack.c.l.s4 1934713408
        %v7096 = vunpack.c.0.s8 %v7095
        %v7097 = vlaneseq
        %v7098 = vshrl.u32 %v7097, 7
        %v7099 = vsub.s32 %v7096, %v7098
        %v7100 = vrot.slane %v7086, %v7099
        %v7101 = vcombine.low %v7036, %v7052
        %v7102 = vcombine.high %v7036, %v7052
        %v7104 = vunpack.c.l.s4 1934713408
        %v7105 = vunpack.c.0.s8 %v7104
        %v7106 = vlaneseq
        %v7107 = vshrl.u32 %v7106, 7
        %v7108 = vsub.s32 %v7105, %v7107
        %v7109 = vrot.slane %v7101, %v7108
        %v7111 = vunpack.c.l.s4 1934713408
        %v7112 = vunpack.c.0.s8 %v7111
        %v7113 = vlaneseq
        %v7114 = vshrl.u32 %v7113, 7
        %v7115 = vsub.s32 %v7112, %v7114
        %v7116 = vrot.slane %v7102, %v7115
        %v7117 = vcombine.low %v7061, %v7093
        %v7118 = vcombine.high %v7061, %v7093
        %v7119 = vcombine.low %v7068, %v7100
        %v7120 = vcombine.high %v7068, %v7100
        %v7121 = vcombine.low %v7077, %v7109
        %v7122 = vcombine.high %v7077, %v7109
        %v7123 = vcombine.low %v7084, %v7116
        %v7124 = vcombine.high %v7084, %v7116
        %v7125 = vcombine.low %v344, %v600
        %v7126 = vcombine.high %v344, %v600
        %v7128 = vunpack.c.l.s4 1983009808
        %v7129 = vunpack.c.0.s8 %v7128
        %v7130 = vlaneseq
        %v7131 = vshrl.u32 %v7130, 7
        %v7132 = vsub.s32 %v7129, %v7131
        %v7133 = vrot.slane %v7125, %v7132
        %v7135 = vunpack.c.l.s4 1983009808
        %v7136 = vunpack.c.0.s8 %v7135
        %v7137 = vlaneseq
        %v7138 = vshrl.u32 %v7137, 7
        %v7139 = vsub.s32 %v7136, %v7138
        %v7140 = vrot.slane %v7126, %v7139
        %v7141 = vcombine.low %v472, %v728
        %v7142 = vcombine.high %v472, %v728
        %v7144 = vunpack.c.l.s4 1983009808
        %v7145 = vunpack.c.0.s8 %v7144
        %v7146 = vlaneseq
        %v7147 = vshrl.u32 %v7146, 7
        %v7148 = vsub.s32 %v7145, %v7147
        %v7149 = vrot.slane %v7141, %v7148
        %v7151 = vunpack.c.l.s4 1983009808
        %v7152 = vunpack.c.0.s8 %v7151
        %v7153 = vlaneseq
        %v7154 = vshrl.u32 %v7153, 7
        %v7155 = vsub.s32 %v7152, %v7154
        %v7156 = vrot.slane %v7142, %v7155
        %v7157 = vcombine.low %v856, %v1112
        %v7158 = vcombine.high %v856, %v1112
        %v7160 = vunpack.c.l.s4 1983009808
        %v7161 = vunpack.c.0.s8 %v7160
        %v7162 = vlaneseq
        %v7163 = vshrl.u32 %v7162, 7
        %v7164 = vsub.s32 %v7161, %v7163
        %v7165 = vrot.slane %v7157, %v7164
        %v7167 = vunpack.c.l.s4 1983009808
        %v7168 = vunpack.c.0.s8 %v7167
        %v7169 = vlaneseq
        %v7170 = vshrl.u32 %v7169, 7
        %v7171 = vsub.s32 %v7168, %v7170
        %v7172 = vrot.slane %v7158, %v7171
        %v7173 = vcombine.low %v984, %v1240
        %v7174 = vcombine.high %v984, %v1240
        %v7176 = vunpack.c.l.s4 1983009808
        %v7177 = vunpack.c.0.s8 %v7176
        %v7178 = vlaneseq
        %v7179 = vshrl.u32 %v7178, 7
        %v7180 = vsub.s32 %v7177, %v7179
        %v7181 = vrot.slane %v7173, %v7180
        %v7183 = vunpack.c.l.s4 1983009808
        %v7184 = vunpack.c.0.s8 %v7183
        %v7185 = vlaneseq
        %v7186 = vshrl.u32 %v7185, 7
        %v7187 = vsub.s32 %v7184, %v7186
        %v7188 = vrot.slane %v7174, %v7187
        %v7189 = vcombine.low %v7133, %v7149
        %v7190 = vcombine.high %v7133, %v7149
        %v7192 = vunpack.c.l.s4 1934713408
        %v7193 = vunpack.c.0.s8 %v7192
        %v7194 = vlaneseq
        %v7195 = vshrl.u32 %v7194, 7
        %v7196 = vsub.s32 %v7193, %v7195
        %v7197 = vrot.slane %v7189, %v7196
        %v7199 = vunpack.c.l.s4 1934713408
        %v7200 = vunpack.c.0.s8 %v7199
        %v7201 = vlaneseq
        %v7202 = vshrl.u32 %v7201, 7
        %v7203 = vsub.s32 %v7200, %v7202
        %v7204 = vrot.slane %v7190, %v7203
        %v7205 = vcombine.low %v7140, %v7156
        %v7206 = vcombine.high %v7140, %v7156
        %v7208 = vunpack.c.l.s4 1934713408
        %v7209 = vunpack.c.0.s8 %v7208
        %v7210 = vlaneseq
        %v7211 = vshrl.u32 %v7210, 7
        %v7212 = vsub.s32 %v7209, %v7211
        %v7213 = vrot.slane %v7205, %v7212
        %v7215 = vunpack.c.l.s4 1934713408
        %v7216 = vunpack.c.0.s8 %v7215
        %v7217 = vlaneseq
        %v7218 = vshrl.u32 %v7217, 7
        %v7219 = vsub.s32 %v7216, %v7218
        %v7220 = vrot.slane %v7206, %v7219
        %v7221 = vcombine.low %v7165, %v7181
        %v7222 = vcombine.high %v7165, %v7181
        %v7224 = vunpack.c.l.s4 1934713408
        %v7225 = vunpack.c.0.s8 %v7224
        %v7226 = vlaneseq
        %v7227 = vshrl.u32 %v7226, 7
        %v7228 = vsub.s32 %v7225, %v7227
        %v7229 = vrot.slane %v7221, %v7228
        %v7231 = vunpack.c.l.s4 1934713408
        %v7232 = vunpack.c.0.s8 %v7231
        %v7233 = vlaneseq
        %v7234 = vshrl.u32 %v7233, 7
        %v7235 = vsub.s32 %v7232, %v7234
        %v7236 = vrot.slane %v7222, %v7235
        %v7237 = vcombine.low %v7172, %v7188
        %v7238 = vcombine.high %v7172, %v7188
        %v7240 = vunpack.c.l.s4 1934713408
        %v7241 = vunpack.c.0.s8 %v7240
        %v7242 = vlaneseq
        %v7243 = vshrl.u32 %v7242, 7
        %v7244 = vsub.s32 %v7241, %v7243
        %v7245 = vrot.slane %v7237, %v7244
        %v7247 = vunpack.c.l.s4 1934713408
        %v7248 = vunpack.c.0.s8 %v7247
        %v7249 = vlaneseq
        %v7250 = vshrl.u32 %v7249, 7
        %v7251 = vsub.s32 %v7248, %v7250
        %v7252 = vrot.slane %v7238, %v7251
        %v7253 = vcombine.low %v7197, %v7229
        %v7254 = vcombine.high %v7197, %v7229
        %v7255 = vcombine.low %v7204, %v7236
        %v7256 = vcombine.high %v7204, %v7236
        %v7257 = vcombine.low %v7213, %v7245
        %v7258 = vcombine.high %v7213, %v7245
        %v7259 = vcombine.low %v7220, %v7252
        %v7260 = vcombine.high %v7220, %v7252
        %v7261 = vcombine.low %v345, %v601
        %v7262 = vcombine.high %v345, %v601
        %v7264 = vunpack.c.l.s4 1983009808
        %v7265 = vunpack.c.0.s8 %v7264
        %v7266 = vlaneseq
        %v7267 = vshrl.u32 %v7266, 7
        %v7268 = vsub.s32 %v7265, %v7267
        %v7269 = vrot.slane %v7261, %v7268
        %v7271 = vunpack.c.l.s4 1983009808
        %v7272 = vunpack.c.0.s8 %v7271
        %v7273 = vlaneseq
        %v7274 = vshrl.u32 %v7273, 7
        %v7275 = vsub.s32 %v7272, %v7274
        %v7276 = vrot.slane %v7262, %v7275
        %v7277 = vcombine.low %v473, %v729
        %v7278 = vcombine.high %v473, %v729
        %v7280 = vunpack.c.l.s4 1983009808
        %v7281 = vunpack.c.0.s8 %v7280
        %v7282 = vlaneseq
        %v7283 = vshrl.u32 %v7282, 7
        %v7284 = vsub.s32 %v7281, %v7283
        %v7285 = vrot.slane %v7277, %v7284
        %v7287 = vunpack.c.l.s4 1983009808
        %v7288 = vunpack.c.0.s8 %v7287
        %v7289 = vlaneseq
        %v7290 = vshrl.u32 %v7289, 7
        %v7291 = vsub.s32 %v7288, %v7290
        %v7292 = vrot.slane %v7278, %v7291
        %v7293 = vcombine.low %v857, %v1113
        %v7294 = vcombine.high %v857, %v1113
        %v7296 = vunpack.c.l.s4 1983009808
        %v7297 = vunpack.c.0.s8 %v7296
        %v7298 = vlaneseq
        %v7299 = vshrl.u32 %v7298, 7
        %v7300 = vsub.s32 %v7297, %v7299
        %v7301 = vrot.slane %v7293, %v7300
        %v7303 = vunpack.c.l.s4 1983009808
        %v7304 = vunpack.c.0.s8 %v7303
        %v7305 = vlaneseq
        %v7306 = vshrl.u32 %v7305, 7
        %v7307 = vsub.s32 %v7304, %v7306
        %v7308 = vrot.slane %v7294, %v7307
        %v7309 = vcombine.low %v985, %v1241
        %v7310 = vcombine.high %v985, %v1241
        %v7312 = vunpack.c.l.s4 1983009808
        %v7313 = vunpack.c.0.s8 %v7312
        %v7314 = vlaneseq
        %v7315 = vshrl.u32 %v7314, 7
        %v7316 = vsub.s32 %v7313, %v7315
        %v7317 = vrot.slane %v7309, %v7316
        %v7319 = vunpack.c.l.s4 1983009808
        %v7320 = vunpack.c.0.s8 %v7319
        %v7321 = vlaneseq
        %v7322 = vshrl.u32 %v7321, 7
        %v7323 = vsub.s32 %v7320, %v7322
        %v7324 = vrot.slane %v7310, %v7323
        %v7325 = vcombine.low %v7269, %v7285
        %v7326 = vcombine.high %v7269, %v7285
        %v7328 = vunpack.c.l.s4 1934713408
        %v7329 = vunpack.c.0.s8 %v7328
        %v7330 = vlaneseq
        %v7331 = vshrl.u32 %v7330, 7
        %v7332 = vsub.s32 %v7329, %v7331
        %v7333 = vrot.slane %v7325, %v7332
        %v7335 = vunpack.c.l.s4 1934713408
        %v7336 = vunpack.c.0.s8 %v7335
        %v7337 = vlaneseq
        %v7338 = vshrl.u32 %v7337, 7
        %v7339 = vsub.s32 %v7336, %v7338
        %v7340 = vrot.slane %v7326, %v7339
        %v7341 = vcombine.low %v7276, %v7292
        %v7342 = vcombine.high %v7276, %v7292
        %v7344 = vunpack.c.l.s4 1934713408
        %v7345 = vunpack.c.0.s8 %v7344
        %v7346 = vlaneseq
        %v7347 = vshrl.u32 %v7346, 7
        %v7348 = vsub.s32 %v7345, %v7347
        %v7349 = vrot.slane %v7341, %v7348
        %v7351 = vunpack.c.l.s4 1934713408
        %v7352 = vunpack.c.0.s8 %v7351
        %v7353 = vlaneseq
        %v7354 = vshrl.u32 %v7353, 7
        %v7355 = vsub.s32 %v7352, %v7354
        %v7356 = vrot.slane %v7342, %v7355
        %v7357 = vcombine.low %v7301, %v7317
        %v7358 = vcombine.high %v7301, %v7317
        %v7360 = vunpack.c.l.s4 1934713408
        %v7361 = vunpack.c.0.s8 %v7360
        %v7362 = vlaneseq
        %v7363 = vshrl.u32 %v7362, 7
        %v7364 = vsub.s32 %v7361, %v7363
        %v7365 = vrot.slane %v7357, %v7364
        %v7367 = vunpack.c.l.s4 1934713408
        %v7368 = vunpack.c.0.s8 %v7367
        %v7369 = vlaneseq
        %v7370 = vshrl.u32 %v7369, 7
        %v7371 = vsub.s32 %v7368, %v7370
        %v7372 = vrot.slane %v7358, %v7371
        %v7373 = vcombine.low %v7308, %v7324
        %v7374 = vcombine.high %v7308, %v7324
        %v7376 = vunpack.c.l.s4 1934713408
        %v7377 = vunpack.c.0.s8 %v7376
        %v7378 = vlaneseq
        %v7379 = vshrl.u32 %v7378, 7
        %v7380 = vsub.s32 %v7377, %v7379
        %v7381 = vrot.slane %v7373, %v7380
        %v7383 = vunpack.c.l.s4 1934713408
        %v7384 = vunpack.c.0.s8 %v7383
        %v7385 = vlaneseq
        %v7386 = vshrl.u32 %v7385, 7
        %v7387 = vsub.s32 %v7384, %v7386
        %v7388 = vrot.slane %v7374, %v7387
        %v7389 = vcombine.low %v7333, %v7365
        %v7390 = vcombine.high %v7333, %v7365
        %v7391 = vcombine.low %v7340, %v7372
        %v7392 = vcombine.high %v7340, %v7372
        %v7393 = vcombine.low %v7349, %v7381
        %v7394 = vcombine.high %v7349, %v7381
        %v7395 = vcombine.low %v7356, %v7388
        %v7396 = vcombine.high %v7356, %v7388
        %v7397 = vcombine.low %v346, %v602
        %v7398 = vcombine.high %v346, %v602
        %v7400 = vunpack.c.l.s4 1983009808
        %v7401 = vunpack.c.0.s8 %v7400
        %v7402 = vlaneseq
        %v7403 = vshrl.u32 %v7402, 7
        %v7404 = vsub.s32 %v7401, %v7403
        %v7405 = vrot.slane %v7397, %v7404
        %v7407 = vunpack.c.l.s4 1983009808
        %v7408 = vunpack.c.0.s8 %v7407
        %v7409 = vlaneseq
        %v7410 = vshrl.u32 %v7409, 7
        %v7411 = vsub.s32 %v7408, %v7410
        %v7412 = vrot.slane %v7398, %v7411
        %v7413 = vcombine.low %v474, %v730
        %v7414 = vcombine.high %v474, %v730
        %v7416 = vunpack.c.l.s4 1983009808
        %v7417 = vunpack.c.0.s8 %v7416
        %v7418 = vlaneseq
        %v7419 = vshrl.u32 %v7418, 7
        %v7420 = vsub.s32 %v7417, %v7419
        %v7421 = vrot.slane %v7413, %v7420
        %v7423 = vunpack.c.l.s4 1983009808
        %v7424 = vunpack.c.0.s8 %v7423
        %v7425 = vlaneseq
        %v7426 = vshrl.u32 %v7425, 7
        %v7427 = vsub.s32 %v7424, %v7426
        %v7428 = vrot.slane %v7414, %v7427
        %v7429 = vcombine.low %v858, %v1114
        %v7430 = vcombine.high %v858, %v1114
        %v7432 = vunpack.c.l.s4 1983009808
        %v7433 = vunpack.c.0.s8 %v7432
        %v7434 = vlaneseq
        %v7435 = vshrl.u32 %v7434, 7
        %v7436 = vsub.s32 %v7433, %v7435
        %v7437 = vrot.slane %v7429, %v7436
        %v7439 = vunpack.c.l.s4 1983009808
        %v7440 = vunpack.c.0.s8 %v7439
        %v7441 = vlaneseq
        %v7442 = vshrl.u32 %v7441, 7
        %v7443 = vsub.s32 %v7440, %v7442
        %v7444 = vrot.slane %v7430, %v7443
        %v7445 = vcombine.low %v986, %v1242
        %v7446 = vcombine.high %v986, %v1242
        %v7448 = vunpack.c.l.s4 1983009808
        %v7449 = vunpack.c.0.s8 %v7448
        %v7450 = vlaneseq
        %v7451 = vshrl.u32 %v7450, 7
        %v7452 = vsub.s32 %v7449, %v7451
        %v7453 = vrot.slane %v7445, %v7452
        %v7455 = vunpack.c.l.s4 1983009808
        %v7456 = vunpack.c.0.s8 %v7455
        %v7457 = vlaneseq
        %v7458 = vshrl.u32 %v7457, 7
        %v7459 = vsub.s32 %v7456, %v7458
        %v7460 = vrot.slane %v7446, %v7459
        %v7461 = vcombine.low %v7405, %v7421
        %v7462 = vcombine.high %v7405, %v7421
        %v7464 = vunpack.c.l.s4 1934713408
        %v7465 = vunpack.c.0.s8 %v7464
        %v7466 = vlaneseq
        %v7467 = vshrl.u32 %v7466, 7
        %v7468 = vsub.s32 %v7465, %v7467
        %v7469 = vrot.slane %v7461, %v7468
        %v7471 = vunpack.c.l.s4 1934713408
        %v7472 = vunpack.c.0.s8 %v7471
        %v7473 = vlaneseq
        %v7474 = vshrl.u32 %v7473, 7
        %v7475 = vsub.s32 %v7472, %v7474
        %v7476 = vrot.slane %v7462, %v7475
        %v7477 = vcombine.low %v7412, %v7428
        %v7478 = vcombine.high %v7412, %v7428
        %v7480 = vunpack.c.l.s4 1934713408
        %v7481 = vunpack.c.0.s8 %v7480
        %v7482 = vlaneseq
        %v7483 = vshrl.u32 %v7482, 7
        %v7484 = vsub.s32 %v7481, %v7483
        %v7485 = vrot.slane %v7477, %v7484
        %v7487 = vunpack.c.l.s4 1934713408
        %v7488 = vunpack.c.0.s8 %v7487
        %v7489 = vlaneseq
        %v7490 = vshrl.u32 %v7489, 7
        %v7491 = vsub.s32 %v7488, %v7490
        %v7492 = vrot.slane %v7478, %v7491
        %v7493 = vcombine.low %v7437, %v7453
        %v7494 = vcombine.high %v7437, %v7453
        %v7496 = vunpack.c.l.s4 1934713408
        %v7497 = vunpack.c.0.s8 %v7496
        %v7498 = vlaneseq
        %v7499 = vshrl.u32 %v7498, 7
        %v7500 = vsub.s32 %v7497, %v7499
        %v7501 = vrot.slane %v7493, %v7500
        %v7503 = vunpack.c.l.s4 1934713408
        %v7504 = vunpack.c.0.s8 %v7503
        %v7505 = vlaneseq
        %v7506 = vshrl.u32 %v7505, 7
        %v7507 = vsub.s32 %v7504, %v7506
        %v7508 = vrot.slane %v7494, %v7507
        %v7509 = vcombine.low %v7444, %v7460
        %v7510 = vcombine.high %v7444, %v7460
        %v7512 = vunpack.c.l.s4 1934713408
        %v7513 = vunpack.c.0.s8 %v7512
        %v7514 = vlaneseq
        %v7515 = vshrl.u32 %v7514, 7
        %v7516 = vsub.s32 %v7513, %v7515
        %v7517 = vrot.slane %v7509, %v7516
        %v7519 = vunpack.c.l.s4 1934713408
        %v7520 = vunpack.c.0.s8 %v7519
        %v7521 = vlaneseq
        %v7522 = vshrl.u32 %v7521, 7
        %v7523 = vsub.s32 %v7520, %v7522
        %v7524 = vrot.slane %v7510, %v7523
        %v7525 = vcombine.low %v7469, %v7501
        %v7526 = vcombine.high %v7469, %v7501
        %v7527 = vcombine.low %v7476, %v7508
        %v7528 = vcombine.high %v7476, %v7508
        %v7529 = vcombine.low %v7485, %v7517
        %v7530 = vcombine.high %v7485, %v7517
        %v7531 = vcombine.low %v7492, %v7524
        %v7532 = vcombine.high %v7492, %v7524
        %v7533 = vcombine.low %v347, %v603
        %v7534 = vcombine.high %v347, %v603
        %v7536 = vunpack.c.l.s4 1983009808
        %v7537 = vunpack.c.0.s8 %v7536
        %v7538 = vlaneseq
        %v7539 = vshrl.u32 %v7538, 7
        %v7540 = vsub.s32 %v7537, %v7539
        %v7541 = vrot.slane %v7533, %v7540
        %v7543 = vunpack.c.l.s4 1983009808
        %v7544 = vunpack.c.0.s8 %v7543
        %v7545 = vlaneseq
        %v7546 = vshrl.u32 %v7545, 7
        %v7547 = vsub.s32 %v7544, %v7546
        %v7548 = vrot.slane %v7534, %v7547
        %v7549 = vcombine.low %v475, %v731
        %v7550 = vcombine.high %v475, %v731
        %v7552 = vunpack.c.l.s4 1983009808
        %v7553 = vunpack.c.0.s8 %v7552
        %v7554 = vlaneseq
        %v7555 = vshrl.u32 %v7554, 7
        %v7556 = vsub.s32 %v7553, %v7555
        %v7557 = vrot.slane %v7549, %v7556
        %v7559 = vunpack.c.l.s4 1983009808
        %v7560 = vunpack.c.0.s8 %v7559
        %v7561 = vlaneseq
        %v7562 = vshrl.u32 %v7561, 7
        %v7563 = vsub.s32 %v7560, %v7562
        %v7564 = vrot.slane %v7550, %v7563
        %v7565 = vcombine.low %v859, %v1115
        %v7566 = vcombine.high %v859, %v1115
        %v7568 = vunpack.c.l.s4 1983009808
        %v7569 = vunpack.c.0.s8 %v7568
        %v7570 = vlaneseq
        %v7571 = vshrl.u32 %v7570, 7
        %v7572 = vsub.s32 %v7569, %v7571
        %v7573 = vrot.slane %v7565, %v7572
        %v7575 = vunpack.c.l.s4 1983009808
        %v7576 = vunpack.c.0.s8 %v7575
        %v7577 = vlaneseq
        %v7578 = vshrl.u32 %v7577, 7
        %v7579 = vsub.s32 %v7576, %v7578
        %v7580 = vrot.slane %v7566, %v7579
        %v7581 = vcombine.low %v987, %v1243
        %v7582 = vcombine.high %v987, %v1243
        %v7584 = vunpack.c.l.s4 1983009808
        %v7585 = vunpack.c.0.s8 %v7584
        %v7586 = vlaneseq
        %v7587 = vshrl.u32 %v7586, 7
        %v7588 = vsub.s32 %v7585, %v7587
        %v7589 = vrot.slane %v7581, %v7588
        %v7591 = vunpack.c.l.s4 1983009808
        %v7592 = vunpack.c.0.s8 %v7591
        %v7593 = vlaneseq
        %v7594 = vshrl.u32 %v7593, 7
        %v7595 = vsub.s32 %v7592, %v7594
        %v7596 = vrot.slane %v7582, %v7595
        %v7597 = vcombine.low %v7541, %v7557
        %v7598 = vcombine.high %v7541, %v7557
        %v7600 = vunpack.c.l.s4 1934713408
        %v7601 = vunpack.c.0.s8 %v7600
        %v7602 = vlaneseq
        %v7603 = vshrl.u32 %v7602, 7
        %v7604 = vsub.s32 %v7601, %v7603
        %v7605 = vrot.slane %v7597, %v7604
        %v7607 = vunpack.c.l.s4 1934713408
        %v7608 = vunpack.c.0.s8 %v7607
        %v7609 = vlaneseq
        %v7610 = vshrl.u32 %v7609, 7
        %v7611 = vsub.s32 %v7608, %v7610
        %v7612 = vrot.slane %v7598, %v7611
        %v7613 = vcombine.low %v7548, %v7564
        %v7614 = vcombine.high %v7548, %v7564
        %v7616 = vunpack.c.l.s4 1934713408
        %v7617 = vunpack.c.0.s8 %v7616
        %v7618 = vlaneseq
        %v7619 = vshrl.u32 %v7618, 7
        %v7620 = vsub.s32 %v7617, %v7619
        %v7621 = vrot.slane %v7613, %v7620
        %v7623 = vunpack.c.l.s4 1934713408
        %v7624 = vunpack.c.0.s8 %v7623
        %v7625 = vlaneseq
        %v7626 = vshrl.u32 %v7625, 7
        %v7627 = vsub.s32 %v7624, %v7626
        %v7628 = vrot.slane %v7614, %v7627
        %v7629 = vcombine.low %v7573, %v7589
        %v7630 = vcombine.high %v7573, %v7589
        %v7632 = vunpack.c.l.s4 1934713408
        %v7633 = vunpack.c.0.s8 %v7632
        %v7634 = vlaneseq
        %v7635 = vshrl.u32 %v7634, 7
        %v7636 = vsub.s32 %v7633, %v7635
        %v7637 = vrot.slane %v7629, %v7636
        %v7639 = vunpack.c.l.s4 1934713408
        %v7640 = vunpack.c.0.s8 %v7639
        %v7641 = vlaneseq
        %v7642 = vshrl.u32 %v7641, 7
        %v7643 = vsub.s32 %v7640, %v7642
        %v7644 = vrot.slane %v7630, %v7643
        %v7645 = vcombine.low %v7580, %v7596
        %v7646 = vcombine.high %v7580, %v7596
        %v7648 = vunpack.c.l.s4 1934713408
        %v7649 = vunpack.c.0.s8 %v7648
        %v7650 = vlaneseq
        %v7651 = vshrl.u32 %v7650, 7
        %v7652 = vsub.s32 %v7649, %v7651
        %v7653 = vrot.slane %v7645, %v7652
        %v7655 = vunpack.c.l.s4 1934713408
        %v7656 = vunpack.c.0.s8 %v7655
        %v7657 = vlaneseq
        %v7658 = vshrl.u32 %v7657, 7
        %v7659 = vsub.s32 %v7656, %v7658
        %v7660 = vrot.slane %v7646, %v7659
        %v7661 = vcombine.low %v7605, %v7637
        %v7662 = vcombine.high %v7605, %v7637
        %v7663 = vcombine.low %v7612, %v7644
        %v7664 = vcombine.high %v7612, %v7644
        %v7665 = vcombine.low %v7621, %v7653
        %v7666 = vcombine.high %v7621, %v7653
        %v7667 = vcombine.low %v7628, %v7660
        %v7668 = vcombine.high %v7628, %v7660
        %v7669 = vcombine.low %v348, %v604
        %v7670 = vcombine.high %v348, %v604
        %v7672 = vunpack.c.l.s4 1983009808
        %v7673 = vunpack.c.0.s8 %v7672
        %v7674 = vlaneseq
        %v7675 = vshrl.u32 %v7674, 7
        %v7676 = vsub.s32 %v7673, %v7675
        %v7677 = vrot.slane %v7669, %v7676
        %v7679 = vunpack.c.l.s4 1983009808
        %v7680 = vunpack.c.0.s8 %v7679
        %v7681 = vlaneseq
        %v7682 = vshrl.u32 %v7681, 7
        %v7683 = vsub.s32 %v7680, %v7682
        %v7684 = vrot.slane %v7670, %v7683
        %v7685 = vcombine.low %v476, %v732
        %v7686 = vcombine.high %v476, %v732
        %v7688 = vunpack.c.l.s4 1983009808
        %v7689 = vunpack.c.0.s8 %v7688
        %v7690 = vlaneseq
        %v7691 = vshrl.u32 %v7690, 7
        %v7692 = vsub.s32 %v7689, %v7691
        %v7693 = vrot.slane %v7685, %v7692
        %v7695 = vunpack.c.l.s4 1983009808
        %v7696 = vunpack.c.0.s8 %v7695
        %v7697 = vlaneseq
        %v7698 = vshrl.u32 %v7697, 7
        %v7699 = vsub.s32 %v7696, %v7698
        %v7700 = vrot.slane %v7686, %v7699
        %v7701 = vcombine.low %v860, %v1116
        %v7702 = vcombine.high %v860, %v1116
        %v7704 = vunpack.c.l.s4 1983009808
        %v7705 = vunpack.c.0.s8 %v7704
        %v7706 = vlaneseq
        %v7707 = vshrl.u32 %v7706, 7
        %v7708 = vsub.s32 %v7705, %v7707
        %v7709 = vrot.slane %v7701, %v7708
        %v7711 = vunpack.c.l.s4 1983009808
        %v7712 = vunpack.c.0.s8 %v7711
        %v7713 = vlaneseq
        %v7714 = vshrl.u32 %v7713, 7
        %v7715 = vsub.s32 %v7712, %v7714
        %v7716 = vrot.slane %v7702, %v7715
        %v7717 = vcombine.low %v988, %v1244
        %v7718 = vcombine.high %v988, %v1244
        %v7720 = vunpack.c.l.s4 1983009808
        %v7721 = vunpack.c.0.s8 %v7720
        %v7722 = vlaneseq
        %v7723 = vshrl.u32 %v7722, 7
        %v7724 = vsub.s32 %v7721, %v7723
        %v7725 = vrot.slane %v7717, %v7724
        %v7727 = vunpack.c.l.s4 1983009808
        %v7728 = vunpack.c.0.s8 %v7727
        %v7729 = vlaneseq
        %v7730 = vshrl.u32 %v7729, 7
        %v7731 = vsub.s32 %v7728, %v7730
        %v7732 = vrot.slane %v7718, %v7731
        %v7733 = vcombine.low %v7677, %v7693
        %v7734 = vcombine.high %v7677, %v7693
        %v7736 = vunpack.c.l.s4 1934713408
        %v7737 = vunpack.c.0.s8 %v7736
        %v7738 = vlaneseq
        %v7739 = vshrl.u32 %v7738, 7
        %v7740 = vsub.s32 %v7737, %v7739
        %v7741 = vrot.slane %v7733, %v7740
        %v7743 = vunpack.c.l.s4 1934713408
        %v7744 = vunpack.c.0.s8 %v7743
        %v7745 = vlaneseq
        %v7746 = vshrl.u32 %v7745, 7
        %v7747 = vsub.s32 %v7744, %v7746
        %v7748 = vrot.slane %v7734, %v7747
        %v7749 = vcombine.low %v7684, %v7700
        %v7750 = vcombine.high %v7684, %v7700
        %v7752 = vunpack.c.l.s4 1934713408
        %v7753 = vunpack.c.0.s8 %v7752
        %v7754 = vlaneseq
        %v7755 = vshrl.u32 %v7754, 7
        %v7756 = vsub.s32 %v7753, %v7755
        %v7757 = vrot.slane %v7749, %v7756
        %v7759 = vunpack.c.l.s4 1934713408
        %v7760 = vunpack.c.0.s8 %v7759
        %v7761 = vlaneseq
        %v7762 = vshrl.u32 %v7761, 7
        %v7763 = vsub.s32 %v7760, %v7762
        %v7764 = vrot.slane %v7750, %v7763
        %v7765 = vcombine.low %v7709, %v7725
        %v7766 = vcombine.high %v7709, %v7725
        %v7768 = vunpack.c.l.s4 1934713408
        %v7769 = vunpack.c.0.s8 %v7768
        %v7770 = vlaneseq
        %v7771 = vshrl.u32 %v7770, 7
        %v7772 = vsub.s32 %v7769, %v7771
        %v7773 = vrot.slane %v7765, %v7772
        %v7775 = vunpack.c.l.s4 1934713408
        %v7776 = vunpack.c.0.s8 %v7775
        %v7777 = vlaneseq
        %v7778 = vshrl.u32 %v7777, 7
        %v7779 = vsub.s32 %v7776, %v7778
        %v7780 = vrot.slane %v7766, %v7779
        %v7781 = vcombine.low %v7716, %v7732
        %v7782 = vcombine.high %v7716, %v7732
        %v7784 = vunpack.c.l.s4 1934713408
        %v7785 = vunpack.c.0.s8 %v7784
        %v7786 = vlaneseq
        %v7787 = vshrl.u32 %v7786, 7
        %v7788 = vsub.s32 %v7785, %v7787
        %v7789 = vrot.slane %v7781, %v7788
        %v7791 = vunpack.c.l.s4 1934713408
        %v7792 = vunpack.c.0.s8 %v7791
        %v7793 = vlaneseq
        %v7794 = vshrl.u32 %v7793, 7
        %v7795 = vsub.s32 %v7792, %v7794
        %v7796 = vrot.slane %v7782, %v7795
        %v7797 = vcombine.low %v7741, %v7773
        %v7798 = vcombine.high %v7741, %v7773
        %v7799 = vcombine.low %v7748, %v7780
        %v7800 = vcombine.high %v7748, %v7780
        %v7801 = vcombine.low %v7757, %v7789
        %v7802 = vcombine.high %v7757, %v7789
        %v7803 = vcombine.low %v7764, %v7796
        %v7804 = vcombine.high %v7764, %v7796
        %v7805 = vcombine.low %v365, %v621
        %v7806 = vcombine.high %v365, %v621
        %v7808 = vunpack.c.l.s4 1983009808
        %v7809 = vunpack.c.0.s8 %v7808
        %v7810 = vlaneseq
        %v7811 = vshrl.u32 %v7810, 7
        %v7812 = vsub.s32 %v7809, %v7811
        %v7813 = vrot.slane %v7805, %v7812
        %v7815 = vunpack.c.l.s4 1983009808
        %v7816 = vunpack.c.0.s8 %v7815
        %v7817 = vlaneseq
        %v7818 = vshrl.u32 %v7817, 7
        %v7819 = vsub.s32 %v7816, %v7818
        %v7820 = vrot.slane %v7806, %v7819
        %v7821 = vcombine.low %v493, %v749
        %v7822 = vcombine.high %v493, %v749
        %v7824 = vunpack.c.l.s4 1983009808
        %v7825 = vunpack.c.0.s8 %v7824
        %v7826 = vlaneseq
        %v7827 = vshrl.u32 %v7826, 7
        %v7828 = vsub.s32 %v7825, %v7827
        %v7829 = vrot.slane %v7821, %v7828
        %v7831 = vunpack.c.l.s4 1983009808
        %v7832 = vunpack.c.0.s8 %v7831
        %v7833 = vlaneseq
        %v7834 = vshrl.u32 %v7833, 7
        %v7835 = vsub.s32 %v7832, %v7834
        %v7836 = vrot.slane %v7822, %v7835
        %v7837 = vcombine.low %v877, %v1133
        %v7838 = vcombine.high %v877, %v1133
        %v7840 = vunpack.c.l.s4 1983009808
        %v7841 = vunpack.c.0.s8 %v7840
        %v7842 = vlaneseq
        %v7843 = vshrl.u32 %v7842, 7
        %v7844 = vsub.s32 %v7841, %v7843
        %v7845 = vrot.slane %v7837, %v7844
        %v7847 = vunpack.c.l.s4 1983009808
        %v7848 = vunpack.c.0.s8 %v7847
        %v7849 = vlaneseq
        %v7850 = vshrl.u32 %v7849, 7
        %v7851 = vsub.s32 %v7848, %v7850
        %v7852 = vrot.slane %v7838, %v7851
        %v7853 = vcombine.low %v1005, %v1261
        %v7854 = vcombine.high %v1005, %v1261
        %v7856 = vunpack.c.l.s4 1983009808
        %v7857 = vunpack.c.0.s8 %v7856
        %v7858 = vlaneseq
        %v7859 = vshrl.u32 %v7858, 7
        %v7860 = vsub.s32 %v7857, %v7859
        %v7861 = vrot.slane %v7853, %v7860
        %v7863 = vunpack.c.l.s4 1983009808
        %v7864 = vunpack.c.0.s8 %v7863
        %v7865 = vlaneseq
        %v7866 = vshrl.u32 %v7865, 7
        %v7867 = vsub.s32 %v7864, %v7866
        %v7868 = vrot.slane %v7854, %v7867
        %v7869 = vcombine.low %v7813, %v7829
        %v7870 = vcombine.high %v7813, %v7829
        %v7872 = vunpack.c.l.s4 1934713408
        %v7873 = vunpack.c.0.s8 %v7872
        %v7874 = vlaneseq
        %v7875 = vshrl.u32 %v7874, 7
        %v7876 = vsub.s32 %v7873, %v7875
        %v7877 = vrot.slane %v7869, %v7876
        %v7879 = vunpack.c.l.s4 1934713408
        %v7880 = vunpack.c.0.s8 %v7879
        %v7881 = vlaneseq
        %v7882 = vshrl.u32 %v7881, 7
        %v7883 = vsub.s32 %v7880, %v7882
        %v7884 = vrot.slane %v7870, %v7883
        %v7885 = vcombine.low %v7820, %v7836
        %v7886 = vcombine.high %v7820, %v7836
        %v7888 = vunpack.c.l.s4 1934713408
        %v7889 = vunpack.c.0.s8 %v7888
        %v7890 = vlaneseq
        %v7891 = vshrl.u32 %v7890, 7
        %v7892 = vsub.s32 %v7889, %v7891
        %v7893 = vrot.slane %v7885, %v7892
        %v7895 = vunpack.c.l.s4 1934713408
        %v7896 = vunpack.c.0.s8 %v7895
        %v7897 = vlaneseq
        %v7898 = vshrl.u32 %v7897, 7
        %v7899 = vsub.s32 %v7896, %v7898
        %v7900 = vrot.slane %v7886, %v7899
        %v7901 = vcombine.low %v7845, %v7861
        %v7902 = vcombine.high %v7845, %v7861
        %v7904 = vunpack.c.l.s4 1934713408
        %v7905 = vunpack.c.0.s8 %v7904
        %v7906 = vlaneseq
        %v7907 = vshrl.u32 %v7906, 7
        %v7908 = vsub.s32 %v7905, %v7907
        %v7909 = vrot.slane %v7901, %v7908
        %v7911 = vunpack.c.l.s4 1934713408
        %v7912 = vunpack.c.0.s8 %v7911
        %v7913 = vlaneseq
        %v7914 = vshrl.u32 %v7913, 7
        %v7915 = vsub.s32 %v7912, %v7914
        %v7916 = vrot.slane %v7902, %v7915
        %v7917 = vcombine.low %v7852, %v7868
        %v7918 = vcombine.high %v7852, %v7868
        %v7920 = vunpack.c.l.s4 1934713408
        %v7921 = vunpack.c.0.s8 %v7920
        %v7922 = vlaneseq
        %v7923 = vshrl.u32 %v7922, 7
        %v7924 = vsub.s32 %v7921, %v7923
        %v7925 = vrot.slane %v7917, %v7924
        %v7927 = vunpack.c.l.s4 1934713408
        %v7928 = vunpack.c.0.s8 %v7927
        %v7929 = vlaneseq
        %v7930 = vshrl.u32 %v7929, 7
        %v7931 = vsub.s32 %v7928, %v7930
        %v7932 = vrot.slane %v7918, %v7931
        %v7933 = vcombine.low %v7877, %v7909
        %v7934 = vcombine.high %v7877, %v7909
        %v7935 = vcombine.low %v7884, %v7916
        %v7936 = vcombine.high %v7884, %v7916
        %v7937 = vcombine.low %v7893, %v7925
        %v7938 = vcombine.high %v7893, %v7925
        %v7939 = vcombine.low %v7900, %v7932
        %v7940 = vcombine.high %v7900, %v7932
        %v7941 = vcombine.low %v366, %v622
        %v7942 = vcombine.high %v366, %v622
        %v7944 = vunpack.c.l.s4 1983009808
        %v7945 = vunpack.c.0.s8 %v7944
        %v7946 = vlaneseq
        %v7947 = vshrl.u32 %v7946, 7
        %v7948 = vsub.s32 %v7945, %v7947
        %v7949 = vrot.slane %v7941, %v7948
        %v7951 = vunpack.c.l.s4 1983009808
        %v7952 = vunpack.c.0.s8 %v7951
        %v7953 = vlaneseq
        %v7954 = vshrl.u32 %v7953, 7
        %v7955 = vsub.s32 %v7952, %v7954
        %v7956 = vrot.slane %v7942, %v7955
        %v7957 = vcombine.low %v494, %v750
        %v7958 = vcombine.high %v494, %v750
        %v7960 = vunpack.c.l.s4 1983009808
        %v7961 = vunpack.c.0.s8 %v7960
        %v7962 = vlaneseq
        %v7963 = vshrl.u32 %v7962, 7
        %v7964 = vsub.s32 %v7961, %v7963
        %v7965 = vrot.slane %v7957, %v7964
        %v7967 = vunpack.c.l.s4 1983009808
        %v7968 = vunpack.c.0.s8 %v7967
        %v7969 = vlaneseq
        %v7970 = vshrl.u32 %v7969, 7
        %v7971 = vsub.s32 %v7968, %v7970
        %v7972 = vrot.slane %v7958, %v7971
        %v7973 = vcombine.low %v878, %v1134
        %v7974 = vcombine.high %v878, %v1134
        %v7976 = vunpack.c.l.s4 1983009808
        %v7977 = vunpack.c.0.s8 %v7976
        %v7978 = vlaneseq
        %v7979 = vshrl.u32 %v7978, 7
        %v7980 = vsub.s32 %v7977, %v7979
        %v7981 = vrot.slane %v7973, %v7980
        %v7983 = vunpack.c.l.s4 1983009808
        %v7984 = vunpack.c.0.s8 %v7983
        %v7985 = vlaneseq
        %v7986 = vshrl.u32 %v7985, 7
        %v7987 = vsub.s32 %v7984, %v7986
        %v7988 = vrot.slane %v7974, %v7987
        %v7989 = vcombine.low %v1006, %v1262
        %v7990 = vcombine.high %v1006, %v1262
        %v7992 = vunpack.c.l.s4 1983009808
        %v7993 = vunpack.c.0.s8 %v7992
        %v7994 = vlaneseq
        %v7995 = vshrl.u32 %v7994, 7
        %v7996 = vsub.s32 %v7993, %v7995
        %v7997 = vrot.slane %v7989, %v7996
        %v7999 = vunpack.c.l.s4 1983009808
        %v8000 = vunpack.c.0.s8 %v7999
        %v8001 = vlaneseq
        %v8002 = vshrl.u32 %v8001, 7
        %v8003 = vsub.s32 %v8000, %v8002
        %v8004 = vrot.slane %v7990, %v8003
        %v8005 = vcombine.low %v7949, %v7965
        %v8006 = vcombine.high %v7949, %v7965
        %v8008 = vunpack.c.l.s4 1934713408
        %v8009 = vunpack.c.0.s8 %v8008
        %v8010 = vlaneseq
        %v8011 = vshrl.u32 %v8010, 7
        %v8012 = vsub.s32 %v8009, %v8011
        %v8013 = vrot.slane %v8005, %v8012
        %v8015 = vunpack.c.l.s4 1934713408
        %v8016 = vunpack.c.0.s8 %v8015
        %v8017 = vlaneseq
        %v8018 = vshrl.u32 %v8017, 7
        %v8019 = vsub.s32 %v8016, %v8018
        %v8020 = vrot.slane %v8006, %v8019
        %v8021 = vcombine.low %v7956, %v7972
        %v8022 = vcombine.high %v7956, %v7972
        %v8024 = vunpack.c.l.s4 1934713408
        %v8025 = vunpack.c.0.s8 %v8024
        %v8026 = vlaneseq
        %v8027 = vshrl.u32 %v8026, 7
        %v8028 = vsub.s32 %v8025, %v8027
        %v8029 = vrot.slane %v8021, %v8028
        %v8031 = vunpack.c.l.s4 1934713408
        %v8032 = vunpack.c.0.s8 %v8031
        %v8033 = vlaneseq
        %v8034 = vshrl.u32 %v8033, 7
        %v8035 = vsub.s32 %v8032, %v8034
        %v8036 = vrot.slane %v8022, %v8035
        %v8037 = vcombine.low %v7981, %v7997
        %v8038 = vcombine.high %v7981, %v7997
        %v8040 = vunpack.c.l.s4 1934713408
        %v8041 = vunpack.c.0.s8 %v8040
        %v8042 = vlaneseq
        %v8043 = vshrl.u32 %v8042, 7
        %v8044 = vsub.s32 %v8041, %v8043
        %v8045 = vrot.slane %v8037, %v8044
        %v8047 = vunpack.c.l.s4 1934713408
        %v8048 = vunpack.c.0.s8 %v8047
        %v8049 = vlaneseq
        %v8050 = vshrl.u32 %v8049, 7
        %v8051 = vsub.s32 %v8048, %v8050
        %v8052 = vrot.slane %v8038, %v8051
        %v8053 = vcombine.low %v7988, %v8004
        %v8054 = vcombine.high %v7988, %v8004
        %v8056 = vunpack.c.l.s4 1934713408
        %v8057 = vunpack.c.0.s8 %v8056
        %v8058 = vlaneseq
        %v8059 = vshrl.u32 %v8058, 7
        %v8060 = vsub.s32 %v8057, %v8059
        %v8061 = vrot.slane %v8053, %v8060
        %v8063 = vunpack.c.l.s4 1934713408
        %v8064 = vunpack.c.0.s8 %v8063
        %v8065 = vlaneseq
        %v8066 = vshrl.u32 %v8065, 7
        %v8067 = vsub.s32 %v8064, %v8066
        %v8068 = vrot.slane %v8054, %v8067
        %v8069 = vcombine.low %v8013, %v8045
        %v8070 = vcombine.high %v8013, %v8045
        %v8071 = vcombine.low %v8020, %v8052
        %v8072 = vcombine.high %v8020, %v8052
        %v8073 = vcombine.low %v8029, %v8061
        %v8074 = vcombine.high %v8029, %v8061
        %v8075 = vcombine.low %v8036, %v8068
        %v8076 = vcombine.high %v8036, %v8068
        %v8077 = vcombine.low %v367, %v623
        %v8078 = vcombine.high %v367, %v623
        %v8080 = vunpack.c.l.s4 1983009808
        %v8081 = vunpack.c.0.s8 %v8080
        %v8082 = vlaneseq
        %v8083 = vshrl.u32 %v8082, 7
        %v8084 = vsub.s32 %v8081, %v8083
        %v8085 = vrot.slane %v8077, %v8084
        %v8087 = vunpack.c.l.s4 1983009808
        %v8088 = vunpack.c.0.s8 %v8087
        %v8089 = vlaneseq
        %v8090 = vshrl.u32 %v8089, 7
        %v8091 = vsub.s32 %v8088, %v8090
        %v8092 = vrot.slane %v8078, %v8091
        %v8093 = vcombine.low %v495, %v751
        %v8094 = vcombine.high %v495, %v751
        %v8096 = vunpack.c.l.s4 1983009808
        %v8097 = vunpack.c.0.s8 %v8096
        %v8098 = vlaneseq
        %v8099 = vshrl.u32 %v8098, 7
        %v8100 = vsub.s32 %v8097, %v8099
        %v8101 = vrot.slane %v8093, %v8100
        %v8103 = vunpack.c.l.s4 1983009808
        %v8104 = vunpack.c.0.s8 %v8103
        %v8105 = vlaneseq
        %v8106 = vshrl.u32 %v8105, 7
        %v8107 = vsub.s32 %v8104, %v8106
        %v8108 = vrot.slane %v8094, %v8107
        %v8109 = vcombine.low %v879, %v1135
        %v8110 = vcombine.high %v879, %v1135
        %v8112 = vunpack.c.l.s4 1983009808
        %v8113 = vunpack.c.0.s8 %v8112
        %v8114 = vlaneseq
        %v8115 = vshrl.u32 %v8114, 7
        %v8116 = vsub.s32 %v8113, %v8115
        %v8117 = vrot.slane %v8109, %v8116
        %v8119 = vunpack.c.l.s4 1983009808
        %v8120 = vunpack.c.0.s8 %v8119
        %v8121 = vlaneseq
        %v8122 = vshrl.u32 %v8121, 7
        %v8123 = vsub.s32 %v8120, %v8122
        %v8124 = vrot.slane %v8110, %v8123
        %v8125 = vcombine.low %v1007, %v1263
        %v8126 = vcombine.high %v1007, %v1263
        %v8128 = vunpack.c.l.s4 1983009808
        %v8129 = vunpack.c.0.s8 %v8128
        %v8130 = vlaneseq
        %v8131 = vshrl.u32 %v8130, 7
        %v8132 = vsub.s32 %v8129, %v8131
        %v8133 = vrot.slane %v8125, %v8132
        %v8135 = vunpack.c.l.s4 1983009808
        %v8136 = vunpack.c.0.s8 %v8135
        %v8137 = vlaneseq
        %v8138 = vshrl.u32 %v8137, 7
        %v8139 = vsub.s32 %v8136, %v8138
        %v8140 = vrot.slane %v8126, %v8139
        %v8141 = vcombine.low %v8085, %v8101
        %v8142 = vcombine.high %v8085, %v8101
        %v8144 = vunpack.c.l.s4 1934713408
        %v8145 = vunpack.c.0.s8 %v8144
        %v8146 = vlaneseq
        %v8147 = vshrl.u32 %v8146, 7
        %v8148 = vsub.s32 %v8145, %v8147
        %v8149 = vrot.slane %v8141, %v8148
        %v8151 = vunpack.c.l.s4 1934713408
        %v8152 = vunpack.c.0.s8 %v8151
        %v8153 = vlaneseq
        %v8154 = vshrl.u32 %v8153, 7
        %v8155 = vsub.s32 %v8152, %v8154
        %v8156 = vrot.slane %v8142, %v8155
        %v8157 = vcombine.low %v8092, %v8108
        %v8158 = vcombine.high %v8092, %v8108
        %v8160 = vunpack.c.l.s4 1934713408
        %v8161 = vunpack.c.0.s8 %v8160
        %v8162 = vlaneseq
        %v8163 = vshrl.u32 %v8162, 7
        %v8164 = vsub.s32 %v8161, %v8163
        %v8165 = vrot.slane %v8157, %v8164
        %v8167 = vunpack.c.l.s4 1934713408
        %v8168 = vunpack.c.0.s8 %v8167
        %v8169 = vlaneseq
        %v8170 = vshrl.u32 %v8169, 7
        %v8171 = vsub.s32 %v8168, %v8170
        %v8172 = vrot.slane %v8158, %v8171
        %v8173 = vcombine.low %v8117, %v8133
        %v8174 = vcombine.high %v8117, %v8133
        %v8176 = vunpack.c.l.s4 1934713408
        %v8177 = vunpack.c.0.s8 %v8176
        %v8178 = vlaneseq
        %v8179 = vshrl.u32 %v8178, 7
        %v8180 = vsub.s32 %v8177, %v8179
        %v8181 = vrot.slane %v8173, %v8180
        %v8183 = vunpack.c.l.s4 1934713408
        %v8184 = vunpack.c.0.s8 %v8183
        %v8185 = vlaneseq
        %v8186 = vshrl.u32 %v8185, 7
        %v8187 = vsub.s32 %v8184, %v8186
        %v8188 = vrot.slane %v8174, %v8187
        %v8189 = vcombine.low %v8124, %v8140
        %v8190 = vcombine.high %v8124, %v8140
        %v8192 = vunpack.c.l.s4 1934713408
        %v8193 = vunpack.c.0.s8 %v8192
        %v8194 = vlaneseq
        %v8195 = vshrl.u32 %v8194, 7
        %v8196 = vsub.s32 %v8193, %v8195
        %v8197 = vrot.slane %v8189, %v8196
        %v8199 = vunpack.c.l.s4 1934713408
        %v8200 = vunpack.c.0.s8 %v8199
        %v8201 = vlaneseq
        %v8202 = vshrl.u32 %v8201, 7
        %v8203 = vsub.s32 %v8200, %v8202
        %v8204 = vrot.slane %v8190, %v8203
        %v8205 = vcombine.low %v8149, %v8181
        %v8206 = vcombine.high %v8149, %v8181
        %v8207 = vcombine.low %v8156, %v8188
        %v8208 = vcombine.high %v8156, %v8188
        %v8209 = vcombine.low %v8165, %v8197
        %v8210 = vcombine.high %v8165, %v8197
        %v8211 = vcombine.low %v8172, %v8204
        %v8212 = vcombine.high %v8172, %v8204
        %v8213 = vcombine.low %v368, %v624
        %v8214 = vcombine.high %v368, %v624
        %v8216 = vunpack.c.l.s4 1983009808
        %v8217 = vunpack.c.0.s8 %v8216
        %v8218 = vlaneseq
        %v8219 = vshrl.u32 %v8218, 7
        %v8220 = vsub.s32 %v8217, %v8219
        %v8221 = vrot.slane %v8213, %v8220
        %v8223 = vunpack.c.l.s4 1983009808
        %v8224 = vunpack.c.0.s8 %v8223
        %v8225 = vlaneseq
        %v8226 = vshrl.u32 %v8225, 7
        %v8227 = vsub.s32 %v8224, %v8226
        %v8228 = vrot.slane %v8214, %v8227
        %v8229 = vcombine.low %v496, %v752
        %v8230 = vcombine.high %v496, %v752
        %v8232 = vunpack.c.l.s4 1983009808
        %v8233 = vunpack.c.0.s8 %v8232
        %v8234 = vlaneseq
        %v8235 = vshrl.u32 %v8234, 7
        %v8236 = vsub.s32 %v8233, %v8235
        %v8237 = vrot.slane %v8229, %v8236
        %v8239 = vunpack.c.l.s4 1983009808
        %v8240 = vunpack.c.0.s8 %v8239
        %v8241 = vlaneseq
        %v8242 = vshrl.u32 %v8241, 7
        %v8243 = vsub.s32 %v8240, %v8242
        %v8244 = vrot.slane %v8230, %v8243
        %v8245 = vcombine.low %v880, %v1136
        %v8246 = vcombine.high %v880, %v1136
        %v8248 = vunpack.c.l.s4 1983009808
        %v8249 = vunpack.c.0.s8 %v8248
        %v8250 = vlaneseq
        %v8251 = vshrl.u32 %v8250, 7
        %v8252 = vsub.s32 %v8249, %v8251
        %v8253 = vrot.slane %v8245, %v8252
        %v8255 = vunpack.c.l.s4 1983009808
        %v8256 = vunpack.c.0.s8 %v8255
        %v8257 = vlaneseq
        %v8258 = vshrl.u32 %v8257, 7
        %v8259 = vsub.s32 %v8256, %v8258
        %v8260 = vrot.slane %v8246, %v8259
        %v8261 = vcombine.low %v1008, %v1264
        %v8262 = vcombine.high %v1008, %v1264
        %v8264 = vunpack.c.l.s4 1983009808
        %v8265 = vunpack.c.0.s8 %v8264
        %v8266 = vlaneseq
        %v8267 = vshrl.u32 %v8266, 7
        %v8268 = vsub.s32 %v8265, %v8267
        %v8269 = vrot.slane %v8261, %v8268
        %v8271 = vunpack.c.l.s4 1983009808
        %v8272 = vunpack.c.0.s8 %v8271
        %v8273 = vlaneseq
        %v8274 = vshrl.u32 %v8273, 7
        %v8275 = vsub.s32 %v8272, %v8274
        %v8276 = vrot.slane %v8262, %v8275
        %v8277 = vcombine.low %v8221, %v8237
        %v8278 = vcombine.high %v8221, %v8237
        %v8280 = vunpack.c.l.s4 1934713408
        %v8281 = vunpack.c.0.s8 %v8280
        %v8282 = vlaneseq
        %v8283 = vshrl.u32 %v8282, 7
        %v8284 = vsub.s32 %v8281, %v8283
        %v8285 = vrot.slane %v8277, %v8284
        %v8287 = vunpack.c.l.s4 1934713408
        %v8288 = vunpack.c.0.s8 %v8287
        %v8289 = vlaneseq
        %v8290 = vshrl.u32 %v8289, 7
        %v8291 = vsub.s32 %v8288, %v8290
        %v8292 = vrot.slane %v8278, %v8291
        %v8293 = vcombine.low %v8228, %v8244
        %v8294 = vcombine.high %v8228, %v8244
        %v8296 = vunpack.c.l.s4 1934713408
        %v8297 = vunpack.c.0.s8 %v8296
        %v8298 = vlaneseq
        %v8299 = vshrl.u32 %v8298, 7
        %v8300 = vsub.s32 %v8297, %v8299
        %v8301 = vrot.slane %v8293, %v8300
        %v8303 = vunpack.c.l.s4 1934713408
        %v8304 = vunpack.c.0.s8 %v8303
        %v8305 = vlaneseq
        %v8306 = vshrl.u32 %v8305, 7
        %v8307 = vsub.s32 %v8304, %v8306
        %v8308 = vrot.slane %v8294, %v8307
        %v8309 = vcombine.low %v8253, %v8269
        %v8310 = vcombine.high %v8253, %v8269
        %v8312 = vunpack.c.l.s4 1934713408
        %v8313 = vunpack.c.0.s8 %v8312
        %v8314 = vlaneseq
        %v8315 = vshrl.u32 %v8314, 7
        %v8316 = vsub.s32 %v8313, %v8315
        %v8317 = vrot.slane %v8309, %v8316
        %v8319 = vunpack.c.l.s4 1934713408
        %v8320 = vunpack.c.0.s8 %v8319
        %v8321 = vlaneseq
        %v8322 = vshrl.u32 %v8321, 7
        %v8323 = vsub.s32 %v8320, %v8322
        %v8324 = vrot.slane %v8310, %v8323
        %v8325 = vcombine.low %v8260, %v8276
        %v8326 = vcombine.high %v8260, %v8276
        %v8328 = vunpack.c.l.s4 1934713408
        %v8329 = vunpack.c.0.s8 %v8328
        %v8330 = vlaneseq
        %v8331 = vshrl.u32 %v8330, 7
        %v8332 = vsub.s32 %v8329, %v8331
        %v8333 = vrot.slane %v8325, %v8332
        %v8335 = vunpack.c.l.s4 1934713408
        %v8336 = vunpack.c.0.s8 %v8335
        %v8337 = vlaneseq
        %v8338 = vshrl.u32 %v8337, 7
        %v8339 = vsub.s32 %v8336, %v8338
        %v8340 = vrot.slane %v8326, %v8339
        %v8341 = vcombine.low %v8285, %v8317
        %v8342 = vcombine.high %v8285, %v8317
        %v8343 = vcombine.low %v8292, %v8324
        %v8344 = vcombine.high %v8292, %v8324
        %v8345 = vcombine.low %v8301, %v8333
        %v8346 = vcombine.high %v8301, %v8333
        %v8347 = vcombine.low %v8308, %v8340
        %v8348 = vcombine.high %v8308, %v8340
        %v8349 = vcombine.low %v369, %v625
        %v8350 = vcombine.high %v369, %v625
        %v8352 = vunpack.c.l.s4 1983009808
        %v8353 = vunpack.c.0.s8 %v8352
        %v8354 = vlaneseq
        %v8355 = vshrl.u32 %v8354, 7
        %v8356 = vsub.s32 %v8353, %v8355
        %v8357 = vrot.slane %v8349, %v8356
        %v8359 = vunpack.c.l.s4 1983009808
        %v8360 = vunpack.c.0.s8 %v8359
        %v8361 = vlaneseq
        %v8362 = vshrl.u32 %v8361, 7
        %v8363 = vsub.s32 %v8360, %v8362
        %v8364 = vrot.slane %v8350, %v8363
        %v8365 = vcombine.low %v497, %v753
        %v8366 = vcombine.high %v497, %v753
        %v8368 = vunpack.c.l.s4 1983009808
        %v8369 = vunpack.c.0.s8 %v8368
        %v8370 = vlaneseq
        %v8371 = vshrl.u32 %v8370, 7
        %v8372 = vsub.s32 %v8369, %v8371
        %v8373 = vrot.slane %v8365, %v8372
        %v8375 = vunpack.c.l.s4 1983009808
        %v8376 = vunpack.c.0.s8 %v8375
        %v8377 = vlaneseq
        %v8378 = vshrl.u32 %v8377, 7
        %v8379 = vsub.s32 %v8376, %v8378
        %v8380 = vrot.slane %v8366, %v8379
        %v8381 = vcombine.low %v881, %v1137
        %v8382 = vcombine.high %v881, %v1137
        %v8384 = vunpack.c.l.s4 1983009808
        %v8385 = vunpack.c.0.s8 %v8384
        %v8386 = vlaneseq
        %v8387 = vshrl.u32 %v8386, 7
        %v8388 = vsub.s32 %v8385, %v8387
        %v8389 = vrot.slane %v8381, %v8388
        %v8391 = vunpack.c.l.s4 1983009808
        %v8392 = vunpack.c.0.s8 %v8391
        %v8393 = vlaneseq
        %v8394 = vshrl.u32 %v8393, 7
        %v8395 = vsub.s32 %v8392, %v8394
        %v8396 = vrot.slane %v8382, %v8395
        %v8397 = vcombine.low %v1009, %v1265
        %v8398 = vcombine.high %v1009, %v1265
        %v8400 = vunpack.c.l.s4 1983009808
        %v8401 = vunpack.c.0.s8 %v8400
        %v8402 = vlaneseq
        %v8403 = vshrl.u32 %v8402, 7
        %v8404 = vsub.s32 %v8401, %v8403
        %v8405 = vrot.slane %v8397, %v8404
        %v8407 = vunpack.c.l.s4 1983009808
        %v8408 = vunpack.c.0.s8 %v8407
        %v8409 = vlaneseq
        %v8410 = vshrl.u32 %v8409, 7
        %v8411 = vsub.s32 %v8408, %v8410
        %v8412 = vrot.slane %v8398, %v8411
        %v8413 = vcombine.low %v8357, %v8373
        %v8414 = vcombine.high %v8357, %v8373
        %v8416 = vunpack.c.l.s4 1934713408
        %v8417 = vunpack.c.0.s8 %v8416
        %v8418 = vlaneseq
        %v8419 = vshrl.u32 %v8418, 7
        %v8420 = vsub.s32 %v8417, %v8419
        %v8421 = vrot.slane %v8413, %v8420
        %v8423 = vunpack.c.l.s4 1934713408
        %v8424 = vunpack.c.0.s8 %v8423
        %v8425 = vlaneseq
        %v8426 = vshrl.u32 %v8425, 7
        %v8427 = vsub.s32 %v8424, %v8426
        %v8428 = vrot.slane %v8414, %v8427
        %v8429 = vcombine.low %v8364, %v8380
        %v8430 = vcombine.high %v8364, %v8380
        %v8432 = vunpack.c.l.s4 1934713408
        %v8433 = vunpack.c.0.s8 %v8432
        %v8434 = vlaneseq
        %v8435 = vshrl.u32 %v8434, 7
        %v8436 = vsub.s32 %v8433, %v8435
        %v8437 = vrot.slane %v8429, %v8436
        %v8439 = vunpack.c.l.s4 1934713408
        %v8440 = vunpack.c.0.s8 %v8439
        %v8441 = vlaneseq
        %v8442 = vshrl.u32 %v8441, 7
        %v8443 = vsub.s32 %v8440, %v8442
        %v8444 = vrot.slane %v8430, %v8443
        %v8445 = vcombine.low %v8389, %v8405
        %v8446 = vcombine.high %v8389, %v8405
        %v8448 = vunpack.c.l.s4 1934713408
        %v8449 = vunpack.c.0.s8 %v8448
        %v8450 = vlaneseq
        %v8451 = vshrl.u32 %v8450, 7
        %v8452 = vsub.s32 %v8449, %v8451
        %v8453 = vrot.slane %v8445, %v8452
        %v8455 = vunpack.c.l.s4 1934713408
        %v8456 = vunpack.c.0.s8 %v8455
        %v8457 = vlaneseq
        %v8458 = vshrl.u32 %v8457, 7
        %v8459 = vsub.s32 %v8456, %v8458
        %v8460 = vrot.slane %v8446, %v8459
        %v8461 = vcombine.low %v8396, %v8412
        %v8462 = vcombine.high %v8396, %v8412
        %v8464 = vunpack.c.l.s4 1934713408
        %v8465 = vunpack.c.0.s8 %v8464
        %v8466 = vlaneseq
        %v8467 = vshrl.u32 %v8466, 7
        %v8468 = vsub.s32 %v8465, %v8467
        %v8469 = vrot.slane %v8461, %v8468
        %v8471 = vunpack.c.l.s4 1934713408
        %v8472 = vunpack.c.0.s8 %v8471
        %v8473 = vlaneseq
        %v8474 = vshrl.u32 %v8473, 7
        %v8475 = vsub.s32 %v8472, %v8474
        %v8476 = vrot.slane %v8462, %v8475
        %v8477 = vcombine.low %v8421, %v8453
        %v8478 = vcombine.high %v8421, %v8453
        %v8479 = vcombine.low %v8428, %v8460
        %v8480 = vcombine.high %v8428, %v8460
        %v8481 = vcombine.low %v8437, %v8469
        %v8482 = vcombine.high %v8437, %v8469
        %v8483 = vcombine.low %v8444, %v8476
        %v8484 = vcombine.high %v8444, %v8476
        %v8485 = vcombine.low %v370, %v626
        %v8486 = vcombine.high %v370, %v626
        %v8488 = vunpack.c.l.s4 1983009808
        %v8489 = vunpack.c.0.s8 %v8488
        %v8490 = vlaneseq
        %v8491 = vshrl.u32 %v8490, 7
        %v8492 = vsub.s32 %v8489, %v8491
        %v8493 = vrot.slane %v8485, %v8492
        %v8495 = vunpack.c.l.s4 1983009808
        %v8496 = vunpack.c.0.s8 %v8495
        %v8497 = vlaneseq
        %v8498 = vshrl.u32 %v8497, 7
        %v8499 = vsub.s32 %v8496, %v8498
        %v8500 = vrot.slane %v8486, %v8499
        %v8501 = vcombine.low %v498, %v754
        %v8502 = vcombine.high %v498, %v754
        %v8504 = vunpack.c.l.s4 1983009808
        %v8505 = vunpack.c.0.s8 %v8504
        %v8506 = vlaneseq
        %v8507 = vshrl.u32 %v8506, 7
        %v8508 = vsub.s32 %v8505, %v8507
        %v8509 = vrot.slane %v8501, %v8508
        %v8511 = vunpack.c.l.s4 1983009808
        %v8512 = vunpack.c.0.s8 %v8511
        %v8513 = vlaneseq
        %v8514 = vshrl.u32 %v8513, 7
        %v8515 = vsub.s32 %v8512, %v8514
        %v8516 = vrot.slane %v8502, %v8515
        %v8517 = vcombine.low %v882, %v1138
        %v8518 = vcombine.high %v882, %v1138
        %v8520 = vunpack.c.l.s4 1983009808
        %v8521 = vunpack.c.0.s8 %v8520
        %v8522 = vlaneseq
        %v8523 = vshrl.u32 %v8522, 7
        %v8524 = vsub.s32 %v8521, %v8523
        %v8525 = vrot.slane %v8517, %v8524
        %v8527 = vunpack.c.l.s4 1983009808
        %v8528 = vunpack.c.0.s8 %v8527
        %v8529 = vlaneseq
        %v8530 = vshrl.u32 %v8529, 7
        %v8531 = vsub.s32 %v8528, %v8530
        %v8532 = vrot.slane %v8518, %v8531
        %v8533 = vcombine.low %v1010, %v1266
        %v8534 = vcombine.high %v1010, %v1266
        %v8536 = vunpack.c.l.s4 1983009808
        %v8537 = vunpack.c.0.s8 %v8536
        %v8538 = vlaneseq
        %v8539 = vshrl.u32 %v8538, 7
        %v8540 = vsub.s32 %v8537, %v8539
        %v8541 = vrot.slane %v8533, %v8540
        %v8543 = vunpack.c.l.s4 1983009808
        %v8544 = vunpack.c.0.s8 %v8543
        %v8545 = vlaneseq
        %v8546 = vshrl.u32 %v8545, 7
        %v8547 = vsub.s32 %v8544, %v8546
        %v8548 = vrot.slane %v8534, %v8547
        %v8549 = vcombine.low %v8493, %v8509
        %v8550 = vcombine.high %v8493, %v8509
        %v8552 = vunpack.c.l.s4 1934713408
        %v8553 = vunpack.c.0.s8 %v8552
        %v8554 = vlaneseq
        %v8555 = vshrl.u32 %v8554, 7
        %v8556 = vsub.s32 %v8553, %v8555
        %v8557 = vrot.slane %v8549, %v8556
        %v8559 = vunpack.c.l.s4 1934713408
        %v8560 = vunpack.c.0.s8 %v8559
        %v8561 = vlaneseq
        %v8562 = vshrl.u32 %v8561, 7
        %v8563 = vsub.s32 %v8560, %v8562
        %v8564 = vrot.slane %v8550, %v8563
        %v8565 = vcombine.low %v8500, %v8516
        %v8566 = vcombine.high %v8500, %v8516
        %v8568 = vunpack.c.l.s4 1934713408
        %v8569 = vunpack.c.0.s8 %v8568
        %v8570 = vlaneseq
        %v8571 = vshrl.u32 %v8570, 7
        %v8572 = vsub.s32 %v8569, %v8571
        %v8573 = vrot.slane %v8565, %v8572
        %v8575 = vunpack.c.l.s4 1934713408
        %v8576 = vunpack.c.0.s8 %v8575
        %v8577 = vlaneseq
        %v8578 = vshrl.u32 %v8577, 7
        %v8579 = vsub.s32 %v8576, %v8578
        %v8580 = vrot.slane %v8566, %v8579
        %v8581 = vcombine.low %v8525, %v8541
        %v8582 = vcombine.high %v8525, %v8541
        %v8584 = vunpack.c.l.s4 1934713408
        %v8585 = vunpack.c.0.s8 %v8584
        %v8586 = vlaneseq
        %v8587 = vshrl.u32 %v8586, 7
        %v8588 = vsub.s32 %v8585, %v8587
        %v8589 = vrot.slane %v8581, %v8588
        %v8591 = vunpack.c.l.s4 1934713408
        %v8592 = vunpack.c.0.s8 %v8591
        %v8593 = vlaneseq
        %v8594 = vshrl.u32 %v8593, 7
        %v8595 = vsub.s32 %v8592, %v8594
        %v8596 = vrot.slane %v8582, %v8595
        %v8597 = vcombine.low %v8532, %v8548
        %v8598 = vcombine.high %v8532, %v8548
        %v8600 = vunpack.c.l.s4 1934713408
        %v8601 = vunpack.c.0.s8 %v8600
        %v8602 = vlaneseq
        %v8603 = vshrl.u32 %v8602, 7
        %v8604 = vsub.s32 %v8601, %v8603
        %v8605 = vrot.slane %v8597, %v8604
        %v8607 = vunpack.c.l.s4 1934713408
        %v8608 = vunpack.c.0.s8 %v8607
        %v8609 = vlaneseq
        %v8610 = vshrl.u32 %v8609, 7
        %v8611 = vsub.s32 %v8608, %v8610
        %v8612 = vrot.slane %v8598, %v8611
        %v8613 = vcombine.low %v8557, %v8589
        %v8614 = vcombine.high %v8557, %v8589
        %v8615 = vcombine.low %v8564, %v8596
        %v8616 = vcombine.high %v8564, %v8596
        %v8617 = vcombine.low %v8573, %v8605
        %v8618 = vcombine.high %v8573, %v8605
        %v8619 = vcombine.low %v8580, %v8612
        %v8620 = vcombine.high %v8580, %v8612
        %v8621 = vcombine.low %v371, %v627
        %v8622 = vcombine.high %v371, %v627
        %v8624 = vunpack.c.l.s4 1983009808
        %v8625 = vunpack.c.0.s8 %v8624
        %v8626 = vlaneseq
        %v8627 = vshrl.u32 %v8626, 7
        %v8628 = vsub.s32 %v8625, %v8627
        %v8629 = vrot.slane %v8621, %v8628
        %v8631 = vunpack.c.l.s4 1983009808
        %v8632 = vunpack.c.0.s8 %v8631
        %v8633 = vlaneseq
        %v8634 = vshrl.u32 %v8633, 7
        %v8635 = vsub.s32 %v8632, %v8634
        %v8636 = vrot.slane %v8622, %v8635
        %v8637 = vcombine.low %v499, %v755
        %v8638 = vcombine.high %v499, %v755
        %v8640 = vunpack.c.l.s4 1983009808
        %v8641 = vunpack.c.0.s8 %v8640
        %v8642 = vlaneseq
        %v8643 = vshrl.u32 %v8642, 7
        %v8644 = vsub.s32 %v8641, %v8643
        %v8645 = vrot.slane %v8637, %v8644
        %v8647 = vunpack.c.l.s4 1983009808
        %v8648 = vunpack.c.0.s8 %v8647
        %v8649 = vlaneseq
        %v8650 = vshrl.u32 %v8649, 7
        %v8651 = vsub.s32 %v8648, %v8650
        %v8652 = vrot.slane %v8638, %v8651
        %v8653 = vcombine.low %v883, %v1139
        %v8654 = vcombine.high %v883, %v1139
        %v8656 = vunpack.c.l.s4 1983009808
        %v8657 = vunpack.c.0.s8 %v8656
        %v8658 = vlaneseq
        %v8659 = vshrl.u32 %v8658, 7
        %v8660 = vsub.s32 %v8657, %v8659
        %v8661 = vrot.slane %v8653, %v8660
        %v8663 = vunpack.c.l.s4 1983009808
        %v8664 = vunpack.c.0.s8 %v8663
        %v8665 = vlaneseq
        %v8666 = vshrl.u32 %v8665, 7
        %v8667 = vsub.s32 %v8664, %v8666
        %v8668 = vrot.slane %v8654, %v8667
        %v8669 = vcombine.low %v1011, %v1267
        %v8670 = vcombine.high %v1011, %v1267
        %v8672 = vunpack.c.l.s4 1983009808
        %v8673 = vunpack.c.0.s8 %v8672
        %v8674 = vlaneseq
        %v8675 = vshrl.u32 %v8674, 7
        %v8676 = vsub.s32 %v8673, %v8675
        %v8677 = vrot.slane %v8669, %v8676
        %v8679 = vunpack.c.l.s4 1983009808
        %v8680 = vunpack.c.0.s8 %v8679
        %v8681 = vlaneseq
        %v8682 = vshrl.u32 %v8681, 7
        %v8683 = vsub.s32 %v8680, %v8682
        %v8684 = vrot.slane %v8670, %v8683
        %v8685 = vcombine.low %v8629, %v8645
        %v8686 = vcombine.high %v8629, %v8645
        %v8688 = vunpack.c.l.s4 1934713408
        %v8689 = vunpack.c.0.s8 %v8688
        %v8690 = vlaneseq
        %v8691 = vshrl.u32 %v8690, 7
        %v8692 = vsub.s32 %v8689, %v8691
        %v8693 = vrot.slane %v8685, %v8692
        %v8695 = vunpack.c.l.s4 1934713408
        %v8696 = vunpack.c.0.s8 %v8695
        %v8697 = vlaneseq
        %v8698 = vshrl.u32 %v8697, 7
        %v8699 = vsub.s32 %v8696, %v8698
        %v8700 = vrot.slane %v8686, %v8699
        %v8701 = vcombine.low %v8636, %v8652
        %v8702 = vcombine.high %v8636, %v8652
        %v8704 = vunpack.c.l.s4 1934713408
        %v8705 = vunpack.c.0.s8 %v8704
        %v8706 = vlaneseq
        %v8707 = vshrl.u32 %v8706, 7
        %v8708 = vsub.s32 %v8705, %v8707
        %v8709 = vrot.slane %v8701, %v8708
        %v8711 = vunpack.c.l.s4 1934713408
        %v8712 = vunpack.c.0.s8 %v8711
        %v8713 = vlaneseq
        %v8714 = vshrl.u32 %v8713, 7
        %v8715 = vsub.s32 %v8712, %v8714
        %v8716 = vrot.slane %v8702, %v8715
        %v8717 = vcombine.low %v8661, %v8677
        %v8718 = vcombine.high %v8661, %v8677
        %v8720 = vunpack.c.l.s4 1934713408
        %v8721 = vunpack.c.0.s8 %v8720
        %v8722 = vlaneseq
        %v8723 = vshrl.u32 %v8722, 7
        %v8724 = vsub.s32 %v8721, %v8723
        %v8725 = vrot.slane %v8717, %v8724
        %v8727 = vunpack.c.l.s4 1934713408
        %v8728 = vunpack.c.0.s8 %v8727
        %v8729 = vlaneseq
        %v8730 = vshrl.u32 %v8729, 7
        %v8731 = vsub.s32 %v8728, %v8730
        %v8732 = vrot.slane %v8718, %v8731
        %v8733 = vcombine.low %v8668, %v8684
        %v8734 = vcombine.high %v8668, %v8684
        %v8736 = vunpack.c.l.s4 1934713408
        %v8737 = vunpack.c.0.s8 %v8736
        %v8738 = vlaneseq
        %v8739 = vshrl.u32 %v8738, 7
        %v8740 = vsub.s32 %v8737, %v8739
        %v8741 = vrot.slane %v8733, %v8740
        %v8743 = vunpack.c.l.s4 1934713408
        %v8744 = vunpack.c.0.s8 %v8743
        %v8745 = vlaneseq
        %v8746 = vshrl.u32 %v8745, 7
        %v8747 = vsub.s32 %v8744, %v8746
        %v8748 = vrot.slane %v8734, %v8747
        %v8749 = vcombine.low %v8693, %v8725
        %v8750 = vcombine.high %v8693, %v8725
        %v8751 = vcombine.low %v8700, %v8732
        %v8752 = vcombine.high %v8700, %v8732
        %v8753 = vcombine.low %v8709, %v8741
        %v8754 = vcombine.high %v8709, %v8741
        %v8755 = vcombine.low %v8716, %v8748
        %v8756 = vcombine.high %v8716, %v8748
        %v8757 = vcombine.low %v372, %v628
        %v8758 = vcombine.high %v372, %v628
        %v8760 = vunpack.c.l.s4 1983009808
        %v8761 = vunpack.c.0.s8 %v8760
        %v8762 = vlaneseq
        %v8763 = vshrl.u32 %v8762, 7
        %v8764 = vsub.s32 %v8761, %v8763
        %v8765 = vrot.slane %v8757, %v8764
        %v8767 = vunpack.c.l.s4 1983009808
        %v8768 = vunpack.c.0.s8 %v8767
        %v8769 = vlaneseq
        %v8770 = vshrl.u32 %v8769, 7
        %v8771 = vsub.s32 %v8768, %v8770
        %v8772 = vrot.slane %v8758, %v8771
        %v8773 = vcombine.low %v500, %v756
        %v8774 = vcombine.high %v500, %v756
        %v8776 = vunpack.c.l.s4 1983009808
        %v8777 = vunpack.c.0.s8 %v8776
        %v8778 = vlaneseq
        %v8779 = vshrl.u32 %v8778, 7
        %v8780 = vsub.s32 %v8777, %v8779
        %v8781 = vrot.slane %v8773, %v8780
        %v8783 = vunpack.c.l.s4 1983009808
        %v8784 = vunpack.c.0.s8 %v8783
        %v8785 = vlaneseq
        %v8786 = vshrl.u32 %v8785, 7
        %v8787 = vsub.s32 %v8784, %v8786
        %v8788 = vrot.slane %v8774, %v8787
        %v8789 = vcombine.low %v884, %v1140
        %v8790 = vcombine.high %v884, %v1140
        %v8792 = vunpack.c.l.s4 1983009808
        %v8793 = vunpack.c.0.s8 %v8792
        %v8794 = vlaneseq
        %v8795 = vshrl.u32 %v8794, 7
        %v8796 = vsub.s32 %v8793, %v8795
        %v8797 = vrot.slane %v8789, %v8796
        %v8799 = vunpack.c.l.s4 1983009808
        %v8800 = vunpack.c.0.s8 %v8799
        %v8801 = vlaneseq
        %v8802 = vshrl.u32 %v8801, 7
        %v8803 = vsub.s32 %v8800, %v8802
        %v8804 = vrot.slane %v8790, %v8803
        %v8805 = vcombine.low %v1012, %v1268
        %v8806 = vcombine.high %v1012, %v1268
        %v8808 = vunpack.c.l.s4 1983009808
        %v8809 = vunpack.c.0.s8 %v8808
        %v8810 = vlaneseq
        %v8811 = vshrl.u32 %v8810, 7
        %v8812 = vsub.s32 %v8809, %v8811
        %v8813 = vrot.slane %v8805, %v8812
        %v8815 = vunpack.c.l.s4 1983009808
        %v8816 = vunpack.c.0.s8 %v8815
        %v8817 = vlaneseq
        %v8818 = vshrl.u32 %v8817, 7
        %v8819 = vsub.s32 %v8816, %v8818
        %v8820 = vrot.slane %v8806, %v8819
        %v8821 = vcombine.low %v8765, %v8781
        %v8822 = vcombine.high %v8765, %v8781
        %v8824 = vunpack.c.l.s4 1934713408
        %v8825 = vunpack.c.0.s8 %v8824
        %v8826 = vlaneseq
        %v8827 = vshrl.u32 %v8826, 7
        %v8828 = vsub.s32 %v8825, %v8827
        %v8829 = vrot.slane %v8821, %v8828
        %v8831 = vunpack.c.l.s4 1934713408
        %v8832 = vunpack.c.0.s8 %v8831
        %v8833 = vlaneseq
        %v8834 = vshrl.u32 %v8833, 7
        %v8835 = vsub.s32 %v8832, %v8834
        %v8836 = vrot.slane %v8822, %v8835
        %v8837 = vcombine.low %v8772, %v8788
        %v8838 = vcombine.high %v8772, %v8788
        %v8840 = vunpack.c.l.s4 1934713408
        %v8841 = vunpack.c.0.s8 %v8840
        %v8842 = vlaneseq
        %v8843 = vshrl.u32 %v8842, 7
        %v8844 = vsub.s32 %v8841, %v8843
        %v8845 = vrot.slane %v8837, %v8844
        %v8847 = vunpack.c.l.s4 1934713408
        %v8848 = vunpack.c.0.s8 %v8847
        %v8849 = vlaneseq
        %v8850 = vshrl.u32 %v8849, 7
        %v8851 = vsub.s32 %v8848, %v8850
        %v8852 = vrot.slane %v8838, %v8851
        %v8853 = vcombine.low %v8797, %v8813
        %v8854 = vcombine.high %v8797, %v8813
        %v8856 = vunpack.c.l.s4 1934713408
        %v8857 = vunpack.c.0.s8 %v8856
        %v8858 = vlaneseq
        %v8859 = vshrl.u32 %v8858, 7
        %v8860 = vsub.s32 %v8857, %v8859
        %v8861 = vrot.slane %v8853, %v8860
        %v8863 = vunpack.c.l.s4 1934713408
        %v8864 = vunpack.c.0.s8 %v8863
        %v8865 = vlaneseq
        %v8866 = vshrl.u32 %v8865, 7
        %v8867 = vsub.s32 %v8864, %v8866
        %v8868 = vrot.slane %v8854, %v8867
        %v8869 = vcombine.low %v8804, %v8820
        %v8870 = vcombine.high %v8804, %v8820
        %v8872 = vunpack.c.l.s4 1934713408
        %v8873 = vunpack.c.0.s8 %v8872
        %v8874 = vlaneseq
        %v8875 = vshrl.u32 %v8874, 7
        %v8876 = vsub.s32 %v8873, %v8875
        %v8877 = vrot.slane %v8869, %v8876
        %v8879 = vunpack.c.l.s4 1934713408
        %v8880 = vunpack.c.0.s8 %v8879
        %v8881 = vlaneseq
        %v8882 = vshrl.u32 %v8881, 7
        %v8883 = vsub.s32 %v8880, %v8882
        %v8884 = vrot.slane %v8870, %v8883
        %v8885 = vcombine.low %v8829, %v8861
        %v8886 = vcombine.high %v8829, %v8861
        %v8887 = vcombine.low %v8836, %v8868
        %v8888 = vcombine.high %v8836, %v8868
        %v8889 = vcombine.low %v8845, %v8877
        %v8890 = vcombine.high %v8845, %v8877
        %v8891 = vcombine.low %v8852, %v8884
        %v8892 = vcombine.high %v8852, %v8884
        %v8893 = vcombine.low %v373, %v629
        %v8894 = vcombine.high %v373, %v629
        %v8896 = vunpack.c.l.s4 1983009808
        %v8897 = vunpack.c.0.s8 %v8896
        %v8898 = vlaneseq
        %v8899 = vshrl.u32 %v8898, 7
        %v8900 = vsub.s32 %v8897, %v8899
        %v8901 = vrot.slane %v8893, %v8900
        %v8903 = vunpack.c.l.s4 1983009808
        %v8904 = vunpack.c.0.s8 %v8903
        %v8905 = vlaneseq
        %v8906 = vshrl.u32 %v8905, 7
        %v8907 = vsub.s32 %v8904, %v8906
        %v8908 = vrot.slane %v8894, %v8907
        %v8909 = vcombine.low %v501, %v757
        %v8910 = vcombine.high %v501, %v757
        %v8912 = vunpack.c.l.s4 1983009808
        %v8913 = vunpack.c.0.s8 %v8912
        %v8914 = vlaneseq
        %v8915 = vshrl.u32 %v8914, 7
        %v8916 = vsub.s32 %v8913, %v8915
        %v8917 = vrot.slane %v8909, %v8916
        %v8919 = vunpack.c.l.s4 1983009808
        %v8920 = vunpack.c.0.s8 %v8919
        %v8921 = vlaneseq
        %v8922 = vshrl.u32 %v8921, 7
        %v8923 = vsub.s32 %v8920, %v8922
        %v8924 = vrot.slane %v8910, %v8923
        %v8925 = vcombine.low %v885, %v1141
        %v8926 = vcombine.high %v885, %v1141
        %v8928 = vunpack.c.l.s4 1983009808
        %v8929 = vunpack.c.0.s8 %v8928
        %v8930 = vlaneseq
        %v8931 = vshrl.u32 %v8930, 7
        %v8932 = vsub.s32 %v8929, %v8931
        %v8933 = vrot.slane %v8925, %v8932
        %v8935 = vunpack.c.l.s4 1983009808
        %v8936 = vunpack.c.0.s8 %v8935
        %v8937 = vlaneseq
        %v8938 = vshrl.u32 %v8937, 7
        %v8939 = vsub.s32 %v8936, %v8938
        %v8940 = vrot.slane %v8926, %v8939
        %v8941 = vcombine.low %v1013, %v1269
        %v8942 = vcombine.high %v1013, %v1269
        %v8944 = vunpack.c.l.s4 1983009808
        %v8945 = vunpack.c.0.s8 %v8944
        %v8946 = vlaneseq
        %v8947 = vshrl.u32 %v8946, 7
        %v8948 = vsub.s32 %v8945, %v8947
        %v8949 = vrot.slane %v8941, %v8948
        %v8951 = vunpack.c.l.s4 1983009808
        %v8952 = vunpack.c.0.s8 %v8951
        %v8953 = vlaneseq
        %v8954 = vshrl.u32 %v8953, 7
        %v8955 = vsub.s32 %v8952, %v8954
        %v8956 = vrot.slane %v8942, %v8955
        %v8957 = vcombine.low %v8901, %v8917
        %v8958 = vcombine.high %v8901, %v8917
        %v8960 = vunpack.c.l.s4 1934713408
        %v8961 = vunpack.c.0.s8 %v8960
        %v8962 = vlaneseq
        %v8963 = vshrl.u32 %v8962, 7
        %v8964 = vsub.s32 %v8961, %v8963
        %v8965 = vrot.slane %v8957, %v8964
        %v8967 = vunpack.c.l.s4 1934713408
        %v8968 = vunpack.c.0.s8 %v8967
        %v8969 = vlaneseq
        %v8970 = vshrl.u32 %v8969, 7
        %v8971 = vsub.s32 %v8968, %v8970
        %v8972 = vrot.slane %v8958, %v8971
        %v8973 = vcombine.low %v8908, %v8924
        %v8974 = vcombine.high %v8908, %v8924
        %v8976 = vunpack.c.l.s4 1934713408
        %v8977 = vunpack.c.0.s8 %v8976
        %v8978 = vlaneseq
        %v8979 = vshrl.u32 %v8978, 7
        %v8980 = vsub.s32 %v8977, %v8979
        %v8981 = vrot.slane %v8973, %v8980
        %v8983 = vunpack.c.l.s4 1934713408
        %v8984 = vunpack.c.0.s8 %v8983
        %v8985 = vlaneseq
        %v8986 = vshrl.u32 %v8985, 7
        %v8987 = vsub.s32 %v8984, %v8986
        %v8988 = vrot.slane %v8974, %v8987
        %v8989 = vcombine.low %v8933, %v8949
        %v8990 = vcombine.high %v8933, %v8949
        %v8992 = vunpack.c.l.s4 1934713408
        %v8993 = vunpack.c.0.s8 %v8992
        %v8994 = vlaneseq
        %v8995 = vshrl.u32 %v8994, 7
        %v8996 = vsub.s32 %v8993, %v8995
        %v8997 = vrot.slane %v8989, %v8996
        %v8999 = vunpack.c.l.s4 1934713408
        %v9000 = vunpack.c.0.s8 %v8999
        %v9001 = vlaneseq
        %v9002 = vshrl.u32 %v9001, 7
        %v9003 = vsub.s32 %v9000, %v9002
        %v9004 = vrot.slane %v8990, %v9003
        %v9005 = vcombine.low %v8940, %v8956
        %v9006 = vcombine.high %v8940, %v8956
        %v9008 = vunpack.c.l.s4 1934713408
        %v9009 = vunpack.c.0.s8 %v9008
        %v9010 = vlaneseq
        %v9011 = vshrl.u32 %v9010, 7
        %v9012 = vsub.s32 %v9009, %v9011
        %v9013 = vrot.slane %v9005, %v9012
        %v9015 = vunpack.c.l.s4 1934713408
        %v9016 = vunpack.c.0.s8 %v9015
        %v9017 = vlaneseq
        %v9018 = vshrl.u32 %v9017, 7
        %v9019 = vsub.s32 %v9016, %v9018
        %v9020 = vrot.slane %v9006, %v9019
        %v9021 = vcombine.low %v8965, %v8997
        %v9022 = vcombine.high %v8965, %v8997
        %v9023 = vcombine.low %v8972, %v9004
        %v9024 = vcombine.high %v8972, %v9004
        %v9025 = vcombine.low %v8981, %v9013
        %v9026 = vcombine.high %v8981, %v9013
        %v9027 = vcombine.low %v8988, %v9020
        %v9028 = vcombine.high %v8988, %v9020
        %v9029 = vcombine.low %v374, %v630
        %v9030 = vcombine.high %v374, %v630
        %v9032 = vunpack.c.l.s4 1983009808
        %v9033 = vunpack.c.0.s8 %v9032
        %v9034 = vlaneseq
        %v9035 = vshrl.u32 %v9034, 7
        %v9036 = vsub.s32 %v9033, %v9035
        %v9037 = vrot.slane %v9029, %v9036
        %v9039 = vunpack.c.l.s4 1983009808
        %v9040 = vunpack.c.0.s8 %v9039
        %v9041 = vlaneseq
        %v9042 = vshrl.u32 %v9041, 7
        %v9043 = vsub.s32 %v9040, %v9042
        %v9044 = vrot.slane %v9030, %v9043
        %v9045 = vcombine.low %v502, %v758
        %v9046 = vcombine.high %v502, %v758
        %v9048 = vunpack.c.l.s4 1983009808
        %v9049 = vunpack.c.0.s8 %v9048
        %v9050 = vlaneseq
        %v9051 = vshrl.u32 %v9050, 7
        %v9052 = vsub.s32 %v9049, %v9051
        %v9053 = vrot.slane %v9045, %v9052
        %v9055 = vunpack.c.l.s4 1983009808
        %v9056 = vunpack.c.0.s8 %v9055
        %v9057 = vlaneseq
        %v9058 = vshrl.u32 %v9057, 7
        %v9059 = vsub.s32 %v9056, %v9058
        %v9060 = vrot.slane %v9046, %v9059
        %v9061 = vcombine.low %v886, %v1142
        %v9062 = vcombine.high %v886, %v1142
        %v9064 = vunpack.c.l.s4 1983009808
        %v9065 = vunpack.c.0.s8 %v9064
        %v9066 = vlaneseq
        %v9067 = vshrl.u32 %v9066, 7
        %v9068 = vsub.s32 %v9065, %v9067
        %v9069 = vrot.slane %v9061, %v9068
        %v9071 = vunpack.c.l.s4 1983009808
        %v9072 = vunpack.c.0.s8 %v9071
        %v9073 = vlaneseq
        %v9074 = vshrl.u32 %v9073, 7
        %v9075 = vsub.s32 %v9072, %v9074
        %v9076 = vrot.slane %v9062, %v9075
        %v9077 = vcombine.low %v1014, %v1270
        %v9078 = vcombine.high %v1014, %v1270
        %v9080 = vunpack.c.l.s4 1983009808
        %v9081 = vunpack.c.0.s8 %v9080
        %v9082 = vlaneseq
        %v9083 = vshrl.u32 %v9082, 7
        %v9084 = vsub.s32 %v9081, %v9083
        %v9085 = vrot.slane %v9077, %v9084
        %v9087 = vunpack.c.l.s4 1983009808
        %v9088 = vunpack.c.0.s8 %v9087
        %v9089 = vlaneseq
        %v9090 = vshrl.u32 %v9089, 7
        %v9091 = vsub.s32 %v9088, %v9090
        %v9092 = vrot.slane %v9078, %v9091
        %v9093 = vcombine.low %v9037, %v9053
        %v9094 = vcombine.high %v9037, %v9053
        %v9096 = vunpack.c.l.s4 1934713408
        %v9097 = vunpack.c.0.s8 %v9096
        %v9098 = vlaneseq
        %v9099 = vshrl.u32 %v9098, 7
        %v9100 = vsub.s32 %v9097, %v9099
        %v9101 = vrot.slane %v9093, %v9100
        %v9103 = vunpack.c.l.s4 1934713408
        %v9104 = vunpack.c.0.s8 %v9103
        %v9105 = vlaneseq
        %v9106 = vshrl.u32 %v9105, 7
        %v9107 = vsub.s32 %v9104, %v9106
        %v9108 = vrot.slane %v9094, %v9107
        %v9109 = vcombine.low %v9044, %v9060
        %v9110 = vcombine.high %v9044, %v9060
        %v9112 = vunpack.c.l.s4 1934713408
        %v9113 = vunpack.c.0.s8 %v9112
        %v9114 = vlaneseq
        %v9115 = vshrl.u32 %v9114, 7
        %v9116 = vsub.s32 %v9113, %v9115
        %v9117 = vrot.slane %v9109, %v9116
        %v9119 = vunpack.c.l.s4 1934713408
        %v9120 = vunpack.c.0.s8 %v9119
        %v9121 = vlaneseq
        %v9122 = vshrl.u32 %v9121, 7
        %v9123 = vsub.s32 %v9120, %v9122
        %v9124 = vrot.slane %v9110, %v9123
        %v9125 = vcombine.low %v9069, %v9085
        %v9126 = vcombine.high %v9069, %v9085
        %v9128 = vunpack.c.l.s4 1934713408
        %v9129 = vunpack.c.0.s8 %v9128
        %v9130 = vlaneseq
        %v9131 = vshrl.u32 %v9130, 7
        %v9132 = vsub.s32 %v9129, %v9131
        %v9133 = vrot.slane %v9125, %v9132
        %v9135 = vunpack.c.l.s4 1934713408
        %v9136 = vunpack.c.0.s8 %v9135
        %v9137 = vlaneseq
        %v9138 = vshrl.u32 %v9137, 7
        %v9139 = vsub.s32 %v9136, %v9138
        %v9140 = vrot.slane %v9126, %v9139
        %v9141 = vcombine.low %v9076, %v9092
        %v9142 = vcombine.high %v9076, %v9092
        %v9144 = vunpack.c.l.s4 1934713408
        %v9145 = vunpack.c.0.s8 %v9144
        %v9146 = vlaneseq
        %v9147 = vshrl.u32 %v9146, 7
        %v9148 = vsub.s32 %v9145, %v9147
        %v9149 = vrot.slane %v9141, %v9148
        %v9151 = vunpack.c.l.s4 1934713408
        %v9152 = vunpack.c.0.s8 %v9151
        %v9153 = vlaneseq
        %v9154 = vshrl.u32 %v9153, 7
        %v9155 = vsub.s32 %v9152, %v9154
        %v9156 = vrot.slane %v9142, %v9155
        %v9157 = vcombine.low %v9101, %v9133
        %v9158 = vcombine.high %v9101, %v9133
        %v9159 = vcombine.low %v9108, %v9140
        %v9160 = vcombine.high %v9108, %v9140
        %v9161 = vcombine.low %v9117, %v9149
        %v9162 = vcombine.high %v9117, %v9149
        %v9163 = vcombine.low %v9124, %v9156
        %v9164 = vcombine.high %v9124, %v9156
        %v9165 = vcombine.low %v375, %v631
        %v9166 = vcombine.high %v375, %v631
        %v9168 = vunpack.c.l.s4 1983009808
        %v9169 = vunpack.c.0.s8 %v9168
        %v9170 = vlaneseq
        %v9171 = vshrl.u32 %v9170, 7
        %v9172 = vsub.s32 %v9169, %v9171
        %v9173 = vrot.slane %v9165, %v9172
        %v9175 = vunpack.c.l.s4 1983009808
        %v9176 = vunpack.c.0.s8 %v9175
        %v9177 = vlaneseq
        %v9178 = vshrl.u32 %v9177, 7
        %v9179 = vsub.s32 %v9176, %v9178
        %v9180 = vrot.slane %v9166, %v9179
        %v9181 = vcombine.low %v503, %v759
        %v9182 = vcombine.high %v503, %v759
        %v9184 = vunpack.c.l.s4 1983009808
        %v9185 = vunpack.c.0.s8 %v9184
        %v9186 = vlaneseq
        %v9187 = vshrl.u32 %v9186, 7
        %v9188 = vsub.s32 %v9185, %v9187
        %v9189 = vrot.slane %v9181, %v9188
        %v9191 = vunpack.c.l.s4 1983009808
        %v9192 = vunpack.c.0.s8 %v9191
        %v9193 = vlaneseq
        %v9194 = vshrl.u32 %v9193, 7
        %v9195 = vsub.s32 %v9192, %v9194
        %v9196 = vrot.slane %v9182, %v9195
        %v9197 = vcombine.low %v887, %v1143
        %v9198 = vcombine.high %v887, %v1143
        %v9200 = vunpack.c.l.s4 1983009808
        %v9201 = vunpack.c.0.s8 %v9200
        %v9202 = vlaneseq
        %v9203 = vshrl.u32 %v9202, 7
        %v9204 = vsub.s32 %v9201, %v9203
        %v9205 = vrot.slane %v9197, %v9204
        %v9207 = vunpack.c.l.s4 1983009808
        %v9208 = vunpack.c.0.s8 %v9207
        %v9209 = vlaneseq
        %v9210 = vshrl.u32 %v9209, 7
        %v9211 = vsub.s32 %v9208, %v9210
        %v9212 = vrot.slane %v9198, %v9211
        %v9213 = vcombine.low %v1015, %v1271
        %v9214 = vcombine.high %v1015, %v1271
        %v9216 = vunpack.c.l.s4 1983009808
        %v9217 = vunpack.c.0.s8 %v9216
        %v9218 = vlaneseq
        %v9219 = vshrl.u32 %v9218, 7
        %v9220 = vsub.s32 %v9217, %v9219
        %v9221 = vrot.slane %v9213, %v9220
        %v9223 = vunpack.c.l.s4 1983009808
        %v9224 = vunpack.c.0.s8 %v9223
        %v9225 = vlaneseq
        %v9226 = vshrl.u32 %v9225, 7
        %v9227 = vsub.s32 %v9224, %v9226
        %v9228 = vrot.slane %v9214, %v9227
        %v9229 = vcombine.low %v9173, %v9189
        %v9230 = vcombine.high %v9173, %v9189
        %v9232 = vunpack.c.l.s4 1934713408
        %v9233 = vunpack.c.0.s8 %v9232
        %v9234 = vlaneseq
        %v9235 = vshrl.u32 %v9234, 7
        %v9236 = vsub.s32 %v9233, %v9235
        %v9237 = vrot.slane %v9229, %v9236
        %v9239 = vunpack.c.l.s4 1934713408
        %v9240 = vunpack.c.0.s8 %v9239
        %v9241 = vlaneseq
        %v9242 = vshrl.u32 %v9241, 7
        %v9243 = vsub.s32 %v9240, %v9242
        %v9244 = vrot.slane %v9230, %v9243
        %v9245 = vcombine.low %v9180, %v9196
        %v9246 = vcombine.high %v9180, %v9196
        %v9248 = vunpack.c.l.s4 1934713408
        %v9249 = vunpack.c.0.s8 %v9248
        %v9250 = vlaneseq
        %v9251 = vshrl.u32 %v9250, 7
        %v9252 = vsub.s32 %v9249, %v9251
        %v9253 = vrot.slane %v9245, %v9252
        %v9255 = vunpack.c.l.s4 1934713408
        %v9256 = vunpack.c.0.s8 %v9255
        %v9257 = vlaneseq
        %v9258 = vshrl.u32 %v9257, 7
        %v9259 = vsub.s32 %v9256, %v9258
        %v9260 = vrot.slane %v9246, %v9259
        %v9261 = vcombine.low %v9205, %v9221
        %v9262 = vcombine.high %v9205, %v9221
        %v9264 = vunpack.c.l.s4 1934713408
        %v9265 = vunpack.c.0.s8 %v9264
        %v9266 = vlaneseq
        %v9267 = vshrl.u32 %v9266, 7
        %v9268 = vsub.s32 %v9265, %v9267
        %v9269 = vrot.slane %v9261, %v9268
        %v9271 = vunpack.c.l.s4 1934713408
        %v9272 = vunpack.c.0.s8 %v9271
        %v9273 = vlaneseq
        %v9274 = vshrl.u32 %v9273, 7
        %v9275 = vsub.s32 %v9272, %v9274
        %v9276 = vrot.slane %v9262, %v9275
        %v9277 = vcombine.low %v9212, %v9228
        %v9278 = vcombine.high %v9212, %v9228
        %v9280 = vunpack.c.l.s4 1934713408
        %v9281 = vunpack.c.0.s8 %v9280
        %v9282 = vlaneseq
        %v9283 = vshrl.u32 %v9282, 7
        %v9284 = vsub.s32 %v9281, %v9283
        %v9285 = vrot.slane %v9277, %v9284
        %v9287 = vunpack.c.l.s4 1934713408
        %v9288 = vunpack.c.0.s8 %v9287
        %v9289 = vlaneseq
        %v9290 = vshrl.u32 %v9289, 7
        %v9291 = vsub.s32 %v9288, %v9290
        %v9292 = vrot.slane %v9278, %v9291
        %v9293 = vcombine.low %v9237, %v9269
        %v9294 = vcombine.high %v9237, %v9269
        %v9295 = vcombine.low %v9244, %v9276
        %v9296 = vcombine.high %v9244, %v9276
        %v9297 = vcombine.low %v9253, %v9285
        %v9298 = vcombine.high %v9253, %v9285
        %v9299 = vcombine.low %v9260, %v9292
        %v9300 = vcombine.high %v9260, %v9292
        %v9301 = vcombine.low %v376, %v632
        %v9302 = vcombine.high %v376, %v632
        %v9304 = vunpack.c.l.s4 1983009808
        %v9305 = vunpack.c.0.s8 %v9304
        %v9306 = vlaneseq
        %v9307 = vshrl.u32 %v9306, 7
        %v9308 = vsub.s32 %v9305, %v9307
        %v9309 = vrot.slane %v9301, %v9308
        %v9311 = vunpack.c.l.s4 1983009808
        %v9312 = vunpack.c.0.s8 %v9311
        %v9313 = vlaneseq
        %v9314 = vshrl.u32 %v9313, 7
        %v9315 = vsub.s32 %v9312, %v9314
        %v9316 = vrot.slane %v9302, %v9315
        %v9317 = vcombine.low %v504, %v760
        %v9318 = vcombine.high %v504, %v760
        %v9320 = vunpack.c.l.s4 1983009808
        %v9321 = vunpack.c.0.s8 %v9320
        %v9322 = vlaneseq
        %v9323 = vshrl.u32 %v9322, 7
        %v9324 = vsub.s32 %v9321, %v9323
        %v9325 = vrot.slane %v9317, %v9324
        %v9327 = vunpack.c.l.s4 1983009808
        %v9328 = vunpack.c.0.s8 %v9327
        %v9329 = vlaneseq
        %v9330 = vshrl.u32 %v9329, 7
        %v9331 = vsub.s32 %v9328, %v9330
        %v9332 = vrot.slane %v9318, %v9331
        %v9333 = vcombine.low %v888, %v1144
        %v9334 = vcombine.high %v888, %v1144
        %v9336 = vunpack.c.l.s4 1983009808
        %v9337 = vunpack.c.0.s8 %v9336
        %v9338 = vlaneseq
        %v9339 = vshrl.u32 %v9338, 7
        %v9340 = vsub.s32 %v9337, %v9339
        %v9341 = vrot.slane %v9333, %v9340
        %v9343 = vunpack.c.l.s4 1983009808
        %v9344 = vunpack.c.0.s8 %v9343
        %v9345 = vlaneseq
        %v9346 = vshrl.u32 %v9345, 7
        %v9347 = vsub.s32 %v9344, %v9346
        %v9348 = vrot.slane %v9334, %v9347
        %v9349 = vcombine.low %v1016, %v1272
        %v9350 = vcombine.high %v1016, %v1272
        %v9352 = vunpack.c.l.s4 1983009808
        %v9353 = vunpack.c.0.s8 %v9352
        %v9354 = vlaneseq
        %v9355 = vshrl.u32 %v9354, 7
        %v9356 = vsub.s32 %v9353, %v9355
        %v9357 = vrot.slane %v9349, %v9356
        %v9359 = vunpack.c.l.s4 1983009808
        %v9360 = vunpack.c.0.s8 %v9359
        %v9361 = vlaneseq
        %v9362 = vshrl.u32 %v9361, 7
        %v9363 = vsub.s32 %v9360, %v9362
        %v9364 = vrot.slane %v9350, %v9363
        %v9365 = vcombine.low %v9309, %v9325
        %v9366 = vcombine.high %v9309, %v9325
        %v9368 = vunpack.c.l.s4 1934713408
        %v9369 = vunpack.c.0.s8 %v9368
        %v9370 = vlaneseq
        %v9371 = vshrl.u32 %v9370, 7
        %v9372 = vsub.s32 %v9369, %v9371
        %v9373 = vrot.slane %v9365, %v9372
        %v9375 = vunpack.c.l.s4 1934713408
        %v9376 = vunpack.c.0.s8 %v9375
        %v9377 = vlaneseq
        %v9378 = vshrl.u32 %v9377, 7
        %v9379 = vsub.s32 %v9376, %v9378
        %v9380 = vrot.slane %v9366, %v9379
        %v9381 = vcombine.low %v9316, %v9332
        %v9382 = vcombine.high %v9316, %v9332
        %v9384 = vunpack.c.l.s4 1934713408
        %v9385 = vunpack.c.0.s8 %v9384
        %v9386 = vlaneseq
        %v9387 = vshrl.u32 %v9386, 7
        %v9388 = vsub.s32 %v9385, %v9387
        %v9389 = vrot.slane %v9381, %v9388
        %v9391 = vunpack.c.l.s4 1934713408
        %v9392 = vunpack.c.0.s8 %v9391
        %v9393 = vlaneseq
        %v9394 = vshrl.u32 %v9393, 7
        %v9395 = vsub.s32 %v9392, %v9394
        %v9396 = vrot.slane %v9382, %v9395
        %v9397 = vcombine.low %v9341, %v9357
        %v9398 = vcombine.high %v9341, %v9357
        %v9400 = vunpack.c.l.s4 1934713408
        %v9401 = vunpack.c.0.s8 %v9400
        %v9402 = vlaneseq
        %v9403 = vshrl.u32 %v9402, 7
        %v9404 = vsub.s32 %v9401, %v9403
        %v9405 = vrot.slane %v9397, %v9404
        %v9407 = vunpack.c.l.s4 1934713408
        %v9408 = vunpack.c.0.s8 %v9407
        %v9409 = vlaneseq
        %v9410 = vshrl.u32 %v9409, 7
        %v9411 = vsub.s32 %v9408, %v9410
        %v9412 = vrot.slane %v9398, %v9411
        %v9413 = vcombine.low %v9348, %v9364
        %v9414 = vcombine.high %v9348, %v9364
        %v9416 = vunpack.c.l.s4 1934713408
        %v9417 = vunpack.c.0.s8 %v9416
        %v9418 = vlaneseq
        %v9419 = vshrl.u32 %v9418, 7
        %v9420 = vsub.s32 %v9417, %v9419
        %v9421 = vrot.slane %v9413, %v9420
        %v9423 = vunpack.c.l.s4 1934713408
        %v9424 = vunpack.c.0.s8 %v9423
        %v9425 = vlaneseq
        %v9426 = vshrl.u32 %v9425, 7
        %v9427 = vsub.s32 %v9424, %v9426
        %v9428 = vrot.slane %v9414, %v9427
        %v9429 = vcombine.low %v9373, %v9405
        %v9430 = vcombine.high %v9373, %v9405
        %v9431 = vcombine.low %v9380, %v9412
        %v9432 = vcombine.high %v9380, %v9412
        %v9433 = vcombine.low %v9389, %v9421
        %v9434 = vcombine.high %v9389, %v9421
        %v9435 = vcombine.low %v9396, %v9428
        %v9436 = vcombine.high %v9396, %v9428
        %v9437 = vcombine.low %v377, %v633
        %v9438 = vcombine.high %v377, %v633
        %v9440 = vunpack.c.l.s4 1983009808
        %v9441 = vunpack.c.0.s8 %v9440
        %v9442 = vlaneseq
        %v9443 = vshrl.u32 %v9442, 7
        %v9444 = vsub.s32 %v9441, %v9443
        %v9445 = vrot.slane %v9437, %v9444
        %v9447 = vunpack.c.l.s4 1983009808
        %v9448 = vunpack.c.0.s8 %v9447
        %v9449 = vlaneseq
        %v9450 = vshrl.u32 %v9449, 7
        %v9451 = vsub.s32 %v9448, %v9450
        %v9452 = vrot.slane %v9438, %v9451
        %v9453 = vcombine.low %v505, %v761
        %v9454 = vcombine.high %v505, %v761
        %v9456 = vunpack.c.l.s4 1983009808
        %v9457 = vunpack.c.0.s8 %v9456
        %v9458 = vlaneseq
        %v9459 = vshrl.u32 %v9458, 7
        %v9460 = vsub.s32 %v9457, %v9459
        %v9461 = vrot.slane %v9453, %v9460
        %v9463 = vunpack.c.l.s4 1983009808
        %v9464 = vunpack.c.0.s8 %v9463
        %v9465 = vlaneseq
        %v9466 = vshrl.u32 %v9465, 7
        %v9467 = vsub.s32 %v9464, %v9466
        %v9468 = vrot.slane %v9454, %v9467
        %v9469 = vcombine.low %v889, %v1145
        %v9470 = vcombine.high %v889, %v1145
        %v9472 = vunpack.c.l.s4 1983009808
        %v9473 = vunpack.c.0.s8 %v9472
        %v9474 = vlaneseq
        %v9475 = vshrl.u32 %v9474, 7
        %v9476 = vsub.s32 %v9473, %v9475
        %v9477 = vrot.slane %v9469, %v9476
        %v9479 = vunpack.c.l.s4 1983009808
        %v9480 = vunpack.c.0.s8 %v9479
        %v9481 = vlaneseq
        %v9482 = vshrl.u32 %v9481, 7
        %v9483 = vsub.s32 %v9480, %v9482
        %v9484 = vrot.slane %v9470, %v9483
        %v9485 = vcombine.low %v1017, %v1273
        %v9486 = vcombine.high %v1017, %v1273
        %v9488 = vunpack.c.l.s4 1983009808
        %v9489 = vunpack.c.0.s8 %v9488
        %v9490 = vlaneseq
        %v9491 = vshrl.u32 %v9490, 7
        %v9492 = vsub.s32 %v9489, %v9491
        %v9493 = vrot.slane %v9485, %v9492
        %v9495 = vunpack.c.l.s4 1983009808
        %v9496 = vunpack.c.0.s8 %v9495
        %v9497 = vlaneseq
        %v9498 = vshrl.u32 %v9497, 7
        %v9499 = vsub.s32 %v9496, %v9498
        %v9500 = vrot.slane %v9486, %v9499
        %v9501 = vcombine.low %v9445, %v9461
        %v9502 = vcombine.high %v9445, %v9461
        %v9504 = vunpack.c.l.s4 1934713408
        %v9505 = vunpack.c.0.s8 %v9504
        %v9506 = vlaneseq
        %v9507 = vshrl.u32 %v9506, 7
        %v9508 = vsub.s32 %v9505, %v9507
        %v9509 = vrot.slane %v9501, %v9508
        %v9511 = vunpack.c.l.s4 1934713408
        %v9512 = vunpack.c.0.s8 %v9511
        %v9513 = vlaneseq
        %v9514 = vshrl.u32 %v9513, 7
        %v9515 = vsub.s32 %v9512, %v9514
        %v9516 = vrot.slane %v9502, %v9515
        %v9517 = vcombine.low %v9452, %v9468
        %v9518 = vcombine.high %v9452, %v9468
        %v9520 = vunpack.c.l.s4 1934713408
        %v9521 = vunpack.c.0.s8 %v9520
        %v9522 = vlaneseq
        %v9523 = vshrl.u32 %v9522, 7
        %v9524 = vsub.s32 %v9521, %v9523
        %v9525 = vrot.slane %v9517, %v9524
        %v9527 = vunpack.c.l.s4 1934713408
        %v9528 = vunpack.c.0.s8 %v9527
        %v9529 = vlaneseq
        %v9530 = vshrl.u32 %v9529, 7
        %v9531 = vsub.s32 %v9528, %v9530
        %v9532 = vrot.slane %v9518, %v9531
        %v9533 = vcombine.low %v9477, %v9493
        %v9534 = vcombine.high %v9477, %v9493
        %v9536 = vunpack.c.l.s4 1934713408
        %v9537 = vunpack.c.0.s8 %v9536
        %v9538 = vlaneseq
        %v9539 = vshrl.u32 %v9538, 7
        %v9540 = vsub.s32 %v9537, %v9539
        %v9541 = vrot.slane %v9533, %v9540
        %v9543 = vunpack.c.l.s4 1934713408
        %v9544 = vunpack.c.0.s8 %v9543
        %v9545 = vlaneseq
        %v9546 = vshrl.u32 %v9545, 7
        %v9547 = vsub.s32 %v9544, %v9546
        %v9548 = vrot.slane %v9534, %v9547
        %v9549 = vcombine.low %v9484, %v9500
        %v9550 = vcombine.high %v9484, %v9500
        %v9552 = vunpack.c.l.s4 1934713408
        %v9553 = vunpack.c.0.s8 %v9552
        %v9554 = vlaneseq
        %v9555 = vshrl.u32 %v9554, 7
        %v9556 = vsub.s32 %v9553, %v9555
        %v9557 = vrot.slane %v9549, %v9556
        %v9559 = vunpack.c.l.s4 1934713408
        %v9560 = vunpack.c.0.s8 %v9559
        %v9561 = vlaneseq
        %v9562 = vshrl.u32 %v9561, 7
        %v9563 = vsub.s32 %v9560, %v9562
        %v9564 = vrot.slane %v9550, %v9563
        %v9565 = vcombine.low %v9509, %v9541
        %v9566 = vcombine.high %v9509, %v9541
        %v9567 = vcombine.low %v9516, %v9548
        %v9568 = vcombine.high %v9516, %v9548
        %v9569 = vcombine.low %v9525, %v9557
        %v9570 = vcombine.high %v9525, %v9557
        %v9571 = vcombine.low %v9532, %v9564
        %v9572 = vcombine.high %v9532, %v9564
        %v9573 = vcombine.low %v378, %v634
        %v9574 = vcombine.high %v378, %v634
        %v9576 = vunpack.c.l.s4 1983009808
        %v9577 = vunpack.c.0.s8 %v9576
        %v9578 = vlaneseq
        %v9579 = vshrl.u32 %v9578, 7
        %v9580 = vsub.s32 %v9577, %v9579
        %v9581 = vrot.slane %v9573, %v9580
        %v9583 = vunpack.c.l.s4 1983009808
        %v9584 = vunpack.c.0.s8 %v9583
        %v9585 = vlaneseq
        %v9586 = vshrl.u32 %v9585, 7
        %v9587 = vsub.s32 %v9584, %v9586
        %v9588 = vrot.slane %v9574, %v9587
        %v9589 = vcombine.low %v506, %v762
        %v9590 = vcombine.high %v506, %v762
        %v9592 = vunpack.c.l.s4 1983009808
        %v9593 = vunpack.c.0.s8 %v9592
        %v9594 = vlaneseq
        %v9595 = vshrl.u32 %v9594, 7
        %v9596 = vsub.s32 %v9593, %v9595
        %v9597 = vrot.slane %v9589, %v9596
        %v9599 = vunpack.c.l.s4 1983009808
        %v9600 = vunpack.c.0.s8 %v9599
        %v9601 = vlaneseq
        %v9602 = vshrl.u32 %v9601, 7
        %v9603 = vsub.s32 %v9600, %v9602
        %v9604 = vrot.slane %v9590, %v9603
        %v9605 = vcombine.low %v890, %v1146
        %v9606 = vcombine.high %v890, %v1146
        %v9608 = vunpack.c.l.s4 1983009808
        %v9609 = vunpack.c.0.s8 %v9608
        %v9610 = vlaneseq
        %v9611 = vshrl.u32 %v9610, 7
        %v9612 = vsub.s32 %v9609, %v9611
        %v9613 = vrot.slane %v9605, %v9612
        %v9615 = vunpack.c.l.s4 1983009808
        %v9616 = vunpack.c.0.s8 %v9615
        %v9617 = vlaneseq
        %v9618 = vshrl.u32 %v9617, 7
        %v9619 = vsub.s32 %v9616, %v9618
        %v9620 = vrot.slane %v9606, %v9619
        %v9621 = vcombine.low %v1018, %v1274
        %v9622 = vcombine.high %v1018, %v1274
        %v9624 = vunpack.c.l.s4 1983009808
        %v9625 = vunpack.c.0.s8 %v9624
        %v9626 = vlaneseq
        %v9627 = vshrl.u32 %v9626, 7
        %v9628 = vsub.s32 %v9625, %v9627
        %v9629 = vrot.slane %v9621, %v9628
        %v9631 = vunpack.c.l.s4 1983009808
        %v9632 = vunpack.c.0.s8 %v9631
        %v9633 = vlaneseq
        %v9634 = vshrl.u32 %v9633, 7
        %v9635 = vsub.s32 %v9632, %v9634
        %v9636 = vrot.slane %v9622, %v9635
        %v9637 = vcombine.low %v9581, %v9597
        %v9638 = vcombine.high %v9581, %v9597
        %v9640 = vunpack.c.l.s4 1934713408
        %v9641 = vunpack.c.0.s8 %v9640
        %v9642 = vlaneseq
        %v9643 = vshrl.u32 %v9642, 7
        %v9644 = vsub.s32 %v9641, %v9643
        %v9645 = vrot.slane %v9637, %v9644
        %v9647 = vunpack.c.l.s4 1934713408
        %v9648 = vunpack.c.0.s8 %v9647
        %v9649 = vlaneseq
        %v9650 = vshrl.u32 %v9649, 7
        %v9651 = vsub.s32 %v9648, %v9650
        %v9652 = vrot.slane %v9638, %v9651
        %v9653 = vcombine.low %v9588, %v9604
        %v9654 = vcombine.high %v9588, %v9604
        %v9656 = vunpack.c.l.s4 1934713408
        %v9657 = vunpack.c.0.s8 %v9656
        %v9658 = vlaneseq
        %v9659 = vshrl.u32 %v9658, 7
        %v9660 = vsub.s32 %v9657, %v9659
        %v9661 = vrot.slane %v9653, %v9660
        %v9663 = vunpack.c.l.s4 1934713408
        %v9664 = vunpack.c.0.s8 %v9663
        %v9665 = vlaneseq
        %v9666 = vshrl.u32 %v9665, 7
        %v9667 = vsub.s32 %v9664, %v9666
        %v9668 = vrot.slane %v9654, %v9667
        %v9669 = vcombine.low %v9613, %v9629
        %v9670 = vcombine.high %v9613, %v9629
        %v9672 = vunpack.c.l.s4 1934713408
        %v9673 = vunpack.c.0.s8 %v9672
        %v9674 = vlaneseq
        %v9675 = vshrl.u32 %v9674, 7
        %v9676 = vsub.s32 %v9673, %v9675
        %v9677 = vrot.slane %v9669, %v9676
        %v9679 = vunpack.c.l.s4 1934713408
        %v9680 = vunpack.c.0.s8 %v9679
        %v9681 = vlaneseq
        %v9682 = vshrl.u32 %v9681, 7
        %v9683 = vsub.s32 %v9680, %v9682
        %v9684 = vrot.slane %v9670, %v9683
        %v9685 = vcombine.low %v9620, %v9636
        %v9686 = vcombine.high %v9620, %v9636
        %v9688 = vunpack.c.l.s4 1934713408
        %v9689 = vunpack.c.0.s8 %v9688
        %v9690 = vlaneseq
        %v9691 = vshrl.u32 %v9690, 7
        %v9692 = vsub.s32 %v9689, %v9691
        %v9693 = vrot.slane %v9685, %v9692
        %v9695 = vunpack.c.l.s4 1934713408
        %v9696 = vunpack.c.0.s8 %v9695
        %v9697 = vlaneseq
        %v9698 = vshrl.u32 %v9697, 7
        %v9699 = vsub.s32 %v9696, %v9698
        %v9700 = vrot.slane %v9686, %v9699
        %v9701 = vcombine.low %v9645, %v9677
        %v9702 = vcombine.high %v9645, %v9677
        %v9703 = vcombine.low %v9652, %v9684
        %v9704 = vcombine.high %v9652, %v9684
        %v9705 = vcombine.low %v9661, %v9693
        %v9706 = vcombine.high %v9661, %v9693
        %v9707 = vcombine.low %v9668, %v9700
        %v9708 = vcombine.high %v9668, %v9700
        %v9709 = vcombine.low %v379, %v635
        %v9710 = vcombine.high %v379, %v635
        %v9712 = vunpack.c.l.s4 1983009808
        %v9713 = vunpack.c.0.s8 %v9712
        %v9714 = vlaneseq
        %v9715 = vshrl.u32 %v9714, 7
        %v9716 = vsub.s32 %v9713, %v9715
        %v9717 = vrot.slane %v9709, %v9716
        %v9719 = vunpack.c.l.s4 1983009808
        %v9720 = vunpack.c.0.s8 %v9719
        %v9721 = vlaneseq
        %v9722 = vshrl.u32 %v9721, 7
        %v9723 = vsub.s32 %v9720, %v9722
        %v9724 = vrot.slane %v9710, %v9723
        %v9725 = vcombine.low %v507, %v763
        %v9726 = vcombine.high %v507, %v763
        %v9728 = vunpack.c.l.s4 1983009808
        %v9729 = vunpack.c.0.s8 %v9728
        %v9730 = vlaneseq
        %v9731 = vshrl.u32 %v9730, 7
        %v9732 = vsub.s32 %v9729, %v9731
        %v9733 = vrot.slane %v9725, %v9732
        %v9735 = vunpack.c.l.s4 1983009808
        %v9736 = vunpack.c.0.s8 %v9735
        %v9737 = vlaneseq
        %v9738 = vshrl.u32 %v9737, 7
        %v9739 = vsub.s32 %v9736, %v9738
        %v9740 = vrot.slane %v9726, %v9739
        %v9741 = vcombine.low %v891, %v1147
        %v9742 = vcombine.high %v891, %v1147
        %v9744 = vunpack.c.l.s4 1983009808
        %v9745 = vunpack.c.0.s8 %v9744
        %v9746 = vlaneseq
        %v9747 = vshrl.u32 %v9746, 7
        %v9748 = vsub.s32 %v9745, %v9747
        %v9749 = vrot.slane %v9741, %v9748
        %v9751 = vunpack.c.l.s4 1983009808
        %v9752 = vunpack.c.0.s8 %v9751
        %v9753 = vlaneseq
        %v9754 = vshrl.u32 %v9753, 7
        %v9755 = vsub.s32 %v9752, %v9754
        %v9756 = vrot.slane %v9742, %v9755
        %v9757 = vcombine.low %v1019, %v1275
        %v9758 = vcombine.high %v1019, %v1275
        %v9760 = vunpack.c.l.s4 1983009808
        %v9761 = vunpack.c.0.s8 %v9760
        %v9762 = vlaneseq
        %v9763 = vshrl.u32 %v9762, 7
        %v9764 = vsub.s32 %v9761, %v9763
        %v9765 = vrot.slane %v9757, %v9764
        %v9767 = vunpack.c.l.s4 1983009808
        %v9768 = vunpack.c.0.s8 %v9767
        %v9769 = vlaneseq
        %v9770 = vshrl.u32 %v9769, 7
        %v9771 = vsub.s32 %v9768, %v9770
        %v9772 = vrot.slane %v9758, %v9771
        %v9773 = vcombine.low %v9717, %v9733
        %v9774 = vcombine.high %v9717, %v9733
        %v9776 = vunpack.c.l.s4 1934713408
        %v9777 = vunpack.c.0.s8 %v9776
        %v9778 = vlaneseq
        %v9779 = vshrl.u32 %v9778, 7
        %v9780 = vsub.s32 %v9777, %v9779
        %v9781 = vrot.slane %v9773, %v9780
        %v9783 = vunpack.c.l.s4 1934713408
        %v9784 = vunpack.c.0.s8 %v9783
        %v9785 = vlaneseq
        %v9786 = vshrl.u32 %v9785, 7
        %v9787 = vsub.s32 %v9784, %v9786
        %v9788 = vrot.slane %v9774, %v9787
        %v9789 = vcombine.low %v9724, %v9740
        %v9790 = vcombine.high %v9724, %v9740
        %v9792 = vunpack.c.l.s4 1934713408
        %v9793 = vunpack.c.0.s8 %v9792
        %v9794 = vlaneseq
        %v9795 = vshrl.u32 %v9794, 7
        %v9796 = vsub.s32 %v9793, %v9795
        %v9797 = vrot.slane %v9789, %v9796
        %v9799 = vunpack.c.l.s4 1934713408
        %v9800 = vunpack.c.0.s8 %v9799
        %v9801 = vlaneseq
        %v9802 = vshrl.u32 %v9801, 7
        %v9803 = vsub.s32 %v9800, %v9802
        %v9804 = vrot.slane %v9790, %v9803
        %v9805 = vcombine.low %v9749, %v9765
        %v9806 = vcombine.high %v9749, %v9765
        %v9808 = vunpack.c.l.s4 1934713408
        %v9809 = vunpack.c.0.s8 %v9808
        %v9810 = vlaneseq
        %v9811 = vshrl.u32 %v9810, 7
        %v9812 = vsub.s32 %v9809, %v9811
        %v9813 = vrot.slane %v9805, %v9812
        %v9815 = vunpack.c.l.s4 1934713408
        %v9816 = vunpack.c.0.s8 %v9815
        %v9817 = vlaneseq
        %v9818 = vshrl.u32 %v9817, 7
        %v9819 = vsub.s32 %v9816, %v9818
        %v9820 = vrot.slane %v9806, %v9819
        %v9821 = vcombine.low %v9756, %v9772
        %v9822 = vcombine.high %v9756, %v9772
        %v9824 = vunpack.c.l.s4 1934713408
        %v9825 = vunpack.c.0.s8 %v9824
        %v9826 = vlaneseq
        %v9827 = vshrl.u32 %v9826, 7
        %v9828 = vsub.s32 %v9825, %v9827
        %v9829 = vrot.slane %v9821, %v9828
        %v9831 = vunpack.c.l.s4 1934713408
        %v9832 = vunpack.c.0.s8 %v9831
        %v9833 = vlaneseq
        %v9834 = vshrl.u32 %v9833, 7
        %v9835 = vsub.s32 %v9832, %v9834
        %v9836 = vrot.slane %v9822, %v9835
        %v9837 = vcombine.low %v9781, %v9813
        %v9838 = vcombine.high %v9781, %v9813
        %v9839 = vcombine.low %v9788, %v9820
        %v9840 = vcombine.high %v9788, %v9820
        %v9841 = vcombine.low %v9797, %v9829
        %v9842 = vcombine.high %v9797, %v9829
        %v9843 = vcombine.low %v9804, %v9836
        %v9844 = vcombine.high %v9804, %v9836
        %v9845 = vcombine.low %v380, %v636
        %v9846 = vcombine.high %v380, %v636
        %v9848 = vunpack.c.l.s4 1983009808
        %v9849 = vunpack.c.0.s8 %v9848
        %v9850 = vlaneseq
        %v9851 = vshrl.u32 %v9850, 7
        %v9852 = vsub.s32 %v9849, %v9851
        %v9853 = vrot.slane %v9845, %v9852
        %v9855 = vunpack.c.l.s4 1983009808
        %v9856 = vunpack.c.0.s8 %v9855
        %v9857 = vlaneseq
        %v9858 = vshrl.u32 %v9857, 7
        %v9859 = vsub.s32 %v9856, %v9858
        %v9860 = vrot.slane %v9846, %v9859
        %v9861 = vcombine.low %v508, %v764
        %v9862 = vcombine.high %v508, %v764
        %v9864 = vunpack.c.l.s4 1983009808
        %v9865 = vunpack.c.0.s8 %v9864
        %v9866 = vlaneseq
        %v9867 = vshrl.u32 %v9866, 7
        %v9868 = vsub.s32 %v9865, %v9867
        %v9869 = vrot.slane %v9861, %v9868
        %v9871 = vunpack.c.l.s4 1983009808
        %v9872 = vunpack.c.0.s8 %v9871
        %v9873 = vlaneseq
        %v9874 = vshrl.u32 %v9873, 7
        %v9875 = vsub.s32 %v9872, %v9874
        %v9876 = vrot.slane %v9862, %v9875
        %v9877 = vcombine.low %v892, %v1148
        %v9878 = vcombine.high %v892, %v1148
        %v9880 = vunpack.c.l.s4 1983009808
        %v9881 = vunpack.c.0.s8 %v9880
        %v9882 = vlaneseq
        %v9883 = vshrl.u32 %v9882, 7
        %v9884 = vsub.s32 %v9881, %v9883
        %v9885 = vrot.slane %v9877, %v9884
        %v9887 = vunpack.c.l.s4 1983009808
        %v9888 = vunpack.c.0.s8 %v9887
        %v9889 = vlaneseq
        %v9890 = vshrl.u32 %v9889, 7
        %v9891 = vsub.s32 %v9888, %v9890
        %v9892 = vrot.slane %v9878, %v9891
        %v9893 = vcombine.low %v1020, %v1276
        %v9894 = vcombine.high %v1020, %v1276
        %v9896 = vunpack.c.l.s4 1983009808
        %v9897 = vunpack.c.0.s8 %v9896
        %v9898 = vlaneseq
        %v9899 = vshrl.u32 %v9898, 7
        %v9900 = vsub.s32 %v9897, %v9899
        %v9901 = vrot.slane %v9893, %v9900
        %v9903 = vunpack.c.l.s4 1983009808
        %v9904 = vunpack.c.0.s8 %v9903
        %v9905 = vlaneseq
        %v9906 = vshrl.u32 %v9905, 7
        %v9907 = vsub.s32 %v9904, %v9906
        %v9908 = vrot.slane %v9894, %v9907
        %v9909 = vcombine.low %v9853, %v9869
        %v9910 = vcombine.high %v9853, %v9869
        %v9912 = vunpack.c.l.s4 1934713408
        %v9913 = vunpack.c.0.s8 %v9912
        %v9914 = vlaneseq
        %v9915 = vshrl.u32 %v9914, 7
        %v9916 = vsub.s32 %v9913, %v9915
        %v9917 = vrot.slane %v9909, %v9916
        %v9919 = vunpack.c.l.s4 1934713408
        %v9920 = vunpack.c.0.s8 %v9919
        %v9921 = vlaneseq
        %v9922 = vshrl.u32 %v9921, 7
        %v9923 = vsub.s32 %v9920, %v9922
        %v9924 = vrot.slane %v9910, %v9923
        %v9925 = vcombine.low %v9860, %v9876
        %v9926 = vcombine.high %v9860, %v9876
        %v9928 = vunpack.c.l.s4 1934713408
        %v9929 = vunpack.c.0.s8 %v9928
        %v9930 = vlaneseq
        %v9931 = vshrl.u32 %v9930, 7
        %v9932 = vsub.s32 %v9929, %v9931
        %v9933 = vrot.slane %v9925, %v9932
        %v9935 = vunpack.c.l.s4 1934713408
        %v9936 = vunpack.c.0.s8 %v9935
        %v9937 = vlaneseq
        %v9938 = vshrl.u32 %v9937, 7
        %v9939 = vsub.s32 %v9936, %v9938
        %v9940 = vrot.slane %v9926, %v9939
        %v9941 = vcombine.low %v9885, %v9901
        %v9942 = vcombine.high %v9885, %v9901
        %v9944 = vunpack.c.l.s4 1934713408
        %v9945 = vunpack.c.0.s8 %v9944
        %v9946 = vlaneseq
        %v9947 = vshrl.u32 %v9946, 7
        %v9948 = vsub.s32 %v9945, %v9947
        %v9949 = vrot.slane %v9941, %v9948
        %v9951 = vunpack.c.l.s4 1934713408
        %v9952 = vunpack.c.0.s8 %v9951
        %v9953 = vlaneseq
        %v9954 = vshrl.u32 %v9953, 7
        %v9955 = vsub.s32 %v9952, %v9954
        %v9956 = vrot.slane %v9942, %v9955
        %v9957 = vcombine.low %v9892, %v9908
        %v9958 = vcombine.high %v9892, %v9908
        %v9960 = vunpack.c.l.s4 1934713408
        %v9961 = vunpack.c.0.s8 %v9960
        %v9962 = vlaneseq
        %v9963 = vshrl.u32 %v9962, 7
        %v9964 = vsub.s32 %v9961, %v9963
        %v9965 = vrot.slane %v9957, %v9964
        %v9967 = vunpack.c.l.s4 1934713408
        %v9968 = vunpack.c.0.s8 %v9967
        %v9969 = vlaneseq
        %v9970 = vshrl.u32 %v9969, 7
        %v9971 = vsub.s32 %v9968, %v9970
        %v9972 = vrot.slane %v9958, %v9971
        %v9973 = vcombine.low %v9917, %v9949
        %v9974 = vcombine.high %v9917, %v9949
        %v9975 = vcombine.low %v9924, %v9956
        %v9976 = vcombine.high %v9924, %v9956
        %v9977 = vcombine.low %v9933, %v9965
        %v9978 = vcombine.high %v9933, %v9965
        %v9979 = vcombine.low %v9940, %v9972
        %v9980 = vcombine.high %v9940, %v9972
        %9982 = vrot.lane.b32.xlu0 %v1406, 4
        %v9983 = vpop.permute.xlu0 %9982
        %9986 = vrot.lane.b32.xlu0 %v1407, 8
        %v9987 = vpop.permute.xlu0 %9986
        %9990 = vrot.lane.b32.xlu0 %v1408, 12
        %v9991 = vpop.permute.xlu0 %9990
        %9994 = vrot.lane.b32.xlu0 %v1409, 16
        %v9995 = vpop.permute.xlu0 %9994
        %9998 = vrot.lane.b32.xlu0 %v1410, 20
        %v9999 = vpop.permute.xlu0 %9998
        %10002 = vrot.lane.b32.xlu0 %v1411, 24
        %v10003 = vpop.permute.xlu0 %10002
        %10006 = vrot.lane.b32.xlu0 %v1412, 28
        %v10007 = vpop.permute.xlu0 %10006
        %10010 = vrot.lane.b32.xlu0 %v1541, 32
        %v10011 = vpop.permute.xlu0 %10010
        %10014 = vrot.lane.b32.xlu0 %v1542, 36
        %v10015 = vpop.permute.xlu0 %10014
        %10018 = vrot.lane.b32.xlu0 %v1543, 40
        %v10019 = vpop.permute.xlu0 %10018
        %10022 = vrot.lane.b32.xlu0 %v1544, 44
        %v10023 = vpop.permute.xlu0 %10022
        %10026 = vrot.lane.b32.xlu0 %v1545, 48
        %v10027 = vpop.permute.xlu0 %10026
        %10030 = vrot.lane.b32.xlu0 %v1546, 52
        %v10031 = vpop.permute.xlu0 %10030
        %10034 = vrot.lane.b32.xlu0 %v1547, 56
        %v10035 = vpop.permute.xlu0 %10034
        %10038 = vrot.lane.b32.xlu0 %v1548, 60
        %v10039 = vpop.permute.xlu0 %10038
        %10042 = vrot.lane.b32.xlu0 %v1677, 64
        %v10043 = vpop.permute.xlu0 %10042
        %10046 = vrot.lane.b32.xlu0 %v1678, 68
        %v10047 = vpop.permute.xlu0 %10046
        %10050 = vrot.lane.b32.xlu0 %v1679, 72
        %v10051 = vpop.permute.xlu0 %10050
        %10054 = vrot.lane.b32.xlu0 %v1680, 76
        %v10055 = vpop.permute.xlu0 %10054
        %10058 = vrot.lane.b32.xlu0 %v1681, 80
        %v10059 = vpop.permute.xlu0 %10058
        %10062 = vrot.lane.b32.xlu0 %v1682, 84
        %v10063 = vpop.permute.xlu0 %10062
        %10066 = vrot.lane.b32.xlu0 %v1683, 88
        %v10067 = vpop.permute.xlu0 %10066
        %10070 = vrot.lane.b32.xlu0 %v1684, 92
        %v10071 = vpop.permute.xlu0 %10070
        %10074 = vrot.lane.b32.xlu0 %v1813, 96
        %v10075 = vpop.permute.xlu0 %10074
        %10078 = vrot.lane.b32.xlu0 %v1814, 100
        %v10079 = vpop.permute.xlu0 %10078
        %10082 = vrot.lane.b32.xlu0 %v1815, 104
        %v10083 = vpop.permute.xlu0 %10082
        %10086 = vrot.lane.b32.xlu0 %v1816, 108
        %v10087 = vpop.permute.xlu0 %10086
        %10090 = vrot.lane.b32.xlu0 %v1817, 112
        %v10091 = vpop.permute.xlu0 %10090
        %10094 = vrot.lane.b32.xlu0 %v1818, 116
        %v10095 = vpop.permute.xlu0 %10094
        %10098 = vrot.lane.b32.xlu0 %v1819, 120
        %v10099 = vpop.permute.xlu0 %10098
        %10102 = vrot.lane.b32.xlu0 %v1820, 124
        %v10103 = vpop.permute.xlu0 %10102
        %10106 = vrot.lane.b32.xlu0 %v1950, 4
        %v10107 = vpop.permute.xlu0 %10106
        %10110 = vrot.lane.b32.xlu0 %v1951, 8
        %v10111 = vpop.permute.xlu0 %10110
        %10114 = vrot.lane.b32.xlu0 %v1952, 12
        %v10115 = vpop.permute.xlu0 %10114
        %10118 = vrot.lane.b32.xlu0 %v1953, 16
        %v10119 = vpop.permute.xlu0 %10118
        %10122 = vrot.lane.b32.xlu0 %v1954, 20
        %v10123 = vpop.permute.xlu0 %10122
        %10126 = vrot.lane.b32.xlu0 %v1955, 24
        %v10127 = vpop.permute.xlu0 %10126
        %10130 = vrot.lane.b32.xlu0 %v1956, 28
        %v10131 = vpop.permute.xlu0 %10130
        %10134 = vrot.lane.b32.xlu0 %v2085, 32
        %v10135 = vpop.permute.xlu0 %10134
        %10138 = vrot.lane.b32.xlu0 %v2086, 36
        %v10139 = vpop.permute.xlu0 %10138
        %10142 = vrot.lane.b32.xlu0 %v2087, 40
        %v10143 = vpop.permute.xlu0 %10142
        %10146 = vrot.lane.b32.xlu0 %v2088, 44
        %v10147 = vpop.permute.xlu0 %10146
        %10150 = vrot.lane.b32.xlu0 %v2089, 48
        %v10151 = vpop.permute.xlu0 %10150
        %10154 = vrot.lane.b32.xlu0 %v2090, 52
        %v10155 = vpop.permute.xlu0 %10154
        %10158 = vrot.lane.b32.xlu0 %v2091, 56
        %v10159 = vpop.permute.xlu0 %10158
        %10162 = vrot.lane.b32.xlu0 %v2092, 60
        %v10163 = vpop.permute.xlu0 %10162
        %10166 = vrot.lane.b32.xlu0 %v2221, 64
        %v10167 = vpop.permute.xlu0 %10166
        %10170 = vrot.lane.b32.xlu0 %v2222, 68
        %v10171 = vpop.permute.xlu0 %10170
        %10174 = vrot.lane.b32.xlu0 %v2223, 72
        %v10175 = vpop.permute.xlu0 %10174
        %10178 = vrot.lane.b32.xlu0 %v2224, 76
        %v10179 = vpop.permute.xlu0 %10178
        %10182 = vrot.lane.b32.xlu0 %v2225, 80
        %v10183 = vpop.permute.xlu0 %10182
        %10186 = vrot.lane.b32.xlu0 %v2226, 84
        %v10187 = vpop.permute.xlu0 %10186
        %10190 = vrot.lane.b32.xlu0 %v2227, 88
        %v10191 = vpop.permute.xlu0 %10190
        %10194 = vrot.lane.b32.xlu0 %v2228, 92
        %v10195 = vpop.permute.xlu0 %10194
        %10198 = vrot.lane.b32.xlu0 %v2357, 96
        %v10199 = vpop.permute.xlu0 %10198
        %10202 = vrot.lane.b32.xlu0 %v2358, 100
        %v10203 = vpop.permute.xlu0 %10202
        %10206 = vrot.lane.b32.xlu0 %v2359, 104
        %v10207 = vpop.permute.xlu0 %10206
        %10210 = vrot.lane.b32.xlu0 %v2360, 108
        %v10211 = vpop.permute.xlu0 %10210
        %10214 = vrot.lane.b32.xlu0 %v2361, 112
        %v10215 = vpop.permute.xlu0 %10214
        %10218 = vrot.lane.b32.xlu0 %v2362, 116
        %v10219 = vpop.permute.xlu0 %10218
        %10222 = vrot.lane.b32.xlu0 %v2363, 120
        %v10223 = vpop.permute.xlu0 %10222
        %10226 = vrot.lane.b32.xlu0 %v2364, 124
        %v10227 = vpop.permute.xlu0 %10226
        %10230 = vrot.lane.b32.xlu0 %v2494, 4
        %v10231 = vpop.permute.xlu0 %10230
        %10234 = vrot.lane.b32.xlu0 %v2495, 8
        %v10235 = vpop.permute.xlu0 %10234
        %10238 = vrot.lane.b32.xlu0 %v2496, 12
        %v10239 = vpop.permute.xlu0 %10238
        %10242 = vrot.lane.b32.xlu0 %v2497, 16
        %v10243 = vpop.permute.xlu0 %10242
        %10246 = vrot.lane.b32.xlu0 %v2498, 20
        %v10247 = vpop.permute.xlu0 %10246
        %10250 = vrot.lane.b32.xlu0 %v2499, 24
        %v10251 = vpop.permute.xlu0 %10250
        %10254 = vrot.lane.b32.xlu0 %v2500, 28
        %v10255 = vpop.permute.xlu0 %10254
        %10258 = vrot.lane.b32.xlu0 %v2629, 32
        %v10259 = vpop.permute.xlu0 %10258
        %10262 = vrot.lane.b32.xlu0 %v2630, 36
        %v10263 = vpop.permute.xlu0 %10262
        %10266 = vrot.lane.b32.xlu0 %v2631, 40
        %v10267 = vpop.permute.xlu0 %10266
        %10270 = vrot.lane.b32.xlu0 %v2632, 44
        %v10271 = vpop.permute.xlu0 %10270
        %10274 = vrot.lane.b32.xlu0 %v2633, 48
        %v10275 = vpop.permute.xlu0 %10274
        %10278 = vrot.lane.b32.xlu0 %v2634, 52
        %v10279 = vpop.permute.xlu0 %10278
        %10282 = vrot.lane.b32.xlu0 %v2635, 56
        %v10283 = vpop.permute.xlu0 %10282
        %10286 = vrot.lane.b32.xlu0 %v2636, 60
        %v10287 = vpop.permute.xlu0 %10286
        %10290 = vrot.lane.b32.xlu0 %v2765, 64
        %v10291 = vpop.permute.xlu0 %10290
        %10294 = vrot.lane.b32.xlu0 %v2766, 68
        %v10295 = vpop.permute.xlu0 %10294
        %10298 = vrot.lane.b32.xlu0 %v2767, 72
        %v10299 = vpop.permute.xlu0 %10298
        %10302 = vrot.lane.b32.xlu0 %v2768, 76
        %v10303 = vpop.permute.xlu0 %10302
        %10306 = vrot.lane.b32.xlu0 %v2769, 80
        %v10307 = vpop.permute.xlu0 %10306
        %10310 = vrot.lane.b32.xlu0 %v2770, 84
        %v10311 = vpop.permute.xlu0 %10310
        %10314 = vrot.lane.b32.xlu0 %v2771, 88
        %v10315 = vpop.permute.xlu0 %10314
        %10318 = vrot.lane.b32.xlu0 %v2772, 92
        %v10319 = vpop.permute.xlu0 %10318
        %10322 = vrot.lane.b32.xlu0 %v2901, 96
        %v10323 = vpop.permute.xlu0 %10322
        %10326 = vrot.lane.b32.xlu0 %v2902, 100
        %v10327 = vpop.permute.xlu0 %10326
        %10330 = vrot.lane.b32.xlu0 %v2903, 104
        %v10331 = vpop.permute.xlu0 %10330
        %10334 = vrot.lane.b32.xlu0 %v2904, 108
        %v10335 = vpop.permute.xlu0 %10334
        %10338 = vrot.lane.b32.xlu0 %v2905, 112
        %v10339 = vpop.permute.xlu0 %10338
        %10342 = vrot.lane.b32.xlu0 %v2906, 116
        %v10343 = vpop.permute.xlu0 %10342
        %10346 = vrot.lane.b32.xlu0 %v2907, 120
        %v10347 = vpop.permute.xlu0 %10346
        %10350 = vrot.lane.b32.xlu0 %v2908, 124
        %v10351 = vpop.permute.xlu0 %10350
        %10354 = vrot.lane.b32.xlu0 %v3038, 4
        %v10355 = vpop.permute.xlu0 %10354
        %10358 = vrot.lane.b32.xlu0 %v3039, 8
        %v10359 = vpop.permute.xlu0 %10358
        %10362 = vrot.lane.b32.xlu0 %v3040, 12
        %v10363 = vpop.permute.xlu0 %10362
        %10366 = vrot.lane.b32.xlu0 %v3041, 16
        %v10367 = vpop.permute.xlu0 %10366
        %10370 = vrot.lane.b32.xlu0 %v3042, 20
        %v10371 = vpop.permute.xlu0 %10370
        %10374 = vrot.lane.b32.xlu0 %v3043, 24
        %v10375 = vpop.permute.xlu0 %10374
        %10378 = vrot.lane.b32.xlu0 %v3044, 28
        %v10379 = vpop.permute.xlu0 %10378
        %10382 = vrot.lane.b32.xlu0 %v3173, 32
        %v10383 = vpop.permute.xlu0 %10382
        %10386 = vrot.lane.b32.xlu0 %v3174, 36
        %v10387 = vpop.permute.xlu0 %10386
        %10390 = vrot.lane.b32.xlu0 %v3175, 40
        %v10391 = vpop.permute.xlu0 %10390
        %10394 = vrot.lane.b32.xlu0 %v3176, 44
        %v10395 = vpop.permute.xlu0 %10394
        %10398 = vrot.lane.b32.xlu0 %v3177, 48
        %v10399 = vpop.permute.xlu0 %10398
        %10402 = vrot.lane.b32.xlu0 %v3178, 52
        %v10403 = vpop.permute.xlu0 %10402
        %10406 = vrot.lane.b32.xlu0 %v3179, 56
        %v10407 = vpop.permute.xlu0 %10406
        %10410 = vrot.lane.b32.xlu0 %v3180, 60
        %v10411 = vpop.permute.xlu0 %10410
        %10414 = vrot.lane.b32.xlu0 %v3309, 64
        %v10415 = vpop.permute.xlu0 %10414
        %10418 = vrot.lane.b32.xlu0 %v3310, 68
        %v10419 = vpop.permute.xlu0 %10418
        %10422 = vrot.lane.b32.xlu0 %v3311, 72
        %v10423 = vpop.permute.xlu0 %10422
        %10426 = vrot.lane.b32.xlu0 %v3312, 76
        %v10427 = vpop.permute.xlu0 %10426
        %10430 = vrot.lane.b32.xlu0 %v3313, 80
        %v10431 = vpop.permute.xlu0 %10430
        %10434 = vrot.lane.b32.xlu0 %v3314, 84
        %v10435 = vpop.permute.xlu0 %10434
        %10438 = vrot.lane.b32.xlu0 %v3315, 88
        %v10439 = vpop.permute.xlu0 %10438
        %10442 = vrot.lane.b32.xlu0 %v3316, 92
        %v10443 = vpop.permute.xlu0 %10442
        %10446 = vrot.lane.b32.xlu0 %v3445, 96
        %v10447 = vpop.permute.xlu0 %10446
        %10450 = vrot.lane.b32.xlu0 %v3446, 100
        %v10451 = vpop.permute.xlu0 %10450
        %10454 = vrot.lane.b32.xlu0 %v3447, 104
        %v10455 = vpop.permute.xlu0 %10454
        %10458 = vrot.lane.b32.xlu0 %v3448, 108
        %v10459 = vpop.permute.xlu0 %10458
        %10462 = vrot.lane.b32.xlu0 %v3449, 112
        %v10463 = vpop.permute.xlu0 %10462
        %10466 = vrot.lane.b32.xlu0 %v3450, 116
        %v10467 = vpop.permute.xlu0 %10466
        %10470 = vrot.lane.b32.xlu0 %v3451, 120
        %v10471 = vpop.permute.xlu0 %10470
        %10474 = vrot.lane.b32.xlu0 %v3452, 124
        %v10475 = vpop.permute.xlu0 %10474
        %10478 = vrot.lane.b32.xlu0 %v3582, 4
        %v10479 = vpop.permute.xlu0 %10478
        %10482 = vrot.lane.b32.xlu0 %v3583, 8
        %v10483 = vpop.permute.xlu0 %10482
        %10486 = vrot.lane.b32.xlu0 %v3584, 12
        %v10487 = vpop.permute.xlu0 %10486
        %10490 = vrot.lane.b32.xlu0 %v3585, 16
        %v10491 = vpop.permute.xlu0 %10490
        %10494 = vrot.lane.b32.xlu0 %v3586, 20
        %v10495 = vpop.permute.xlu0 %10494
        %10498 = vrot.lane.b32.xlu0 %v3587, 24
        %v10499 = vpop.permute.xlu0 %10498
        %10502 = vrot.lane.b32.xlu0 %v3588, 28
        %v10503 = vpop.permute.xlu0 %10502
        %10506 = vrot.lane.b32.xlu0 %v3717, 32
        %v10507 = vpop.permute.xlu0 %10506
        %10510 = vrot.lane.b32.xlu0 %v3718, 36
        %v10511 = vpop.permute.xlu0 %10510
        %10514 = vrot.lane.b32.xlu0 %v3719, 40
        %v10515 = vpop.permute.xlu0 %10514
        %10518 = vrot.lane.b32.xlu0 %v3720, 44
        %v10519 = vpop.permute.xlu0 %10518
        %10522 = vrot.lane.b32.xlu0 %v3721, 48
        %v10523 = vpop.permute.xlu0 %10522
        %10526 = vrot.lane.b32.xlu0 %v3722, 52
        %v10527 = vpop.permute.xlu0 %10526
        %10530 = vrot.lane.b32.xlu0 %v3723, 56
        %v10531 = vpop.permute.xlu0 %10530
        %10534 = vrot.lane.b32.xlu0 %v3724, 60
        %v10535 = vpop.permute.xlu0 %10534
        %10538 = vrot.lane.b32.xlu0 %v3853, 64
        %v10539 = vpop.permute.xlu0 %10538
        %10542 = vrot.lane.b32.xlu0 %v3854, 68
        %v10543 = vpop.permute.xlu0 %10542
        %10546 = vrot.lane.b32.xlu0 %v3855, 72
        %v10547 = vpop.permute.xlu0 %10546
        %10550 = vrot.lane.b32.xlu0 %v3856, 76
        %v10551 = vpop.permute.xlu0 %10550
        %10554 = vrot.lane.b32.xlu0 %v3857, 80
        %v10555 = vpop.permute.xlu0 %10554
        %10558 = vrot.lane.b32.xlu0 %v3858, 84
        %v10559 = vpop.permute.xlu0 %10558
        %10562 = vrot.lane.b32.xlu0 %v3859, 88
        %v10563 = vpop.permute.xlu0 %10562
        %10566 = vrot.lane.b32.xlu0 %v3860, 92
        %v10567 = vpop.permute.xlu0 %10566
        %10570 = vrot.lane.b32.xlu0 %v3989, 96
        %v10571 = vpop.permute.xlu0 %10570
        %10574 = vrot.lane.b32.xlu0 %v3990, 100
        %v10575 = vpop.permute.xlu0 %10574
        %10578 = vrot.lane.b32.xlu0 %v3991, 104
        %v10579 = vpop.permute.xlu0 %10578
        %10582 = vrot.lane.b32.xlu0 %v3992, 108
        %v10583 = vpop.permute.xlu0 %10582
        %10586 = vrot.lane.b32.xlu0 %v3993, 112
        %v10587 = vpop.permute.xlu0 %10586
        %10590 = vrot.lane.b32.xlu0 %v3994, 116
        %v10591 = vpop.permute.xlu0 %10590
        %10594 = vrot.lane.b32.xlu0 %v3995, 120
        %v10595 = vpop.permute.xlu0 %10594
        %10598 = vrot.lane.b32.xlu0 %v3996, 124
        %v10599 = vpop.permute.xlu0 %10598
        %10602 = vrot.lane.b32.xlu0 %v4126, 4
        %v10603 = vpop.permute.xlu0 %10602
        %10606 = vrot.lane.b32.xlu0 %v4127, 8
        %v10607 = vpop.permute.xlu0 %10606
        %10610 = vrot.lane.b32.xlu0 %v4128, 12
        %v10611 = vpop.permute.xlu0 %10610
        %10614 = vrot.lane.b32.xlu0 %v4129, 16
        %v10615 = vpop.permute.xlu0 %10614
        %10618 = vrot.lane.b32.xlu0 %v4130, 20
        %v10619 = vpop.permute.xlu0 %10618
        %10622 = vrot.lane.b32.xlu0 %v4131, 24
        %v10623 = vpop.permute.xlu0 %10622
        %10626 = vrot.lane.b32.xlu0 %v4132, 28
        %v10627 = vpop.permute.xlu0 %10626
        %10630 = vrot.lane.b32.xlu0 %v4261, 32
        %v10631 = vpop.permute.xlu0 %10630
        %10634 = vrot.lane.b32.xlu0 %v4262, 36
        %v10635 = vpop.permute.xlu0 %10634
        %10638 = vrot.lane.b32.xlu0 %v4263, 40
        %v10639 = vpop.permute.xlu0 %10638
        %10642 = vrot.lane.b32.xlu0 %v4264, 44
        %v10643 = vpop.permute.xlu0 %10642
        %10646 = vrot.lane.b32.xlu0 %v4265, 48
        %v10647 = vpop.permute.xlu0 %10646
        %10650 = vrot.lane.b32.xlu0 %v4266, 52
        %v10651 = vpop.permute.xlu0 %10650
        %10654 = vrot.lane.b32.xlu0 %v4267, 56
        %v10655 = vpop.permute.xlu0 %10654
        %10658 = vrot.lane.b32.xlu0 %v4268, 60
        %v10659 = vpop.permute.xlu0 %10658
        %10662 = vrot.lane.b32.xlu0 %v4397, 64
        %v10663 = vpop.permute.xlu0 %10662
        %10666 = vrot.lane.b32.xlu0 %v4398, 68
        %v10667 = vpop.permute.xlu0 %10666
        %10670 = vrot.lane.b32.xlu0 %v4399, 72
        %v10671 = vpop.permute.xlu0 %10670
        %10674 = vrot.lane.b32.xlu0 %v4400, 76
        %v10675 = vpop.permute.xlu0 %10674
        %10678 = vrot.lane.b32.xlu0 %v4401, 80
        %v10679 = vpop.permute.xlu0 %10678
        %10682 = vrot.lane.b32.xlu0 %v4402, 84
        %v10683 = vpop.permute.xlu0 %10682
        %10686 = vrot.lane.b32.xlu0 %v4403, 88
        %v10687 = vpop.permute.xlu0 %10686
        %10690 = vrot.lane.b32.xlu0 %v4404, 92
        %v10691 = vpop.permute.xlu0 %10690
        %10694 = vrot.lane.b32.xlu0 %v4533, 96
        %v10695 = vpop.permute.xlu0 %10694
        %10698 = vrot.lane.b32.xlu0 %v4534, 100
        %v10699 = vpop.permute.xlu0 %10698
        %10702 = vrot.lane.b32.xlu0 %v4535, 104
        %v10703 = vpop.permute.xlu0 %10702
        %10706 = vrot.lane.b32.xlu0 %v4536, 108
        %v10707 = vpop.permute.xlu0 %10706
        %10710 = vrot.lane.b32.xlu0 %v4537, 112
        %v10711 = vpop.permute.xlu0 %10710
        %10714 = vrot.lane.b32.xlu0 %v4538, 116
        %v10715 = vpop.permute.xlu0 %10714
        %10718 = vrot.lane.b32.xlu0 %v4539, 120
        %v10719 = vpop.permute.xlu0 %10718
        %10722 = vrot.lane.b32.xlu0 %v4540, 124
        %v10723 = vpop.permute.xlu0 %10722
        %10726 = vrot.lane.b32.xlu0 %v4670, 4
        %v10727 = vpop.permute.xlu0 %10726
        %10730 = vrot.lane.b32.xlu0 %v4671, 8
        %v10731 = vpop.permute.xlu0 %10730
        %10734 = vrot.lane.b32.xlu0 %v4672, 12
        %v10735 = vpop.permute.xlu0 %10734
        %10738 = vrot.lane.b32.xlu0 %v4673, 16
        %v10739 = vpop.permute.xlu0 %10738
        %10742 = vrot.lane.b32.xlu0 %v4674, 20
        %v10743 = vpop.permute.xlu0 %10742
        %10746 = vrot.lane.b32.xlu0 %v4675, 24
        %v10747 = vpop.permute.xlu0 %10746
        %10750 = vrot.lane.b32.xlu0 %v4676, 28
        %v10751 = vpop.permute.xlu0 %10750
        %10754 = vrot.lane.b32.xlu0 %v4805, 32
        %v10755 = vpop.permute.xlu0 %10754
        %10758 = vrot.lane.b32.xlu0 %v4806, 36
        %v10759 = vpop.permute.xlu0 %10758
        %10762 = vrot.lane.b32.xlu0 %v4807, 40
        %v10763 = vpop.permute.xlu0 %10762
        %10766 = vrot.lane.b32.xlu0 %v4808, 44
        %v10767 = vpop.permute.xlu0 %10766
        %10770 = vrot.lane.b32.xlu0 %v4809, 48
        %v10771 = vpop.permute.xlu0 %10770
        %10774 = vrot.lane.b32.xlu0 %v4810, 52
        %v10775 = vpop.permute.xlu0 %10774
        %10778 = vrot.lane.b32.xlu0 %v4811, 56
        %v10779 = vpop.permute.xlu0 %10778
        %10782 = vrot.lane.b32.xlu0 %v4812, 60
        %v10783 = vpop.permute.xlu0 %10782
        %10786 = vrot.lane.b32.xlu0 %v4941, 64
        %v10787 = vpop.permute.xlu0 %10786
        %10790 = vrot.lane.b32.xlu0 %v4942, 68
        %v10791 = vpop.permute.xlu0 %10790
        %10794 = vrot.lane.b32.xlu0 %v4943, 72
        %v10795 = vpop.permute.xlu0 %10794
        %10798 = vrot.lane.b32.xlu0 %v4944, 76
        %v10799 = vpop.permute.xlu0 %10798
        %10802 = vrot.lane.b32.xlu0 %v4945, 80
        %v10803 = vpop.permute.xlu0 %10802
        %10806 = vrot.lane.b32.xlu0 %v4946, 84
        %v10807 = vpop.permute.xlu0 %10806
        %10810 = vrot.lane.b32.xlu0 %v4947, 88
        %v10811 = vpop.permute.xlu0 %10810
        %10814 = vrot.lane.b32.xlu0 %v4948, 92
        %v10815 = vpop.permute.xlu0 %10814
        %10818 = vrot.lane.b32.xlu0 %v5077, 96
        %v10819 = vpop.permute.xlu0 %10818
        %10822 = vrot.lane.b32.xlu0 %v5078, 100
        %v10823 = vpop.permute.xlu0 %10822
        %10826 = vrot.lane.b32.xlu0 %v5079, 104
        %v10827 = vpop.permute.xlu0 %10826
        %10830 = vrot.lane.b32.xlu0 %v5080, 108
        %v10831 = vpop.permute.xlu0 %10830
        %10834 = vrot.lane.b32.xlu0 %v5081, 112
        %v10835 = vpop.permute.xlu0 %10834
        %10838 = vrot.lane.b32.xlu0 %v5082, 116
        %v10839 = vpop.permute.xlu0 %10838
        %10842 = vrot.lane.b32.xlu0 %v5083, 120
        %v10843 = vpop.permute.xlu0 %10842
        %10846 = vrot.lane.b32.xlu0 %v5084, 124
        %v10847 = vpop.permute.xlu0 %10846
        %10850 = vrot.lane.b32.xlu0 %v5214, 4
        %v10851 = vpop.permute.xlu0 %10850
        %10854 = vrot.lane.b32.xlu0 %v5215, 8
        %v10855 = vpop.permute.xlu0 %10854
        %10858 = vrot.lane.b32.xlu0 %v5216, 12
        %v10859 = vpop.permute.xlu0 %10858
        %10862 = vrot.lane.b32.xlu0 %v5217, 16
        %v10863 = vpop.permute.xlu0 %10862
        %10866 = vrot.lane.b32.xlu0 %v5218, 20
        %v10867 = vpop.permute.xlu0 %10866
        %10870 = vrot.lane.b32.xlu0 %v5219, 24
        %v10871 = vpop.permute.xlu0 %10870
        %10874 = vrot.lane.b32.xlu0 %v5220, 28
        %v10875 = vpop.permute.xlu0 %10874
        %10878 = vrot.lane.b32.xlu0 %v5349, 32
        %v10879 = vpop.permute.xlu0 %10878
        %10882 = vrot.lane.b32.xlu0 %v5350, 36
        %v10883 = vpop.permute.xlu0 %10882
        %10886 = vrot.lane.b32.xlu0 %v5351, 40
        %v10887 = vpop.permute.xlu0 %10886
        %10890 = vrot.lane.b32.xlu0 %v5352, 44
        %v10891 = vpop.permute.xlu0 %10890
        %10894 = vrot.lane.b32.xlu0 %v5353, 48
        %v10895 = vpop.permute.xlu0 %10894
        %10898 = vrot.lane.b32.xlu0 %v5354, 52
        %v10899 = vpop.permute.xlu0 %10898
        %10902 = vrot.lane.b32.xlu0 %v5355, 56
        %v10903 = vpop.permute.xlu0 %10902
        %10906 = vrot.lane.b32.xlu0 %v5356, 60
        %v10907 = vpop.permute.xlu0 %10906
        %10910 = vrot.lane.b32.xlu0 %v5485, 64
        %v10911 = vpop.permute.xlu0 %10910
        %10914 = vrot.lane.b32.xlu0 %v5486, 68
        %v10915 = vpop.permute.xlu0 %10914
        %10918 = vrot.lane.b32.xlu0 %v5487, 72
        %v10919 = vpop.permute.xlu0 %10918
        %10922 = vrot.lane.b32.xlu0 %v5488, 76
        %v10923 = vpop.permute.xlu0 %10922
        %10926 = vrot.lane.b32.xlu0 %v5489, 80
        %v10927 = vpop.permute.xlu0 %10926
        %10930 = vrot.lane.b32.xlu0 %v5490, 84
        %v10931 = vpop.permute.xlu0 %10930
        %10934 = vrot.lane.b32.xlu0 %v5491, 88
        %v10935 = vpop.permute.xlu0 %10934
        %10938 = vrot.lane.b32.xlu0 %v5492, 92
        %v10939 = vpop.permute.xlu0 %10938
        %10942 = vrot.lane.b32.xlu0 %v5621, 96
        %v10943 = vpop.permute.xlu0 %10942
        %10946 = vrot.lane.b32.xlu0 %v5622, 100
        %v10947 = vpop.permute.xlu0 %10946
        %10950 = vrot.lane.b32.xlu0 %v5623, 104
        %v10951 = vpop.permute.xlu0 %10950
        %10954 = vrot.lane.b32.xlu0 %v5624, 108
        %v10955 = vpop.permute.xlu0 %10954
        %10958 = vrot.lane.b32.xlu0 %v5625, 112
        %v10959 = vpop.permute.xlu0 %10958
        %10962 = vrot.lane.b32.xlu0 %v5626, 116
        %v10963 = vpop.permute.xlu0 %10962
        %10966 = vrot.lane.b32.xlu0 %v5627, 120
        %v10967 = vpop.permute.xlu0 %10966
        %10970 = vrot.lane.b32.xlu0 %v5628, 124
        %v10971 = vpop.permute.xlu0 %10970
        %10974 = vrot.lane.b32.xlu0 %v5758, 4
        %v10975 = vpop.permute.xlu0 %10974
        %10978 = vrot.lane.b32.xlu0 %v5759, 8
        %v10979 = vpop.permute.xlu0 %10978
        %10982 = vrot.lane.b32.xlu0 %v5760, 12
        %v10983 = vpop.permute.xlu0 %10982
        %10986 = vrot.lane.b32.xlu0 %v5761, 16
        %v10987 = vpop.permute.xlu0 %10986
        %10990 = vrot.lane.b32.xlu0 %v5762, 20
        %v10991 = vpop.permute.xlu0 %10990
        %10994 = vrot.lane.b32.xlu0 %v5763, 24
        %v10995 = vpop.permute.xlu0 %10994
        %10998 = vrot.lane.b32.xlu0 %v5764, 28
        %v10999 = vpop.permute.xlu0 %10998
        %11002 = vrot.lane.b32.xlu0 %v5893, 32
        %v11003 = vpop.permute.xlu0 %11002
        %11006 = vrot.lane.b32.xlu0 %v5894, 36
        %v11007 = vpop.permute.xlu0 %11006
        %11010 = vrot.lane.b32.xlu0 %v5895, 40
        %v11011 = vpop.permute.xlu0 %11010
        %11014 = vrot.lane.b32.xlu0 %v5896, 44
        %v11015 = vpop.permute.xlu0 %11014
        %11018 = vrot.lane.b32.xlu0 %v5897, 48
        %v11019 = vpop.permute.xlu0 %11018
        %11022 = vrot.lane.b32.xlu0 %v5898, 52
        %v11023 = vpop.permute.xlu0 %11022
        %11026 = vrot.lane.b32.xlu0 %v5899, 56
        %v11027 = vpop.permute.xlu0 %11026
        %11030 = vrot.lane.b32.xlu0 %v5900, 60
        %v11031 = vpop.permute.xlu0 %11030
        %11034 = vrot.lane.b32.xlu0 %v6029, 64
        %v11035 = vpop.permute.xlu0 %11034
        %11038 = vrot.lane.b32.xlu0 %v6030, 68
        %v11039 = vpop.permute.xlu0 %11038
        %11042 = vrot.lane.b32.xlu0 %v6031, 72
        %v11043 = vpop.permute.xlu0 %11042
        %11046 = vrot.lane.b32.xlu0 %v6032, 76
        %v11047 = vpop.permute.xlu0 %11046
        %11050 = vrot.lane.b32.xlu0 %v6033, 80
        %v11051 = vpop.permute.xlu0 %11050
        %11054 = vrot.lane.b32.xlu0 %v6034, 84
        %v11055 = vpop.permute.xlu0 %11054
        %11058 = vrot.lane.b32.xlu0 %v6035, 88
        %v11059 = vpop.permute.xlu0 %11058
        %11062 = vrot.lane.b32.xlu0 %v6036, 92
        %v11063 = vpop.permute.xlu0 %11062
        %11066 = vrot.lane.b32.xlu0 %v6165, 96
        %v11067 = vpop.permute.xlu0 %11066
        %11070 = vrot.lane.b32.xlu0 %v6166, 100
        %v11071 = vpop.permute.xlu0 %11070
        %11074 = vrot.lane.b32.xlu0 %v6167, 104
        %v11075 = vpop.permute.xlu0 %11074
        %11078 = vrot.lane.b32.xlu0 %v6168, 108
        %v11079 = vpop.permute.xlu0 %11078
        %11082 = vrot.lane.b32.xlu0 %v6169, 112
        %v11083 = vpop.permute.xlu0 %11082
        %11086 = vrot.lane.b32.xlu0 %v6170, 116
        %v11087 = vpop.permute.xlu0 %11086
        %11090 = vrot.lane.b32.xlu0 %v6171, 120
        %v11091 = vpop.permute.xlu0 %11090
        %11094 = vrot.lane.b32.xlu0 %v6172, 124
        %v11095 = vpop.permute.xlu0 %11094
        %11098 = vrot.lane.b32.xlu0 %v6302, 4
        %v11099 = vpop.permute.xlu0 %11098
        %11102 = vrot.lane.b32.xlu0 %v6303, 8
        %v11103 = vpop.permute.xlu0 %11102
        %11106 = vrot.lane.b32.xlu0 %v6304, 12
        %v11107 = vpop.permute.xlu0 %11106
        %11110 = vrot.lane.b32.xlu0 %v6305, 16
        %v11111 = vpop.permute.xlu0 %11110
        %11114 = vrot.lane.b32.xlu0 %v6306, 20
        %v11115 = vpop.permute.xlu0 %11114
        %11118 = vrot.lane.b32.xlu0 %v6307, 24
        %v11119 = vpop.permute.xlu0 %11118
        %11122 = vrot.lane.b32.xlu0 %v6308, 28
        %v11123 = vpop.permute.xlu0 %11122
        %11126 = vrot.lane.b32.xlu0 %v6437, 32
        %v11127 = vpop.permute.xlu0 %11126
        %11130 = vrot.lane.b32.xlu0 %v6438, 36
        %v11131 = vpop.permute.xlu0 %11130
        %11134 = vrot.lane.b32.xlu0 %v6439, 40
        %v11135 = vpop.permute.xlu0 %11134
        %11138 = vrot.lane.b32.xlu0 %v6440, 44
        %v11139 = vpop.permute.xlu0 %11138
        %11142 = vrot.lane.b32.xlu0 %v6441, 48
        %v11143 = vpop.permute.xlu0 %11142
        %11146 = vrot.lane.b32.xlu0 %v6442, 52
        %v11147 = vpop.permute.xlu0 %11146
        %11150 = vrot.lane.b32.xlu0 %v6443, 56
        %v11151 = vpop.permute.xlu0 %11150
        %11154 = vrot.lane.b32.xlu0 %v6444, 60
        %v11155 = vpop.permute.xlu0 %11154
        %11158 = vrot.lane.b32.xlu0 %v6573, 64
        %v11159 = vpop.permute.xlu0 %11158
        %11162 = vrot.lane.b32.xlu0 %v6574, 68
        %v11163 = vpop.permute.xlu0 %11162
        %11166 = vrot.lane.b32.xlu0 %v6575, 72
        %v11167 = vpop.permute.xlu0 %11166
        %11170 = vrot.lane.b32.xlu0 %v6576, 76
        %v11171 = vpop.permute.xlu0 %11170
        %11174 = vrot.lane.b32.xlu0 %v6577, 80
        %v11175 = vpop.permute.xlu0 %11174
        %11178 = vrot.lane.b32.xlu0 %v6578, 84
        %v11179 = vpop.permute.xlu0 %11178
        %11182 = vrot.lane.b32.xlu0 %v6579, 88
        %v11183 = vpop.permute.xlu0 %11182
        %11186 = vrot.lane.b32.xlu0 %v6580, 92
        %v11187 = vpop.permute.xlu0 %11186
        %11190 = vrot.lane.b32.xlu0 %v6709, 96
        %v11191 = vpop.permute.xlu0 %11190
        %11194 = vrot.lane.b32.xlu0 %v6710, 100
        %v11195 = vpop.permute.xlu0 %11194
        %11198 = vrot.lane.b32.xlu0 %v6711, 104
        %v11199 = vpop.permute.xlu0 %11198
        %11202 = vrot.lane.b32.xlu0 %v6712, 108
        %v11203 = vpop.permute.xlu0 %11202
        %11206 = vrot.lane.b32.xlu0 %v6713, 112
        %v11207 = vpop.permute.xlu0 %11206
        %11210 = vrot.lane.b32.xlu0 %v6714, 116
        %v11211 = vpop.permute.xlu0 %11210
        %11214 = vrot.lane.b32.xlu0 %v6715, 120
        %v11215 = vpop.permute.xlu0 %11214
        %11218 = vrot.lane.b32.xlu0 %v6716, 124
        %v11219 = vpop.permute.xlu0 %11218
        %11222 = vrot.lane.b32.xlu0 %v6846, 4
        %v11223 = vpop.permute.xlu0 %11222
        %11226 = vrot.lane.b32.xlu0 %v6847, 8
        %v11227 = vpop.permute.xlu0 %11226
        %11230 = vrot.lane.b32.xlu0 %v6848, 12
        %v11231 = vpop.permute.xlu0 %11230
        %11234 = vrot.lane.b32.xlu0 %v6849, 16
        %v11235 = vpop.permute.xlu0 %11234
        %11238 = vrot.lane.b32.xlu0 %v6850, 20
        %v11239 = vpop.permute.xlu0 %11238
        %11242 = vrot.lane.b32.xlu0 %v6851, 24
        %v11243 = vpop.permute.xlu0 %11242
        %11246 = vrot.lane.b32.xlu0 %v6852, 28
        %v11247 = vpop.permute.xlu0 %11246
        %11250 = vrot.lane.b32.xlu0 %v6981, 32
        %v11251 = vpop.permute.xlu0 %11250
        %11254 = vrot.lane.b32.xlu0 %v6982, 36
        %v11255 = vpop.permute.xlu0 %11254
        %11258 = vrot.lane.b32.xlu0 %v6983, 40
        %v11259 = vpop.permute.xlu0 %11258
        %11262 = vrot.lane.b32.xlu0 %v6984, 44
        %v11263 = vpop.permute.xlu0 %11262
        %11266 = vrot.lane.b32.xlu0 %v6985, 48
        %v11267 = vpop.permute.xlu0 %11266
        %11270 = vrot.lane.b32.xlu0 %v6986, 52
        %v11271 = vpop.permute.xlu0 %11270
        %11274 = vrot.lane.b32.xlu0 %v6987, 56
        %v11275 = vpop.permute.xlu0 %11274
        %11278 = vrot.lane.b32.xlu0 %v6988, 60
        %v11279 = vpop.permute.xlu0 %11278
        %11282 = vrot.lane.b32.xlu0 %v7117, 64
        %v11283 = vpop.permute.xlu0 %11282
        %11286 = vrot.lane.b32.xlu0 %v7118, 68
        %v11287 = vpop.permute.xlu0 %11286
        %11290 = vrot.lane.b32.xlu0 %v7119, 72
        %v11291 = vpop.permute.xlu0 %11290
        %11294 = vrot.lane.b32.xlu0 %v7120, 76
        %v11295 = vpop.permute.xlu0 %11294
        %11298 = vrot.lane.b32.xlu0 %v7121, 80
        %v11299 = vpop.permute.xlu0 %11298
        %11302 = vrot.lane.b32.xlu0 %v7122, 84
        %v11303 = vpop.permute.xlu0 %11302
        %11306 = vrot.lane.b32.xlu0 %v7123, 88
        %v11307 = vpop.permute.xlu0 %11306
        %11310 = vrot.lane.b32.xlu0 %v7124, 92
        %v11311 = vpop.permute.xlu0 %11310
        %11314 = vrot.lane.b32.xlu0 %v7253, 96
        %v11315 = vpop.permute.xlu0 %11314
        %11318 = vrot.lane.b32.xlu0 %v7254, 100
        %v11319 = vpop.permute.xlu0 %11318
        %11322 = vrot.lane.b32.xlu0 %v7255, 104
        %v11323 = vpop.permute.xlu0 %11322
        %11326 = vrot.lane.b32.xlu0 %v7256, 108
        %v11327 = vpop.permute.xlu0 %11326
        %11330 = vrot.lane.b32.xlu0 %v7257, 112
        %v11331 = vpop.permute.xlu0 %11330
        %11334 = vrot.lane.b32.xlu0 %v7258, 116
        %v11335 = vpop.permute.xlu0 %11334
        %11338 = vrot.lane.b32.xlu0 %v7259, 120
        %v11339 = vpop.permute.xlu0 %11338
        %11342 = vrot.lane.b32.xlu0 %v7260, 124
        %v11343 = vpop.permute.xlu0 %11342
        %11346 = vrot.lane.b32.xlu0 %v7390, 4
        %v11347 = vpop.permute.xlu0 %11346
        %11350 = vrot.lane.b32.xlu0 %v7391, 8
        %v11351 = vpop.permute.xlu0 %11350
        %11354 = vrot.lane.b32.xlu0 %v7392, 12
        %v11355 = vpop.permute.xlu0 %11354
        %11358 = vrot.lane.b32.xlu0 %v7393, 16
        %v11359 = vpop.permute.xlu0 %11358
        %11362 = vrot.lane.b32.xlu0 %v7394, 20
        %v11363 = vpop.permute.xlu0 %11362
        %11366 = vrot.lane.b32.xlu0 %v7395, 24
        %v11367 = vpop.permute.xlu0 %11366
        %11370 = vrot.lane.b32.xlu0 %v7396, 28
        %v11371 = vpop.permute.xlu0 %11370
        %11374 = vrot.lane.b32.xlu0 %v7525, 32
        %v11375 = vpop.permute.xlu0 %11374
        %11378 = vrot.lane.b32.xlu0 %v7526, 36
        %v11379 = vpop.permute.xlu0 %11378
        %11382 = vrot.lane.b32.xlu0 %v7527, 40
        %v11383 = vpop.permute.xlu0 %11382
        %11386 = vrot.lane.b32.xlu0 %v7528, 44
        %v11387 = vpop.permute.xlu0 %11386
        %11390 = vrot.lane.b32.xlu0 %v7529, 48
        %v11391 = vpop.permute.xlu0 %11390
        %11394 = vrot.lane.b32.xlu0 %v7530, 52
        %v11395 = vpop.permute.xlu0 %11394
        %11398 = vrot.lane.b32.xlu0 %v7531, 56
        %v11399 = vpop.permute.xlu0 %11398
        %11402 = vrot.lane.b32.xlu0 %v7532, 60
        %v11403 = vpop.permute.xlu0 %11402
        %11406 = vrot.lane.b32.xlu0 %v7661, 64
        %v11407 = vpop.permute.xlu0 %11406
        %11410 = vrot.lane.b32.xlu0 %v7662, 68
        %v11411 = vpop.permute.xlu0 %11410
        %11414 = vrot.lane.b32.xlu0 %v7663, 72
        %v11415 = vpop.permute.xlu0 %11414
        %11418 = vrot.lane.b32.xlu0 %v7664, 76
        %v11419 = vpop.permute.xlu0 %11418
        %11422 = vrot.lane.b32.xlu0 %v7665, 80
        %v11423 = vpop.permute.xlu0 %11422
        %11426 = vrot.lane.b32.xlu0 %v7666, 84
        %v11427 = vpop.permute.xlu0 %11426
        %11430 = vrot.lane.b32.xlu0 %v7667, 88
        %v11431 = vpop.permute.xlu0 %11430
        %11434 = vrot.lane.b32.xlu0 %v7668, 92
        %v11435 = vpop.permute.xlu0 %11434
        %11438 = vrot.lane.b32.xlu0 %v7797, 96
        %v11439 = vpop.permute.xlu0 %11438
        %11442 = vrot.lane.b32.xlu0 %v7798, 100
        %v11443 = vpop.permute.xlu0 %11442
        %11446 = vrot.lane.b32.xlu0 %v7799, 104
        %v11447 = vpop.permute.xlu0 %11446
        %11450 = vrot.lane.b32.xlu0 %v7800, 108
        %v11451 = vpop.permute.xlu0 %11450
        %11454 = vrot.lane.b32.xlu0 %v7801, 112
        %v11455 = vpop.permute.xlu0 %11454
        %11458 = vrot.lane.b32.xlu0 %v7802, 116
        %v11459 = vpop.permute.xlu0 %11458
        %11462 = vrot.lane.b32.xlu0 %v7803, 120
        %v11463 = vpop.permute.xlu0 %11462
        %11466 = vrot.lane.b32.xlu0 %v7804, 124
        %v11467 = vpop.permute.xlu0 %11466
        %11470 = vrot.lane.b32.xlu0 %v7934, 4
        %v11471 = vpop.permute.xlu0 %11470
        %11474 = vrot.lane.b32.xlu0 %v7935, 8
        %v11475 = vpop.permute.xlu0 %11474
        %11478 = vrot.lane.b32.xlu0 %v7936, 12
        %v11479 = vpop.permute.xlu0 %11478
        %11482 = vrot.lane.b32.xlu0 %v7937, 16
        %v11483 = vpop.permute.xlu0 %11482
        %11486 = vrot.lane.b32.xlu0 %v7938, 20
        %v11487 = vpop.permute.xlu0 %11486
        %11490 = vrot.lane.b32.xlu0 %v7939, 24
        %v11491 = vpop.permute.xlu0 %11490
        %11494 = vrot.lane.b32.xlu0 %v7940, 28
        %v11495 = vpop.permute.xlu0 %11494
        %11498 = vrot.lane.b32.xlu0 %v8069, 32
        %v11499 = vpop.permute.xlu0 %11498
        %11502 = vrot.lane.b32.xlu0 %v8070, 36
        %v11503 = vpop.permute.xlu0 %11502
        %11506 = vrot.lane.b32.xlu0 %v8071, 40
        %v11507 = vpop.permute.xlu0 %11506
        %11510 = vrot.lane.b32.xlu0 %v8072, 44
        %v11511 = vpop.permute.xlu0 %11510
        %11514 = vrot.lane.b32.xlu0 %v8073, 48
        %v11515 = vpop.permute.xlu0 %11514
        %11518 = vrot.lane.b32.xlu0 %v8074, 52
        %v11519 = vpop.permute.xlu0 %11518
        %11522 = vrot.lane.b32.xlu0 %v8075, 56
        %v11523 = vpop.permute.xlu0 %11522
        %11526 = vrot.lane.b32.xlu0 %v8076, 60
        %v11527 = vpop.permute.xlu0 %11526
        %11530 = vrot.lane.b32.xlu0 %v8205, 64
        %v11531 = vpop.permute.xlu0 %11530
        %11534 = vrot.lane.b32.xlu0 %v8206, 68
        %v11535 = vpop.permute.xlu0 %11534
        %11538 = vrot.lane.b32.xlu0 %v8207, 72
        %v11539 = vpop.permute.xlu0 %11538
        %11542 = vrot.lane.b32.xlu0 %v8208, 76
        %v11543 = vpop.permute.xlu0 %11542
        %11546 = vrot.lane.b32.xlu0 %v8209, 80
        %v11547 = vpop.permute.xlu0 %11546
        %11550 = vrot.lane.b32.xlu0 %v8210, 84
        %v11551 = vpop.permute.xlu0 %11550
        %11554 = vrot.lane.b32.xlu0 %v8211, 88
        %v11555 = vpop.permute.xlu0 %11554
        %11558 = vrot.lane.b32.xlu0 %v8212, 92
        %v11559 = vpop.permute.xlu0 %11558
        %11562 = vrot.lane.b32.xlu0 %v8341, 96
        %v11563 = vpop.permute.xlu0 %11562
        %11566 = vrot.lane.b32.xlu0 %v8342, 100
        %v11567 = vpop.permute.xlu0 %11566
        %11570 = vrot.lane.b32.xlu0 %v8343, 104
        %v11571 = vpop.permute.xlu0 %11570
        %11574 = vrot.lane.b32.xlu0 %v8344, 108
        %v11575 = vpop.permute.xlu0 %11574
        %11578 = vrot.lane.b32.xlu0 %v8345, 112
        %v11579 = vpop.permute.xlu0 %11578
        %11582 = vrot.lane.b32.xlu0 %v8346, 116
        %v11583 = vpop.permute.xlu0 %11582
        %11586 = vrot.lane.b32.xlu0 %v8347, 120
        %v11587 = vpop.permute.xlu0 %11586
        %11590 = vrot.lane.b32.xlu0 %v8348, 124
        %v11591 = vpop.permute.xlu0 %11590
        %11594 = vrot.lane.b32.xlu0 %v8478, 4
        %v11595 = vpop.permute.xlu0 %11594
        %11598 = vrot.lane.b32.xlu0 %v8479, 8
        %v11599 = vpop.permute.xlu0 %11598
        %11602 = vrot.lane.b32.xlu0 %v8480, 12
        %v11603 = vpop.permute.xlu0 %11602
        %11606 = vrot.lane.b32.xlu0 %v8481, 16
        %v11607 = vpop.permute.xlu0 %11606
        %11610 = vrot.lane.b32.xlu0 %v8482, 20
        %v11611 = vpop.permute.xlu0 %11610
        %11614 = vrot.lane.b32.xlu0 %v8483, 24
        %v11615 = vpop.permute.xlu0 %11614
        %11618 = vrot.lane.b32.xlu0 %v8484, 28
        %v11619 = vpop.permute.xlu0 %11618
        %11622 = vrot.lane.b32.xlu0 %v8613, 32
        %v11623 = vpop.permute.xlu0 %11622
        %11626 = vrot.lane.b32.xlu0 %v8614, 36
        %v11627 = vpop.permute.xlu0 %11626
        %11630 = vrot.lane.b32.xlu0 %v8615, 40
        %v11631 = vpop.permute.xlu0 %11630
        %11634 = vrot.lane.b32.xlu0 %v8616, 44
        %v11635 = vpop.permute.xlu0 %11634
        %11638 = vrot.lane.b32.xlu0 %v8617, 48
        %v11639 = vpop.permute.xlu0 %11638
        %11642 = vrot.lane.b32.xlu0 %v8618, 52
        %v11643 = vpop.permute.xlu0 %11642
        %11646 = vrot.lane.b32.xlu0 %v8619, 56
        %v11647 = vpop.permute.xlu0 %11646
        %11650 = vrot.lane.b32.xlu0 %v8620, 60
        %v11651 = vpop.permute.xlu0 %11650
        %11654 = vrot.lane.b32.xlu0 %v8749, 64
        %v11655 = vpop.permute.xlu0 %11654
        %11658 = vrot.lane.b32.xlu0 %v8750, 68
        %v11659 = vpop.permute.xlu0 %11658
        %11662 = vrot.lane.b32.xlu0 %v8751, 72
        %v11663 = vpop.permute.xlu0 %11662
        %11666 = vrot.lane.b32.xlu0 %v8752, 76
        %v11667 = vpop.permute.xlu0 %11666
        %11670 = vrot.lane.b32.xlu0 %v8753, 80
        %v11671 = vpop.permute.xlu0 %11670
        %11674 = vrot.lane.b32.xlu0 %v8754, 84
        %v11675 = vpop.permute.xlu0 %11674
        %11678 = vrot.lane.b32.xlu0 %v8755, 88
        %v11679 = vpop.permute.xlu0 %11678
        %11682 = vrot.lane.b32.xlu0 %v8756, 92
        %v11683 = vpop.permute.xlu0 %11682
        %11686 = vrot.lane.b32.xlu0 %v8885, 96
        %v11687 = vpop.permute.xlu0 %11686
        %11690 = vrot.lane.b32.xlu0 %v8886, 100
        %v11691 = vpop.permute.xlu0 %11690
        %11694 = vrot.lane.b32.xlu0 %v8887, 104
        %v11695 = vpop.permute.xlu0 %11694
        %11698 = vrot.lane.b32.xlu0 %v8888, 108
        %v11699 = vpop.permute.xlu0 %11698
        %11702 = vrot.lane.b32.xlu0 %v8889, 112
        %v11703 = vpop.permute.xlu0 %11702
        %11706 = vrot.lane.b32.xlu0 %v8890, 116
        %v11707 = vpop.permute.xlu0 %11706
        %11710 = vrot.lane.b32.xlu0 %v8891, 120
        %v11711 = vpop.permute.xlu0 %11710
        %11714 = vrot.lane.b32.xlu0 %v8892, 124
        %v11715 = vpop.permute.xlu0 %11714
        %11718 = vrot.lane.b32.xlu0 %v9022, 4
        %v11719 = vpop.permute.xlu0 %11718
        %11722 = vrot.lane.b32.xlu0 %v9023, 8
        %v11723 = vpop.permute.xlu0 %11722
        %11726 = vrot.lane.b32.xlu0 %v9024, 12
        %v11727 = vpop.permute.xlu0 %11726
        %11730 = vrot.lane.b32.xlu0 %v9025, 16
        %v11731 = vpop.permute.xlu0 %11730
        %11734 = vrot.lane.b32.xlu0 %v9026, 20
        %v11735 = vpop.permute.xlu0 %11734
        %11738 = vrot.lane.b32.xlu0 %v9027, 24
        %v11739 = vpop.permute.xlu0 %11738
        %11742 = vrot.lane.b32.xlu0 %v9028, 28
        %v11743 = vpop.permute.xlu0 %11742
        %11746 = vrot.lane.b32.xlu0 %v9157, 32
        %v11747 = vpop.permute.xlu0 %11746
        %11750 = vrot.lane.b32.xlu0 %v9158, 36
        %v11751 = vpop.permute.xlu0 %11750
        %11754 = vrot.lane.b32.xlu0 %v9159, 40
        %v11755 = vpop.permute.xlu0 %11754
        %11758 = vrot.lane.b32.xlu0 %v9160, 44
        %v11759 = vpop.permute.xlu0 %11758
        %11762 = vrot.lane.b32.xlu0 %v9161, 48
        %v11763 = vpop.permute.xlu0 %11762
        %11766 = vrot.lane.b32.xlu0 %v9162, 52
        %v11767 = vpop.permute.xlu0 %11766
        %11770 = vrot.lane.b32.xlu0 %v9163, 56
        %v11771 = vpop.permute.xlu0 %11770
        %11774 = vrot.lane.b32.xlu0 %v9164, 60
        %v11775 = vpop.permute.xlu0 %11774
        %11778 = vrot.lane.b32.xlu0 %v9293, 64
        %v11779 = vpop.permute.xlu0 %11778
        %11782 = vrot.lane.b32.xlu0 %v9294, 68
        %v11783 = vpop.permute.xlu0 %11782
        %11786 = vrot.lane.b32.xlu0 %v9295, 72
        %v11787 = vpop.permute.xlu0 %11786
        %11790 = vrot.lane.b32.xlu0 %v9296, 76
        %v11791 = vpop.permute.xlu0 %11790
        %11794 = vrot.lane.b32.xlu0 %v9297, 80
        %v11795 = vpop.permute.xlu0 %11794
        %11798 = vrot.lane.b32.xlu0 %v9298, 84
        %v11799 = vpop.permute.xlu0 %11798
        %11802 = vrot.lane.b32.xlu0 %v9299, 88
        %v11803 = vpop.permute.xlu0 %11802
        %11806 = vrot.lane.b32.xlu0 %v9300, 92
        %v11807 = vpop.permute.xlu0 %11806
        %11810 = vrot.lane.b32.xlu0 %v9429, 96
        %v11811 = vpop.permute.xlu0 %11810
        %11814 = vrot.lane.b32.xlu0 %v9430, 100
        %v11815 = vpop.permute.xlu0 %11814
        %11818 = vrot.lane.b32.xlu0 %v9431, 104
        %v11819 = vpop.permute.xlu0 %11818
        %11822 = vrot.lane.b32.xlu0 %v9432, 108
        %v11823 = vpop.permute.xlu0 %11822
        %11826 = vrot.lane.b32.xlu0 %v9433, 112
        %v11827 = vpop.permute.xlu0 %11826
        %11830 = vrot.lane.b32.xlu0 %v9434, 116
        %v11831 = vpop.permute.xlu0 %11830
        %11834 = vrot.lane.b32.xlu0 %v9435, 120
        %v11835 = vpop.permute.xlu0 %11834
        %11838 = vrot.lane.b32.xlu0 %v9436, 124
        %v11839 = vpop.permute.xlu0 %11838
        %11842 = vrot.lane.b32.xlu0 %v9566, 4
        %v11843 = vpop.permute.xlu0 %11842
        %11846 = vrot.lane.b32.xlu0 %v9567, 8
        %v11847 = vpop.permute.xlu0 %11846
        %11850 = vrot.lane.b32.xlu0 %v9568, 12
        %v11851 = vpop.permute.xlu0 %11850
        %11854 = vrot.lane.b32.xlu0 %v9569, 16
        %v11855 = vpop.permute.xlu0 %11854
        %11858 = vrot.lane.b32.xlu0 %v9570, 20
        %v11859 = vpop.permute.xlu0 %11858
        %11862 = vrot.lane.b32.xlu0 %v9571, 24
        %v11863 = vpop.permute.xlu0 %11862
        %11866 = vrot.lane.b32.xlu0 %v9572, 28
        %v11867 = vpop.permute.xlu0 %11866
        %11870 = vrot.lane.b32.xlu0 %v9701, 32
        %v11871 = vpop.permute.xlu0 %11870
        %11874 = vrot.lane.b32.xlu0 %v9702, 36
        %v11875 = vpop.permute.xlu0 %11874
        %11878 = vrot.lane.b32.xlu0 %v9703, 40
        %v11879 = vpop.permute.xlu0 %11878
        %11882 = vrot.lane.b32.xlu0 %v9704, 44
        %v11883 = vpop.permute.xlu0 %11882
        %11886 = vrot.lane.b32.xlu0 %v9705, 48
        %v11887 = vpop.permute.xlu0 %11886
        %11890 = vrot.lane.b32.xlu0 %v9706, 52
        %v11891 = vpop.permute.xlu0 %11890
        %11894 = vrot.lane.b32.xlu0 %v9707, 56
        %v11895 = vpop.permute.xlu0 %11894
        %11898 = vrot.lane.b32.xlu0 %v9708, 60
        %v11899 = vpop.permute.xlu0 %11898
        %11902 = vrot.lane.b32.xlu0 %v9837, 64
        %v11903 = vpop.permute.xlu0 %11902
        %11906 = vrot.lane.b32.xlu0 %v9838, 68
        %v11907 = vpop.permute.xlu0 %11906
        %11910 = vrot.lane.b32.xlu0 %v9839, 72
        %v11911 = vpop.permute.xlu0 %11910
        %11914 = vrot.lane.b32.xlu0 %v9840, 76
        %v11915 = vpop.permute.xlu0 %11914
        %11918 = vrot.lane.b32.xlu0 %v9841, 80
        %v11919 = vpop.permute.xlu0 %11918
        %11922 = vrot.lane.b32.xlu0 %v9842, 84
        %v11923 = vpop.permute.xlu0 %11922
        %11926 = vrot.lane.b32.xlu0 %v9843, 88
        %v11927 = vpop.permute.xlu0 %11926
        %11930 = vrot.lane.b32.xlu0 %v9844, 92
        %v11931 = vpop.permute.xlu0 %11930
        %11934 = vrot.lane.b32.xlu0 %v9973, 96
        %v11935 = vpop.permute.xlu0 %11934
        %11938 = vrot.lane.b32.xlu0 %v9974, 100
        %v11939 = vpop.permute.xlu0 %11938
        %11942 = vrot.lane.b32.xlu0 %v9975, 104
        %v11943 = vpop.permute.xlu0 %11942
        %11946 = vrot.lane.b32.xlu0 %v9976, 108
        %v11947 = vpop.permute.xlu0 %11946
        %11950 = vrot.lane.b32.xlu0 %v9977, 112
        %v11951 = vpop.permute.xlu0 %11950
        %11954 = vrot.lane.b32.xlu0 %v9978, 116
        %v11955 = vpop.permute.xlu0 %11954
        %11958 = vrot.lane.b32.xlu0 %v9979, 120
        %v11959 = vpop.permute.xlu0 %11958
        %11962 = vrot.lane.b32.xlu0 %v9980, 124
        %v11963 = vpop.permute.xlu0 %11962
        %vm11965 = vcmask 31744
        %v11966 = vsel %vm11965, %v1405, %v9983
        %vm11967 = vcmask 64512
        %v11968 = vsel %vm11967, %v11966, %v9987
        %vm11969 = vcmask 97280
        %v11970 = vsel %vm11969, %v11968, %v9991
        %vm11971 = vcmask 130048
        %v11972 = vsel %vm11971, %v11970, %v9995
        %vm11973 = vcmask 162816
        %v11974 = vsel %vm11973, %v11972, %v9999
        %vm11975 = vcmask 195584
        %v11976 = vsel %vm11975, %v11974, %v10003
        %vm11977 = vcmask 228352
        %v11978 = vsel %vm11977, %v11976, %v10007
        %vm11979 = vcmask 261120
        %v11980 = vsel %vm11979, %v11978, %v10011
        %vm11981 = vcmask 293888
        %v11982 = vsel %vm11981, %v11980, %v10015
        %vm11983 = vcmask 326656
        %v11984 = vsel %vm11983, %v11982, %v10019
        %vm11985 = vcmask 359424
        %v11986 = vsel %vm11985, %v11984, %v10023
        %vm11987 = vcmask 392192
        %v11988 = vsel %vm11987, %v11986, %v10027
        %vm11989 = vcmask 424960
        %v11990 = vsel %vm11989, %v11988, %v10031
        %vm11991 = vcmask 457728
        %v11992 = vsel %vm11991, %v11990, %v10035
        %vm11993 = vcmask 490496
        %v11994 = vsel %vm11993, %v11992, %v10039
        %vm11995 = vcmask 523264
        %v11996 = vsel %vm11995, %v11994, %v10043
        %vm11997 = vcmask 556032
        %v11998 = vsel %vm11997, %v11996, %v10047
        %vm11999 = vcmask 588800
        %v12000 = vsel %vm11999, %v11998, %v10051
        %vm12001 = vcmask 621568
        %v12002 = vsel %vm12001, %v12000, %v10055
        %vm12003 = vcmask 654336
        %v12004 = vsel %vm12003, %v12002, %v10059
        %vm12005 = vcmask 687104
        %v12006 = vsel %vm12005, %v12004, %v10063
        %vm12007 = vcmask 719872
        %v12008 = vsel %vm12007, %v12006, %v10067
        %vm12009 = vcmask 752640
        %v12010 = vsel %vm12009, %v12008, %v10071
        %vm12011 = vcmask 785408
        %v12012 = vsel %vm12011, %v12010, %v10075
        %vm12013 = vcmask 818176
        %v12014 = vsel %vm12013, %v12012, %v10079
        %vm12015 = vcmask 850944
        %v12016 = vsel %vm12015, %v12014, %v10083
        %vm12017 = vcmask 883712
        %v12018 = vsel %vm12017, %v12016, %v10087
        %vm12019 = vcmask 916480
        %v12020 = vsel %vm12019, %v12018, %v10091
        %vm12021 = vcmask 949248
        %v12022 = vsel %vm12021, %v12020, %v10095
        %vm12023 = vcmask 982016
        %v12024 = vsel %vm12023, %v12022, %v10099
        %vm12025 = vcmask 1014784
        %v12026 = vsel %vm12025, %v12024, %v10103
        %v12027 = vsel %vm11965, %v1949, %v10107
        %v12028 = vsel %vm11967, %v12027, %v10111
        %v12029 = vsel %vm11969, %v12028, %v10115
        %v12030 = vsel %vm11971, %v12029, %v10119
        %v12031 = vsel %vm11973, %v12030, %v10123
        %v12032 = vsel %vm11975, %v12031, %v10127
        %v12033 = vsel %vm11977, %v12032, %v10131
        %v12034 = vsel %vm11979, %v12033, %v10135
        %v12035 = vsel %vm11981, %v12034, %v10139
        %v12036 = vsel %vm11983, %v12035, %v10143
        %v12037 = vsel %vm11985, %v12036, %v10147
        %v12038 = vsel %vm11987, %v12037, %v10151
        %v12039 = vsel %vm11989, %v12038, %v10155
        %v12040 = vsel %vm11991, %v12039, %v10159
        %v12041 = vsel %vm11993, %v12040, %v10163
        %v12042 = vsel %vm11995, %v12041, %v10167
        %v12043 = vsel %vm11997, %v12042, %v10171
        %v12044 = vsel %vm11999, %v12043, %v10175
        %v12045 = vsel %vm12001, %v12044, %v10179
        %v12046 = vsel %vm12003, %v12045, %v10183
        %v12047 = vsel %vm12005, %v12046, %v10187
        %v12048 = vsel %vm12007, %v12047, %v10191
        %v12049 = vsel %vm12009, %v12048, %v10195
        %v12050 = vsel %vm12011, %v12049, %v10199
        %v12051 = vsel %vm12013, %v12050, %v10203
        %v12052 = vsel %vm12015, %v12051, %v10207
        %v12053 = vsel %vm12017, %v12052, %v10211
        %v12054 = vsel %vm12019, %v12053, %v10215
        %v12055 = vsel %vm12021, %v12054, %v10219
        %v12056 = vsel %vm12023, %v12055, %v10223
        %v12057 = vsel %vm12025, %v12056, %v10227
        %v12058 = vsel %vm11965, %v2493, %v10231
        %v12059 = vsel %vm11967, %v12058, %v10235
        %v12060 = vsel %vm11969, %v12059, %v10239
        %v12061 = vsel %vm11971, %v12060, %v10243
        %v12062 = vsel %vm11973, %v12061, %v10247
        %v12063 = vsel %vm11975, %v12062, %v10251
        %v12064 = vsel %vm11977, %v12063, %v10255
        %v12065 = vsel %vm11979, %v12064, %v10259
        %v12066 = vsel %vm11981, %v12065, %v10263
        %v12067 = vsel %vm11983, %v12066, %v10267
        %v12068 = vsel %vm11985, %v12067, %v10271
        %v12069 = vsel %vm11987, %v12068, %v10275
        %v12070 = vsel %vm11989, %v12069, %v10279
        %v12071 = vsel %vm11991, %v12070, %v10283
        %v12072 = vsel %vm11993, %v12071, %v10287
        %v12073 = vsel %vm11995, %v12072, %v10291
        %v12074 = vsel %vm11997, %v12073, %v10295
        %v12075 = vsel %vm11999, %v12074, %v10299
        %v12076 = vsel %vm12001, %v12075, %v10303
        %v12077 = vsel %vm12003, %v12076, %v10307
        %v12078 = vsel %vm12005, %v12077, %v10311
        %v12079 = vsel %vm12007, %v12078, %v10315
        %v12080 = vsel %vm12009, %v12079, %v10319
        %v12081 = vsel %vm12011, %v12080, %v10323
        %v12082 = vsel %vm12013, %v12081, %v10327
        %v12083 = vsel %vm12015, %v12082, %v10331
        %v12084 = vsel %vm12017, %v12083, %v10335
        %v12085 = vsel %vm12019, %v12084, %v10339
        %v12086 = vsel %vm12021, %v12085, %v10343
        %v12087 = vsel %vm12023, %v12086, %v10347
        %v12088 = vsel %vm12025, %v12087, %v10351
        %v12089 = vsel %vm11965, %v3037, %v10355
        %v12090 = vsel %vm11967, %v12089, %v10359
        %v12091 = vsel %vm11969, %v12090, %v10363
        %v12092 = vsel %vm11971, %v12091, %v10367
        %v12093 = vsel %vm11973, %v12092, %v10371
        %v12094 = vsel %vm11975, %v12093, %v10375
        %v12095 = vsel %vm11977, %v12094, %v10379
        %v12096 = vsel %vm11979, %v12095, %v10383
        %v12097 = vsel %vm11981, %v12096, %v10387
        %v12098 = vsel %vm11983, %v12097, %v10391
        %v12099 = vsel %vm11985, %v12098, %v10395
        %v12100 = vsel %vm11987, %v12099, %v10399
        %v12101 = vsel %vm11989, %v12100, %v10403
        %v12102 = vsel %vm11991, %v12101, %v10407
        %v12103 = vsel %vm11993, %v12102, %v10411
        %v12104 = vsel %vm11995, %v12103, %v10415
        %v12105 = vsel %vm11997, %v12104, %v10419
        %v12106 = vsel %vm11999, %v12105, %v10423
        %v12107 = vsel %vm12001, %v12106, %v10427
        %v12108 = vsel %vm12003, %v12107, %v10431
        %v12109 = vsel %vm12005, %v12108, %v10435
        %v12110 = vsel %vm12007, %v12109, %v10439
        %v12111 = vsel %vm12009, %v12110, %v10443
        %v12112 = vsel %vm12011, %v12111, %v10447
        %v12113 = vsel %vm12013, %v12112, %v10451
        %v12114 = vsel %vm12015, %v12113, %v10455
        %v12115 = vsel %vm12017, %v12114, %v10459
        %v12116 = vsel %vm12019, %v12115, %v10463
        %v12117 = vsel %vm12021, %v12116, %v10467
        %v12118 = vsel %vm12023, %v12117, %v10471
        %v12119 = vsel %vm12025, %v12118, %v10475
        %v12120 = vsel %vm11965, %v3581, %v10479
        %v12121 = vsel %vm11967, %v12120, %v10483
        %v12122 = vsel %vm11969, %v12121, %v10487
        %v12123 = vsel %vm11971, %v12122, %v10491
        %v12124 = vsel %vm11973, %v12123, %v10495
        %v12125 = vsel %vm11975, %v12124, %v10499
        %v12126 = vsel %vm11977, %v12125, %v10503
        %v12127 = vsel %vm11979, %v12126, %v10507
        %v12128 = vsel %vm11981, %v12127, %v10511
        %v12129 = vsel %vm11983, %v12128, %v10515
        %v12130 = vsel %vm11985, %v12129, %v10519
        %v12131 = vsel %vm11987, %v12130, %v10523
        %v12132 = vsel %vm11989, %v12131, %v10527
        %v12133 = vsel %vm11991, %v12132, %v10531
        %v12134 = vsel %vm11993, %v12133, %v10535
        %v12135 = vsel %vm11995, %v12134, %v10539
        %v12136 = vsel %vm11997, %v12135, %v10543
        %v12137 = vsel %vm11999, %v12136, %v10547
        %v12138 = vsel %vm12001, %v12137, %v10551
        %v12139 = vsel %vm12003, %v12138, %v10555
        %v12140 = vsel %vm12005, %v12139, %v10559
        %v12141 = vsel %vm12007, %v12140, %v10563
        %v12142 = vsel %vm12009, %v12141, %v10567
        %v12143 = vsel %vm12011, %v12142, %v10571
        %v12144 = vsel %vm12013, %v12143, %v10575
        %v12145 = vsel %vm12015, %v12144, %v10579
        %v12146 = vsel %vm12017, %v12145, %v10583
        %v12147 = vsel %vm12019, %v12146, %v10587
        %v12148 = vsel %vm12021, %v12147, %v10591
        %v12149 = vsel %vm12023, %v12148, %v10595
        %v12150 = vsel %vm12025, %v12149, %v10599
        %v12151 = vsel %vm11965, %v4125, %v10603
        %v12152 = vsel %vm11967, %v12151, %v10607
        %v12153 = vsel %vm11969, %v12152, %v10611
        %v12154 = vsel %vm11971, %v12153, %v10615
        %v12155 = vsel %vm11973, %v12154, %v10619
        %v12156 = vsel %vm11975, %v12155, %v10623
        %v12157 = vsel %vm11977, %v12156, %v10627
        %v12158 = vsel %vm11979, %v12157, %v10631
        %v12159 = vsel %vm11981, %v12158, %v10635
        %v12160 = vsel %vm11983, %v12159, %v10639
        %v12161 = vsel %vm11985, %v12160, %v10643
        %v12162 = vsel %vm11987, %v12161, %v10647
        %v12163 = vsel %vm11989, %v12162, %v10651
        %v12164 = vsel %vm11991, %v12163, %v10655
        %v12165 = vsel %vm11993, %v12164, %v10659
        %v12166 = vsel %vm11995, %v12165, %v10663
        %v12167 = vsel %vm11997, %v12166, %v10667
        %v12168 = vsel %vm11999, %v12167, %v10671
        %v12169 = vsel %vm12001, %v12168, %v10675
        %v12170 = vsel %vm12003, %v12169, %v10679
        %v12171 = vsel %vm12005, %v12170, %v10683
        %v12172 = vsel %vm12007, %v12171, %v10687
        %v12173 = vsel %vm12009, %v12172, %v10691
        %v12174 = vsel %vm12011, %v12173, %v10695
        %v12175 = vsel %vm12013, %v12174, %v10699
        %v12176 = vsel %vm12015, %v12175, %v10703
        %v12177 = vsel %vm12017, %v12176, %v10707
        %v12178 = vsel %vm12019, %v12177, %v10711
        %v12179 = vsel %vm12021, %v12178, %v10715
        %v12180 = vsel %vm12023, %v12179, %v10719
        %v12181 = vsel %vm12025, %v12180, %v10723
        %v12182 = vsel %vm11965, %v4669, %v10727
        %v12183 = vsel %vm11967, %v12182, %v10731
        %v12184 = vsel %vm11969, %v12183, %v10735
        %v12185 = vsel %vm11971, %v12184, %v10739
        %v12186 = vsel %vm11973, %v12185, %v10743
        %v12187 = vsel %vm11975, %v12186, %v10747
        %v12188 = vsel %vm11977, %v12187, %v10751
        %v12189 = vsel %vm11979, %v12188, %v10755
        %v12190 = vsel %vm11981, %v12189, %v10759
        %v12191 = vsel %vm11983, %v12190, %v10763
        %v12192 = vsel %vm11985, %v12191, %v10767
        %v12193 = vsel %vm11987, %v12192, %v10771
        %v12194 = vsel %vm11989, %v12193, %v10775
        %v12195 = vsel %vm11991, %v12194, %v10779
        %v12196 = vsel %vm11993, %v12195, %v10783
        %v12197 = vsel %vm11995, %v12196, %v10787
        %v12198 = vsel %vm11997, %v12197, %v10791
        %v12199 = vsel %vm11999, %v12198, %v10795
        %v12200 = vsel %vm12001, %v12199, %v10799
        %v12201 = vsel %vm12003, %v12200, %v10803
        %v12202 = vsel %vm12005, %v12201, %v10807
        %v12203 = vsel %vm12007, %v12202, %v10811
        %v12204 = vsel %vm12009, %v12203, %v10815
        %v12205 = vsel %vm12011, %v12204, %v10819
        %v12206 = vsel %vm12013, %v12205, %v10823
        %v12207 = vsel %vm12015, %v12206, %v10827
        %v12208 = vsel %vm12017, %v12207, %v10831
        %v12209 = vsel %vm12019, %v12208, %v10835
        %v12210 = vsel %vm12021, %v12209, %v10839
        %v12211 = vsel %vm12023, %v12210, %v10843
        %v12212 = vsel %vm12025, %v12211, %v10847
        %v12213 = vsel %vm11965, %v5213, %v10851
        %v12214 = vsel %vm11967, %v12213, %v10855
        %v12215 = vsel %vm11969, %v12214, %v10859
        %v12216 = vsel %vm11971, %v12215, %v10863
        %v12217 = vsel %vm11973, %v12216, %v10867
        %v12218 = vsel %vm11975, %v12217, %v10871
        %v12219 = vsel %vm11977, %v12218, %v10875
        %v12220 = vsel %vm11979, %v12219, %v10879
        %v12221 = vsel %vm11981, %v12220, %v10883
        %v12222 = vsel %vm11983, %v12221, %v10887
        %v12223 = vsel %vm11985, %v12222, %v10891
        %v12224 = vsel %vm11987, %v12223, %v10895
        %v12225 = vsel %vm11989, %v12224, %v10899
        %v12226 = vsel %vm11991, %v12225, %v10903
        %v12227 = vsel %vm11993, %v12226, %v10907
        %v12228 = vsel %vm11995, %v12227, %v10911
        %v12229 = vsel %vm11997, %v12228, %v10915
        %v12230 = vsel %vm11999, %v12229, %v10919
        %v12231 = vsel %vm12001, %v12230, %v10923
        %v12232 = vsel %vm12003, %v12231, %v10927
        %v12233 = vsel %vm12005, %v12232, %v10931
        %v12234 = vsel %vm12007, %v12233, %v10935
        %v12235 = vsel %vm12009, %v12234, %v10939
        %v12236 = vsel %vm12011, %v12235, %v10943
        %v12237 = vsel %vm12013, %v12236, %v10947
        %v12238 = vsel %vm12015, %v12237, %v10951
        %v12239 = vsel %vm12017, %v12238, %v10955
        %v12240 = vsel %vm12019, %v12239, %v10959
        %v12241 = vsel %vm12021, %v12240, %v10963
        %v12242 = vsel %vm12023, %v12241, %v10967
        %v12243 = vsel %vm12025, %v12242, %v10971
        %v12244 = vsel %vm11965, %v5757, %v10975
        %v12245 = vsel %vm11967, %v12244, %v10979
        %v12246 = vsel %vm11969, %v12245, %v10983
        %v12247 = vsel %vm11971, %v12246, %v10987
        %v12248 = vsel %vm11973, %v12247, %v10991
        %v12249 = vsel %vm11975, %v12248, %v10995
        %v12250 = vsel %vm11977, %v12249, %v10999
        %v12251 = vsel %vm11979, %v12250, %v11003
        %v12252 = vsel %vm11981, %v12251, %v11007
        %v12253 = vsel %vm11983, %v12252, %v11011
        %v12254 = vsel %vm11985, %v12253, %v11015
        %v12255 = vsel %vm11987, %v12254, %v11019
        %v12256 = vsel %vm11989, %v12255, %v11023
        %v12257 = vsel %vm11991, %v12256, %v11027
        %v12258 = vsel %vm11993, %v12257, %v11031
        %v12259 = vsel %vm11995, %v12258, %v11035
        %v12260 = vsel %vm11997, %v12259, %v11039
        %v12261 = vsel %vm11999, %v12260, %v11043
        %v12262 = vsel %vm12001, %v12261, %v11047
        %v12263 = vsel %vm12003, %v12262, %v11051
        %v12264 = vsel %vm12005, %v12263, %v11055
        %v12265 = vsel %vm12007, %v12264, %v11059
        %v12266 = vsel %vm12009, %v12265, %v11063
        %v12267 = vsel %vm12011, %v12266, %v11067
        %v12268 = vsel %vm12013, %v12267, %v11071
        %v12269 = vsel %vm12015, %v12268, %v11075
        %v12270 = vsel %vm12017, %v12269, %v11079
        %v12271 = vsel %vm12019, %v12270, %v11083
        %v12272 = vsel %vm12021, %v12271, %v11087
        %v12273 = vsel %vm12023, %v12272, %v11091
        %v12274 = vsel %vm12025, %v12273, %v11095
        %v12275 = vsel %vm11965, %v6301, %v11099
        %v12276 = vsel %vm11967, %v12275, %v11103
        %v12277 = vsel %vm11969, %v12276, %v11107
        %v12278 = vsel %vm11971, %v12277, %v11111
        %v12279 = vsel %vm11973, %v12278, %v11115
        %v12280 = vsel %vm11975, %v12279, %v11119
        %v12281 = vsel %vm11977, %v12280, %v11123
        %v12282 = vsel %vm11979, %v12281, %v11127
        %v12283 = vsel %vm11981, %v12282, %v11131
        %v12284 = vsel %vm11983, %v12283, %v11135
        %v12285 = vsel %vm11985, %v12284, %v11139
        %v12286 = vsel %vm11987, %v12285, %v11143
        %v12287 = vsel %vm11989, %v12286, %v11147
        %v12288 = vsel %vm11991, %v12287, %v11151
        %v12289 = vsel %vm11993, %v12288, %v11155
        %v12290 = vsel %vm11995, %v12289, %v11159
        %v12291 = vsel %vm11997, %v12290, %v11163
        %v12292 = vsel %vm11999, %v12291, %v11167
        %v12293 = vsel %vm12001, %v12292, %v11171
        %v12294 = vsel %vm12003, %v12293, %v11175
        %v12295 = vsel %vm12005, %v12294, %v11179
        %v12296 = vsel %vm12007, %v12295, %v11183
        %v12297 = vsel %vm12009, %v12296, %v11187
        %v12298 = vsel %vm12011, %v12297, %v11191
        %v12299 = vsel %vm12013, %v12298, %v11195
        %v12300 = vsel %vm12015, %v12299, %v11199
        %v12301 = vsel %vm12017, %v12300, %v11203
        %v12302 = vsel %vm12019, %v12301, %v11207
        %v12303 = vsel %vm12021, %v12302, %v11211
        %v12304 = vsel %vm12023, %v12303, %v11215
        %v12305 = vsel %vm12025, %v12304, %v11219
        %v12306 = vsel %vm11965, %v6845, %v11223
        %v12307 = vsel %vm11967, %v12306, %v11227
        %v12308 = vsel %vm11969, %v12307, %v11231
        %v12309 = vsel %vm11971, %v12308, %v11235
        %v12310 = vsel %vm11973, %v12309, %v11239
        %v12311 = vsel %vm11975, %v12310, %v11243
        %v12312 = vsel %vm11977, %v12311, %v11247
        %v12313 = vsel %vm11979, %v12312, %v11251
        %v12314 = vsel %vm11981, %v12313, %v11255
        %v12315 = vsel %vm11983, %v12314, %v11259
        %v12316 = vsel %vm11985, %v12315, %v11263
        %v12317 = vsel %vm11987, %v12316, %v11267
        %v12318 = vsel %vm11989, %v12317, %v11271
        %v12319 = vsel %vm11991, %v12318, %v11275
        %v12320 = vsel %vm11993, %v12319, %v11279
        %v12321 = vsel %vm11995, %v12320, %v11283
        %v12322 = vsel %vm11997, %v12321, %v11287
        %v12323 = vsel %vm11999, %v12322, %v11291
        %v12324 = vsel %vm12001, %v12323, %v11295
        %v12325 = vsel %vm12003, %v12324, %v11299
        %v12326 = vsel %vm12005, %v12325, %v11303
        %v12327 = vsel %vm12007, %v12326, %v11307
        %v12328 = vsel %vm12009, %v12327, %v11311
        %v12329 = vsel %vm12011, %v12328, %v11315
        %v12330 = vsel %vm12013, %v12329, %v11319
        %v12331 = vsel %vm12015, %v12330, %v11323
        %v12332 = vsel %vm12017, %v12331, %v11327
        %v12333 = vsel %vm12019, %v12332, %v11331
        %v12334 = vsel %vm12021, %v12333, %v11335
        %v12335 = vsel %vm12023, %v12334, %v11339
        %v12336 = vsel %vm12025, %v12335, %v11343
        %v12337 = vsel %vm11965, %v7389, %v11347
        %v12338 = vsel %vm11967, %v12337, %v11351
        %v12339 = vsel %vm11969, %v12338, %v11355
        %v12340 = vsel %vm11971, %v12339, %v11359
        %v12341 = vsel %vm11973, %v12340, %v11363
        %v12342 = vsel %vm11975, %v12341, %v11367
        %v12343 = vsel %vm11977, %v12342, %v11371
        %v12344 = vsel %vm11979, %v12343, %v11375
        %v12345 = vsel %vm11981, %v12344, %v11379
        %v12346 = vsel %vm11983, %v12345, %v11383
        %v12347 = vsel %vm11985, %v12346, %v11387
        %v12348 = vsel %vm11987, %v12347, %v11391
        %v12349 = vsel %vm11989, %v12348, %v11395
        %v12350 = vsel %vm11991, %v12349, %v11399
        %v12351 = vsel %vm11993, %v12350, %v11403
        %v12352 = vsel %vm11995, %v12351, %v11407
        %v12353 = vsel %vm11997, %v12352, %v11411
        %v12354 = vsel %vm11999, %v12353, %v11415
        %v12355 = vsel %vm12001, %v12354, %v11419
        %v12356 = vsel %vm12003, %v12355, %v11423
        %v12357 = vsel %vm12005, %v12356, %v11427
        %v12358 = vsel %vm12007, %v12357, %v11431
        %v12359 = vsel %vm12009, %v12358, %v11435
        %v12360 = vsel %vm12011, %v12359, %v11439
        %v12361 = vsel %vm12013, %v12360, %v11443
        %v12362 = vsel %vm12015, %v12361, %v11447
        %v12363 = vsel %vm12017, %v12362, %v11451
        %v12364 = vsel %vm12019, %v12363, %v11455
        %v12365 = vsel %vm12021, %v12364, %v11459
        %v12366 = vsel %vm12023, %v12365, %v11463
        %v12367 = vsel %vm12025, %v12366, %v11467
        %v12368 = vsel %vm11965, %v7933, %v11471
        %v12369 = vsel %vm11967, %v12368, %v11475
        %v12370 = vsel %vm11969, %v12369, %v11479
        %v12371 = vsel %vm11971, %v12370, %v11483
        %v12372 = vsel %vm11973, %v12371, %v11487
        %v12373 = vsel %vm11975, %v12372, %v11491
        %v12374 = vsel %vm11977, %v12373, %v11495
        %v12375 = vsel %vm11979, %v12374, %v11499
        %v12376 = vsel %vm11981, %v12375, %v11503
        %v12377 = vsel %vm11983, %v12376, %v11507
        %v12378 = vsel %vm11985, %v12377, %v11511
        %v12379 = vsel %vm11987, %v12378, %v11515
        %v12380 = vsel %vm11989, %v12379, %v11519
        %v12381 = vsel %vm11991, %v12380, %v11523
        %v12382 = vsel %vm11993, %v12381, %v11527
        %v12383 = vsel %vm11995, %v12382, %v11531
        %v12384 = vsel %vm11997, %v12383, %v11535
        %v12385 = vsel %vm11999, %v12384, %v11539
        %v12386 = vsel %vm12001, %v12385, %v11543
        %v12387 = vsel %vm12003, %v12386, %v11547
        %v12388 = vsel %vm12005, %v12387, %v11551
        %v12389 = vsel %vm12007, %v12388, %v11555
        %v12390 = vsel %vm12009, %v12389, %v11559
        %v12391 = vsel %vm12011, %v12390, %v11563
        %v12392 = vsel %vm12013, %v12391, %v11567
        %v12393 = vsel %vm12015, %v12392, %v11571
        %v12394 = vsel %vm12017, %v12393, %v11575
        %v12395 = vsel %vm12019, %v12394, %v11579
        %v12396 = vsel %vm12021, %v12395, %v11583
        %v12397 = vsel %vm12023, %v12396, %v11587
        %v12398 = vsel %vm12025, %v12397, %v11591
        %v12399 = vsel %vm11965, %v8477, %v11595
        %v12400 = vsel %vm11967, %v12399, %v11599
        %v12401 = vsel %vm11969, %v12400, %v11603
        %v12402 = vsel %vm11971, %v12401, %v11607
        %v12403 = vsel %vm11973, %v12402, %v11611
        %v12404 = vsel %vm11975, %v12403, %v11615
        %v12405 = vsel %vm11977, %v12404, %v11619
        %v12406 = vsel %vm11979, %v12405, %v11623
        %v12407 = vsel %vm11981, %v12406, %v11627
        %v12408 = vsel %vm11983, %v12407, %v11631
        %v12409 = vsel %vm11985, %v12408, %v11635
        %v12410 = vsel %vm11987, %v12409, %v11639
        %v12411 = vsel %vm11989, %v12410, %v11643
        %v12412 = vsel %vm11991, %v12411, %v11647
        %v12413 = vsel %vm11993, %v12412, %v11651
        %v12414 = vsel %vm11995, %v12413, %v11655
        %v12415 = vsel %vm11997, %v12414, %v11659
        %v12416 = vsel %vm11999, %v12415, %v11663
        %v12417 = vsel %vm12001, %v12416, %v11667
        %v12418 = vsel %vm12003, %v12417, %v11671
        %v12419 = vsel %vm12005, %v12418, %v11675
        %v12420 = vsel %vm12007, %v12419, %v11679
        %v12421 = vsel %vm12009, %v12420, %v11683
        %v12422 = vsel %vm12011, %v12421, %v11687
        %v12423 = vsel %vm12013, %v12422, %v11691
        %v12424 = vsel %vm12015, %v12423, %v11695
        %v12425 = vsel %vm12017, %v12424, %v11699
        %v12426 = vsel %vm12019, %v12425, %v11703
        %v12427 = vsel %vm12021, %v12426, %v11707
        %v12428 = vsel %vm12023, %v12427, %v11711
        %v12429 = vsel %vm12025, %v12428, %v11715
        %v12430 = vsel %vm11965, %v9021, %v11719
        %v12431 = vsel %vm11967, %v12430, %v11723
        %v12432 = vsel %vm11969, %v12431, %v11727
        %v12433 = vsel %vm11971, %v12432, %v11731
        %v12434 = vsel %vm11973, %v12433, %v11735
        %v12435 = vsel %vm11975, %v12434, %v11739
        %v12436 = vsel %vm11977, %v12435, %v11743
        %v12437 = vsel %vm11979, %v12436, %v11747
        %v12438 = vsel %vm11981, %v12437, %v11751
        %v12439 = vsel %vm11983, %v12438, %v11755
        %v12440 = vsel %vm11985, %v12439, %v11759
        %v12441 = vsel %vm11987, %v12440, %v11763
        %v12442 = vsel %vm11989, %v12441, %v11767
        %v12443 = vsel %vm11991, %v12442, %v11771
        %v12444 = vsel %vm11993, %v12443, %v11775
        %v12445 = vsel %vm11995, %v12444, %v11779
        %v12446 = vsel %vm11997, %v12445, %v11783
        %v12447 = vsel %vm11999, %v12446, %v11787
        %v12448 = vsel %vm12001, %v12447, %v11791
        %v12449 = vsel %vm12003, %v12448, %v11795
        %v12450 = vsel %vm12005, %v12449, %v11799
        %v12451 = vsel %vm12007, %v12450, %v11803
        %v12452 = vsel %vm12009, %v12451, %v11807
        %v12453 = vsel %vm12011, %v12452, %v11811
        %v12454 = vsel %vm12013, %v12453, %v11815
        %v12455 = vsel %vm12015, %v12454, %v11819
        %v12456 = vsel %vm12017, %v12455, %v11823
        %v12457 = vsel %vm12019, %v12456, %v11827
        %v12458 = vsel %vm12021, %v12457, %v11831
        %v12459 = vsel %vm12023, %v12458, %v11835
        %v12460 = vsel %vm12025, %v12459, %v11839
        %v12461 = vsel %vm11965, %v9565, %v11843
        %v12462 = vsel %vm11967, %v12461, %v11847
        %v12463 = vsel %vm11969, %v12462, %v11851
        %v12464 = vsel %vm11971, %v12463, %v11855
        %v12465 = vsel %vm11973, %v12464, %v11859
        %v12466 = vsel %vm11975, %v12465, %v11863
        %v12467 = vsel %vm11977, %v12466, %v11867
        %v12468 = vsel %vm11979, %v12467, %v11871
        %v12469 = vsel %vm11981, %v12468, %v11875
        %v12470 = vsel %vm11983, %v12469, %v11879
        %v12471 = vsel %vm11985, %v12470, %v11883
        %v12472 = vsel %vm11987, %v12471, %v11887
        %v12473 = vsel %vm11989, %v12472, %v11891
        %v12474 = vsel %vm11991, %v12473, %v11895
        %v12475 = vsel %vm11993, %v12474, %v11899
        %v12476 = vsel %vm11995, %v12475, %v11903
        %v12477 = vsel %vm11997, %v12476, %v11907
        %v12478 = vsel %vm11999, %v12477, %v11911
        %v12479 = vsel %vm12001, %v12478, %v11915
        %v12480 = vsel %vm12003, %v12479, %v11919
        %v12481 = vsel %vm12005, %v12480, %v11923
        %v12482 = vsel %vm12007, %v12481, %v11927
        %v12483 = vsel %vm12009, %v12482, %v11931
        %v12484 = vsel %vm12011, %v12483, %v11935
        %v12485 = vsel %vm12013, %v12484, %v11939
        %v12486 = vsel %vm12015, %v12485, %v11943
        %v12487 = vsel %vm12017, %v12486, %v11947
        %v12488 = vsel %vm12019, %v12487, %v11951
        %v12489 = vsel %vm12021, %v12488, %v11955
        %v12490 = vsel %vm12023, %v12489, %v11959
        %v12491 = vsel %vm12025, %v12490, %v11963
        %12492 = vst [vmem:[%s153] sm:$0xff] %v12026
        %12493 = vst [vmem:[%s153 + $0x8] sm:$0xff] %v12057
        %12494 = vst [vmem:[%s153 + $0x10] sm:$0xff] %v12088
        %12495 = vst [vmem:[%s153 + $0x18] sm:$0xff] %v12119
        %12496 = vst [vmem:[%s153 + $0x20] sm:$0xff] %v12150
        %12497 = vst [vmem:[%s153 + $0x28] sm:$0xff] %v12181
        %12498 = vst [vmem:[%s153 + $0x30] sm:$0xff] %v12212
        %12499 = vst [vmem:[%s153 + $0x38] sm:$0xff] %v12243
        %12500 = vst [vmem:[%s153 + $0x40] sm:$0xff] %v12274
        %12501 = vst [vmem:[%s153 + $0x48] sm:$0xff] %v12305
        %12502 = vst [vmem:[%s153 + $0x50] sm:$0xff] %v12336
        %12503 = vst [vmem:[%s153 + $0x58] sm:$0xff] %v12367
        %12504 = vst [vmem:[%s153 + $0x60] sm:$0xff] %v12398
        %12505 = vst [vmem:[%s153 + $0x68] sm:$0xff] %v12429
        %12506 = vst [vmem:[%s153 + $0x70] sm:$0xff] %v12460
        %12507 = vst [vmem:[%s153 + $0x78] sm:$0xff] %v12491
        %s12508 = sand.u32 %s68, 1
        %s12509 = scalar_lea.sflag [#allocation4], %s12508
        %s12510 = sand.u32 %s68, 1
        %s12511 = smul.addr %s12510, 128
        %s12512 = scalar_lea.vmem [#allocation5], %s12511
        // Predicated region
        $region29: #{tpu_custom_call.1} parent=23 // pred_check
          %p12513 = pneg %p78
        $region30: #{tpu_custom_call.1} parent=23 // pred_check_branch
          %12515 = sbr.rel (%p12513) target = $region32
        $region31: #{tpu_custom_call.1} parent=23 // pred_region
          %s12516 = smul.u32 16, %s23
          %s12518 = ssub.s32 2048, 2048
          %12519 = vsyncadd %s12509, %s12518
          %s12520 = smul.addr %s22, 32
          %s12521 = sadd.s32 %s12516, %s12520
          %s12522 = smul.addr %s12521, 128
          %s12523 = scalar_lea.hbm %s1, %s12522
          %s12525 = sshll.u32 %s12512, 4
          %s12526 = int_to_ptr.vmem [resolvable:$true] %s12525
          %12528 = dma.vmem_to_hbm [thread:$0]  %s12526, 2048, %s12523, %s12509
        $region32: #{tpu_custom_call.1} parent=23 // pred_fallthru
          _
      $region24: #{tpu_custom_call.1} parent=5 // pred_fallthru
        _
      %p12529 = scmp.le.s32.totalorder 2, %s13
      // Predicated region
      $region33: #{tpu_custom_call.1} parent=5 // pred_check
        %p12530 = pneg %p12529
      $region34: #{tpu_custom_call.1} parent=5 // pred_check_branch
        %12532 = sbr.rel (%p12530) target = $region36
      $region35: #{tpu_custom_call.1} parent=5 // pred_region
        %s12533 = ssub.s32 %s13, 2
        // Predicated region
        $region37: #{tpu_custom_call.1} parent=35 // pred_check
          %p12534 = pneg %p84
        $region38: #{tpu_custom_call.1} parent=35 // pred_check_branch
          %12536 = sbr.rel (%p12534) target = $region40
        $region39: #{tpu_custom_call.1} parent=35 // pred_region
          %s12537 = sand.u32 %s69, 1
          %s12538 = scalar_lea.sflag [#allocation4], %s12537
          %s12539 = sand.u32 %s69, 1
          %s12540 = smul.addr %s12539, 128
          %s12541 = scalar_lea.vmem [#allocation5], %s12540
          %12542 = dma.done %s12538, 2048
        $region40: #{tpu_custom_call.1} parent=35 // pred_fallthru
          _
      $region36: #{tpu_custom_call.1} parent=5 // pred_fallthru
        _
    $region6: #{tpu_custom_call.1} parent=1 // loop_footer
      %s17 = sadd.s32 1, %s13
    $region7: #{tpu_custom_call.1} parent=1 // loop_footer_branch
      %12 = sbr.rel target = $region3
    $region8: #{tpu_custom_call.1} parent=1 // loop_exit
      _
    %12543 = vsyncpa [#allocation3], 1
    %s12544 = scalar_lea.sflag [#allocation3], 1
    %12545 = vsyncpa %s12544, 1
    %12546 = vsyncpa [#allocation4], 1
    %s12547 = scalar_lea.sflag [#allocation4], 1
    %12548 = vsyncpa %s12547, 1

</llo_original>
